<compile_context>
chip_gen: v6e
topology: v6e:2x2x1
jax: 0.10.0
libtpu: 0.0.40
codegen_flags: <defaults>
</compile_context>

<pallas_src>
import functools

import jax
import jax.numpy as jnp
from jax.experimental import pallas as pl
from jax.experimental.pallas import tpu as pltpu


# ----------------------------------------------------------------------------
# Single fused kernel: feature extractor + AvgPool + r/t heads
# ----------------------------------------------------------------------------
def fused_kernel(xe_ref, pool_ref,                       # (bs*N,128) bf16, (bs,bs*N) bf16
                 w1_ref, w2_ref, w5a_ref, w5b_ref,       # bf16 fused weights (VMEM)
                 wh3_ref, bias_ref,                      # (256,OUT) bf16, (8,1024) f32
                 w6_hbm, wh1_hbm, wh2_hbm,               # big late-layer weights (pl.ANY / HBM)
                 out_ref,                                # (bs, OUT) f32
                 w6_vmem, wh1_vmem, wh2_vmem, sem,       # VMEM scratch + DMA sems
                 *, inv_n):
    # Kick off the big late-layer weight DMAs so they fly under conv1/2/5 compute.
    cp_w6 = pltpu.make_async_copy(w6_hbm, w6_vmem, sem.at[0])
    cp_wh1 = pltpu.make_async_copy(wh1_hbm, wh1_vmem, sem.at[1])
    cp_wh2 = pltpu.make_async_copy(wh2_hbm, wh2_vmem, sem.at[2])
    cp_w6.start()
    cp_wh1.start()
    cp_wh2.start()

    def mm(a, w):
        # bf16 x bf16 single-pass MXU matmul, f32 accumulate.
        return jnp.dot(a, w, preferred_element_type=jnp.float32)

    def relu_bf16(v):
        # Keep inter-layer activations bf16 (halves vst/vld traffic; next MXU
        # pass needs bf16 anyway).
        return jnp.maximum(v, 0.0).astype(jnp.bfloat16)

    xe = xe_ref[...]                                     # (bs*N,128) [x|emb|1.0|0pad]

    # conv1 / e_conv1 fused (block-diag, biases folded via the 1.0 lane) + ReLU
    h1 = relu_bf16(mm(xe, w1_ref[...]))                  # (bs*N,128) = [x1|e1]

    # conv2 / e_conv2 fused (block-diag) + ReLU
    h2 = relu_bf16(mm(h1, w2_ref[...]) + bias_ref[0:1, 0:256])       # (bs*N,256) = [x2|e2]

    # conv5 on pointfeat_3 = [x1|e1|x2|e2] as a K-split (no concat copy) + ReLU
    h5 = relu_bf16(mm(h1, w5a_ref[...]) + mm(h2, w5b_ref[...])
                   + bias_ref[1:2, 0:512])                           # (bs*N,512)

    # conv6 + ReLU (manually DMA'd weight -> wait right before use)
    cp_w6.wait()
    h6 = relu_bf16(mm(h5, w6_vmem[...]) + bias_ref[2:3, 0:1024])     # (bs*N,1024)

    # AvgPool1d(N) as an MXU matmul: exact 0/1 segment sum, scaled by 1/N in f32
    ap = (mm(pool_ref[...], h6) * inv_n).astype(jnp.bfloat16)        # (bs,1024)

    # head layer 1: [conv1_r | conv1_t] fused
    cp_wh1.wait()
    h = relu_bf16(mm(ap, wh1_vmem[...]) + bias_ref[3:4, 0:1024])     # (bs,1024) = [rx|tx]

    # head layer 2: conv2_r / conv2_t on the rx / tx halves (no zero-padded weight)
    cp_wh2.wait()
    hr = relu_bf16(mm(h[:, 0:512], wh2_vmem[:, 0:128]) + bias_ref[4:5, 0:128])
    ht = relu_bf16(mm(h[:, 512:1024], wh2_vmem[:, 128:256]) + bias_ref[4:5, 128:256])

    # head layer 3: block-diag conv3_r / conv3_t -> lane-dense [rx|tx|0pad] slab
    out_pad = out_ref.shape[1]
    out_ref[...] = (mm(hr, wh3_ref[0:128, :]) + mm(ht, wh3_ref[128:256, :])
                    + bias_ref[5:6, 0:out_pad])


# ----------------------------------------------------------------------------
# Parameter construction (deterministic, PyTorch-default-like uniform init)
# ----------------------------------------------------------------------------
def init_params(key, num_obj):
    def lin(k, fan_in, fan_out):
        kw, kb = jax.random.split(k)
        bound = 1.0 / jnp.sqrt(jnp.float32(fan_in))
        w = jax.random.uniform(kw, (fan_in, fan_out), jnp.float32, -bound, bound)
        b = jax.random.uniform(kb, (1, fan_out), jnp.float32, -bound, bound)
        return w, b

    keys = jax.random.split(key, 12)
    p = {}
    p["w1"], p["b1"] = lin(keys[0], 3, 64)        # conv1
    p["ew1"], p["eb1"] = lin(keys[1], 32, 64)     # e_conv1
    p["w2"], p["b2"] = lin(keys[2], 64, 128)      # conv2
    p["ew2"], p["eb2"] = lin(keys[3], 64, 128)    # e_conv2
    p["w5"], p["b5"] = lin(keys[4], 384, 512)     # conv5 (rows ordered [x1|e1|x2|e2])
    p["w6"], p["b6"] = lin(keys[5], 512, 1024)    # conv6
    p["w1r"], p["b1r"] = lin(keys[6], 1024, 512)
    p["w1t"], p["b1t"] = lin(keys[7], 1024, 512)
    p["w2r"], p["b2r"] = lin(keys[8], 512, 128)
    p["w2t"], p["b2t"] = lin(keys[9], 512, 128)
    p["w3r"], p["b3r"] = lin(keys[10], 128, num_obj * 4)
    p["w3t"], p["b3t"] = lin(keys[11], 128, num_obj * 3)
    return p


def fuse_params(p, num_obj):
    """Build the fused / block-diagonal bf16 weight set + packed bias slab."""
    f = {}

    # conv1 + e_conv1: input layout [x(0:3) | emb(3:35) | 1.0(35) | zero pad(36:128)]
    # Biases written into row 35 so the 1.0 lane acts as the bias term.
    w1 = jnp.zeros((128, 128), jnp.float32)
    w1 = w1.at[0:3, 0:64].set(p["w1"])
    w1 = w1.at[3:35, 64:128].set(p["ew1"])
    w1 = w1.at[35, 0:64].set(p["b1"][0])
    w1 = w1.at[35, 64:128].set(p["eb1"][0])
    f["w1"] = w1.astype(jnp.bfloat16)

    # conv2 + e_conv2: block-diag over [x1 | e1] -> [x2 | e2]
    w2 = jnp.zeros((128, 256), jnp.float32)
    w2 = w2.at[0:64, 0:128].set(p["w2"])
    w2 = w2.at[64:128, 128:256].set(p["ew2"])
    f["w2"] = w2.astype(jnp.bfloat16)

    # conv5: K-split so the kernel never materializes pointfeat_3
    f["w5a"] = p["w5"][0:128, :].astype(jnp.bfloat16)    # rows for [x1|e1]
    f["w5b"] = p["w5"][128:384, :].astype(jnp.bfloat16)  # rows for [x2|e2]

    f["w6"] = p["w6"].astype(jnp.bfloat16)                                           # (512,1024)
    f["wh1"] = jnp.concatenate([p["w1r"], p["w1t"]], axis=1).astype(jnp.bfloat16)    # (1024,1024)
    f["wh2"] = jnp.concatenate([p["w2r"], p["w2t"]], axis=1).astype(jnp.bfloat16)    # (512,256)

    # head layer 3: block-diag, output padded to a 128-lane slab
    nr, nt = num_obj * 4, num_obj * 3
    assert nr + nt <= 1024, "bias slab / output slab sizing assumes num_obj*7 <= 1024"
    out_pad = max(128, ((nr + nt + 127) // 128) * 128)
    wh3 = jnp.zeros((256, out_pad), jnp.float32)
    wh3 = wh3.at[0:128, 0:nr].set(p["w3r"])
    wh3 = wh3.at[128:256, nr:nr + nt].set(p["w3t"])
    f["wh3"] = wh3.astype(jnp.bfloat16)

    # One packed (8,1024) f32 bias slab -> single tiny DMA, sliced in-kernel.
    bias = jnp.zeros((8, 1024), jnp.float32)
    bias = bias.at[0, 0:256].set(jnp.concatenate([p["b2"], p["eb2"]], axis=1)[0])
    bias = bias.at[1, 0:512].set(p["b5"][0])
    bias = bias.at[2, 0:1024].set(p["b6"][0])
    bias = bias.at[3, 0:1024].set(jnp.concatenate([p["b1r"], p["b1t"]], axis=1)[0])
    bias = bias.at[4, 0:128].set(p["b2r"][0])
    bias = bias.at[4, 128:256].set(p["b2t"][0])
    bias = bias.at[5, 0:nr].set(p["b3r"][0])
    bias = bias.at[5, nr:nr + nt].set(p["b3t"][0])
    f["bias"] = bias
    return f


# ----------------------------------------------------------------------------
# Wrapper
# ----------------------------------------------------------------------------
@functools.partial(jax.jit, static_argnames=("num_obj",))
def pose_refine_net_v2(x, emb_ncw, obj, fused, *, num_obj):
    """x: (bs, N, 3) f32   emb_ncw: (bs, 32, N) f32 (PyTorch NCW)   obj: (bs, 1) int32."""
    bs, n_points, _ = x.shape
    emb = jnp.transpose(emb_ncw, (0, 2, 1))                            # (bs, N, 32)

    # Lane-dense kernel input: [x | emb | 1.0 | zero pad] -> (bs*N, 128) bf16.
    # Lane 35 == 1.0 feeds the folded conv1/e_conv1 bias row of w1; lanes 36..127
    # must stay zero to match w1's zero rows.
    ones = jnp.ones((bs, n_points, 1), jnp.float32)
    xe = jnp.concatenate([x, emb, ones], axis=-1)                      # (bs, N, 36)
    xe = jnp.pad(xe, ((0, 0), (0, 0), (0, 128 - xe.shape[-1])))
    xe = xe.reshape(bs * n_points, 128).astype(jnp.bfloat16)

    # 0/1 segment matrix for AvgPool-as-matmul: row b has ones on its N points.
    pool = jnp.repeat(jnp.eye(bs, dtype=jnp.bfloat16), n_points, axis=1)   # (bs, bs*N)

    out_pad = fused["wh3"].shape[1]
    kernel = functools.partial(fused_kernel, inv_n=1.0 / n_points)

    vmem_specs = [pl.BlockSpec(memory_space=pltpu.MemorySpace.VMEM) for _ in range(8)]
    hbm_specs = [pl.BlockSpec(memory_space=pl.ANY) for _ in range(3)]

    out = pl.pallas_call(
        kernel,
        out_shape=jax.ShapeDtypeStruct((bs, out_pad), jnp.float32),
        in_specs=vmem_specs + hbm_specs,
        out_specs=pl.BlockSpec(memory_space=pltpu.MemorySpace.VMEM),
        scratch_shapes=[
            pltpu.VMEM(fused["w6"].shape, jnp.bfloat16),
            pltpu.VMEM(fused["wh1"].shape, jnp.bfloat16),
            pltpu.VMEM(fused["wh2"].shape, jnp.bfloat16),
            pltpu.SemaphoreType.DMA((3,)),
        ],
        compiler_params=pltpu.CompilerParams(vmem_limit_bytes=32 * 1024 * 1024),
    )(xe, pool,
      fused["w1"], fused["w2"], fused["w5a"], fused["w5b"],
      fused["wh3"], fused["bias"],
      fused["w6"], fused["wh1"], fused["wh2"])

    nr, nt = num_obj * 4, num_obj * 3
    rx = out[:, :nr].reshape(bs, num_obj, 4)
    tx = out[:, nr:nr + nt].reshape(bs, num_obj, 3)

    # torch.index_select(rx[0], 0, obj[0]) -- tiny gather, plain-JAX glue (b=0 as in PyTorch)
    b = 0
    out_rx = rx[b][obj[b]]                                             # (len(obj[b]), 4)
    out_tx = tx[b][obj[b]]                                             # (len(obj[b]), 3)
    return out_rx, out_tx


if __name__ == "__main__":
    bs = 2
    num_points = 128
    num_obj = 5

    key = jax.random.PRNGKey(0)
    kx, kemb, kparam = jax.random.split(key, 3)

    x = jax.random.normal(kx, (bs, num_points, 3), jnp.float32)        # (bs, N, 3)
    emb = jax.random.normal(kemb, (bs, 32, num_points), jnp.float32)   # (bs, 32, N) NCW
    obj = jnp.array([[2], [3]], dtype=jnp.int32)                       # (bs, 1)

    params = init_params(kparam, num_obj)
    fused = fuse_params(params, num_obj)

    out_rx, out_tx = pose_refine_net_v2(x, emb, obj, fused, num_obj=num_obj)
    jax.block_until_ready((out_rx, out_tx))

    assert out_rx.shape == (1, 4), out_rx.shape
    assert out_tx.shape == (1, 3), out_tx.shape
    print("KERNEL_OK")
</pallas_src>

<mosaic_0001>
module attributes {stable_mosaic.version = 11 : i64} {
  func.func @fused_kernel(%arg0: memref<256x128xbf16, #tpu.memory_space<vmem>>, %arg1: memref<2x256xbf16, #tpu.memory_space<vmem>>, %arg2: memref<128x128xbf16, #tpu.memory_space<vmem>>, %arg3: memref<128x256xbf16, #tpu.memory_space<vmem>>, %arg4: memref<128x512xbf16, #tpu.memory_space<vmem>>, %arg5: memref<256x512xbf16, #tpu.memory_space<vmem>>, %arg6: memref<256x128xbf16, #tpu.memory_space<vmem>>, %arg7: memref<8x1024xf32, #tpu.memory_space<vmem>>, %arg8: memref<512x1024xbf16, #tpu.memory_space<any>>, %arg9: memref<1024x1024xbf16, #tpu.memory_space<any>>, %arg10: memref<512x256xbf16, #tpu.memory_space<any>>, %arg11: memref<2x128xf32, #tpu.memory_space<vmem>>, %arg12: memref<512x1024xbf16, #tpu.memory_space<vmem>>, %arg13: memref<1024x1024xbf16, #tpu.memory_space<vmem>>, %arg14: memref<512x256xbf16, #tpu.memory_space<vmem>>, %arg15: memref<3x!tpu.dma_semaphore, #tpu.memory_space<semaphore_mem>>) attributes {dimension_semantics = [], scalar_prefetch = 0 : i64, scratch_operands = 4 : i64, tpu.core_type = #tpu.core_type<tc>} {
    %c0_i32 = arith.constant 0 : i32
    %0 = tpu.memref_slice %arg15[%c0_i32] : memref<3x!tpu.dma_semaphore, #tpu.memory_space<semaphore_mem>> -> memref<1x!tpu.dma_semaphore, #tpu.memory_space<semaphore_mem>>
    %1 = tpu.memref_squeeze %0 : memref<1x!tpu.dma_semaphore, #tpu.memory_space<semaphore_mem>> -> memref<!tpu.dma_semaphore, #tpu.memory_space<semaphore_mem>>
    tpu.enqueue_dma source(%arg8 : memref<512x1024xbf16, #tpu.memory_space<any>>) target(%arg12 : memref<512x1024xbf16, #tpu.memory_space<vmem>>) target_semaphore(%1 : memref<!tpu.dma_semaphore, #tpu.memory_space<semaphore_mem>>)
    %c1_i32 = arith.constant 1 : i32
    %2 = tpu.memref_slice %arg15[%c1_i32] : memref<3x!tpu.dma_semaphore, #tpu.memory_space<semaphore_mem>> -> memref<1x!tpu.dma_semaphore, #tpu.memory_space<semaphore_mem>>
    %3 = tpu.memref_squeeze %2 : memref<1x!tpu.dma_semaphore, #tpu.memory_space<semaphore_mem>> -> memref<!tpu.dma_semaphore, #tpu.memory_space<semaphore_mem>>
    tpu.enqueue_dma source(%arg9 : memref<1024x1024xbf16, #tpu.memory_space<any>>) target(%arg13 : memref<1024x1024xbf16, #tpu.memory_space<vmem>>) target_semaphore(%3 : memref<!tpu.dma_semaphore, #tpu.memory_space<semaphore_mem>>)
    %c2_i32 = arith.constant 2 : i32
    %4 = tpu.memref_slice %arg15[%c2_i32] : memref<3x!tpu.dma_semaphore, #tpu.memory_space<semaphore_mem>> -> memref<1x!tpu.dma_semaphore, #tpu.memory_space<semaphore_mem>>
    %5 = tpu.memref_squeeze %4 : memref<1x!tpu.dma_semaphore, #tpu.memory_space<semaphore_mem>> -> memref<!tpu.dma_semaphore, #tpu.memory_space<semaphore_mem>>
    tpu.enqueue_dma source(%arg10 : memref<512x256xbf16, #tpu.memory_space<any>>) target(%arg14 : memref<512x256xbf16, #tpu.memory_space<vmem>>) target_semaphore(%5 : memref<!tpu.dma_semaphore, #tpu.memory_space<semaphore_mem>>)
    %c0 = arith.constant 0 : index
    %c0_0 = arith.constant 0 : index
    %6 = vector.load %arg0[%c0, %c0_0] : memref<256x128xbf16, #tpu.memory_space<vmem>>, vector<256x128xbf16>
    %c0_1 = arith.constant 0 : index
    %c0_2 = arith.constant 0 : index
    %7 = vector.load %arg2[%c0_1, %c0_2] : memref<128x128xbf16, #tpu.memory_space<vmem>>, vector<128x128xbf16>
    %cst = arith.constant dense<0.000000e+00> : vector<256x128xf32>
    %8 = tpu.matmul %6, %7, %cst {dimension_numbers = #tpu.dot_dimension_numbers<[1], [0], [0], [1], [0, 0, 1, 1], [], []>} : vector<256x128xbf16>, vector<128x128xbf16>, vector<256x128xf32> -> vector<256x128xf32>
    %cst_3 = arith.constant 0.000000e+00 : f32
    %9 = vector.broadcast %cst_3 : f32 to vector<256x128xf32>
    %10 = arith.maximumf %8, %9 : vector<256x128xf32>
    %11 = arith.truncf %10 : vector<256x128xf32> to vector<256x128xbf16>
    %c0_4 = arith.constant 0 : index
    %c0_5 = arith.constant 0 : index
    %12 = vector.load %arg3[%c0_4, %c0_5] : memref<128x256xbf16, #tpu.memory_space<vmem>>, vector<128x256xbf16>
    %cst_6 = arith.constant dense<0.000000e+00> : vector<256x256xf32>
    %13 = tpu.matmul %11, %12, %cst_6 {dimension_numbers = #tpu.dot_dimension_numbers<[1], [0], [0], [1], [0, 0, 1, 1], [], []>} : vector<256x128xbf16>, vector<128x256xbf16>, vector<256x256xf32> -> vector<256x256xf32>
    %c0_7 = arith.constant 0 : index
    %c0_8 = arith.constant 0 : index
    %14 = vector.load %arg7[%c0_7, %c0_8] : memref<8x1024xf32, #tpu.memory_space<vmem>>, vector<1x256xf32>
    %15 = vector.broadcast %14 : vector<1x256xf32> to vector<256x256xf32>
    %16 = arith.addf %13, %15 : vector<256x256xf32>
    %cst_9 = arith.constant 0.000000e+00 : f32
    %17 = vector.broadcast %cst_9 : f32 to vector<256x256xf32>
    %18 = arith.maximumf %16, %17 : vector<256x256xf32>
    %19 = arith.truncf %18 : vector<256x256xf32> to vector<256x256xbf16>
    %c0_10 = arith.constant 0 : index
    %c0_11 = arith.constant 0 : index
    %20 = vector.load %arg4[%c0_10, %c0_11] : memref<128x512xbf16, #tpu.memory_space<vmem>>, vector<128x512xbf16>
    %cst_12 = arith.constant dense<0.000000e+00> : vector<256x512xf32>
    %21 = tpu.matmul %11, %20, %cst_12 {dimension_numbers = #tpu.dot_dimension_numbers<[1], [0], [0], [1], [0, 0, 1, 1], [], []>} : vector<256x128xbf16>, vector<128x512xbf16>, vector<256x512xf32> -> vector<256x512xf32>
    %c0_13 = arith.constant 0 : index
    %c0_14 = arith.constant 0 : index
    %22 = vector.load %arg5[%c0_13, %c0_14] : memref<256x512xbf16, #tpu.memory_space<vmem>>, vector<256x512xbf16>
    %cst_15 = arith.constant dense<0.000000e+00> : vector<256x512xf32>
    %23 = tpu.matmul %19, %22, %cst_15 {dimension_numbers = #tpu.dot_dimension_numbers<[1], [0], [0], [1], [0, 0, 1, 1], [], []>} : vector<256x256xbf16>, vector<256x512xbf16>, vector<256x512xf32> -> vector<256x512xf32>
    %24 = arith.addf %21, %23 : vector<256x512xf32>
    %c1 = arith.constant 1 : index
    %c0_16 = arith.constant 0 : index
    %25 = vector.load %arg7[%c1, %c0_16] : memref<8x1024xf32, #tpu.memory_space<vmem>>, vector<1x512xf32>
    %26 = vector.broadcast %25 : vector<1x512xf32> to vector<256x512xf32>
    %27 = arith.addf %24, %26 : vector<256x512xf32>
    %cst_17 = arith.constant 0.000000e+00 : f32
    %28 = vector.broadcast %cst_17 : f32 to vector<256x512xf32>
    %29 = arith.maximumf %27, %28 : vector<256x512xf32>
    %30 = arith.truncf %29 : vector<256x512xf32> to vector<256x512xbf16>
    %c0_i32_18 = arith.constant 0 : i32
    %31 = tpu.memref_slice %arg15[%c0_i32_18] : memref<3x!tpu.dma_semaphore, #tpu.memory_space<semaphore_mem>> -> memref<1x!tpu.dma_semaphore, #tpu.memory_space<semaphore_mem>>
    %32 = tpu.memref_squeeze %31 : memref<1x!tpu.dma_semaphore, #tpu.memory_space<semaphore_mem>> -> memref<!tpu.dma_semaphore, #tpu.memory_space<semaphore_mem>>
    tpu.wait_dma2 semaphore(%32 : memref<!tpu.dma_semaphore, #tpu.memory_space<semaphore_mem>>) src(%arg8 : memref<512x1024xbf16, #tpu.memory_space<any>>) dst(%arg12 : memref<512x1024xbf16, #tpu.memory_space<vmem>>)
    %c0_19 = arith.constant 0 : index
    %c0_20 = arith.constant 0 : index
    %33 = vector.load %arg12[%c0_19, %c0_20] : memref<512x1024xbf16, #tpu.memory_space<vmem>>, vector<512x1024xbf16>
    %cst_21 = arith.constant dense<0.000000e+00> : vector<256x1024xf32>
    %34 = tpu.matmul %30, %33, %cst_21 {dimension_numbers = #tpu.dot_dimension_numbers<[1], [0], [0], [1], [0, 0, 1, 1], [], []>} : vector<256x512xbf16>, vector<512x1024xbf16>, vector<256x1024xf32> -> vector<256x1024xf32>
    %c2 = arith.constant 2 : index
    %c0_22 = arith.constant 0 : index
    %35 = vector.load %arg7[%c2, %c0_22] : memref<8x1024xf32, #tpu.memory_space<vmem>>, vector<1x1024xf32>
    %36 = vector.broadcast %35 : vector<1x1024xf32> to vector<256x1024xf32>
    %37 = arith.addf %34, %36 : vector<256x1024xf32>
    %cst_23 = arith.constant 0.000000e+00 : f32
    %38 = vector.broadcast %cst_23 : f32 to vector<256x1024xf32>
    %39 = arith.maximumf %37, %38 : vector<256x1024xf32>
    %40 = arith.truncf %39 : vector<256x1024xf32> to vector<256x1024xbf16>
    %c0_24 = arith.constant 0 : index
    %c0_25 = arith.constant 0 : index
    %41 = vector.load %arg1[%c0_24, %c0_25] : memref<2x256xbf16, #tpu.memory_space<vmem>>, vector<2x256xbf16>
    %cst_26 = arith.constant dense<0.000000e+00> : vector<2x1024xf32>
    %42 = tpu.matmul %41, %40, %cst_26 {dimension_numbers = #tpu.dot_dimension_numbers<[1], [0], [0], [1], [0, 0, 1, 1], [], []>} : vector<2x256xbf16>, vector<256x1024xbf16>, vector<2x1024xf32> -> vector<2x1024xf32>
    %cst_27 = arith.constant 7.812500e-03 : f32
    %43 = vector.broadcast %cst_27 : f32 to vector<2x1024xf32>
    %44 = arith.mulf %42, %43 : vector<2x1024xf32>
    %45 = arith.truncf %44 : vector<2x1024xf32> to vector<2x1024xbf16>
    %c1_i32_28 = arith.constant 1 : i32
    %46 = tpu.memref_slice %arg15[%c1_i32_28] : memref<3x!tpu.dma_semaphore, #tpu.memory_space<semaphore_mem>> -> memref<1x!tpu.dma_semaphore, #tpu.memory_space<semaphore_mem>>
    %47 = tpu.memref_squeeze %46 : memref<1x!tpu.dma_semaphore, #tpu.memory_space<semaphore_mem>> -> memref<!tpu.dma_semaphore, #tpu.memory_space<semaphore_mem>>
    tpu.wait_dma2 semaphore(%47 : memref<!tpu.dma_semaphore, #tpu.memory_space<semaphore_mem>>) src(%arg9 : memref<1024x1024xbf16, #tpu.memory_space<any>>) dst(%arg13 : memref<1024x1024xbf16, #tpu.memory_space<vmem>>)
    %c0_29 = arith.constant 0 : index
    %c0_30 = arith.constant 0 : index
    %48 = vector.load %arg13[%c0_29, %c0_30] : memref<1024x1024xbf16, #tpu.memory_space<vmem>>, vector<1024x1024xbf16>
    %cst_31 = arith.constant dense<0.000000e+00> : vector<2x1024xf32>
    %49 = tpu.matmul %45, %48, %cst_31 {dimension_numbers = #tpu.dot_dimension_numbers<[1], [0], [0], [1], [0, 0, 1, 1], [], []>} : vector<2x1024xbf16>, vector<1024x1024xbf16>, vector<2x1024xf32> -> vector<2x1024xf32>
    %c3 = arith.constant 3 : index
    %c0_32 = arith.constant 0 : index
    %50 = vector.load %arg7[%c3, %c0_32] : memref<8x1024xf32, #tpu.memory_space<vmem>>, vector<1x1024xf32>
    %51 = vector.broadcast %50 : vector<1x1024xf32> to vector<2x1024xf32>
    %52 = arith.addf %49, %51 : vector<2x1024xf32>
    %cst_33 = arith.constant 0.000000e+00 : f32
    %53 = vector.broadcast %cst_33 : f32 to vector<2x1024xf32>
    %54 = arith.maximumf %52, %53 : vector<2x1024xf32>
    %55 = arith.truncf %54 : vector<2x1024xf32> to vector<2x1024xbf16>
    %c2_i32_34 = arith.constant 2 : i32
    %56 = tpu.memref_slice %arg15[%c2_i32_34] : memref<3x!tpu.dma_semaphore, #tpu.memory_space<semaphore_mem>> -> memref<1x!tpu.dma_semaphore, #tpu.memory_space<semaphore_mem>>
    %57 = tpu.memref_squeeze %56 : memref<1x!tpu.dma_semaphore, #tpu.memory_space<semaphore_mem>> -> memref<!tpu.dma_semaphore, #tpu.memory_space<semaphore_mem>>
    tpu.wait_dma2 semaphore(%57 : memref<!tpu.dma_semaphore, #tpu.memory_space<semaphore_mem>>) src(%arg10 : memref<512x256xbf16, #tpu.memory_space<any>>) dst(%arg14 : memref<512x256xbf16, #tpu.memory_space<vmem>>)
    %58 = vector.extract_strided_slice %55 {offsets = [0, 0], sizes = [2, 512], strides = [1, 1]} : vector<2x1024xbf16> to vector<2x512xbf16>
    %c0_35 = arith.constant 0 : index
    %c0_36 = arith.constant 0 : index
    %59 = vector.load %arg14[%c0_35, %c0_36] : memref<512x256xbf16, #tpu.memory_space<vmem>>, vector<512x128xbf16>
    %cst_37 = arith.constant dense<0.000000e+00> : vector<2x128xf32>
    %60 = tpu.matmul %58, %59, %cst_37 {dimension_numbers = #tpu.dot_dimension_numbers<[1], [0], [0], [1], [0, 0, 1, 1], [], []>} : vector<2x512xbf16>, vector<512x128xbf16>, vector<2x128xf32> -> vector<2x128xf32>
    %c4 = arith.constant 4 : index
    %c0_38 = arith.constant 0 : index
    %61 = vector.load %arg7[%c4, %c0_38] : memref<8x1024xf32, #tpu.memory_space<vmem>>, vector<1x128xf32>
    %62 = vector.broadcast %61 : vector<1x128xf32> to vector<2x128xf32>
    %63 = arith.addf %60, %62 : vector<2x128xf32>
    %cst_39 = arith.constant 0.000000e+00 : f32
    %64 = vector.broadcast %cst_39 : f32 to vector<2x128xf32>
    %65 = arith.maximumf %63, %64 : vector<2x128xf32>
    %66 = arith.truncf %65 : vector<2x128xf32> to vector<2x128xbf16>
    %67 = vector.extract_strided_slice %55 {offsets = [0, 512], sizes = [2, 512], strides = [1, 1]} : vector<2x1024xbf16> to vector<2x512xbf16>
    %c0_40 = arith.constant 0 : index
    %c128 = arith.constant 128 : index
    %68 = vector.load %arg14[%c0_40, %c128] : memref<512x256xbf16, #tpu.memory_space<vmem>>, vector<512x128xbf16>
    %cst_41 = arith.constant dense<0.000000e+00> : vector<2x128xf32>
    %69 = tpu.matmul %67, %68, %cst_41 {dimension_numbers = #tpu.dot_dimension_numbers<[1], [0], [0], [1], [0, 0, 1, 1], [], []>} : vector<2x512xbf16>, vector<512x128xbf16>, vector<2x128xf32> -> vector<2x128xf32>
    %c4_42 = arith.constant 4 : index
    %c128_43 = arith.constant 128 : index
    %70 = vector.load %arg7[%c4_42, %c128_43] : memref<8x1024xf32, #tpu.memory_space<vmem>>, vector<1x128xf32>
    %71 = vector.broadcast %70 : vector<1x128xf32> to vector<2x128xf32>
    %72 = arith.addf %69, %71 : vector<2x128xf32>
    %cst_44 = arith.constant 0.000000e+00 : f32
    %73 = vector.broadcast %cst_44 : f32 to vector<2x128xf32>
    %74 = arith.maximumf %72, %73 : vector<2x128xf32>
    %75 = arith.truncf %74 : vector<2x128xf32> to vector<2x128xbf16>
    %c0_45 = arith.constant 0 : index
    %c0_46 = arith.constant 0 : index
    %76 = vector.load %arg6[%c0_45, %c0_46] : memref<256x128xbf16, #tpu.memory_space<vmem>>, vector<128x128xbf16>
    %cst_47 = arith.constant dense<0.000000e+00> : vector<2x128xf32>
    %77 = tpu.matmul %66, %76, %cst_47 {dimension_numbers = #tpu.dot_dimension_numbers<[1], [0], [0], [1], [0, 0, 1, 1], [], []>} : vector<2x128xbf16>, vector<128x128xbf16>, vector<2x128xf32> -> vector<2x128xf32>
    %c128_48 = arith.constant 128 : index
    %c0_49 = arith.constant 0 : index
    %78 = vector.load %arg6[%c128_48, %c0_49] : memref<256x128xbf16, #tpu.memory_space<vmem>>, vector<128x128xbf16>
    %cst_50 = arith.constant dense<0.000000e+00> : vector<2x128xf32>
    %79 = tpu.matmul %75, %78, %cst_50 {dimension_numbers = #tpu.dot_dimension_numbers<[1], [0], [0], [1], [0, 0, 1, 1], [], []>} : vector<2x128xbf16>, vector<128x128xbf16>, vector<2x128xf32> -> vector<2x128xf32>
    %80 = arith.addf %77, %79 : vector<2x128xf32>
    %c5 = arith.constant 5 : index
    %c0_51 = arith.constant 0 : index
    %81 = vector.load %arg7[%c5, %c0_51] : memref<8x1024xf32, #tpu.memory_space<vmem>>, vector<1x128xf32>
    %82 = vector.broadcast %81 : vector<1x128xf32> to vector<2x128xf32>
    %83 = arith.addf %80, %82 : vector<2x128xf32>
    %c0_52 = arith.constant 0 : index
    %c0_53 = arith.constant 0 : index
    %84 = vector.load %arg11[%c0_52, %c0_53] : memref<2x128xf32, #tpu.memory_space<vmem>>, vector<2x128xf32>
    tpu.vector_store %arg11[%c0_52, %c0_53], %83 {strides = array<i32>} : memref<2x128xf32, #tpu.memory_space<vmem>>, vector<2x128xf32>,
    return
  }
}

</mosaic_0001>

<llo_original>
// kernel: squeeze.4
$region0: #{squeeze.4}
  %s0 = inlined_call_operand.vmem [shape: f32[20], index: 0, kind: input, shape index: {}]
  %s1 = inlined_call_operand.vmem [shape: f32[5,4], index: 1, kind: output, shape index: {}]
  $region1: #{squeeze.4} parent=0
    #allocation0 [shape = 'u8[4096]{0}', space=vmem, size = 0x1000, scoped, tag = 'scoped mem for input reshape']
    %s3 = sshll.u32 1, 1
    %s4 = ssub.s32 %s3, 1
    %v5 = vld [vmem:[%s0] sm:%s4]
    %6 = vst [vmem:[#allocation0] sm:%s4] %v5
    %v7 = vld [vmem:[#allocation0] sm:$0x1]
    %vm8 = vcmask 31744
    %9 = vst.msk [vmem:[%s1] sm:$0x1] %vm8, %v7
    %v10 = vld [vmem:[#allocation0] sm:$0x1]
    %11 = vrot.lane.b32.xlu0 %v10, 124
    %v12 = vpop.permute.xlu0 %11
    %vm13 = vcmask 31744
    %s14 = scalar_lea.vmem %s1, 1
    %15 = vst.msk [vmem:[%s14] sm:$0x1] %vm13, %v12
    %v16 = vld [vmem:[#allocation0] sm:$0x1]
    %17 = vrot.lane.b32.xlu0 %v16, 120
    %v18 = vpop.permute.xlu0 %17
    %vm19 = vcmask 31744
    %s20 = scalar_lea.vmem %s1, 2
    %21 = vst.msk [vmem:[%s20] sm:$0x1] %vm19, %v18
    %v22 = vld [vmem:[#allocation0] sm:$0x1]
    %23 = vrot.lane.b32.xlu0 %v22, 116
    %v24 = vpop.permute.xlu0 %23
    %vm25 = vcmask 31744
    %s26 = scalar_lea.vmem %s1, 3
    %27 = vst.msk [vmem:[%s26] sm:$0x1] %vm25, %v24
    %v28 = vld [vmem:[#allocation0] sm:$0x1]
    %29 = vrot.lane.b32.xlu0 %v28, 112
    %v30 = vpop.permute.xlu0 %29
    %vm31 = vcmask 31744
    %s32 = scalar_lea.vmem %s1, 4
    %33 = vst.msk [vmem:[%s32] sm:$0x1] %vm31, %v30

// kernel: squeeze.6
$region0: #{squeeze.6}
  %s0 = inlined_call_operand.vmem [shape: f32[15], index: 0, kind: input, shape index: {}]
  %s1 = inlined_call_operand.vmem [shape: f32[5,3], index: 1, kind: output, shape index: {}]
  $region1: #{squeeze.6} parent=0
    #allocation0 [shape = 'u8[4096]{0}', space=vmem, size = 0x1000, scoped, tag = 'scoped mem for input reshape']
    %s3 = sshll.u32 1, 1
    %s4 = ssub.s32 %s3, 1
    %v5 = vld [vmem:[%s0] sm:%s4]
    %6 = vst [vmem:[#allocation0] sm:%s4] %v5
    %v7 = vld [vmem:[#allocation0] sm:$0x1]
    %vm8 = vcmask 23552
    %9 = vst.msk [vmem:[%s1] sm:$0x1] %vm8, %v7
    %v10 = vld [vmem:[#allocation0] sm:$0x1]
    %11 = vrot.lane.b32.xlu0 %v10, 125
    %v12 = vpop.permute.xlu0 %11
    %vm13 = vcmask 23552
    %s14 = scalar_lea.vmem %s1, 1
    %15 = vst.msk [vmem:[%s14] sm:$0x1] %vm13, %v12
    %v16 = vld [vmem:[#allocation0] sm:$0x1]
    %17 = vrot.lane.b32.xlu0 %v16, 122
    %v18 = vpop.permute.xlu0 %17
    %vm19 = vcmask 23552
    %s20 = scalar_lea.vmem %s1, 2
    %21 = vst.msk [vmem:[%s20] sm:$0x1] %vm19, %v18
    %v22 = vld [vmem:[#allocation0] sm:$0x1]
    %23 = vrot.lane.b32.xlu0 %v22, 119
    %v24 = vpop.permute.xlu0 %23
    %vm25 = vcmask 23552
    %s26 = scalar_lea.vmem %s1, 3
    %27 = vst.msk [vmem:[%s26] sm:$0x1] %vm25, %v24
    %v28 = vld [vmem:[#allocation0] sm:$0x1]
    %29 = vrot.lane.b32.xlu0 %v28, 116
    %v30 = vpop.permute.xlu0 %29
    %vm31 = vcmask 23552
    %s32 = scalar_lea.vmem %s1, 4
    %33 = vst.msk [vmem:[%s32] sm:$0x1] %vm31, %v30

// kernel: pose_refine_net_v2.1
$region0: #{pose_refine_net_v2.1}
  #allocation0 [shape = 'u32[]', space=smem, size = 0x4, offset = 0x4, fixed_abs, tag = 'smem constant byte address 0x4 - core index']
  #allocation1 [shape = 'u32[144,128]{1,0:T(1,128)}', space=vmem, size = 0x12000, scoped, tag = 'internal scratch']
  #allocation2 [shape = 'bf16[512,1024]{1,0:T(8,128)(2,1)}', space=vmem, size = 0x100000, scoped, tag = 'scratch operand']
  #allocation3 [shape = 'bf16[1024,1024]{1,0:T(8,128)(2,1)}', space=vmem, size = 0x200000, scoped, tag = 'scratch operand']
  #allocation4 [shape = 'bf16[512,256]{1,0:T(8,128)(2,1)}', space=vmem, size = 0x40000, scoped, tag = 'scratch operand']
  #allocation5 [shape = 's32[3]{0}', space=sflag, size = 0xc, scoped, tag = 'scratch operand']
  #allocation16 [shape = 's32[]', space=sflag, size = 0x4, offset = 0, fixed_abs, tag = 'sflag constant byte address 0x0 - dummy sync flag']
  #allocation17 [shape = 's32[]', space=sflag, size = 0x4, offset = 0, fixed_abs, tag = 'sflag constant byte address 0x0 - dummy sync flag']
  #allocation18 [shape = 'u32[]', space=smem, size = 0x4, offset = 0x44, fixed_abs, tag = 'smem constant byte address 0x44 - assertion arg 0']
  #allocation19 [shape = 'u32[]', space=smem, size = 0x4, offset = 0x48, fixed_abs, tag = 'smem constant byte address 0x48 - assertion arg 1']
  #allocation20 [shape = 's32[]', space=sflag, size = 0x4, offset = 0, fixed_abs, tag = 'sflag constant byte address 0x0 - dummy sync flag']
  #allocation21 [shape = 's32[]', space=sflag, size = 0x4, offset = 0, fixed_abs, tag = 'sflag constant byte address 0x0 - dummy sync flag']
  #allocation22 [shape = 's32[]', space=sflag, size = 0x4, offset = 0, fixed_abs, tag = 'sflag constant byte address 0x0 - dummy sync flag']
  #allocation23 [shape = 's32[]', space=sflag, size = 0x4, offset = 0, fixed_abs, tag = 'sflag constant byte address 0x0 - dummy sync flag']
  %s0 = inlined_call_operand.vmem [shape: bf16[256,128], index: 0, kind: input, shape index: {}]
  %s1 = inlined_call_operand.vmem [shape: bf16[2,256], index: 1, kind: input, shape index: {}]
  %s2 = inlined_call_operand.hbm [shape: bf16[128,128], index: 2, kind: input, shape index: {}]
  %s3 = inlined_call_operand.hbm [shape: bf16[128,256], index: 3, kind: input, shape index: {}]
  %s4 = inlined_call_operand.hbm [shape: bf16[128,512], index: 4, kind: input, shape index: {}]
  %s5 = inlined_call_operand.hbm [shape: bf16[256,512], index: 5, kind: input, shape index: {}]
  %s6 = inlined_call_operand.hbm [shape: bf16[256,128], index: 6, kind: input, shape index: {}]
  %s7 = inlined_call_operand.hbm [shape: f32[8,1024], index: 7, kind: input, shape index: {}]
  %s8 = inlined_call_operand.hbm [shape: bf16[512,1024], index: 8, kind: input, shape index: {}]
  %s9 = inlined_call_operand.hbm [shape: bf16[1024,1024], index: 9, kind: input, shape index: {}]
  %s10 = inlined_call_operand.hbm [shape: bf16[512,256], index: 10, kind: input, shape index: {}]
  %s11 = inlined_call_operand.vmem [shape: f32[2,128], index: 11, kind: output, shape index: {}]
  %s12 = sld [smem:[#allocation0]]
  $region78: #{pose_refine_net_v2.1} parent=0
    _
  %s14 = ssub.s32 1, %s12
  %s15 = scalar_select 0, %s14, %s12
  $region1: #{pose_refine_net_v2.1} parent=0
    #allocation6 [shape = 'u8[32768]{0}', space=vmem, size = 0x8000, scoped, tag = 'input window, operand 2, single buffered']
    #allocation7 [shape = 's32[1]{0}', space=sflag, size = 0x4, scoped, tag = 'scoped memory for pose_refine_net_v2.1']
    #allocation8 [shape = 'u8[65536]{0}', space=vmem, size = 0x10000, scoped, tag = 'input window, operand 3, single buffered']
    #allocation9 [shape = 's32[1]{0}', space=sflag, size = 0x4, scoped, tag = 'scoped memory for pose_refine_net_v2.1']
    #allocation10 [shape = 'u8[131072]{0}', space=vmem, size = 0x20000, scoped, tag = 'input window, operand 4, single buffered']
    #allocation11 [shape = 'u8[262144]{0}', space=vmem, size = 0x40000, scoped, tag = 'input window, operand 5, single buffered']
    #allocation12 [shape = 's32[1]{0}', space=sflag, size = 0x4, scoped, tag = 'scoped memory for pose_refine_net_v2.1']
    #allocation13 [shape = 'u8[65536]{0}', space=vmem, size = 0x10000, scoped, tag = 'input window, operand 6, single buffered']
    #allocation14 [shape = 'u8[32768]{0}', space=vmem, size = 0x8000, scoped, tag = 'input window, operand 7, single buffered']
    #allocation15 [shape = 's32[1]{0}', space=sflag, size = 0x4, scoped, tag = 'scoped memory for pose_refine_net_v2.1']
    %16 = vsyncpa [#allocation7], 0
    %17 = vsyncpa [#allocation9], 0
    %18 = vsyncpa [#allocation12], 0
    %19 = vsyncpa [#allocation15], 0
    // Predicated region
    $region2: #{pose_refine_net_v2.1} parent=1 // pred_check
      _
    $region3: #{pose_refine_net_v2.1} parent=1 // pred_check_branch
      %21 = sbr.rel (0) target = $region5
    $region4: #{pose_refine_net_v2.1} parent=1 // pred_region
      _
    $region5: #{pose_refine_net_v2.1} parent=1 // pred_fallthru
      _
    // Predicated region
    $region6: #{pose_refine_net_v2.1} parent=1 // pred_check
      _
    $region7: #{pose_refine_net_v2.1} parent=1 // pred_check_branch
      %23 = sbr.rel (0) target = $region9
    $region8: #{pose_refine_net_v2.1} parent=1 // pred_region
      _
    $region9: #{pose_refine_net_v2.1} parent=1 // pred_fallthru
      _
    // Predicated region
    $region10: #{pose_refine_net_v2.1} parent=1 // pred_check
      _
    $region11: #{pose_refine_net_v2.1} parent=1 // pred_check_branch
      %25 = sbr.rel (0) target = $region13
    $region12: #{pose_refine_net_v2.1} parent=1 // pred_region
      %s27 = ssub.s32 1024, 1024
      %28 = vsyncadd [#allocation7], %s27
      %s29 = sshll.u32 [#allocation6], 4
      %s30 = int_to_ptr.vmem [resolvable:$true] %s29
      %35 = dma.hbm_to_vmem [thread:$0]  %s2, 1024, %s30, [#allocation7], 64, 64, 4
    $region13: #{pose_refine_net_v2.1} parent=1 // pred_fallthru
      _
    // Predicated region
    $region14: #{pose_refine_net_v2.1} parent=1 // pred_check
      _
    $region15: #{pose_refine_net_v2.1} parent=1 // pred_check_branch
      %37 = sbr.rel (0) target = $region17
    $region16: #{pose_refine_net_v2.1} parent=1 // pred_region
      %s39 = ssub.s32 2048, 2048
      %40 = vsyncadd [#allocation9], %s39
      %s41 = sshll.u32 [#allocation8], 4
      %s42 = int_to_ptr.vmem [resolvable:$true] %s41
      %47 = dma.hbm_to_vmem [thread:$0]  %s3, 2048, %s42, [#allocation9], 128, 128, 8
    $region17: #{pose_refine_net_v2.1} parent=1 // pred_fallthru
      _
    // Predicated region
    $region18: #{pose_refine_net_v2.1} parent=1 // pred_check
      _
    $region19: #{pose_refine_net_v2.1} parent=1 // pred_check_branch
      %49 = sbr.rel (0) target = $region21
    $region20: #{pose_refine_net_v2.1} parent=1 // pred_region
      %s51 = ssub.s32 4096, 4096
      %52 = vsyncadd [#allocation9], %s51
      %s53 = sshll.u32 [#allocation10], 4
      %s54 = int_to_ptr.vmem [resolvable:$true] %s53
      %59 = dma.hbm_to_vmem [thread:$0]  %s4, 4096, %s54, [#allocation9], 256, 256, 16
    $region21: #{pose_refine_net_v2.1} parent=1 // pred_fallthru
      _
    // Predicated region
    $region22: #{pose_refine_net_v2.1} parent=1 // pred_check
      _
    $region23: #{pose_refine_net_v2.1} parent=1 // pred_check_branch
      %61 = sbr.rel (0) target = $region25
    $region24: #{pose_refine_net_v2.1} parent=1 // pred_region
      %s63 = ssub.s32 8192, 8192
      %64 = vsyncadd [#allocation12], %s63
      %s65 = sshll.u32 [#allocation11], 4
      %s66 = int_to_ptr.vmem [resolvable:$true] %s65
      %71 = dma.hbm_to_vmem [thread:$0]  %s5, 8192, %s66, [#allocation12], 256, 256, 16
    $region25: #{pose_refine_net_v2.1} parent=1 // pred_fallthru
      _
    // Predicated region
    $region26: #{pose_refine_net_v2.1} parent=1 // pred_check
      _
    $region27: #{pose_refine_net_v2.1} parent=1 // pred_check_branch
      %73 = sbr.rel (0) target = $region29
    $region28: #{pose_refine_net_v2.1} parent=1 // pred_region
      %s75 = ssub.s32 2048, 2048
      %76 = vsyncadd [#allocation12], %s75
      %s77 = sshll.u32 [#allocation13], 4
      %s78 = int_to_ptr.vmem [resolvable:$true] %s77
      %83 = dma.hbm_to_vmem [thread:$0]  %s6, 2048, %s78, [#allocation12], 64, 64, 4
    $region29: #{pose_refine_net_v2.1} parent=1 // pred_fallthru
      _
    // Predicated region
    $region30: #{pose_refine_net_v2.1} parent=1 // pred_check
      _
    $region31: #{pose_refine_net_v2.1} parent=1 // pred_check_branch
      %85 = sbr.rel (0) target = $region33
    $region32: #{pose_refine_net_v2.1} parent=1 // pred_region
      %s87 = ssub.s32 1024, 1024
      %88 = vsyncadd [#allocation15], %s87
      %s90 = sshll.u32 [#allocation14], 4
      %s91 = int_to_ptr.vmem [resolvable:$true] %s90
      %93 = dma.hbm_to_vmem [thread:$0]  %s7, 1024, %s91, [#allocation15]
    $region33: #{pose_refine_net_v2.1} parent=1 // pred_fallthru
      _
    // Predicated region
    $region34: #{pose_refine_net_v2.1} parent=1 // pred_check
      _
    $region35: #{pose_refine_net_v2.1} parent=1 // pred_check_branch
      %95 = sbr.rel (0) target = $region37
    $region36: #{pose_refine_net_v2.1} parent=1 // pred_region
      %96 = dma.done [#allocation7], 1024
    $region37: #{pose_refine_net_v2.1} parent=1 // pred_fallthru
      _
    // Predicated region
    $region38: #{pose_refine_net_v2.1} parent=1 // pred_check
      _
    $region39: #{pose_refine_net_v2.1} parent=1 // pred_check_branch
      %98 = sbr.rel (0) target = $region41
    $region40: #{pose_refine_net_v2.1} parent=1 // pred_region
      %99 = dma.done [#allocation9], 2048
    $region41: #{pose_refine_net_v2.1} parent=1 // pred_fallthru
      _
    // Predicated region
    $region42: #{pose_refine_net_v2.1} parent=1 // pred_check
      _
    $region43: #{pose_refine_net_v2.1} parent=1 // pred_check_branch
      %101 = sbr.rel (0) target = $region45
    $region44: #{pose_refine_net_v2.1} parent=1 // pred_region
      %102 = dma.done [#allocation9], 4096
    $region45: #{pose_refine_net_v2.1} parent=1 // pred_fallthru
      _
    // Predicated region
    $region46: #{pose_refine_net_v2.1} parent=1 // pred_check
      _
    $region47: #{pose_refine_net_v2.1} parent=1 // pred_check_branch
      %104 = sbr.rel (0) target = $region49
    $region48: #{pose_refine_net_v2.1} parent=1 // pred_region
      %105 = dma.done [#allocation12], 8192
    $region49: #{pose_refine_net_v2.1} parent=1 // pred_fallthru
      _
    // Predicated region
    $region50: #{pose_refine_net_v2.1} parent=1 // pred_check
      _
    $region51: #{pose_refine_net_v2.1} parent=1 // pred_check_branch
      %107 = sbr.rel (0) target = $region53
    $region52: #{pose_refine_net_v2.1} parent=1 // pred_region
      %108 = dma.done [#allocation12], 2048
    $region53: #{pose_refine_net_v2.1} parent=1 // pred_fallthru
      _
    // Predicated region
    $region54: #{pose_refine_net_v2.1} parent=1 // pred_check
      _
    $region55: #{pose_refine_net_v2.1} parent=1 // pred_check_branch
      %110 = sbr.rel (0) target = $region57
    $region56: #{pose_refine_net_v2.1} parent=1 // pred_region
      %111 = dma.done [#allocation15], 1024
    $region57: #{pose_refine_net_v2.1} parent=1 // pred_fallthru
      _
    // Predicated region
    $region58: #{pose_refine_net_v2.1} parent=1 // pred_check
      _
    $region59: #{pose_refine_net_v2.1} parent=1 // pred_check_branch
      %114 = sbr.rel target = $region61
    $region60: #{pose_refine_net_v2.1} parent=1 // pred_region
      %115 = sst [smem:[#allocation18]] [#allocation17]
      %116 = sst [smem:[#allocation19]] [#allocation16]
    $region61: #{pose_refine_net_v2.1} parent=1 // pred_fallthru
      _
    %118 = shalt.err (0)
    %s120 = sshll.u32 [#allocation2], 4
    %s121 = int_to_ptr.vmem [resolvable:$true] %s120
    %123 = dma.hbm_to_vmem [thread:$0]  %s8, 32768, %s121, [#allocation5]
    %s124 = scalar_lea.sflag [#allocation5], 1
    // Predicated region
    $region62: #{pose_refine_net_v2.1} parent=1 // pred_check
      _
    $region63: #{pose_refine_net_v2.1} parent=1 // pred_check_branch
      %126 = sbr.rel target = $region65
    $region64: #{pose_refine_net_v2.1} parent=1 // pred_region
      %127 = sst [smem:[#allocation18]] [#allocation21]
      %128 = sst [smem:[#allocation19]] [#allocation20]
    $region65: #{pose_refine_net_v2.1} parent=1 // pred_fallthru
      _
    %130 = shalt.err (0)
    %s132 = sshll.u32 [#allocation3], 4
    %s133 = int_to_ptr.vmem [resolvable:$true] %s132
    %135 = dma.hbm_to_vmem [thread:$0]  %s9, 65536, %s133, %s124
    %s136 = scalar_lea.sflag [#allocation5], 2
    // Predicated region
    $region66: #{pose_refine_net_v2.1} parent=1 // pred_check
      _
    $region67: #{pose_refine_net_v2.1} parent=1 // pred_check_branch
      %138 = sbr.rel target = $region69
    $region68: #{pose_refine_net_v2.1} parent=1 // pred_region
      %139 = sst [smem:[#allocation18]] [#allocation23]
      %140 = sst [smem:[#allocation19]] [#allocation22]
    $region69: #{pose_refine_net_v2.1} parent=1 // pred_fallthru
      _
    %142 = shalt.err (0)
    %s144 = sshll.u32 [#allocation4], 4
    %s145 = int_to_ptr.vmem [resolvable:$true] %s144
    %147 = dma.hbm_to_vmem [thread:$0]  %s10, 8192, %s145, %s136
    %v148 = vld [vmem:[%s0] sm:$0xf]
    %v149 = vld [vmem:[%s0 + $0x4] sm:$0xf]
    %v150 = vld [vmem:[%s0 + $0x8] sm:$0xf]
    %v151 = vld [vmem:[%s0 + $0xc] sm:$0xf]
    %v152 = vld [vmem:[%s0 + $0x10] sm:$0xf]
    %v153 = vld [vmem:[%s0 + $0x14] sm:$0xf]
    %v154 = vld [vmem:[%s0 + $0x18] sm:$0xf]
    %v155 = vld [vmem:[%s0 + $0x1c] sm:$0xf]
    %v156 = vld [vmem:[%s0 + $0x20] sm:$0xf]
    %v157 = vld [vmem:[%s0 + $0x24] sm:$0xf]
    %v158 = vld [vmem:[%s0 + $0x28] sm:$0xf]
    %v159 = vld [vmem:[%s0 + $0x2c] sm:$0xf]
    %v160 = vld [vmem:[%s0 + $0x30] sm:$0xf]
    %v161 = vld [vmem:[%s0 + $0x34] sm:$0xf]
    %v162 = vld [vmem:[%s0 + $0x38] sm:$0xf]
    %v163 = vld [vmem:[%s0 + $0x3c] sm:$0xf]
    %v164 = vld [vmem:[%s0 + $0x40] sm:$0xf]
    %v165 = vld [vmem:[%s0 + $0x44] sm:$0xf]
    %v166 = vld [vmem:[%s0 + $0x48] sm:$0xf]
    %v167 = vld [vmem:[%s0 + $0x4c] sm:$0xf]
    %v168 = vld [vmem:[%s0 + $0x50] sm:$0xf]
    %v169 = vld [vmem:[%s0 + $0x54] sm:$0xf]
    %v170 = vld [vmem:[%s0 + $0x58] sm:$0xf]
    %v171 = vld [vmem:[%s0 + $0x5c] sm:$0xf]
    %v172 = vld [vmem:[%s0 + $0x60] sm:$0xf]
    %v173 = vld [vmem:[%s0 + $0x64] sm:$0xf]
    %v174 = vld [vmem:[%s0 + $0x68] sm:$0xf]
    %v175 = vld [vmem:[%s0 + $0x6c] sm:$0xf]
    %v176 = vld [vmem:[%s0 + $0x70] sm:$0xf]
    %v177 = vld [vmem:[%s0 + $0x74] sm:$0xf]
    %v178 = vld [vmem:[%s0 + $0x78] sm:$0xf]
    %v179 = vld [vmem:[%s0 + $0x7c] sm:$0xf]
    %v180 = vld [vmem:[#allocation6] sm:$0xf]
    %v181 = vld [vmem:[#allocation6 + $0x4] sm:$0xf]
    %v182 = vld [vmem:[#allocation6 + $0x8] sm:$0xf]
    %v183 = vld [vmem:[#allocation6 + $0xc] sm:$0xf]
    %v184 = vld [vmem:[#allocation6 + $0x10] sm:$0xf]
    %v185 = vld [vmem:[#allocation6 + $0x14] sm:$0xf]
    %v186 = vld [vmem:[#allocation6 + $0x18] sm:$0xf]
    %v187 = vld [vmem:[#allocation6 + $0x1c] sm:$0xf]
    %v188 = vld [vmem:[#allocation6 + $0x20] sm:$0xf]
    %v189 = vld [vmem:[#allocation6 + $0x24] sm:$0xf]
    %v190 = vld [vmem:[#allocation6 + $0x28] sm:$0xf]
    %v191 = vld [vmem:[#allocation6 + $0x2c] sm:$0xf]
    %v192 = vld [vmem:[#allocation6 + $0x30] sm:$0xf]
    %v193 = vld [vmem:[#allocation6 + $0x34] sm:$0xf]
    %v194 = vld [vmem:[#allocation6 + $0x38] sm:$0xf]
    %v195 = vld [vmem:[#allocation6 + $0x3c] sm:$0xf]
    %v228 = vunpack.c.l.b16 %v148
    %v229 = vunpack.c.l.b16 %v149
    %v230 = vunpack.c.l.b16 %v150
    %v231 = vunpack.c.l.b16 %v151
    %v232 = vunpack.c.l.b16 %v152
    %v233 = vunpack.c.l.b16 %v153
    %v234 = vunpack.c.l.b16 %v154
    %v235 = vunpack.c.l.b16 %v155
    %v236 = vunpack.c.l.b16 %v156
    %v237 = vunpack.c.l.b16 %v157
    %v238 = vunpack.c.l.b16 %v158
    %v239 = vunpack.c.l.b16 %v159
    %v240 = vunpack.c.l.b16 %v160
    %v241 = vunpack.c.l.b16 %v161
    %v242 = vunpack.c.l.b16 %v162
    %v243 = vunpack.c.l.b16 %v163
    %v244 = vunpack.c.l.b16 %v164
    %v245 = vunpack.c.l.b16 %v165
    %v246 = vunpack.c.l.b16 %v166
    %v247 = vunpack.c.l.b16 %v167
    %v248 = vunpack.c.l.b16 %v168
    %v249 = vunpack.c.l.b16 %v169
    %v250 = vunpack.c.l.b16 %v170
    %v251 = vunpack.c.l.b16 %v171
    %v252 = vunpack.c.l.b16 %v172
    %v253 = vunpack.c.l.b16 %v173
    %v254 = vunpack.c.l.b16 %v174
    %v255 = vunpack.c.l.b16 %v175
    %v256 = vunpack.c.l.b16 %v176
    %v257 = vunpack.c.l.b16 %v177
    %v258 = vunpack.c.l.b16 %v178
    %v259 = vunpack.c.l.b16 %v179
    %v260 = vpack.c.b16 %v229, %v228
    %v261 = vpack.c.b16 %v231, %v230
    %v262 = vpack.c.b16 %v233, %v232
    %v263 = vpack.c.b16 %v235, %v234
    %v264 = vpack.c.b16 %v237, %v236
    %v265 = vpack.c.b16 %v239, %v238
    %v266 = vpack.c.b16 %v241, %v240
    %v267 = vpack.c.b16 %v243, %v242
    %v268 = vpack.c.b16 %v245, %v244
    %v269 = vpack.c.b16 %v247, %v246
    %v270 = vpack.c.b16 %v249, %v248
    %v271 = vpack.c.b16 %v251, %v250
    %v272 = vpack.c.b16 %v253, %v252
    %v273 = vpack.c.b16 %v255, %v254
    %v274 = vpack.c.b16 %v257, %v256
    %v275 = vpack.c.b16 %v259, %v258
    %v308 = vunpack.c.l.b16 %v180
    %v309 = vunpack.c.l.b16 %v181
    %v310 = vunpack.c.l.b16 %v182
    %v311 = vunpack.c.l.b16 %v183
    %v312 = vunpack.c.l.b16 %v184
    %v313 = vunpack.c.l.b16 %v185
    %v314 = vunpack.c.l.b16 %v186
    %v315 = vunpack.c.l.b16 %v187
    %v316 = vunpack.c.l.b16 %v188
    %v317 = vunpack.c.l.b16 %v189
    %v318 = vunpack.c.l.b16 %v190
    %v319 = vunpack.c.l.b16 %v191
    %v320 = vunpack.c.l.b16 %v192
    %v321 = vunpack.c.l.b16 %v193
    %v322 = vunpack.c.l.b16 %v194
    %v323 = vunpack.c.l.b16 %v195
    %v324 = vpack.c.b16 %v309, %v308
    %v325 = vpack.c.b16 %v311, %v310
    %v326 = vpack.c.b16 %v313, %v312
    %v327 = vpack.c.b16 %v315, %v314
    %v328 = vpack.c.b16 %v317, %v316
    %v329 = vpack.c.b16 %v319, %v318
    %v330 = vpack.c.b16 %v321, %v320
    %v331 = vpack.c.b16 %v323, %v322
    %340 = vmatprep.subr.bf16.mxu0 0
    %341 = vmatpush1.bf16.msra.mxu0 %v331
    %342 = vmatprep.subr.bf16.mxu0 0
    %343 = vmatpush1.bf16.msra.mxu0 %v330
    %344 = vmatprep.subr.bf16.mxu0 0
    %345 = vmatpush1.bf16.msra.mxu0 %v329
    %346 = vmatprep.subr.bf16.mxu0 0
    %347 = vmatpush1.bf16.msra.mxu0 %v328
    %348 = vmatprep.subr.bf16.mxu0 0
    %349 = vmatpush1.bf16.msra.mxu0 %v327
    %350 = vmatprep.subr.bf16.mxu0 0
    %351 = vmatpush1.bf16.msra.mxu0 %v326
    %352 = vmatprep.subr.bf16.mxu0 0
    %353 = vmatpush1.bf16.msra.mxu0 %v325
    %354 = vmatprep.subr.bf16.mxu0 0
    %355 = vmatpush1.bf16.msra.mxu0 %v324
    %356 = vmatprep.subr.bf16.mxu0 0
    %357 = vmatpush2.bf16.msra.mxu0 0
    %358 = vmatprep.subr.bf16.mxu0 0
    %359 = vmatpush2.bf16.msra.mxu0 0
    %360 = vmatprep.subr.bf16.mxu0 0
    %361 = vmatpush2.bf16.msra.mxu0 0
    %362 = vmatprep.subr.bf16.mxu0 0
    %363 = vmatpush2.bf16.msra.mxu0 0
    %364 = vmatprep.subr.bf16.mxu0 0
    %365 = vmatpush2.bf16.msra.mxu0 0
    %366 = vmatprep.subr.bf16.mxu0 0
    %367 = vmatpush2.bf16.msra.mxu0 0
    %368 = vmatprep.subr.bf16.mxu0 0
    %369 = vmatpush2.bf16.msra.mxu0 0
    %370 = vmatprep.subr.bf16.mxu0 0
    %371 = vmatpush2.bf16.msra.mxu0 0
    %372 = vmatprep.mubr.bf16.mxu0 0
    %373 = vmatmul.mubr.bf16.gmra.mxu0 %v260
    %v374 = vpop.f32.mrf.mxu0
    %v375 = vadd.f32 0.0, %v374
    %v376 = vpop.f32.mrf.mxu0
    %v377 = vpop.f32.mrf.mxu0
    %v378 = vadd.f32 0.0, %v377
    %v379 = vpop.f32.mrf.mxu0
    %380 = vmatprep.mubr.bf16.mxu0 0
    %381 = vmatmul.mubr.bf16.gmra.mxu0 %v261
    %v382 = vpop.f32.mrf.mxu0
    %v383 = vadd.f32 0.0, %v382
    %v384 = vpop.f32.mrf.mxu0
    %v385 = vpop.f32.mrf.mxu0
    %v386 = vadd.f32 0.0, %v385
    %v387 = vpop.f32.mrf.mxu0
    %388 = vmatprep.mubr.bf16.mxu0 0
    %389 = vmatmul.mubr.bf16.gmra.mxu0 %v262
    %v390 = vpop.f32.mrf.mxu0
    %v391 = vadd.f32 0.0, %v390
    %v392 = vpop.f32.mrf.mxu0
    %v393 = vpop.f32.mrf.mxu0
    %v394 = vadd.f32 0.0, %v393
    %v395 = vpop.f32.mrf.mxu0
    %396 = vmatprep.mubr.bf16.mxu0 0
    %397 = vmatmul.mubr.bf16.gmra.mxu0 %v263
    %v398 = vpop.f32.mrf.mxu0
    %v399 = vadd.f32 0.0, %v398
    %v400 = vpop.f32.mrf.mxu0
    %v401 = vpop.f32.mrf.mxu0
    %v402 = vadd.f32 0.0, %v401
    %v403 = vpop.f32.mrf.mxu0
    %404 = vmatprep.mubr.bf16.mxu0 0
    %405 = vmatmul.mubr.bf16.gmra.mxu0 %v264
    %v406 = vpop.f32.mrf.mxu0
    %v407 = vadd.f32 0.0, %v406
    %v408 = vpop.f32.mrf.mxu0
    %v409 = vpop.f32.mrf.mxu0
    %v410 = vadd.f32 0.0, %v409
    %v411 = vpop.f32.mrf.mxu0
    %412 = vmatprep.mubr.bf16.mxu0 0
    %413 = vmatmul.mubr.bf16.gmra.mxu0 %v265
    %v414 = vpop.f32.mrf.mxu0
    %v415 = vadd.f32 0.0, %v414
    %v416 = vpop.f32.mrf.mxu0
    %v417 = vpop.f32.mrf.mxu0
    %v418 = vadd.f32 0.0, %v417
    %v419 = vpop.f32.mrf.mxu0
    %420 = vmatprep.mubr.bf16.mxu0 0
    %421 = vmatmul.mubr.bf16.gmra.mxu0 %v266
    %v422 = vpop.f32.mrf.mxu0
    %v423 = vadd.f32 0.0, %v422
    %v424 = vpop.f32.mrf.mxu0
    %v425 = vpop.f32.mrf.mxu0
    %v426 = vadd.f32 0.0, %v425
    %v427 = vpop.f32.mrf.mxu0
    %428 = vmatprep.mubr.bf16.mxu0 0
    %429 = vmatmul.mubr.bf16.gmra.mxu0 %v267
    %v430 = vpop.f32.mrf.mxu0
    %v431 = vadd.f32 0.0, %v430
    %v432 = vpop.f32.mrf.mxu0
    %v433 = vpop.f32.mrf.mxu0
    %v434 = vadd.f32 0.0, %v433
    %v435 = vpop.f32.mrf.mxu0
    %436 = vmatprep.mubr.bf16.mxu0 0
    %437 = vmatmul.mubr.bf16.gmra.mxu0 %v268
    %v438 = vpop.f32.mrf.mxu0
    %v439 = vadd.f32 0.0, %v438
    %v440 = vpop.f32.mrf.mxu0
    %v441 = vpop.f32.mrf.mxu0
    %v442 = vadd.f32 0.0, %v441
    %v443 = vpop.f32.mrf.mxu0
    %444 = vmatprep.mubr.bf16.mxu0 0
    %445 = vmatmul.mubr.bf16.gmra.mxu0 %v269
    %v446 = vpop.f32.mrf.mxu0
    %v447 = vadd.f32 0.0, %v446
    %v448 = vpop.f32.mrf.mxu0
    %v449 = vpop.f32.mrf.mxu0
    %v450 = vadd.f32 0.0, %v449
    %v451 = vpop.f32.mrf.mxu0
    %452 = vmatprep.mubr.bf16.mxu0 0
    %453 = vmatmul.mubr.bf16.gmra.mxu0 %v270
    %v454 = vpop.f32.mrf.mxu0
    %v455 = vadd.f32 0.0, %v454
    %v456 = vpop.f32.mrf.mxu0
    %v457 = vpop.f32.mrf.mxu0
    %v458 = vadd.f32 0.0, %v457
    %v459 = vpop.f32.mrf.mxu0
    %460 = vmatprep.mubr.bf16.mxu0 0
    %461 = vmatmul.mubr.bf16.gmra.mxu0 %v271
    %v462 = vpop.f32.mrf.mxu0
    %v463 = vadd.f32 0.0, %v462
    %v464 = vpop.f32.mrf.mxu0
    %v465 = vpop.f32.mrf.mxu0
    %v466 = vadd.f32 0.0, %v465
    %v467 = vpop.f32.mrf.mxu0
    %468 = vmatprep.mubr.bf16.mxu0 0
    %469 = vmatmul.mubr.bf16.gmra.mxu0 %v272
    %v470 = vpop.f32.mrf.mxu0
    %v471 = vadd.f32 0.0, %v470
    %v472 = vpop.f32.mrf.mxu0
    %v473 = vpop.f32.mrf.mxu0
    %v474 = vadd.f32 0.0, %v473
    %v475 = vpop.f32.mrf.mxu0
    %476 = vmatprep.mubr.bf16.mxu0 0
    %477 = vmatmul.mubr.bf16.gmra.mxu0 %v273
    %v478 = vpop.f32.mrf.mxu0
    %v479 = vadd.f32 0.0, %v478
    %v480 = vpop.f32.mrf.mxu0
    %v481 = vpop.f32.mrf.mxu0
    %v482 = vadd.f32 0.0, %v481
    %v483 = vpop.f32.mrf.mxu0
    %484 = vmatprep.mubr.bf16.mxu0 0
    %485 = vmatmul.mubr.bf16.gmra.mxu0 %v274
    %v486 = vpop.f32.mrf.mxu0
    %v487 = vadd.f32 0.0, %v486
    %v488 = vpop.f32.mrf.mxu0
    %v489 = vpop.f32.mrf.mxu0
    %v490 = vadd.f32 0.0, %v489
    %v491 = vpop.f32.mrf.mxu0
    %492 = vmatprep.mubr.bf16.mxu0 0
    %493 = vmatmul.mubr.bf16.gmra.mxu0 %v275
    %v494 = vpop.f32.mrf.mxu0
    %v495 = vadd.f32 0.0, %v494
    %v496 = vpop.f32.mrf.mxu0
    %v497 = vpop.f32.mrf.mxu0
    %v498 = vadd.f32 0.0, %v497
    %v499 = vpop.f32.mrf.mxu0
    %500 = vdwg.mxu0
    %v501 = vmax.f32 %v375, 0.0
    %v502 = vmax.f32 %v378, 0.0
    %v503 = vmax.f32 %v383, 0.0
    %v504 = vmax.f32 %v386, 0.0
    %v505 = vmax.f32 %v391, 0.0
    %v506 = vmax.f32 %v394, 0.0
    %v507 = vmax.f32 %v399, 0.0
    %v508 = vmax.f32 %v402, 0.0
    %v509 = vmax.f32 %v407, 0.0
    %v510 = vmax.f32 %v410, 0.0
    %v511 = vmax.f32 %v415, 0.0
    %v512 = vmax.f32 %v418, 0.0
    %v513 = vmax.f32 %v423, 0.0
    %v514 = vmax.f32 %v426, 0.0
    %v515 = vmax.f32 %v431, 0.0
    %v516 = vmax.f32 %v434, 0.0
    %v517 = vmax.f32 %v439, 0.0
    %v518 = vmax.f32 %v442, 0.0
    %v519 = vmax.f32 %v447, 0.0
    %v520 = vmax.f32 %v450, 0.0
    %v521 = vmax.f32 %v455, 0.0
    %v522 = vmax.f32 %v458, 0.0
    %v523 = vmax.f32 %v463, 0.0
    %v524 = vmax.f32 %v466, 0.0
    %v525 = vmax.f32 %v471, 0.0
    %v526 = vmax.f32 %v474, 0.0
    %v527 = vmax.f32 %v479, 0.0
    %v528 = vmax.f32 %v482, 0.0
    %v529 = vmax.f32 %v487, 0.0
    %v530 = vmax.f32 %v490, 0.0
    %v531 = vmax.f32 %v495, 0.0
    %v532 = vmax.f32 %v498, 0.0
    %v533 = vpack.c.bf16 %v502, %v501
    %v534 = vpack.c.bf16 %v504, %v503
    %v535 = vpack.c.bf16 %v506, %v505
    %v536 = vpack.c.bf16 %v508, %v507
    %v537 = vpack.c.bf16 %v510, %v509
    %v538 = vpack.c.bf16 %v512, %v511
    %v539 = vpack.c.bf16 %v514, %v513
    %v540 = vpack.c.bf16 %v516, %v515
    %v541 = vpack.c.bf16 %v518, %v517
    %v542 = vpack.c.bf16 %v520, %v519
    %v543 = vpack.c.bf16 %v522, %v521
    %v544 = vpack.c.bf16 %v524, %v523
    %v545 = vpack.c.bf16 %v526, %v525
    %v546 = vpack.c.bf16 %v528, %v527
    %v547 = vpack.c.bf16 %v530, %v529
    %v548 = vpack.c.bf16 %v532, %v531
    %v549 = vld [vmem:[#allocation8] sm:$0xff]
    %v550 = vld [vmem:[#allocation8 + $0x8] sm:$0xff]
    %v551 = vld [vmem:[#allocation8 + $0x10] sm:$0xff]
    %v552 = vld [vmem:[#allocation8 + $0x18] sm:$0xff]
    %v553 = vld [vmem:[#allocation8 + $0x20] sm:$0xff]
    %v554 = vld [vmem:[#allocation8 + $0x28] sm:$0xff]
    %v555 = vld [vmem:[#allocation8 + $0x30] sm:$0xff]
    %v556 = vld [vmem:[#allocation8 + $0x38] sm:$0xff]
    %v557 = vld [vmem:[#allocation8 + $0x40] sm:$0xff]
    %v558 = vld [vmem:[#allocation8 + $0x48] sm:$0xff]
    %v559 = vld [vmem:[#allocation8 + $0x50] sm:$0xff]
    %v560 = vld [vmem:[#allocation8 + $0x58] sm:$0xff]
    %v561 = vld [vmem:[#allocation8 + $0x60] sm:$0xff]
    %v562 = vld [vmem:[#allocation8 + $0x68] sm:$0xff]
    %v563 = vld [vmem:[#allocation8 + $0x70] sm:$0xff]
    %v564 = vld [vmem:[#allocation8 + $0x78] sm:$0xff]
    %v565 = vld [vmem:[#allocation14] ss:$8 sm:$0x3]
    %v567 = vlaneseq
    %v568 = vshrl.u32 %v567, 7
    %v569 = vsub.s32 0, %v568
    %v570 = vrot.slane %v565, %v569
    %v571 = vlaneseq
    %v572 = vshrl.u32 %v571, 7
    %v573 = vsub.s32 1, %v572
    %v574 = vrot.slane %v565, %v573
    %v593 = vunpack.c.l.b16 %v549
    %v594 = vunpack.c.h.b16 %v549
    %v595 = vunpack.c.l.b16 %v550
    %v596 = vunpack.c.h.b16 %v550
    %v597 = vunpack.c.l.b16 %v551
    %v598 = vunpack.c.h.b16 %v551
    %v599 = vunpack.c.l.b16 %v552
    %v600 = vunpack.c.h.b16 %v552
    %v601 = vunpack.c.l.b16 %v553
    %v602 = vunpack.c.h.b16 %v553
    %v603 = vunpack.c.l.b16 %v554
    %v604 = vunpack.c.h.b16 %v554
    %v605 = vunpack.c.l.b16 %v555
    %v606 = vunpack.c.h.b16 %v555
    %v607 = vunpack.c.l.b16 %v556
    %v608 = vunpack.c.h.b16 %v556
    %v609 = vunpack.c.l.b16 %v557
    %v610 = vunpack.c.h.b16 %v557
    %v611 = vunpack.c.l.b16 %v558
    %v612 = vunpack.c.h.b16 %v558
    %v613 = vunpack.c.l.b16 %v559
    %v614 = vunpack.c.h.b16 %v559
    %v615 = vunpack.c.l.b16 %v560
    %v616 = vunpack.c.h.b16 %v560
    %v617 = vunpack.c.l.b16 %v561
    %v618 = vunpack.c.h.b16 %v561
    %v619 = vunpack.c.l.b16 %v562
    %v620 = vunpack.c.h.b16 %v562
    %v621 = vunpack.c.l.b16 %v563
    %v622 = vunpack.c.h.b16 %v563
    %v623 = vunpack.c.l.b16 %v564
    %v624 = vunpack.c.h.b16 %v564
    %v625 = vpack.c.b16 %v595, %v593
    %v626 = vpack.c.b16 %v596, %v594
    %v627 = vpack.c.b16 %v599, %v597
    %v628 = vpack.c.b16 %v600, %v598
    %v629 = vpack.c.b16 %v603, %v601
    %v630 = vpack.c.b16 %v604, %v602
    %v631 = vpack.c.b16 %v607, %v605
    %v632 = vpack.c.b16 %v608, %v606
    %v633 = vpack.c.b16 %v611, %v609
    %v634 = vpack.c.b16 %v612, %v610
    %v635 = vpack.c.b16 %v615, %v613
    %v636 = vpack.c.b16 %v616, %v614
    %v637 = vpack.c.b16 %v619, %v617
    %v638 = vpack.c.b16 %v620, %v618
    %v639 = vpack.c.b16 %v623, %v621
    %v640 = vpack.c.b16 %v624, %v622
    %657 = vmatprep.subr.bf16.mxu0 %v640
    %658 = vmatpush1.bf16.msra.mxu0 %v639
    %659 = vmatprep.subr.bf16.mxu0 %v638
    %660 = vmatpush1.bf16.msra.mxu0 %v637
    %661 = vmatprep.subr.bf16.mxu0 %v636
    %662 = vmatpush1.bf16.msra.mxu0 %v635
    %663 = vmatprep.subr.bf16.mxu0 %v634
    %664 = vmatpush1.bf16.msra.mxu0 %v633
    %665 = vmatprep.subr.bf16.mxu0 %v632
    %666 = vmatpush1.bf16.msra.mxu0 %v631
    %667 = vmatprep.subr.bf16.mxu0 %v630
    %668 = vmatpush1.bf16.msra.mxu0 %v629
    %669 = vmatprep.subr.bf16.mxu0 %v628
    %670 = vmatpush1.bf16.msra.mxu0 %v627
    %671 = vmatprep.subr.bf16.mxu0 %v626
    %672 = vmatpush1.bf16.msra.mxu0 %v625
    %673 = vmatprep.subr.bf16.mxu0 0
    %674 = vmatpush2.bf16.msra.mxu0 0
    %675 = vmatprep.subr.bf16.mxu0 0
    %676 = vmatpush2.bf16.msra.mxu0 0
    %677 = vmatprep.subr.bf16.mxu0 0
    %678 = vmatpush2.bf16.msra.mxu0 0
    %679 = vmatprep.subr.bf16.mxu0 0
    %680 = vmatpush2.bf16.msra.mxu0 0
    %681 = vmatprep.subr.bf16.mxu0 0
    %682 = vmatpush2.bf16.msra.mxu0 0
    %683 = vmatprep.subr.bf16.mxu0 0
    %684 = vmatpush2.bf16.msra.mxu0 0
    %685 = vmatprep.subr.bf16.mxu0 0
    %686 = vmatpush2.bf16.msra.mxu0 0
    %687 = vmatprep.subr.bf16.mxu0 0
    %688 = vmatpush2.bf16.msra.mxu0 0
    %689 = vmatprep.mubr.bf16.mxu0 0
    %690 = vmatmul.mubr.bf16.gmra.mxu0 %v533
    %v691 = vpop.f32.mrf.mxu0
    %v692 = vadd.f32 %v570, %v691
    %v693 = vpop.f32.mrf.mxu0
    %v694 = vadd.f32 %v574, %v693
    %v695 = vpop.f32.mrf.mxu0
    %v696 = vadd.f32 %v570, %v695
    %v697 = vpop.f32.mrf.mxu0
    %v698 = vadd.f32 %v574, %v697
    %699 = vmatprep.mubr.bf16.mxu0 0
    %700 = vmatmul.mubr.bf16.gmra.mxu0 %v534
    %v701 = vpop.f32.mrf.mxu0
    %v702 = vadd.f32 %v570, %v701
    %v703 = vpop.f32.mrf.mxu0
    %v704 = vadd.f32 %v574, %v703
    %v705 = vpop.f32.mrf.mxu0
    %v706 = vadd.f32 %v570, %v705
    %v707 = vpop.f32.mrf.mxu0
    %v708 = vadd.f32 %v574, %v707
    %709 = vmatprep.mubr.bf16.mxu0 0
    %710 = vmatmul.mubr.bf16.gmra.mxu0 %v535
    %v711 = vpop.f32.mrf.mxu0
    %v712 = vadd.f32 %v570, %v711
    %v713 = vpop.f32.mrf.mxu0
    %v714 = vadd.f32 %v574, %v713
    %v715 = vpop.f32.mrf.mxu0
    %v716 = vadd.f32 %v570, %v715
    %v717 = vpop.f32.mrf.mxu0
    %v718 = vadd.f32 %v574, %v717
    %719 = vmatprep.mubr.bf16.mxu0 0
    %720 = vmatmul.mubr.bf16.gmra.mxu0 %v536
    %v721 = vpop.f32.mrf.mxu0
    %v722 = vadd.f32 %v570, %v721
    %v723 = vpop.f32.mrf.mxu0
    %v724 = vadd.f32 %v574, %v723
    %v725 = vpop.f32.mrf.mxu0
    %v726 = vadd.f32 %v570, %v725
    %v727 = vpop.f32.mrf.mxu0
    %v728 = vadd.f32 %v574, %v727
    %729 = vmatprep.mubr.bf16.mxu0 0
    %730 = vmatmul.mubr.bf16.gmra.mxu0 %v537
    %v731 = vpop.f32.mrf.mxu0
    %v732 = vadd.f32 %v570, %v731
    %v733 = vpop.f32.mrf.mxu0
    %v734 = vadd.f32 %v574, %v733
    %v735 = vpop.f32.mrf.mxu0
    %v736 = vadd.f32 %v570, %v735
    %v737 = vpop.f32.mrf.mxu0
    %v738 = vadd.f32 %v574, %v737
    %739 = vmatprep.mubr.bf16.mxu0 0
    %740 = vmatmul.mubr.bf16.gmra.mxu0 %v538
    %v741 = vpop.f32.mrf.mxu0
    %v742 = vadd.f32 %v570, %v741
    %v743 = vpop.f32.mrf.mxu0
    %v744 = vadd.f32 %v574, %v743
    %v745 = vpop.f32.mrf.mxu0
    %v746 = vadd.f32 %v570, %v745
    %v747 = vpop.f32.mrf.mxu0
    %v748 = vadd.f32 %v574, %v747
    %749 = vmatprep.mubr.bf16.mxu0 0
    %750 = vmatmul.mubr.bf16.gmra.mxu0 %v539
    %v751 = vpop.f32.mrf.mxu0
    %v752 = vadd.f32 %v570, %v751
    %v753 = vpop.f32.mrf.mxu0
    %v754 = vadd.f32 %v574, %v753
    %v755 = vpop.f32.mrf.mxu0
    %v756 = vadd.f32 %v570, %v755
    %v757 = vpop.f32.mrf.mxu0
    %v758 = vadd.f32 %v574, %v757
    %759 = vmatprep.mubr.bf16.mxu0 0
    %760 = vmatmul.mubr.bf16.gmra.mxu0 %v540
    %v761 = vpop.f32.mrf.mxu0
    %v762 = vadd.f32 %v570, %v761
    %v763 = vpop.f32.mrf.mxu0
    %v764 = vadd.f32 %v574, %v763
    %v765 = vpop.f32.mrf.mxu0
    %v766 = vadd.f32 %v570, %v765
    %v767 = vpop.f32.mrf.mxu0
    %v768 = vadd.f32 %v574, %v767
    %769 = vmatprep.mubr.bf16.mxu0 0
    %770 = vmatmul.mubr.bf16.gmra.mxu0 %v541
    %v771 = vpop.f32.mrf.mxu0
    %v772 = vadd.f32 %v570, %v771
    %v773 = vpop.f32.mrf.mxu0
    %v774 = vadd.f32 %v574, %v773
    %v775 = vpop.f32.mrf.mxu0
    %v776 = vadd.f32 %v570, %v775
    %v777 = vpop.f32.mrf.mxu0
    %v778 = vadd.f32 %v574, %v777
    %779 = vmatprep.mubr.bf16.mxu0 0
    %780 = vmatmul.mubr.bf16.gmra.mxu0 %v542
    %v781 = vpop.f32.mrf.mxu0
    %v782 = vadd.f32 %v570, %v781
    %v783 = vpop.f32.mrf.mxu0
    %v784 = vadd.f32 %v574, %v783
    %v785 = vpop.f32.mrf.mxu0
    %v786 = vadd.f32 %v570, %v785
    %v787 = vpop.f32.mrf.mxu0
    %v788 = vadd.f32 %v574, %v787
    %789 = vmatprep.mubr.bf16.mxu0 0
    %790 = vmatmul.mubr.bf16.gmra.mxu0 %v543
    %v791 = vpop.f32.mrf.mxu0
    %v792 = vadd.f32 %v570, %v791
    %v793 = vpop.f32.mrf.mxu0
    %v794 = vadd.f32 %v574, %v793
    %v795 = vpop.f32.mrf.mxu0
    %v796 = vadd.f32 %v570, %v795
    %v797 = vpop.f32.mrf.mxu0
    %v798 = vadd.f32 %v574, %v797
    %799 = vmatprep.mubr.bf16.mxu0 0
    %800 = vmatmul.mubr.bf16.gmra.mxu0 %v544
    %v801 = vpop.f32.mrf.mxu0
    %v802 = vadd.f32 %v570, %v801
    %v803 = vpop.f32.mrf.mxu0
    %v804 = vadd.f32 %v574, %v803
    %v805 = vpop.f32.mrf.mxu0
    %v806 = vadd.f32 %v570, %v805
    %v807 = vpop.f32.mrf.mxu0
    %v808 = vadd.f32 %v574, %v807
    %809 = vmatprep.mubr.bf16.mxu0 0
    %810 = vmatmul.mubr.bf16.gmra.mxu0 %v545
    %v811 = vpop.f32.mrf.mxu0
    %v812 = vadd.f32 %v570, %v811
    %v813 = vpop.f32.mrf.mxu0
    %v814 = vadd.f32 %v574, %v813
    %v815 = vpop.f32.mrf.mxu0
    %v816 = vadd.f32 %v570, %v815
    %v817 = vpop.f32.mrf.mxu0
    %v818 = vadd.f32 %v574, %v817
    %819 = vmatprep.mubr.bf16.mxu0 0
    %820 = vmatmul.mubr.bf16.gmra.mxu0 %v546
    %v821 = vpop.f32.mrf.mxu0
    %v822 = vadd.f32 %v570, %v821
    %v823 = vpop.f32.mrf.mxu0
    %v824 = vadd.f32 %v574, %v823
    %v825 = vpop.f32.mrf.mxu0
    %v826 = vadd.f32 %v570, %v825
    %v827 = vpop.f32.mrf.mxu0
    %v828 = vadd.f32 %v574, %v827
    %829 = vmatprep.mubr.bf16.mxu0 0
    %830 = vmatmul.mubr.bf16.gmra.mxu0 %v547
    %v831 = vpop.f32.mrf.mxu0
    %v832 = vadd.f32 %v570, %v831
    %v833 = vpop.f32.mrf.mxu0
    %v834 = vadd.f32 %v574, %v833
    %v835 = vpop.f32.mrf.mxu0
    %v836 = vadd.f32 %v570, %v835
    %v837 = vpop.f32.mrf.mxu0
    %v838 = vadd.f32 %v574, %v837
    %839 = vmatprep.mubr.bf16.mxu0 0
    %840 = vmatmul.mubr.bf16.gmra.mxu0 %v548
    %v841 = vpop.f32.mrf.mxu0
    %v842 = vadd.f32 %v570, %v841
    %v843 = vpop.f32.mrf.mxu0
    %v844 = vadd.f32 %v574, %v843
    %v845 = vpop.f32.mrf.mxu0
    %v846 = vadd.f32 %v570, %v845
    %v847 = vpop.f32.mrf.mxu0
    %v848 = vadd.f32 %v574, %v847
    %849 = vdwg.mxu0
    %v850 = vmax.f32 %v692, 0.0
    %v851 = vmax.f32 %v694, 0.0
    %v852 = vmax.f32 %v696, 0.0
    %v853 = vmax.f32 %v698, 0.0
    %v854 = vmax.f32 %v702, 0.0
    %v855 = vmax.f32 %v704, 0.0
    %v856 = vmax.f32 %v706, 0.0
    %v857 = vmax.f32 %v708, 0.0
    %v858 = vmax.f32 %v712, 0.0
    %v859 = vmax.f32 %v714, 0.0
    %v860 = vmax.f32 %v716, 0.0
    %v861 = vmax.f32 %v718, 0.0
    %v862 = vmax.f32 %v722, 0.0
    %v863 = vmax.f32 %v724, 0.0
    %v864 = vmax.f32 %v726, 0.0
    %v865 = vmax.f32 %v728, 0.0
    %v866 = vmax.f32 %v732, 0.0
    %v867 = vmax.f32 %v734, 0.0
    %v868 = vmax.f32 %v736, 0.0
    %v869 = vmax.f32 %v738, 0.0
    %v870 = vmax.f32 %v742, 0.0
    %v871 = vmax.f32 %v744, 0.0
    %v872 = vmax.f32 %v746, 0.0
    %v873 = vmax.f32 %v748, 0.0
    %v874 = vmax.f32 %v752, 0.0
    %v875 = vmax.f32 %v754, 0.0
    %v876 = vmax.f32 %v756, 0.0
    %v877 = vmax.f32 %v758, 0.0
    %v878 = vmax.f32 %v762, 0.0
    %v879 = vmax.f32 %v764, 0.0
    %v880 = vmax.f32 %v766, 0.0
    %v881 = vmax.f32 %v768, 0.0
    %v882 = vmax.f32 %v772, 0.0
    %v883 = vmax.f32 %v774, 0.0
    %v884 = vmax.f32 %v776, 0.0
    %v885 = vmax.f32 %v778, 0.0
    %v886 = vmax.f32 %v782, 0.0
    %v887 = vmax.f32 %v784, 0.0
    %v888 = vmax.f32 %v786, 0.0
    %v889 = vmax.f32 %v788, 0.0
    %v890 = vmax.f32 %v792, 0.0
    %v891 = vmax.f32 %v794, 0.0
    %v892 = vmax.f32 %v796, 0.0
    %v893 = vmax.f32 %v798, 0.0
    %v894 = vmax.f32 %v802, 0.0
    %v895 = vmax.f32 %v804, 0.0
    %v896 = vmax.f32 %v806, 0.0
    %v897 = vmax.f32 %v808, 0.0
    %v898 = vmax.f32 %v812, 0.0
    %v899 = vmax.f32 %v814, 0.0
    %v900 = vmax.f32 %v816, 0.0
    %v901 = vmax.f32 %v818, 0.0
    %v902 = vmax.f32 %v822, 0.0
    %v903 = vmax.f32 %v824, 0.0
    %v904 = vmax.f32 %v826, 0.0
    %v905 = vmax.f32 %v828, 0.0
    %v906 = vmax.f32 %v832, 0.0
    %v907 = vmax.f32 %v834, 0.0
    %v908 = vmax.f32 %v836, 0.0
    %v909 = vmax.f32 %v838, 0.0
    %v910 = vmax.f32 %v842, 0.0
    %v911 = vmax.f32 %v844, 0.0
    %v912 = vmax.f32 %v846, 0.0
    %v913 = vmax.f32 %v848, 0.0
    %v914 = vpack.c.bf16 %v852, %v850
    %v915 = vpack.c.bf16 %v853, %v851
    %v916 = vpack.c.bf16 %v856, %v854
    %v917 = vpack.c.bf16 %v857, %v855
    %v918 = vpack.c.bf16 %v860, %v858
    %v919 = vpack.c.bf16 %v861, %v859
    %v920 = vpack.c.bf16 %v864, %v862
    %v921 = vpack.c.bf16 %v865, %v863
    %v922 = vpack.c.bf16 %v868, %v866
    %v923 = vpack.c.bf16 %v869, %v867
    %v924 = vpack.c.bf16 %v872, %v870
    %v925 = vpack.c.bf16 %v873, %v871
    %v926 = vpack.c.bf16 %v876, %v874
    %v927 = vpack.c.bf16 %v877, %v875
    %v928 = vpack.c.bf16 %v880, %v878
    %v929 = vpack.c.bf16 %v881, %v879
    %v930 = vpack.c.bf16 %v884, %v882
    %v931 = vpack.c.bf16 %v885, %v883
    %v932 = vpack.c.bf16 %v888, %v886
    %v933 = vpack.c.bf16 %v889, %v887
    %v934 = vpack.c.bf16 %v892, %v890
    %v935 = vpack.c.bf16 %v893, %v891
    %v936 = vpack.c.bf16 %v896, %v894
    %v937 = vpack.c.bf16 %v897, %v895
    %v938 = vpack.c.bf16 %v900, %v898
    %v939 = vpack.c.bf16 %v901, %v899
    %v940 = vpack.c.bf16 %v904, %v902
    %v941 = vpack.c.bf16 %v905, %v903
    %v942 = vpack.c.bf16 %v908, %v906
    %v943 = vpack.c.bf16 %v909, %v907
    %v944 = vpack.c.bf16 %v912, %v910
    %v945 = vpack.c.bf16 %v913, %v911
    %v946 = vld [vmem:[#allocation10] sm:$0xff]
    %v947 = vld [vmem:[#allocation10 + $0x8] sm:$0xff]
    %v948 = vld [vmem:[#allocation10 + $0x10] sm:$0xff]
    %v949 = vld [vmem:[#allocation10 + $0x18] sm:$0xff]
    %v950 = vld [vmem:[#allocation10 + $0x20] sm:$0xff]
    %v951 = vld [vmem:[#allocation10 + $0x28] sm:$0xff]
    %v952 = vld [vmem:[#allocation10 + $0x30] sm:$0xff]
    %v953 = vld [vmem:[#allocation10 + $0x38] sm:$0xff]
    %v954 = vld [vmem:[#allocation10 + $0x40] sm:$0xff]
    %v955 = vld [vmem:[#allocation10 + $0x48] sm:$0xff]
    %v956 = vld [vmem:[#allocation10 + $0x50] sm:$0xff]
    %v957 = vld [vmem:[#allocation10 + $0x58] sm:$0xff]
    %v958 = vld [vmem:[#allocation10 + $0x60] sm:$0xff]
    %v959 = vld [vmem:[#allocation10 + $0x68] sm:$0xff]
    %v960 = vld [vmem:[#allocation10 + $0x70] sm:$0xff]
    %v961 = vld [vmem:[#allocation10 + $0x78] sm:$0xff]
    %v962 = vld [vmem:[#allocation10 + $0x80] sm:$0xff]
    %v963 = vld [vmem:[#allocation10 + $0x88] sm:$0xff]
    %v964 = vld [vmem:[#allocation10 + $0x90] sm:$0xff]
    %v965 = vld [vmem:[#allocation10 + $0x98] sm:$0xff]
    %v966 = vld [vmem:[#allocation10 + $0xa0] sm:$0xff]
    %v967 = vld [vmem:[#allocation10 + $0xa8] sm:$0xff]
    %v968 = vld [vmem:[#allocation10 + $0xb0] sm:$0xff]
    %v969 = vld [vmem:[#allocation10 + $0xb8] sm:$0xff]
    %v970 = vld [vmem:[#allocation10 + $0xc0] sm:$0xff]
    %v971 = vld [vmem:[#allocation10 + $0xc8] sm:$0xff]
    %v972 = vld [vmem:[#allocation10 + $0xd0] sm:$0xff]
    %v973 = vld [vmem:[#allocation10 + $0xd8] sm:$0xff]
    %v974 = vld [vmem:[#allocation10 + $0xe0] sm:$0xff]
    %v975 = vld [vmem:[#allocation10 + $0xe8] sm:$0xff]
    %v976 = vld [vmem:[#allocation10 + $0xf0] sm:$0xff]
    %v977 = vld [vmem:[#allocation10 + $0xf8] sm:$0xff]
    %v978 = vld [vmem:[#allocation11] sm:$0xff]
    %v979 = vld [vmem:[#allocation11 + $0x8] sm:$0xff]
    %v980 = vld [vmem:[#allocation11 + $0x10] sm:$0xff]
    %v981 = vld [vmem:[#allocation11 + $0x18] sm:$0xff]
    %v982 = vld [vmem:[#allocation11 + $0x20] sm:$0xff]
    %v983 = vld [vmem:[#allocation11 + $0x28] sm:$0xff]
    %v984 = vld [vmem:[#allocation11 + $0x30] sm:$0xff]
    %v985 = vld [vmem:[#allocation11 + $0x38] sm:$0xff]
    %v986 = vld [vmem:[#allocation11 + $0x40] sm:$0xff]
    %v987 = vld [vmem:[#allocation11 + $0x48] sm:$0xff]
    %v988 = vld [vmem:[#allocation11 + $0x50] sm:$0xff]
    %v989 = vld [vmem:[#allocation11 + $0x58] sm:$0xff]
    %v990 = vld [vmem:[#allocation11 + $0x60] sm:$0xff]
    %v991 = vld [vmem:[#allocation11 + $0x68] sm:$0xff]
    %v992 = vld [vmem:[#allocation11 + $0x70] sm:$0xff]
    %v993 = vld [vmem:[#allocation11 + $0x78] sm:$0xff]
    %v994 = vld [vmem:[#allocation11 + $0x80] sm:$0xff]
    %v995 = vld [vmem:[#allocation11 + $0x88] sm:$0xff]
    %v996 = vld [vmem:[#allocation11 + $0x90] sm:$0xff]
    %v997 = vld [vmem:[#allocation11 + $0x98] sm:$0xff]
    %v998 = vld [vmem:[#allocation11 + $0xa0] sm:$0xff]
    %v999 = vld [vmem:[#allocation11 + $0xa8] sm:$0xff]
    %v1000 = vld [vmem:[#allocation11 + $0xb0] sm:$0xff]
    %v1001 = vld [vmem:[#allocation11 + $0xb8] sm:$0xff]
    %v1002 = vld [vmem:[#allocation11 + $0xc0] sm:$0xff]
    %v1003 = vld [vmem:[#allocation11 + $0xc8] sm:$0xff]
    %v1004 = vld [vmem:[#allocation11 + $0xd0] sm:$0xff]
    %v1005 = vld [vmem:[#allocation11 + $0xd8] sm:$0xff]
    %v1006 = vld [vmem:[#allocation11 + $0xe0] sm:$0xff]
    %v1007 = vld [vmem:[#allocation11 + $0xe8] sm:$0xff]
    %v1008 = vld [vmem:[#allocation11 + $0xf0] sm:$0xff]
    %v1009 = vld [vmem:[#allocation11 + $0xf8] sm:$0xff]
    %v1010 = vld [vmem:[#allocation11 + $0x100] sm:$0xff]
    %v1011 = vld [vmem:[#allocation11 + $0x108] sm:$0xff]
    %v1012 = vld [vmem:[#allocation11 + $0x110] sm:$0xff]
    %v1013 = vld [vmem:[#allocation11 + $0x118] sm:$0xff]
    %v1014 = vld [vmem:[#allocation11 + $0x120] sm:$0xff]
    %v1015 = vld [vmem:[#allocation11 + $0x128] sm:$0xff]
    %v1016 = vld [vmem:[#allocation11 + $0x130] sm:$0xff]
    %v1017 = vld [vmem:[#allocation11 + $0x138] sm:$0xff]
    %v1018 = vld [vmem:[#allocation11 + $0x140] sm:$0xff]
    %v1019 = vld [vmem:[#allocation11 + $0x148] sm:$0xff]
    %v1020 = vld [vmem:[#allocation11 + $0x150] sm:$0xff]
    %v1021 = vld [vmem:[#allocation11 + $0x158] sm:$0xff]
    %v1022 = vld [vmem:[#allocation11 + $0x160] sm:$0xff]
    %v1023 = vld [vmem:[#allocation11 + $0x168] sm:$0xff]
    %v1024 = vld [vmem:[#allocation11 + $0x170] sm:$0xff]
    %v1025 = vld [vmem:[#allocation11 + $0x178] sm:$0xff]
    %v1026 = vld [vmem:[#allocation11 + $0x180] sm:$0xff]
    %v1027 = vld [vmem:[#allocation11 + $0x188] sm:$0xff]
    %v1028 = vld [vmem:[#allocation11 + $0x190] sm:$0xff]
    %v1029 = vld [vmem:[#allocation11 + $0x198] sm:$0xff]
    %v1030 = vld [vmem:[#allocation11 + $0x1a0] sm:$0xff]
    %v1031 = vld [vmem:[#allocation11 + $0x1a8] sm:$0xff]
    %v1032 = vld [vmem:[#allocation11 + $0x1b0] sm:$0xff]
    %v1033 = vld [vmem:[#allocation11 + $0x1b8] sm:$0xff]
    %v1034 = vld [vmem:[#allocation11 + $0x1c0] sm:$0xff]
    %v1035 = vld [vmem:[#allocation11 + $0x1c8] sm:$0xff]
    %v1036 = vld [vmem:[#allocation11 + $0x1d0] sm:$0xff]
    %v1037 = vld [vmem:[#allocation11 + $0x1d8] sm:$0xff]
    %v1038 = vld [vmem:[#allocation11 + $0x1e0] sm:$0xff]
    %v1039 = vld [vmem:[#allocation11 + $0x1e8] sm:$0xff]
    %v1040 = vld [vmem:[#allocation11 + $0x1f0] sm:$0xff]
    %v1041 = vld [vmem:[#allocation11 + $0x1f8] sm:$0xff]
    %v1106 = vunpack.c.l.b16 %v978
    %v1107 = vunpack.c.h.b16 %v978
    %v1108 = vunpack.c.l.b16 %v979
    %v1109 = vunpack.c.h.b16 %v979
    %v1110 = vunpack.c.l.b16 %v980
    %v1111 = vunpack.c.h.b16 %v980
    %v1112 = vunpack.c.l.b16 %v981
    %v1113 = vunpack.c.h.b16 %v981
    %v1114 = vunpack.c.l.b16 %v982
    %v1115 = vunpack.c.h.b16 %v982
    %v1116 = vunpack.c.l.b16 %v983
    %v1117 = vunpack.c.h.b16 %v983
    %v1118 = vunpack.c.l.b16 %v984
    %v1119 = vunpack.c.h.b16 %v984
    %v1120 = vunpack.c.l.b16 %v985
    %v1121 = vunpack.c.h.b16 %v985
    %v1122 = vunpack.c.l.b16 %v986
    %v1123 = vunpack.c.h.b16 %v986
    %v1124 = vunpack.c.l.b16 %v987
    %v1125 = vunpack.c.h.b16 %v987
    %v1126 = vunpack.c.l.b16 %v988
    %v1127 = vunpack.c.h.b16 %v988
    %v1128 = vunpack.c.l.b16 %v989
    %v1129 = vunpack.c.h.b16 %v989
    %v1130 = vunpack.c.l.b16 %v990
    %v1131 = vunpack.c.h.b16 %v990
    %v1132 = vunpack.c.l.b16 %v991
    %v1133 = vunpack.c.h.b16 %v991
    %v1134 = vunpack.c.l.b16 %v992
    %v1135 = vunpack.c.h.b16 %v992
    %v1136 = vunpack.c.l.b16 %v993
    %v1137 = vunpack.c.h.b16 %v993
    %v1138 = vunpack.c.l.b16 %v994
    %v1139 = vunpack.c.h.b16 %v994
    %v1140 = vunpack.c.l.b16 %v995
    %v1141 = vunpack.c.h.b16 %v995
    %v1142 = vunpack.c.l.b16 %v996
    %v1143 = vunpack.c.h.b16 %v996
    %v1144 = vunpack.c.l.b16 %v997
    %v1145 = vunpack.c.h.b16 %v997
    %v1146 = vunpack.c.l.b16 %v998
    %v1147 = vunpack.c.h.b16 %v998
    %v1148 = vunpack.c.l.b16 %v999
    %v1149 = vunpack.c.h.b16 %v999
    %v1150 = vunpack.c.l.b16 %v1000
    %v1151 = vunpack.c.h.b16 %v1000
    %v1152 = vunpack.c.l.b16 %v1001
    %v1153 = vunpack.c.h.b16 %v1001
    %v1154 = vunpack.c.l.b16 %v1002
    %v1155 = vunpack.c.h.b16 %v1002
    %v1156 = vunpack.c.l.b16 %v1003
    %v1157 = vunpack.c.h.b16 %v1003
    %v1158 = vunpack.c.l.b16 %v1004
    %v1159 = vunpack.c.h.b16 %v1004
    %v1160 = vunpack.c.l.b16 %v1005
    %v1161 = vunpack.c.h.b16 %v1005
    %v1162 = vunpack.c.l.b16 %v1006
    %v1163 = vunpack.c.h.b16 %v1006
    %v1164 = vunpack.c.l.b16 %v1007
    %v1165 = vunpack.c.h.b16 %v1007
    %v1166 = vunpack.c.l.b16 %v1008
    %v1167 = vunpack.c.h.b16 %v1008
    %v1168 = vunpack.c.l.b16 %v1009
    %v1169 = vunpack.c.h.b16 %v1009
    %v1170 = vunpack.c.l.b16 %v1010
    %v1171 = vunpack.c.h.b16 %v1010
    %v1172 = vunpack.c.l.b16 %v1011
    %v1173 = vunpack.c.h.b16 %v1011
    %v1174 = vunpack.c.l.b16 %v1012
    %v1175 = vunpack.c.h.b16 %v1012
    %v1176 = vunpack.c.l.b16 %v1013
    %v1177 = vunpack.c.h.b16 %v1013
    %v1178 = vunpack.c.l.b16 %v1014
    %v1179 = vunpack.c.h.b16 %v1014
    %v1180 = vunpack.c.l.b16 %v1015
    %v1181 = vunpack.c.h.b16 %v1015
    %v1182 = vunpack.c.l.b16 %v1016
    %v1183 = vunpack.c.h.b16 %v1016
    %v1184 = vunpack.c.l.b16 %v1017
    %v1185 = vunpack.c.h.b16 %v1017
    %v1186 = vunpack.c.l.b16 %v1018
    %v1187 = vunpack.c.h.b16 %v1018
    %v1188 = vunpack.c.l.b16 %v1019
    %v1189 = vunpack.c.h.b16 %v1019
    %v1190 = vunpack.c.l.b16 %v1020
    %v1191 = vunpack.c.h.b16 %v1020
    %v1192 = vunpack.c.l.b16 %v1021
    %v1193 = vunpack.c.h.b16 %v1021
    %v1194 = vunpack.c.l.b16 %v1022
    %v1195 = vunpack.c.h.b16 %v1022
    %v1196 = vunpack.c.l.b16 %v1023
    %v1197 = vunpack.c.h.b16 %v1023
    %v1198 = vunpack.c.l.b16 %v1024
    %v1199 = vunpack.c.h.b16 %v1024
    %v1200 = vunpack.c.l.b16 %v1025
    %v1201 = vunpack.c.h.b16 %v1025
    %v1202 = vunpack.c.l.b16 %v1026
    %v1203 = vunpack.c.h.b16 %v1026
    %v1204 = vunpack.c.l.b16 %v1027
    %v1205 = vunpack.c.h.b16 %v1027
    %v1206 = vunpack.c.l.b16 %v1028
    %v1207 = vunpack.c.h.b16 %v1028
    %v1208 = vunpack.c.l.b16 %v1029
    %v1209 = vunpack.c.h.b16 %v1029
    %v1210 = vunpack.c.l.b16 %v1030
    %v1211 = vunpack.c.h.b16 %v1030
    %v1212 = vunpack.c.l.b16 %v1031
    %v1213 = vunpack.c.h.b16 %v1031
    %v1214 = vunpack.c.l.b16 %v1032
    %v1215 = vunpack.c.h.b16 %v1032
    %v1216 = vunpack.c.l.b16 %v1033
    %v1217 = vunpack.c.h.b16 %v1033
    %v1218 = vunpack.c.l.b16 %v1034
    %v1219 = vunpack.c.h.b16 %v1034
    %v1220 = vunpack.c.l.b16 %v1035
    %v1221 = vunpack.c.h.b16 %v1035
    %v1222 = vunpack.c.l.b16 %v1036
    %v1223 = vunpack.c.h.b16 %v1036
    %v1224 = vunpack.c.l.b16 %v1037
    %v1225 = vunpack.c.h.b16 %v1037
    %v1226 = vunpack.c.l.b16 %v1038
    %v1227 = vunpack.c.h.b16 %v1038
    %v1228 = vunpack.c.l.b16 %v1039
    %v1229 = vunpack.c.h.b16 %v1039
    %v1230 = vunpack.c.l.b16 %v1040
    %v1231 = vunpack.c.h.b16 %v1040
    %v1232 = vunpack.c.l.b16 %v1041
    %v1233 = vunpack.c.h.b16 %v1041
    %v1234 = vpack.c.b16 %v1110, %v1106
    %v1235 = vpack.c.b16 %v1111, %v1107
    %v1236 = vpack.c.b16 %v1112, %v1108
    %v1237 = vpack.c.b16 %v1113, %v1109
    %v1238 = vpack.c.b16 %v1118, %v1114
    %v1239 = vpack.c.b16 %v1119, %v1115
    %v1240 = vpack.c.b16 %v1120, %v1116
    %v1241 = vpack.c.b16 %v1121, %v1117
    %v1242 = vpack.c.b16 %v1126, %v1122
    %v1243 = vpack.c.b16 %v1127, %v1123
    %v1244 = vpack.c.b16 %v1128, %v1124
    %v1245 = vpack.c.b16 %v1129, %v1125
    %v1246 = vpack.c.b16 %v1134, %v1130
    %v1247 = vpack.c.b16 %v1135, %v1131
    %v1248 = vpack.c.b16 %v1136, %v1132
    %v1249 = vpack.c.b16 %v1137, %v1133
    %v1250 = vpack.c.b16 %v1142, %v1138
    %v1251 = vpack.c.b16 %v1143, %v1139
    %v1252 = vpack.c.b16 %v1144, %v1140
    %v1253 = vpack.c.b16 %v1145, %v1141
    %v1254 = vpack.c.b16 %v1150, %v1146
    %v1255 = vpack.c.b16 %v1151, %v1147
    %v1256 = vpack.c.b16 %v1152, %v1148
    %v1257 = vpack.c.b16 %v1153, %v1149
    %v1258 = vpack.c.b16 %v1158, %v1154
    %v1259 = vpack.c.b16 %v1159, %v1155
    %v1260 = vpack.c.b16 %v1160, %v1156
    %v1261 = vpack.c.b16 %v1161, %v1157
    %v1262 = vpack.c.b16 %v1166, %v1162
    %v1263 = vpack.c.b16 %v1167, %v1163
    %v1264 = vpack.c.b16 %v1168, %v1164
    %v1265 = vpack.c.b16 %v1169, %v1165
    %v1266 = vpack.c.b16 %v1174, %v1170
    %v1267 = vpack.c.b16 %v1175, %v1171
    %v1268 = vpack.c.b16 %v1176, %v1172
    %v1269 = vpack.c.b16 %v1177, %v1173
    %v1270 = vpack.c.b16 %v1182, %v1178
    %v1271 = vpack.c.b16 %v1183, %v1179
    %v1272 = vpack.c.b16 %v1184, %v1180
    %v1273 = vpack.c.b16 %v1185, %v1181
    %v1274 = vpack.c.b16 %v1190, %v1186
    %v1275 = vpack.c.b16 %v1191, %v1187
    %v1276 = vpack.c.b16 %v1192, %v1188
    %v1277 = vpack.c.b16 %v1193, %v1189
    %v1278 = vpack.c.b16 %v1198, %v1194
    %v1279 = vpack.c.b16 %v1199, %v1195
    %v1280 = vpack.c.b16 %v1200, %v1196
    %v1281 = vpack.c.b16 %v1201, %v1197
    %v1282 = vpack.c.b16 %v1206, %v1202
    %v1283 = vpack.c.b16 %v1207, %v1203
    %v1284 = vpack.c.b16 %v1208, %v1204
    %v1285 = vpack.c.b16 %v1209, %v1205
    %v1286 = vpack.c.b16 %v1214, %v1210
    %v1287 = vpack.c.b16 %v1215, %v1211
    %v1288 = vpack.c.b16 %v1216, %v1212
    %v1289 = vpack.c.b16 %v1217, %v1213
    %v1290 = vpack.c.b16 %v1222, %v1218
    %v1291 = vpack.c.b16 %v1223, %v1219
    %v1292 = vpack.c.b16 %v1224, %v1220
    %v1293 = vpack.c.b16 %v1225, %v1221
    %v1294 = vpack.c.b16 %v1230, %v1226
    %v1295 = vpack.c.b16 %v1231, %v1227
    %v1296 = vpack.c.b16 %v1232, %v1228
    %v1297 = vpack.c.b16 %v1233, %v1229
    %1362 = vmatprep.subr.bf16.mxu0 %v1263
    %1363 = vmatpush1.bf16.msra.mxu0 %v1262
    %1364 = vmatprep.subr.bf16.mxu0 %v1259
    %1365 = vmatpush1.bf16.msra.mxu0 %v1258
    %1366 = vmatprep.subr.bf16.mxu0 %v1255
    %1367 = vmatpush1.bf16.msra.mxu0 %v1254
    %1368 = vmatprep.subr.bf16.mxu0 %v1251
    %1369 = vmatpush1.bf16.msra.mxu0 %v1250
    %1370 = vmatprep.subr.bf16.mxu0 %v1247
    %1371 = vmatpush1.bf16.msra.mxu0 %v1246
    %1372 = vmatprep.subr.bf16.mxu0 %v1243
    %1373 = vmatpush1.bf16.msra.mxu0 %v1242
    %1374 = vmatprep.subr.bf16.mxu0 %v1239
    %1375 = vmatpush1.bf16.msra.mxu0 %v1238
    %1376 = vmatprep.subr.bf16.mxu0 %v1235
    %1377 = vmatpush1.bf16.msra.mxu0 %v1234
    %1378 = vmatprep.subr.bf16.mxu0 %v1295
    %1379 = vmatpush2.bf16.msra.mxu0 %v1294
    %1380 = vmatprep.subr.bf16.mxu0 %v1291
    %1381 = vmatpush2.bf16.msra.mxu0 %v1290
    %1382 = vmatprep.subr.bf16.mxu0 %v1287
    %1383 = vmatpush2.bf16.msra.mxu0 %v1286
    %1384 = vmatprep.subr.bf16.mxu0 %v1283
    %1385 = vmatpush2.bf16.msra.mxu0 %v1282
    %1386 = vmatprep.subr.bf16.mxu0 %v1279
    %1387 = vmatpush2.bf16.msra.mxu0 %v1278
    %1388 = vmatprep.subr.bf16.mxu0 %v1275
    %1389 = vmatpush2.bf16.msra.mxu0 %v1274
    %1390 = vmatprep.subr.bf16.mxu0 %v1271
    %1391 = vmatpush2.bf16.msra.mxu0 %v1270
    %1392 = vmatprep.subr.bf16.mxu0 %v1267
    %1393 = vmatpush2.bf16.msra.mxu0 %v1266
    %1394 = vmatprep.mubr.bf16.mxu0 %v915
    %1395 = vmatmul.mubr.bf16.gmra.mxu0 %v914
    %v1396 = vpop.f32.mrf.mxu0
    %v1397 = vadd.f32 0.0, %v1396
    %v1398 = vpop.f32.mrf.mxu0
    %v1399 = vadd.f32 0.0, %v1398
    %v1400 = vpop.f32.mrf.mxu0
    %v1401 = vadd.f32 0.0, %v1400
    %v1402 = vpop.f32.mrf.mxu0
    %v1403 = vadd.f32 0.0, %v1402
    %1404 = vmatprep.mubr.bf16.mxu0 %v917
    %1405 = vmatmul.mubr.bf16.gmra.mxu0 %v916
    %v1406 = vpop.f32.mrf.mxu0
    %v1407 = vadd.f32 0.0, %v1406
    %v1408 = vpop.f32.mrf.mxu0
    %v1409 = vadd.f32 0.0, %v1408
    %v1410 = vpop.f32.mrf.mxu0
    %v1411 = vadd.f32 0.0, %v1410
    %v1412 = vpop.f32.mrf.mxu0
    %v1413 = vadd.f32 0.0, %v1412
    %1414 = vmatprep.mubr.bf16.mxu0 %v919
    %1415 = vmatmul.mubr.bf16.gmra.mxu0 %v918
    %v1416 = vpop.f32.mrf.mxu0
    %v1417 = vadd.f32 0.0, %v1416
    %v1418 = vpop.f32.mrf.mxu0
    %v1419 = vadd.f32 0.0, %v1418
    %v1420 = vpop.f32.mrf.mxu0
    %v1421 = vadd.f32 0.0, %v1420
    %v1422 = vpop.f32.mrf.mxu0
    %v1423 = vadd.f32 0.0, %v1422
    %1424 = vmatprep.mubr.bf16.mxu0 %v921
    %1425 = vmatmul.mubr.bf16.gmra.mxu0 %v920
    %v1426 = vpop.f32.mrf.mxu0
    %v1427 = vadd.f32 0.0, %v1426
    %v1428 = vpop.f32.mrf.mxu0
    %v1429 = vadd.f32 0.0, %v1428
    %v1430 = vpop.f32.mrf.mxu0
    %v1431 = vadd.f32 0.0, %v1430
    %v1432 = vpop.f32.mrf.mxu0
    %v1433 = vadd.f32 0.0, %v1432
    %1434 = vmatprep.mubr.bf16.mxu0 %v923
    %1435 = vmatmul.mubr.bf16.gmra.mxu0 %v922
    %v1436 = vpop.f32.mrf.mxu0
    %v1437 = vadd.f32 0.0, %v1436
    %v1438 = vpop.f32.mrf.mxu0
    %v1439 = vadd.f32 0.0, %v1438
    %v1440 = vpop.f32.mrf.mxu0
    %v1441 = vadd.f32 0.0, %v1440
    %v1442 = vpop.f32.mrf.mxu0
    %v1443 = vadd.f32 0.0, %v1442
    %1444 = vmatprep.mubr.bf16.mxu0 %v925
    %1445 = vmatmul.mubr.bf16.gmra.mxu0 %v924
    %v1446 = vpop.f32.mrf.mxu0
    %v1447 = vadd.f32 0.0, %v1446
    %v1448 = vpop.f32.mrf.mxu0
    %v1449 = vadd.f32 0.0, %v1448
    %v1450 = vpop.f32.mrf.mxu0
    %v1451 = vadd.f32 0.0, %v1450
    %v1452 = vpop.f32.mrf.mxu0
    %v1453 = vadd.f32 0.0, %v1452
    %1454 = vmatprep.mubr.bf16.mxu0 %v927
    %1455 = vmatmul.mubr.bf16.gmra.mxu0 %v926
    %v1456 = vpop.f32.mrf.mxu0
    %v1457 = vadd.f32 0.0, %v1456
    %v1458 = vpop.f32.mrf.mxu0
    %v1459 = vadd.f32 0.0, %v1458
    %v1460 = vpop.f32.mrf.mxu0
    %v1461 = vadd.f32 0.0, %v1460
    %v1462 = vpop.f32.mrf.mxu0
    %v1463 = vadd.f32 0.0, %v1462
    %1464 = vmatprep.mubr.bf16.mxu0 %v929
    %1465 = vmatmul.mubr.bf16.gmra.mxu0 %v928
    %v1466 = vpop.f32.mrf.mxu0
    %v1467 = vadd.f32 0.0, %v1466
    %v1468 = vpop.f32.mrf.mxu0
    %v1469 = vadd.f32 0.0, %v1468
    %v1470 = vpop.f32.mrf.mxu0
    %v1471 = vadd.f32 0.0, %v1470
    %v1472 = vpop.f32.mrf.mxu0
    %v1473 = vadd.f32 0.0, %v1472
    %1474 = vmatprep.mubr.bf16.mxu0 %v931
    %1475 = vmatmul.mubr.bf16.gmra.mxu0 %v930
    %v1476 = vpop.f32.mrf.mxu0
    %v1477 = vadd.f32 0.0, %v1476
    %v1478 = vpop.f32.mrf.mxu0
    %v1479 = vadd.f32 0.0, %v1478
    %v1480 = vpop.f32.mrf.mxu0
    %v1481 = vadd.f32 0.0, %v1480
    %v1482 = vpop.f32.mrf.mxu0
    %v1483 = vadd.f32 0.0, %v1482
    %1484 = vmatprep.mubr.bf16.mxu0 %v933
    %1485 = vmatmul.mubr.bf16.gmra.mxu0 %v932
    %v1486 = vpop.f32.mrf.mxu0
    %v1487 = vadd.f32 0.0, %v1486
    %v1488 = vpop.f32.mrf.mxu0
    %v1489 = vadd.f32 0.0, %v1488
    %v1490 = vpop.f32.mrf.mxu0
    %v1491 = vadd.f32 0.0, %v1490
    %v1492 = vpop.f32.mrf.mxu0
    %v1493 = vadd.f32 0.0, %v1492
    %1494 = vmatprep.mubr.bf16.mxu0 %v935
    %1495 = vmatmul.mubr.bf16.gmra.mxu0 %v934
    %v1496 = vpop.f32.mrf.mxu0
    %v1497 = vadd.f32 0.0, %v1496
    %v1498 = vpop.f32.mrf.mxu0
    %v1499 = vadd.f32 0.0, %v1498
    %v1500 = vpop.f32.mrf.mxu0
    %v1501 = vadd.f32 0.0, %v1500
    %v1502 = vpop.f32.mrf.mxu0
    %v1503 = vadd.f32 0.0, %v1502
    %1504 = vmatprep.mubr.bf16.mxu0 %v937
    %1505 = vmatmul.mubr.bf16.gmra.mxu0 %v936
    %v1506 = vpop.f32.mrf.mxu0
    %v1507 = vadd.f32 0.0, %v1506
    %v1508 = vpop.f32.mrf.mxu0
    %v1509 = vadd.f32 0.0, %v1508
    %v1510 = vpop.f32.mrf.mxu0
    %v1511 = vadd.f32 0.0, %v1510
    %v1512 = vpop.f32.mrf.mxu0
    %v1513 = vadd.f32 0.0, %v1512
    %1514 = vmatprep.mubr.bf16.mxu0 %v939
    %1515 = vmatmul.mubr.bf16.gmra.mxu0 %v938
    %v1516 = vpop.f32.mrf.mxu0
    %v1517 = vadd.f32 0.0, %v1516
    %v1518 = vpop.f32.mrf.mxu0
    %v1519 = vadd.f32 0.0, %v1518
    %v1520 = vpop.f32.mrf.mxu0
    %v1521 = vadd.f32 0.0, %v1520
    %v1522 = vpop.f32.mrf.mxu0
    %v1523 = vadd.f32 0.0, %v1522
    %1524 = vmatprep.mubr.bf16.mxu0 %v941
    %1525 = vmatmul.mubr.bf16.gmra.mxu0 %v940
    %v1526 = vpop.f32.mrf.mxu0
    %v1527 = vadd.f32 0.0, %v1526
    %v1528 = vpop.f32.mrf.mxu0
    %v1529 = vadd.f32 0.0, %v1528
    %v1530 = vpop.f32.mrf.mxu0
    %v1531 = vadd.f32 0.0, %v1530
    %v1532 = vpop.f32.mrf.mxu0
    %v1533 = vadd.f32 0.0, %v1532
    %1534 = vmatprep.mubr.bf16.mxu0 %v943
    %1535 = vmatmul.mubr.bf16.gmra.mxu0 %v942
    %v1536 = vpop.f32.mrf.mxu0
    %v1537 = vadd.f32 0.0, %v1536
    %v1538 = vpop.f32.mrf.mxu0
    %v1539 = vadd.f32 0.0, %v1538
    %v1540 = vpop.f32.mrf.mxu0
    %v1541 = vadd.f32 0.0, %v1540
    %v1542 = vpop.f32.mrf.mxu0
    %v1543 = vadd.f32 0.0, %v1542
    %1544 = vmatprep.mubr.bf16.mxu0 %v945
    %1545 = vmatmul.mubr.bf16.gmra.mxu0 %v944
    %v1546 = vpop.f32.mrf.mxu0
    %v1547 = vadd.f32 0.0, %v1546
    %v1548 = vpop.f32.mrf.mxu0
    %v1549 = vadd.f32 0.0, %v1548
    %v1550 = vpop.f32.mrf.mxu0
    %v1551 = vadd.f32 0.0, %v1550
    %v1552 = vpop.f32.mrf.mxu0
    %v1553 = vadd.f32 0.0, %v1552
    %1554 = vdwg.mxu0
    %1555 = vmatprep.subr.bf16.mxu0 %v1265
    %1556 = vmatpush1.bf16.msra.mxu0 %v1264
    %1557 = vmatprep.subr.bf16.mxu0 %v1261
    %1558 = vmatpush1.bf16.msra.mxu0 %v1260
    %1559 = vmatprep.subr.bf16.mxu0 %v1257
    %1560 = vmatpush1.bf16.msra.mxu0 %v1256
    %1561 = vmatprep.subr.bf16.mxu0 %v1253
    %1562 = vmatpush1.bf16.msra.mxu0 %v1252
    %1563 = vmatprep.subr.bf16.mxu0 %v1249
    %1564 = vmatpush1.bf16.msra.mxu0 %v1248
    %1565 = vmatprep.subr.bf16.mxu0 %v1245
    %1566 = vmatpush1.bf16.msra.mxu0 %v1244
    %1567 = vmatprep.subr.bf16.mxu0 %v1241
    %1568 = vmatpush1.bf16.msra.mxu0 %v1240
    %1569 = vmatprep.subr.bf16.mxu0 %v1237
    %1570 = vmatpush1.bf16.msra.mxu0 %v1236
    %1571 = vmatprep.subr.bf16.mxu0 %v1297
    %1572 = vmatpush2.bf16.msra.mxu0 %v1296
    %1573 = vmatprep.subr.bf16.mxu0 %v1293
    %1574 = vmatpush2.bf16.msra.mxu0 %v1292
    %1575 = vmatprep.subr.bf16.mxu0 %v1289
    %1576 = vmatpush2.bf16.msra.mxu0 %v1288
    %1577 = vmatprep.subr.bf16.mxu0 %v1285
    %1578 = vmatpush2.bf16.msra.mxu0 %v1284
    %1579 = vmatprep.subr.bf16.mxu0 %v1281
    %1580 = vmatpush2.bf16.msra.mxu0 %v1280
    %1581 = vmatprep.subr.bf16.mxu0 %v1277
    %1582 = vmatpush2.bf16.msra.mxu0 %v1276
    %1583 = vmatprep.subr.bf16.mxu0 %v1273
    %1584 = vmatpush2.bf16.msra.mxu0 %v1272
    %1585 = vmatprep.subr.bf16.mxu0 %v1269
    %1586 = vmatpush2.bf16.msra.mxu0 %v1268
    %1587 = vmatprep.mubr.bf16.mxu0 %v915
    %1588 = vmatmul.mubr.bf16.gmra.mxu0 %v914
    %v1589 = vpop.f32.mrf.mxu0
    %v1590 = vadd.f32 0.0, %v1589
    %v1591 = vpop.f32.mrf.mxu0
    %v1592 = vadd.f32 0.0, %v1591
    %v1593 = vpop.f32.mrf.mxu0
    %v1594 = vadd.f32 0.0, %v1593
    %v1595 = vpop.f32.mrf.mxu0
    %v1596 = vadd.f32 0.0, %v1595
    %1597 = vmatprep.mubr.bf16.mxu0 %v917
    %1598 = vmatmul.mubr.bf16.gmra.mxu0 %v916
    %v1599 = vpop.f32.mrf.mxu0
    %v1600 = vadd.f32 0.0, %v1599
    %v1601 = vpop.f32.mrf.mxu0
    %v1602 = vadd.f32 0.0, %v1601
    %v1603 = vpop.f32.mrf.mxu0
    %v1604 = vadd.f32 0.0, %v1603
    %v1605 = vpop.f32.mrf.mxu0
    %v1606 = vadd.f32 0.0, %v1605
    %1607 = vmatprep.mubr.bf16.mxu0 %v919
    %1608 = vmatmul.mubr.bf16.gmra.mxu0 %v918
    %v1609 = vpop.f32.mrf.mxu0
    %v1610 = vadd.f32 0.0, %v1609
    %v1611 = vpop.f32.mrf.mxu0
    %v1612 = vadd.f32 0.0, %v1611
    %v1613 = vpop.f32.mrf.mxu0
    %v1614 = vadd.f32 0.0, %v1613
    %v1615 = vpop.f32.mrf.mxu0
    %v1616 = vadd.f32 0.0, %v1615
    %1617 = vmatprep.mubr.bf16.mxu0 %v921
    %1618 = vmatmul.mubr.bf16.gmra.mxu0 %v920
    %v1619 = vpop.f32.mrf.mxu0
    %v1620 = vadd.f32 0.0, %v1619
    %v1621 = vpop.f32.mrf.mxu0
    %v1622 = vadd.f32 0.0, %v1621
    %v1623 = vpop.f32.mrf.mxu0
    %v1624 = vadd.f32 0.0, %v1623
    %v1625 = vpop.f32.mrf.mxu0
    %v1626 = vadd.f32 0.0, %v1625
    %1627 = vmatprep.mubr.bf16.mxu0 %v923
    %1628 = vmatmul.mubr.bf16.gmra.mxu0 %v922
    %v1629 = vpop.f32.mrf.mxu0
    %v1630 = vadd.f32 0.0, %v1629
    %v1631 = vpop.f32.mrf.mxu0
    %v1632 = vadd.f32 0.0, %v1631
    %v1633 = vpop.f32.mrf.mxu0
    %v1634 = vadd.f32 0.0, %v1633
    %v1635 = vpop.f32.mrf.mxu0
    %v1636 = vadd.f32 0.0, %v1635
    %1637 = vmatprep.mubr.bf16.mxu0 %v925
    %1638 = vmatmul.mubr.bf16.gmra.mxu0 %v924
    %v1639 = vpop.f32.mrf.mxu0
    %v1640 = vadd.f32 0.0, %v1639
    %v1641 = vpop.f32.mrf.mxu0
    %v1642 = vadd.f32 0.0, %v1641
    %v1643 = vpop.f32.mrf.mxu0
    %v1644 = vadd.f32 0.0, %v1643
    %v1645 = vpop.f32.mrf.mxu0
    %v1646 = vadd.f32 0.0, %v1645
    %1647 = vmatprep.mubr.bf16.mxu0 %v927
    %1648 = vmatmul.mubr.bf16.gmra.mxu0 %v926
    %v1649 = vpop.f32.mrf.mxu0
    %v1650 = vadd.f32 0.0, %v1649
    %v1651 = vpop.f32.mrf.mxu0
    %v1652 = vadd.f32 0.0, %v1651
    %v1653 = vpop.f32.mrf.mxu0
    %v1654 = vadd.f32 0.0, %v1653
    %v1655 = vpop.f32.mrf.mxu0
    %v1656 = vadd.f32 0.0, %v1655
    %1657 = vmatprep.mubr.bf16.mxu0 %v929
    %1658 = vmatmul.mubr.bf16.gmra.mxu0 %v928
    %v1659 = vpop.f32.mrf.mxu0
    %v1660 = vadd.f32 0.0, %v1659
    %v1661 = vpop.f32.mrf.mxu0
    %v1662 = vadd.f32 0.0, %v1661
    %v1663 = vpop.f32.mrf.mxu0
    %v1664 = vadd.f32 0.0, %v1663
    %v1665 = vpop.f32.mrf.mxu0
    %v1666 = vadd.f32 0.0, %v1665
    %1667 = vmatprep.mubr.bf16.mxu0 %v931
    %1668 = vmatmul.mubr.bf16.gmra.mxu0 %v930
    %v1669 = vpop.f32.mrf.mxu0
    %v1670 = vadd.f32 0.0, %v1669
    %v1671 = vpop.f32.mrf.mxu0
    %v1672 = vadd.f32 0.0, %v1671
    %v1673 = vpop.f32.mrf.mxu0
    %v1674 = vadd.f32 0.0, %v1673
    %v1675 = vpop.f32.mrf.mxu0
    %v1676 = vadd.f32 0.0, %v1675
    %1677 = vmatprep.mubr.bf16.mxu0 %v933
    %1678 = vmatmul.mubr.bf16.gmra.mxu0 %v932
    %v1679 = vpop.f32.mrf.mxu0
    %v1680 = vadd.f32 0.0, %v1679
    %v1681 = vpop.f32.mrf.mxu0
    %v1682 = vadd.f32 0.0, %v1681
    %v1683 = vpop.f32.mrf.mxu0
    %v1684 = vadd.f32 0.0, %v1683
    %v1685 = vpop.f32.mrf.mxu0
    %v1686 = vadd.f32 0.0, %v1685
    %1687 = vmatprep.mubr.bf16.mxu0 %v935
    %1688 = vmatmul.mubr.bf16.gmra.mxu0 %v934
    %v1689 = vpop.f32.mrf.mxu0
    %v1690 = vadd.f32 0.0, %v1689
    %v1691 = vpop.f32.mrf.mxu0
    %v1692 = vadd.f32 0.0, %v1691
    %v1693 = vpop.f32.mrf.mxu0
    %v1694 = vadd.f32 0.0, %v1693
    %v1695 = vpop.f32.mrf.mxu0
    %v1696 = vadd.f32 0.0, %v1695
    %1697 = vmatprep.mubr.bf16.mxu0 %v937
    %1698 = vmatmul.mubr.bf16.gmra.mxu0 %v936
    %v1699 = vpop.f32.mrf.mxu0
    %v1700 = vadd.f32 0.0, %v1699
    %v1701 = vpop.f32.mrf.mxu0
    %v1702 = vadd.f32 0.0, %v1701
    %v1703 = vpop.f32.mrf.mxu0
    %v1704 = vadd.f32 0.0, %v1703
    %v1705 = vpop.f32.mrf.mxu0
    %v1706 = vadd.f32 0.0, %v1705
    %1707 = vmatprep.mubr.bf16.mxu0 %v939
    %1708 = vmatmul.mubr.bf16.gmra.mxu0 %v938
    %v1709 = vpop.f32.mrf.mxu0
    %v1710 = vadd.f32 0.0, %v1709
    %v1711 = vpop.f32.mrf.mxu0
    %v1712 = vadd.f32 0.0, %v1711
    %v1713 = vpop.f32.mrf.mxu0
    %v1714 = vadd.f32 0.0, %v1713
    %v1715 = vpop.f32.mrf.mxu0
    %v1716 = vadd.f32 0.0, %v1715
    %1717 = vmatprep.mubr.bf16.mxu0 %v941
    %1718 = vmatmul.mubr.bf16.gmra.mxu0 %v940
    %v1719 = vpop.f32.mrf.mxu0
    %v1720 = vadd.f32 0.0, %v1719
    %v1721 = vpop.f32.mrf.mxu0
    %v1722 = vadd.f32 0.0, %v1721
    %v1723 = vpop.f32.mrf.mxu0
    %v1724 = vadd.f32 0.0, %v1723
    %v1725 = vpop.f32.mrf.mxu0
    %v1726 = vadd.f32 0.0, %v1725
    %1727 = vmatprep.mubr.bf16.mxu0 %v943
    %1728 = vmatmul.mubr.bf16.gmra.mxu0 %v942
    %v1729 = vpop.f32.mrf.mxu0
    %v1730 = vadd.f32 0.0, %v1729
    %v1731 = vpop.f32.mrf.mxu0
    %v1732 = vadd.f32 0.0, %v1731
    %v1733 = vpop.f32.mrf.mxu0
    %v1734 = vadd.f32 0.0, %v1733
    %v1735 = vpop.f32.mrf.mxu0
    %v1736 = vadd.f32 0.0, %v1735
    %1737 = vmatprep.mubr.bf16.mxu0 %v945
    %1738 = vmatmul.mubr.bf16.gmra.mxu0 %v944
    %v1739 = vpop.f32.mrf.mxu0
    %v1740 = vadd.f32 0.0, %v1739
    %v1741 = vpop.f32.mrf.mxu0
    %v1742 = vadd.f32 0.0, %v1741
    %v1743 = vpop.f32.mrf.mxu0
    %v1744 = vadd.f32 0.0, %v1743
    %v1745 = vpop.f32.mrf.mxu0
    %v1746 = vadd.f32 0.0, %v1745
    %1747 = vdwg.mxu0
    %v1780 = vunpack.c.l.b16 %v946
    %v1781 = vunpack.c.h.b16 %v946
    %v1782 = vunpack.c.l.b16 %v947
    %v1783 = vunpack.c.h.b16 %v947
    %v1784 = vunpack.c.l.b16 %v948
    %v1785 = vunpack.c.h.b16 %v948
    %v1786 = vunpack.c.l.b16 %v949
    %v1787 = vunpack.c.h.b16 %v949
    %v1788 = vunpack.c.l.b16 %v950
    %v1789 = vunpack.c.h.b16 %v950
    %v1790 = vunpack.c.l.b16 %v951
    %v1791 = vunpack.c.h.b16 %v951
    %v1792 = vunpack.c.l.b16 %v952
    %v1793 = vunpack.c.h.b16 %v952
    %v1794 = vunpack.c.l.b16 %v953
    %v1795 = vunpack.c.h.b16 %v953
    %v1796 = vunpack.c.l.b16 %v954
    %v1797 = vunpack.c.h.b16 %v954
    %v1798 = vunpack.c.l.b16 %v955
    %v1799 = vunpack.c.h.b16 %v955
    %v1800 = vunpack.c.l.b16 %v956
    %v1801 = vunpack.c.h.b16 %v956
    %v1802 = vunpack.c.l.b16 %v957
    %v1803 = vunpack.c.h.b16 %v957
    %v1804 = vunpack.c.l.b16 %v958
    %v1805 = vunpack.c.h.b16 %v958
    %v1806 = vunpack.c.l.b16 %v959
    %v1807 = vunpack.c.h.b16 %v959
    %v1808 = vunpack.c.l.b16 %v960
    %v1809 = vunpack.c.h.b16 %v960
    %v1810 = vunpack.c.l.b16 %v961
    %v1811 = vunpack.c.h.b16 %v961
    %v1812 = vunpack.c.l.b16 %v962
    %v1813 = vunpack.c.h.b16 %v962
    %v1814 = vunpack.c.l.b16 %v963
    %v1815 = vunpack.c.h.b16 %v963
    %v1816 = vunpack.c.l.b16 %v964
    %v1817 = vunpack.c.h.b16 %v964
    %v1818 = vunpack.c.l.b16 %v965
    %v1819 = vunpack.c.h.b16 %v965
    %v1820 = vunpack.c.l.b16 %v966
    %v1821 = vunpack.c.h.b16 %v966
    %v1822 = vunpack.c.l.b16 %v967
    %v1823 = vunpack.c.h.b16 %v967
    %v1824 = vunpack.c.l.b16 %v968
    %v1825 = vunpack.c.h.b16 %v968
    %v1826 = vunpack.c.l.b16 %v969
    %v1827 = vunpack.c.h.b16 %v969
    %v1828 = vunpack.c.l.b16 %v970
    %v1829 = vunpack.c.h.b16 %v970
    %v1830 = vunpack.c.l.b16 %v971
    %v1831 = vunpack.c.h.b16 %v971
    %v1832 = vunpack.c.l.b16 %v972
    %v1833 = vunpack.c.h.b16 %v972
    %v1834 = vunpack.c.l.b16 %v973
    %v1835 = vunpack.c.h.b16 %v973
    %v1836 = vunpack.c.l.b16 %v974
    %v1837 = vunpack.c.h.b16 %v974
    %v1838 = vunpack.c.l.b16 %v975
    %v1839 = vunpack.c.h.b16 %v975
    %v1840 = vunpack.c.l.b16 %v976
    %v1841 = vunpack.c.h.b16 %v976
    %v1842 = vunpack.c.l.b16 %v977
    %v1843 = vunpack.c.h.b16 %v977
    %v1844 = vpack.c.b16 %v1784, %v1780
    %v1845 = vpack.c.b16 %v1785, %v1781
    %v1846 = vpack.c.b16 %v1786, %v1782
    %v1847 = vpack.c.b16 %v1787, %v1783
    %v1848 = vpack.c.b16 %v1792, %v1788
    %v1849 = vpack.c.b16 %v1793, %v1789
    %v1850 = vpack.c.b16 %v1794, %v1790
    %v1851 = vpack.c.b16 %v1795, %v1791
    %v1852 = vpack.c.b16 %v1800, %v1796
    %v1853 = vpack.c.b16 %v1801, %v1797
    %v1854 = vpack.c.b16 %v1802, %v1798
    %v1855 = vpack.c.b16 %v1803, %v1799
    %v1856 = vpack.c.b16 %v1808, %v1804
    %v1857 = vpack.c.b16 %v1809, %v1805
    %v1858 = vpack.c.b16 %v1810, %v1806
    %v1859 = vpack.c.b16 %v1811, %v1807
    %v1860 = vpack.c.b16 %v1816, %v1812
    %v1861 = vpack.c.b16 %v1817, %v1813
    %v1862 = vpack.c.b16 %v1818, %v1814
    %v1863 = vpack.c.b16 %v1819, %v1815
    %v1864 = vpack.c.b16 %v1824, %v1820
    %v1865 = vpack.c.b16 %v1825, %v1821
    %v1866 = vpack.c.b16 %v1826, %v1822
    %v1867 = vpack.c.b16 %v1827, %v1823
    %v1868 = vpack.c.b16 %v1832, %v1828
    %v1869 = vpack.c.b16 %v1833, %v1829
    %v1870 = vpack.c.b16 %v1834, %v1830
    %v1871 = vpack.c.b16 %v1835, %v1831
    %v1872 = vpack.c.b16 %v1840, %v1836
    %v1873 = vpack.c.b16 %v1841, %v1837
    %v1874 = vpack.c.b16 %v1842, %v1838
    %v1875 = vpack.c.b16 %v1843, %v1839
    %1908 = vmatprep.subr.bf16.mxu0 %v1873
    %1909 = vmatpush1.bf16.msra.mxu0 %v1872
    %1910 = vmatprep.subr.bf16.mxu0 %v1869
    %1911 = vmatpush1.bf16.msra.mxu0 %v1868
    %1912 = vmatprep.subr.bf16.mxu0 %v1865
    %1913 = vmatpush1.bf16.msra.mxu0 %v1864
    %1914 = vmatprep.subr.bf16.mxu0 %v1861
    %1915 = vmatpush1.bf16.msra.mxu0 %v1860
    %1916 = vmatprep.subr.bf16.mxu0 %v1857
    %1917 = vmatpush1.bf16.msra.mxu0 %v1856
    %1918 = vmatprep.subr.bf16.mxu0 %v1853
    %1919 = vmatpush1.bf16.msra.mxu0 %v1852
    %1920 = vmatprep.subr.bf16.mxu0 %v1849
    %1921 = vmatpush1.bf16.msra.mxu0 %v1848
    %1922 = vmatprep.subr.bf16.mxu0 %v1845
    %1923 = vmatpush1.bf16.msra.mxu0 %v1844
    %1924 = vmatprep.subr.bf16.mxu0 0
    %1925 = vmatpush2.bf16.msra.mxu0 0
    %1926 = vmatprep.subr.bf16.mxu0 0
    %1927 = vmatpush2.bf16.msra.mxu0 0
    %1928 = vmatprep.subr.bf16.mxu0 0
    %1929 = vmatpush2.bf16.msra.mxu0 0
    %1930 = vmatprep.subr.bf16.mxu0 0
    %1931 = vmatpush2.bf16.msra.mxu0 0
    %1932 = vmatprep.subr.bf16.mxu0 0
    %1933 = vmatpush2.bf16.msra.mxu0 0
    %1934 = vmatprep.subr.bf16.mxu0 0
    %1935 = vmatpush2.bf16.msra.mxu0 0
    %1936 = vmatprep.subr.bf16.mxu0 0
    %1937 = vmatpush2.bf16.msra.mxu0 0
    %1938 = vmatprep.subr.bf16.mxu0 0
    %1939 = vmatpush2.bf16.msra.mxu0 0
    %1940 = vmatprep.mubr.bf16.mxu0 0
    %1941 = vmatmul.mubr.bf16.gmra.mxu0 %v533
    %v1942 = vpop.f32.mrf.mxu0
    %v1943 = vadd.f32 %v1397, %v1942
    %v1944 = vpop.f32.mrf.mxu0
    %v1945 = vadd.f32 %v1399, %v1944
    %v1946 = vpop.f32.mrf.mxu0
    %v1947 = vadd.f32 %v1401, %v1946
    %v1948 = vpop.f32.mrf.mxu0
    %v1949 = vadd.f32 %v1403, %v1948
    %1950 = vmatprep.mubr.bf16.mxu0 0
    %1951 = vmatmul.mubr.bf16.gmra.mxu0 %v534
    %v1952 = vpop.f32.mrf.mxu0
    %v1953 = vadd.f32 %v1407, %v1952
    %v1954 = vpop.f32.mrf.mxu0
    %v1955 = vadd.f32 %v1409, %v1954
    %v1956 = vpop.f32.mrf.mxu0
    %v1957 = vadd.f32 %v1411, %v1956
    %v1958 = vpop.f32.mrf.mxu0
    %v1959 = vadd.f32 %v1413, %v1958
    %1960 = vmatprep.mubr.bf16.mxu0 0
    %1961 = vmatmul.mubr.bf16.gmra.mxu0 %v535
    %v1962 = vpop.f32.mrf.mxu0
    %v1963 = vadd.f32 %v1417, %v1962
    %v1964 = vpop.f32.mrf.mxu0
    %v1965 = vadd.f32 %v1419, %v1964
    %v1966 = vpop.f32.mrf.mxu0
    %v1967 = vadd.f32 %v1421, %v1966
    %v1968 = vpop.f32.mrf.mxu0
    %v1969 = vadd.f32 %v1423, %v1968
    %1970 = vmatprep.mubr.bf16.mxu0 0
    %1971 = vmatmul.mubr.bf16.gmra.mxu0 %v536
    %v1972 = vpop.f32.mrf.mxu0
    %v1973 = vadd.f32 %v1427, %v1972
    %v1974 = vpop.f32.mrf.mxu0
    %v1975 = vadd.f32 %v1429, %v1974
    %v1976 = vpop.f32.mrf.mxu0
    %v1977 = vadd.f32 %v1431, %v1976
    %v1978 = vpop.f32.mrf.mxu0
    %v1979 = vadd.f32 %v1433, %v1978
    %1980 = vmatprep.mubr.bf16.mxu0 0
    %1981 = vmatmul.mubr.bf16.gmra.mxu0 %v537
    %v1982 = vpop.f32.mrf.mxu0
    %v1983 = vadd.f32 %v1437, %v1982
    %v1984 = vpop.f32.mrf.mxu0
    %v1985 = vadd.f32 %v1439, %v1984
    %v1986 = vpop.f32.mrf.mxu0
    %v1987 = vadd.f32 %v1441, %v1986
    %v1988 = vpop.f32.mrf.mxu0
    %v1989 = vadd.f32 %v1443, %v1988
    %1990 = vmatprep.mubr.bf16.mxu0 0
    %1991 = vmatmul.mubr.bf16.gmra.mxu0 %v538
    %v1992 = vpop.f32.mrf.mxu0
    %v1993 = vadd.f32 %v1447, %v1992
    %v1994 = vpop.f32.mrf.mxu0
    %v1995 = vadd.f32 %v1449, %v1994
    %v1996 = vpop.f32.mrf.mxu0
    %v1997 = vadd.f32 %v1451, %v1996
    %v1998 = vpop.f32.mrf.mxu0
    %v1999 = vadd.f32 %v1453, %v1998
    %2000 = vmatprep.mubr.bf16.mxu0 0
    %2001 = vmatmul.mubr.bf16.gmra.mxu0 %v539
    %v2002 = vpop.f32.mrf.mxu0
    %v2003 = vadd.f32 %v1457, %v2002
    %v2004 = vpop.f32.mrf.mxu0
    %v2005 = vadd.f32 %v1459, %v2004
    %v2006 = vpop.f32.mrf.mxu0
    %v2007 = vadd.f32 %v1461, %v2006
    %v2008 = vpop.f32.mrf.mxu0
    %v2009 = vadd.f32 %v1463, %v2008
    %2010 = vmatprep.mubr.bf16.mxu0 0
    %2011 = vmatmul.mubr.bf16.gmra.mxu0 %v540
    %v2012 = vpop.f32.mrf.mxu0
    %v2013 = vadd.f32 %v1467, %v2012
    %v2014 = vpop.f32.mrf.mxu0
    %v2015 = vadd.f32 %v1469, %v2014
    %v2016 = vpop.f32.mrf.mxu0
    %v2017 = vadd.f32 %v1471, %v2016
    %v2018 = vpop.f32.mrf.mxu0
    %v2019 = vadd.f32 %v1473, %v2018
    %2020 = vmatprep.mubr.bf16.mxu0 0
    %2021 = vmatmul.mubr.bf16.gmra.mxu0 %v541
    %v2022 = vpop.f32.mrf.mxu0
    %v2023 = vadd.f32 %v1477, %v2022
    %v2024 = vpop.f32.mrf.mxu0
    %v2025 = vadd.f32 %v1479, %v2024
    %v2026 = vpop.f32.mrf.mxu0
    %v2027 = vadd.f32 %v1481, %v2026
    %v2028 = vpop.f32.mrf.mxu0
    %v2029 = vadd.f32 %v1483, %v2028
    %2030 = vmatprep.mubr.bf16.mxu0 0
    %2031 = vmatmul.mubr.bf16.gmra.mxu0 %v542
    %v2032 = vpop.f32.mrf.mxu0
    %v2033 = vadd.f32 %v1487, %v2032
    %v2034 = vpop.f32.mrf.mxu0
    %v2035 = vadd.f32 %v1489, %v2034
    %v2036 = vpop.f32.mrf.mxu0
    %v2037 = vadd.f32 %v1491, %v2036
    %v2038 = vpop.f32.mrf.mxu0
    %v2039 = vadd.f32 %v1493, %v2038
    %2040 = vmatprep.mubr.bf16.mxu0 0
    %2041 = vmatmul.mubr.bf16.gmra.mxu0 %v543
    %v2042 = vpop.f32.mrf.mxu0
    %v2043 = vadd.f32 %v1497, %v2042
    %v2044 = vpop.f32.mrf.mxu0
    %v2045 = vadd.f32 %v1499, %v2044
    %v2046 = vpop.f32.mrf.mxu0
    %v2047 = vadd.f32 %v1501, %v2046
    %v2048 = vpop.f32.mrf.mxu0
    %v2049 = vadd.f32 %v1503, %v2048
    %2050 = vmatprep.mubr.bf16.mxu0 0
    %2051 = vmatmul.mubr.bf16.gmra.mxu0 %v544
    %v2052 = vpop.f32.mrf.mxu0
    %v2053 = vadd.f32 %v1507, %v2052
    %v2054 = vpop.f32.mrf.mxu0
    %v2055 = vadd.f32 %v1509, %v2054
    %v2056 = vpop.f32.mrf.mxu0
    %v2057 = vadd.f32 %v1511, %v2056
    %v2058 = vpop.f32.mrf.mxu0
    %v2059 = vadd.f32 %v1513, %v2058
    %2060 = vmatprep.mubr.bf16.mxu0 0
    %2061 = vmatmul.mubr.bf16.gmra.mxu0 %v545
    %v2062 = vpop.f32.mrf.mxu0
    %v2063 = vadd.f32 %v1517, %v2062
    %v2064 = vpop.f32.mrf.mxu0
    %v2065 = vadd.f32 %v1519, %v2064
    %v2066 = vpop.f32.mrf.mxu0
    %v2067 = vadd.f32 %v1521, %v2066
    %v2068 = vpop.f32.mrf.mxu0
    %v2069 = vadd.f32 %v1523, %v2068
    %2070 = vmatprep.mubr.bf16.mxu0 0
    %2071 = vmatmul.mubr.bf16.gmra.mxu0 %v546
    %v2072 = vpop.f32.mrf.mxu0
    %v2073 = vadd.f32 %v1527, %v2072
    %v2074 = vpop.f32.mrf.mxu0
    %v2075 = vadd.f32 %v1529, %v2074
    %v2076 = vpop.f32.mrf.mxu0
    %v2077 = vadd.f32 %v1531, %v2076
    %v2078 = vpop.f32.mrf.mxu0
    %v2079 = vadd.f32 %v1533, %v2078
    %2080 = vmatprep.mubr.bf16.mxu0 0
    %2081 = vmatmul.mubr.bf16.gmra.mxu0 %v547
    %v2082 = vpop.f32.mrf.mxu0
    %v2083 = vadd.f32 %v1537, %v2082
    %v2084 = vpop.f32.mrf.mxu0
    %v2085 = vadd.f32 %v1539, %v2084
    %v2086 = vpop.f32.mrf.mxu0
    %v2087 = vadd.f32 %v1541, %v2086
    %v2088 = vpop.f32.mrf.mxu0
    %v2089 = vadd.f32 %v1543, %v2088
    %2090 = vmatprep.mubr.bf16.mxu0 0
    %2091 = vmatmul.mubr.bf16.gmra.mxu0 %v548
    %v2092 = vpop.f32.mrf.mxu0
    %v2093 = vadd.f32 %v1547, %v2092
    %v2094 = vpop.f32.mrf.mxu0
    %v2095 = vadd.f32 %v1549, %v2094
    %v2096 = vpop.f32.mrf.mxu0
    %v2097 = vadd.f32 %v1551, %v2096
    %v2098 = vpop.f32.mrf.mxu0
    %v2099 = vadd.f32 %v1553, %v2098
    %2100 = vdwg.mxu0
    %2101 = vmatprep.subr.bf16.mxu0 %v1875
    %2102 = vmatpush1.bf16.msra.mxu0 %v1874
    %2103 = vmatprep.subr.bf16.mxu0 %v1871
    %2104 = vmatpush1.bf16.msra.mxu0 %v1870
    %2105 = vmatprep.subr.bf16.mxu0 %v1867
    %2106 = vmatpush1.bf16.msra.mxu0 %v1866
    %2107 = vmatprep.subr.bf16.mxu0 %v1863
    %2108 = vmatpush1.bf16.msra.mxu0 %v1862
    %2109 = vmatprep.subr.bf16.mxu0 %v1859
    %2110 = vmatpush1.bf16.msra.mxu0 %v1858
    %2111 = vmatprep.subr.bf16.mxu0 %v1855
    %2112 = vmatpush1.bf16.msra.mxu0 %v1854
    %2113 = vmatprep.subr.bf16.mxu0 %v1851
    %2114 = vmatpush1.bf16.msra.mxu0 %v1850
    %2115 = vmatprep.subr.bf16.mxu0 %v1847
    %2116 = vmatpush1.bf16.msra.mxu0 %v1846
    %2117 = vmatprep.subr.bf16.mxu0 0
    %2118 = vmatpush2.bf16.msra.mxu0 0
    %2119 = vmatprep.subr.bf16.mxu0 0
    %2120 = vmatpush2.bf16.msra.mxu0 0
    %2121 = vmatprep.subr.bf16.mxu0 0
    %2122 = vmatpush2.bf16.msra.mxu0 0
    %2123 = vmatprep.subr.bf16.mxu0 0
    %2124 = vmatpush2.bf16.msra.mxu0 0
    %2125 = vmatprep.subr.bf16.mxu0 0
    %2126 = vmatpush2.bf16.msra.mxu0 0
    %2127 = vmatprep.subr.bf16.mxu0 0
    %2128 = vmatpush2.bf16.msra.mxu0 0
    %2129 = vmatprep.subr.bf16.mxu0 0
    %2130 = vmatpush2.bf16.msra.mxu0 0
    %2131 = vmatprep.subr.bf16.mxu0 0
    %2132 = vmatpush2.bf16.msra.mxu0 0
    %2133 = vmatprep.mubr.bf16.mxu0 0
    %2134 = vmatmul.mubr.bf16.gmra.mxu0 %v533
    %v2135 = vpop.f32.mrf.mxu0
    %v2136 = vadd.f32 %v1590, %v2135
    %v2137 = vpop.f32.mrf.mxu0
    %v2138 = vadd.f32 %v1592, %v2137
    %v2139 = vpop.f32.mrf.mxu0
    %v2140 = vadd.f32 %v1594, %v2139
    %v2141 = vpop.f32.mrf.mxu0
    %v2142 = vadd.f32 %v1596, %v2141
    %2143 = vmatprep.mubr.bf16.mxu0 0
    %2144 = vmatmul.mubr.bf16.gmra.mxu0 %v534
    %v2145 = vpop.f32.mrf.mxu0
    %v2146 = vadd.f32 %v1600, %v2145
    %v2147 = vpop.f32.mrf.mxu0
    %v2148 = vadd.f32 %v1602, %v2147
    %v2149 = vpop.f32.mrf.mxu0
    %v2150 = vadd.f32 %v1604, %v2149
    %v2151 = vpop.f32.mrf.mxu0
    %v2152 = vadd.f32 %v1606, %v2151
    %2153 = vmatprep.mubr.bf16.mxu0 0
    %2154 = vmatmul.mubr.bf16.gmra.mxu0 %v535
    %v2155 = vpop.f32.mrf.mxu0
    %v2156 = vadd.f32 %v1610, %v2155
    %v2157 = vpop.f32.mrf.mxu0
    %v2158 = vadd.f32 %v1612, %v2157
    %v2159 = vpop.f32.mrf.mxu0
    %v2160 = vadd.f32 %v1614, %v2159
    %v2161 = vpop.f32.mrf.mxu0
    %v2162 = vadd.f32 %v1616, %v2161
    %2163 = vmatprep.mubr.bf16.mxu0 0
    %2164 = vmatmul.mubr.bf16.gmra.mxu0 %v536
    %v2165 = vpop.f32.mrf.mxu0
    %v2166 = vadd.f32 %v1620, %v2165
    %v2167 = vpop.f32.mrf.mxu0
    %v2168 = vadd.f32 %v1622, %v2167
    %v2169 = vpop.f32.mrf.mxu0
    %v2170 = vadd.f32 %v1624, %v2169
    %v2171 = vpop.f32.mrf.mxu0
    %v2172 = vadd.f32 %v1626, %v2171
    %2173 = vmatprep.mubr.bf16.mxu0 0
    %2174 = vmatmul.mubr.bf16.gmra.mxu0 %v537
    %v2175 = vpop.f32.mrf.mxu0
    %v2176 = vadd.f32 %v1630, %v2175
    %v2177 = vpop.f32.mrf.mxu0
    %v2178 = vadd.f32 %v1632, %v2177
    %v2179 = vpop.f32.mrf.mxu0
    %v2180 = vadd.f32 %v1634, %v2179
    %v2181 = vpop.f32.mrf.mxu0
    %v2182 = vadd.f32 %v1636, %v2181
    %2183 = vmatprep.mubr.bf16.mxu0 0
    %2184 = vmatmul.mubr.bf16.gmra.mxu0 %v538
    %v2185 = vpop.f32.mrf.mxu0
    %v2186 = vadd.f32 %v1640, %v2185
    %v2187 = vpop.f32.mrf.mxu0
    %v2188 = vadd.f32 %v1642, %v2187
    %v2189 = vpop.f32.mrf.mxu0
    %v2190 = vadd.f32 %v1644, %v2189
    %v2191 = vpop.f32.mrf.mxu0
    %v2192 = vadd.f32 %v1646, %v2191
    %2193 = vmatprep.mubr.bf16.mxu0 0
    %2194 = vmatmul.mubr.bf16.gmra.mxu0 %v539
    %v2195 = vpop.f32.mrf.mxu0
    %v2196 = vadd.f32 %v1650, %v2195
    %v2197 = vpop.f32.mrf.mxu0
    %v2198 = vadd.f32 %v1652, %v2197
    %v2199 = vpop.f32.mrf.mxu0
    %v2200 = vadd.f32 %v1654, %v2199
    %v2201 = vpop.f32.mrf.mxu0
    %v2202 = vadd.f32 %v1656, %v2201
    %2203 = vmatprep.mubr.bf16.mxu0 0
    %2204 = vmatmul.mubr.bf16.gmra.mxu0 %v540
    %v2205 = vpop.f32.mrf.mxu0
    %v2206 = vadd.f32 %v1660, %v2205
    %v2207 = vpop.f32.mrf.mxu0
    %v2208 = vadd.f32 %v1662, %v2207
    %v2209 = vpop.f32.mrf.mxu0
    %v2210 = vadd.f32 %v1664, %v2209
    %v2211 = vpop.f32.mrf.mxu0
    %v2212 = vadd.f32 %v1666, %v2211
    %2213 = vmatprep.mubr.bf16.mxu0 0
    %2214 = vmatmul.mubr.bf16.gmra.mxu0 %v541
    %v2215 = vpop.f32.mrf.mxu0
    %v2216 = vadd.f32 %v1670, %v2215
    %v2217 = vpop.f32.mrf.mxu0
    %v2218 = vadd.f32 %v1672, %v2217
    %v2219 = vpop.f32.mrf.mxu0
    %v2220 = vadd.f32 %v1674, %v2219
    %v2221 = vpop.f32.mrf.mxu0
    %v2222 = vadd.f32 %v1676, %v2221
    %2223 = vmatprep.mubr.bf16.mxu0 0
    %2224 = vmatmul.mubr.bf16.gmra.mxu0 %v542
    %v2225 = vpop.f32.mrf.mxu0
    %v2226 = vadd.f32 %v1680, %v2225
    %v2227 = vpop.f32.mrf.mxu0
    %v2228 = vadd.f32 %v1682, %v2227
    %v2229 = vpop.f32.mrf.mxu0
    %v2230 = vadd.f32 %v1684, %v2229
    %v2231 = vpop.f32.mrf.mxu0
    %v2232 = vadd.f32 %v1686, %v2231
    %2233 = vmatprep.mubr.bf16.mxu0 0
    %2234 = vmatmul.mubr.bf16.gmra.mxu0 %v543
    %v2235 = vpop.f32.mrf.mxu0
    %v2236 = vadd.f32 %v1690, %v2235
    %v2237 = vpop.f32.mrf.mxu0
    %v2238 = vadd.f32 %v1692, %v2237
    %v2239 = vpop.f32.mrf.mxu0
    %v2240 = vadd.f32 %v1694, %v2239
    %v2241 = vpop.f32.mrf.mxu0
    %v2242 = vadd.f32 %v1696, %v2241
    %2243 = vmatprep.mubr.bf16.mxu0 0
    %2244 = vmatmul.mubr.bf16.gmra.mxu0 %v544
    %v2245 = vpop.f32.mrf.mxu0
    %v2246 = vadd.f32 %v1700, %v2245
    %v2247 = vpop.f32.mrf.mxu0
    %v2248 = vadd.f32 %v1702, %v2247
    %v2249 = vpop.f32.mrf.mxu0
    %v2250 = vadd.f32 %v1704, %v2249
    %v2251 = vpop.f32.mrf.mxu0
    %v2252 = vadd.f32 %v1706, %v2251
    %2253 = vmatprep.mubr.bf16.mxu0 0
    %2254 = vmatmul.mubr.bf16.gmra.mxu0 %v545
    %v2255 = vpop.f32.mrf.mxu0
    %v2256 = vadd.f32 %v1710, %v2255
    %v2257 = vpop.f32.mrf.mxu0
    %v2258 = vadd.f32 %v1712, %v2257
    %v2259 = vpop.f32.mrf.mxu0
    %v2260 = vadd.f32 %v1714, %v2259
    %v2261 = vpop.f32.mrf.mxu0
    %v2262 = vadd.f32 %v1716, %v2261
    %2263 = vmatprep.mubr.bf16.mxu0 0
    %2264 = vmatmul.mubr.bf16.gmra.mxu0 %v546
    %v2265 = vpop.f32.mrf.mxu0
    %v2266 = vadd.f32 %v1720, %v2265
    %v2267 = vpop.f32.mrf.mxu0
    %v2268 = vadd.f32 %v1722, %v2267
    %v2269 = vpop.f32.mrf.mxu0
    %v2270 = vadd.f32 %v1724, %v2269
    %v2271 = vpop.f32.mrf.mxu0
    %v2272 = vadd.f32 %v1726, %v2271
    %2273 = vmatprep.mubr.bf16.mxu0 0
    %2274 = vmatmul.mubr.bf16.gmra.mxu0 %v547
    %v2275 = vpop.f32.mrf.mxu0
    %v2276 = vadd.f32 %v1730, %v2275
    %v2277 = vpop.f32.mrf.mxu0
    %v2278 = vadd.f32 %v1732, %v2277
    %v2279 = vpop.f32.mrf.mxu0
    %v2280 = vadd.f32 %v1734, %v2279
    %v2281 = vpop.f32.mrf.mxu0
    %v2282 = vadd.f32 %v1736, %v2281
    %2283 = vmatprep.mubr.bf16.mxu0 0
    %2284 = vmatmul.mubr.bf16.gmra.mxu0 %v548
    %v2285 = vpop.f32.mrf.mxu0
    %v2286 = vadd.f32 %v1740, %v2285
    %v2287 = vpop.f32.mrf.mxu0
    %v2288 = vadd.f32 %v1742, %v2287
    %v2289 = vpop.f32.mrf.mxu0
    %v2290 = vadd.f32 %v1744, %v2289
    %v2291 = vpop.f32.mrf.mxu0
    %v2292 = vadd.f32 %v1746, %v2291
    %2293 = vdwg.mxu0
    %s2294 = scalar_lea.vmem [#allocation14], 1
    %v2295 = vld [vmem:[%s2294] ss:$8 sm:$0xf]
    %v2297 = vlaneseq
    %v2298 = vshrl.u32 %v2297, 7
    %v2299 = vsub.s32 0, %v2298
    %v2300 = vrot.slane %v2295, %v2299
    %v2301 = vlaneseq
    %v2302 = vshrl.u32 %v2301, 7
    %v2303 = vsub.s32 1, %v2302
    %v2304 = vrot.slane %v2295, %v2303
    %v2305 = vlaneseq
    %v2306 = vshrl.u32 %v2305, 7
    %v2307 = vsub.s32 2, %v2306
    %v2308 = vrot.slane %v2295, %v2307
    %v2309 = vlaneseq
    %v2310 = vshrl.u32 %v2309, 7
    %v2311 = vsub.s32 3, %v2310
    %v2312 = vrot.slane %v2295, %v2311
    %v2317 = vadd.f32 %v1943, %v2300
    %v2318 = vadd.f32 %v1945, %v2304
    %v2319 = vadd.f32 %v2136, %v2308
    %v2320 = vadd.f32 %v2138, %v2312
    %v2321 = vadd.f32 %v1947, %v2300
    %v2322 = vadd.f32 %v1949, %v2304
    %v2323 = vadd.f32 %v2140, %v2308
    %v2324 = vadd.f32 %v2142, %v2312
    %v2325 = vadd.f32 %v1953, %v2300
    %v2326 = vadd.f32 %v1955, %v2304
    %v2327 = vadd.f32 %v2146, %v2308
    %v2328 = vadd.f32 %v2148, %v2312
    %v2329 = vadd.f32 %v1957, %v2300
    %v2330 = vadd.f32 %v1959, %v2304
    %v2331 = vadd.f32 %v2150, %v2308
    %v2332 = vadd.f32 %v2152, %v2312
    %v2333 = vadd.f32 %v1963, %v2300
    %v2334 = vadd.f32 %v1965, %v2304
    %v2335 = vadd.f32 %v2156, %v2308
    %v2336 = vadd.f32 %v2158, %v2312
    %v2337 = vadd.f32 %v1967, %v2300
    %v2338 = vadd.f32 %v1969, %v2304
    %v2339 = vadd.f32 %v2160, %v2308
    %v2340 = vadd.f32 %v2162, %v2312
    %v2341 = vadd.f32 %v1973, %v2300
    %v2342 = vadd.f32 %v1975, %v2304
    %v2343 = vadd.f32 %v2166, %v2308
    %v2344 = vadd.f32 %v2168, %v2312
    %v2345 = vadd.f32 %v1977, %v2300
    %v2346 = vadd.f32 %v1979, %v2304
    %v2347 = vadd.f32 %v2170, %v2308
    %v2348 = vadd.f32 %v2172, %v2312
    %v2349 = vadd.f32 %v1983, %v2300
    %v2350 = vadd.f32 %v1985, %v2304
    %v2351 = vadd.f32 %v2176, %v2308
    %v2352 = vadd.f32 %v2178, %v2312
    %v2353 = vadd.f32 %v1987, %v2300
    %v2354 = vadd.f32 %v1989, %v2304
    %v2355 = vadd.f32 %v2180, %v2308
    %v2356 = vadd.f32 %v2182, %v2312
    %v2357 = vadd.f32 %v1993, %v2300
    %v2358 = vadd.f32 %v1995, %v2304
    %v2359 = vadd.f32 %v2186, %v2308
    %v2360 = vadd.f32 %v2188, %v2312
    %v2361 = vadd.f32 %v1997, %v2300
    %v2362 = vadd.f32 %v1999, %v2304
    %v2363 = vadd.f32 %v2190, %v2308
    %v2364 = vadd.f32 %v2192, %v2312
    %v2365 = vadd.f32 %v2003, %v2300
    %v2366 = vadd.f32 %v2005, %v2304
    %v2367 = vadd.f32 %v2196, %v2308
    %v2368 = vadd.f32 %v2198, %v2312
    %v2369 = vadd.f32 %v2007, %v2300
    %v2370 = vadd.f32 %v2009, %v2304
    %v2371 = vadd.f32 %v2200, %v2308
    %v2372 = vadd.f32 %v2202, %v2312
    %v2373 = vadd.f32 %v2013, %v2300
    %v2374 = vadd.f32 %v2015, %v2304
    %v2375 = vadd.f32 %v2206, %v2308
    %v2376 = vadd.f32 %v2208, %v2312
    %v2377 = vadd.f32 %v2017, %v2300
    %v2378 = vadd.f32 %v2019, %v2304
    %v2379 = vadd.f32 %v2210, %v2308
    %v2380 = vadd.f32 %v2212, %v2312
    %v2381 = vadd.f32 %v2023, %v2300
    %v2382 = vadd.f32 %v2025, %v2304
    %v2383 = vadd.f32 %v2216, %v2308
    %v2384 = vadd.f32 %v2218, %v2312
    %v2385 = vadd.f32 %v2027, %v2300
    %v2386 = vadd.f32 %v2029, %v2304
    %v2387 = vadd.f32 %v2220, %v2308
    %v2388 = vadd.f32 %v2222, %v2312
    %v2389 = vadd.f32 %v2033, %v2300
    %v2390 = vadd.f32 %v2035, %v2304
    %v2391 = vadd.f32 %v2226, %v2308
    %v2392 = vadd.f32 %v2228, %v2312
    %v2393 = vadd.f32 %v2037, %v2300
    %v2394 = vadd.f32 %v2039, %v2304
    %v2395 = vadd.f32 %v2230, %v2308
    %v2396 = vadd.f32 %v2232, %v2312
    %v2397 = vadd.f32 %v2043, %v2300
    %v2398 = vadd.f32 %v2045, %v2304
    %v2399 = vadd.f32 %v2236, %v2308
    %v2400 = vadd.f32 %v2238, %v2312
    %v2401 = vadd.f32 %v2047, %v2300
    %v2402 = vadd.f32 %v2049, %v2304
    %v2403 = vadd.f32 %v2240, %v2308
    %v2404 = vadd.f32 %v2242, %v2312
    %v2405 = vadd.f32 %v2053, %v2300
    %v2406 = vadd.f32 %v2055, %v2304
    %v2407 = vadd.f32 %v2246, %v2308
    %v2408 = vadd.f32 %v2248, %v2312
    %v2409 = vadd.f32 %v2057, %v2300
    %v2410 = vadd.f32 %v2059, %v2304
    %v2411 = vadd.f32 %v2250, %v2308
    %v2412 = vadd.f32 %v2252, %v2312
    %v2413 = vadd.f32 %v2063, %v2300
    %v2414 = vadd.f32 %v2065, %v2304
    %v2415 = vadd.f32 %v2256, %v2308
    %v2416 = vadd.f32 %v2258, %v2312
    %v2417 = vadd.f32 %v2067, %v2300
    %v2418 = vadd.f32 %v2069, %v2304
    %v2419 = vadd.f32 %v2260, %v2308
    %v2420 = vadd.f32 %v2262, %v2312
    %v2421 = vadd.f32 %v2073, %v2300
    %v2422 = vadd.f32 %v2075, %v2304
    %v2423 = vadd.f32 %v2266, %v2308
    %v2424 = vadd.f32 %v2268, %v2312
    %v2425 = vadd.f32 %v2077, %v2300
    %v2426 = vadd.f32 %v2079, %v2304
    %v2427 = vadd.f32 %v2270, %v2308
    %v2428 = vadd.f32 %v2272, %v2312
    %v2429 = vadd.f32 %v2083, %v2300
    %v2430 = vadd.f32 %v2085, %v2304
    %v2431 = vadd.f32 %v2276, %v2308
    %v2432 = vadd.f32 %v2278, %v2312
    %v2433 = vadd.f32 %v2087, %v2300
    %v2434 = vadd.f32 %v2089, %v2304
    %v2435 = vadd.f32 %v2280, %v2308
    %v2436 = vadd.f32 %v2282, %v2312
    %v2437 = vadd.f32 %v2093, %v2300
    %v2438 = vadd.f32 %v2095, %v2304
    %v2439 = vadd.f32 %v2286, %v2308
    %v2440 = vadd.f32 %v2288, %v2312
    %v2441 = vadd.f32 %v2097, %v2300
    %v2442 = vadd.f32 %v2099, %v2304
    %v2443 = vadd.f32 %v2290, %v2308
    %v2444 = vadd.f32 %v2292, %v2312
    %v2445 = vmax.f32 %v2317, 0.0
    %v2446 = vmax.f32 %v2318, 0.0
    %v2447 = vmax.f32 %v2319, 0.0
    %v2448 = vmax.f32 %v2320, 0.0
    %v2449 = vmax.f32 %v2321, 0.0
    %v2450 = vmax.f32 %v2322, 0.0
    %v2451 = vmax.f32 %v2323, 0.0
    %v2452 = vmax.f32 %v2324, 0.0
    %v2453 = vmax.f32 %v2325, 0.0
    %v2454 = vmax.f32 %v2326, 0.0
    %v2455 = vmax.f32 %v2327, 0.0
    %v2456 = vmax.f32 %v2328, 0.0
    %v2457 = vmax.f32 %v2329, 0.0
    %v2458 = vmax.f32 %v2330, 0.0
    %v2459 = vmax.f32 %v2331, 0.0
    %v2460 = vmax.f32 %v2332, 0.0
    %v2461 = vmax.f32 %v2333, 0.0
    %v2462 = vmax.f32 %v2334, 0.0
    %v2463 = vmax.f32 %v2335, 0.0
    %v2464 = vmax.f32 %v2336, 0.0
    %v2465 = vmax.f32 %v2337, 0.0
    %v2466 = vmax.f32 %v2338, 0.0
    %v2467 = vmax.f32 %v2339, 0.0
    %v2468 = vmax.f32 %v2340, 0.0
    %v2469 = vmax.f32 %v2341, 0.0
    %v2470 = vmax.f32 %v2342, 0.0
    %v2471 = vmax.f32 %v2343, 0.0
    %v2472 = vmax.f32 %v2344, 0.0
    %v2473 = vmax.f32 %v2345, 0.0
    %v2474 = vmax.f32 %v2346, 0.0
    %v2475 = vmax.f32 %v2347, 0.0
    %v2476 = vmax.f32 %v2348, 0.0
    %v2477 = vmax.f32 %v2349, 0.0
    %v2478 = vmax.f32 %v2350, 0.0
    %v2479 = vmax.f32 %v2351, 0.0
    %v2480 = vmax.f32 %v2352, 0.0
    %v2481 = vmax.f32 %v2353, 0.0
    %v2482 = vmax.f32 %v2354, 0.0
    %v2483 = vmax.f32 %v2355, 0.0
    %v2484 = vmax.f32 %v2356, 0.0
    %v2485 = vmax.f32 %v2357, 0.0
    %v2486 = vmax.f32 %v2358, 0.0
    %v2487 = vmax.f32 %v2359, 0.0
    %v2488 = vmax.f32 %v2360, 0.0
    %v2489 = vmax.f32 %v2361, 0.0
    %v2490 = vmax.f32 %v2362, 0.0
    %v2491 = vmax.f32 %v2363, 0.0
    %v2492 = vmax.f32 %v2364, 0.0
    %v2493 = vmax.f32 %v2365, 0.0
    %v2494 = vmax.f32 %v2366, 0.0
    %v2495 = vmax.f32 %v2367, 0.0
    %v2496 = vmax.f32 %v2368, 0.0
    %v2497 = vmax.f32 %v2369, 0.0
    %v2498 = vmax.f32 %v2370, 0.0
    %v2499 = vmax.f32 %v2371, 0.0
    %v2500 = vmax.f32 %v2372, 0.0
    %v2501 = vmax.f32 %v2373, 0.0
    %v2502 = vmax.f32 %v2374, 0.0
    %v2503 = vmax.f32 %v2375, 0.0
    %v2504 = vmax.f32 %v2376, 0.0
    %v2505 = vmax.f32 %v2377, 0.0
    %v2506 = vmax.f32 %v2378, 0.0
    %v2507 = vmax.f32 %v2379, 0.0
    %v2508 = vmax.f32 %v2380, 0.0
    %v2509 = vmax.f32 %v2381, 0.0
    %v2510 = vmax.f32 %v2382, 0.0
    %v2511 = vmax.f32 %v2383, 0.0
    %v2512 = vmax.f32 %v2384, 0.0
    %v2513 = vmax.f32 %v2385, 0.0
    %v2514 = vmax.f32 %v2386, 0.0
    %v2515 = vmax.f32 %v2387, 0.0
    %v2516 = vmax.f32 %v2388, 0.0
    %v2517 = vmax.f32 %v2389, 0.0
    %v2518 = vmax.f32 %v2390, 0.0
    %v2519 = vmax.f32 %v2391, 0.0
    %v2520 = vmax.f32 %v2392, 0.0
    %v2521 = vmax.f32 %v2393, 0.0
    %v2522 = vmax.f32 %v2394, 0.0
    %v2523 = vmax.f32 %v2395, 0.0
    %v2524 = vmax.f32 %v2396, 0.0
    %v2525 = vmax.f32 %v2397, 0.0
    %v2526 = vmax.f32 %v2398, 0.0
    %v2527 = vmax.f32 %v2399, 0.0
    %v2528 = vmax.f32 %v2400, 0.0
    %v2529 = vmax.f32 %v2401, 0.0
    %v2530 = vmax.f32 %v2402, 0.0
    %v2531 = vmax.f32 %v2403, 0.0
    %v2532 = vmax.f32 %v2404, 0.0
    %v2533 = vmax.f32 %v2405, 0.0
    %v2534 = vmax.f32 %v2406, 0.0
    %v2535 = vmax.f32 %v2407, 0.0
    %v2536 = vmax.f32 %v2408, 0.0
    %v2537 = vmax.f32 %v2409, 0.0
    %v2538 = vmax.f32 %v2410, 0.0
    %v2539 = vmax.f32 %v2411, 0.0
    %v2540 = vmax.f32 %v2412, 0.0
    %v2541 = vmax.f32 %v2413, 0.0
    %v2542 = vmax.f32 %v2414, 0.0
    %v2543 = vmax.f32 %v2415, 0.0
    %v2544 = vmax.f32 %v2416, 0.0
    %v2545 = vmax.f32 %v2417, 0.0
    %v2546 = vmax.f32 %v2418, 0.0
    %v2547 = vmax.f32 %v2419, 0.0
    %v2548 = vmax.f32 %v2420, 0.0
    %v2549 = vmax.f32 %v2421, 0.0
    %v2550 = vmax.f32 %v2422, 0.0
    %v2551 = vmax.f32 %v2423, 0.0
    %v2552 = vmax.f32 %v2424, 0.0
    %v2553 = vmax.f32 %v2425, 0.0
    %v2554 = vmax.f32 %v2426, 0.0
    %v2555 = vmax.f32 %v2427, 0.0
    %v2556 = vmax.f32 %v2428, 0.0
    %v2557 = vmax.f32 %v2429, 0.0
    %v2558 = vmax.f32 %v2430, 0.0
    %v2559 = vmax.f32 %v2431, 0.0
    %v2560 = vmax.f32 %v2432, 0.0
    %v2561 = vmax.f32 %v2433, 0.0
    %v2562 = vmax.f32 %v2434, 0.0
    %v2563 = vmax.f32 %v2435, 0.0
    %v2564 = vmax.f32 %v2436, 0.0
    %v2565 = vmax.f32 %v2437, 0.0
    %v2566 = vmax.f32 %v2438, 0.0
    %v2567 = vmax.f32 %v2439, 0.0
    %v2568 = vmax.f32 %v2440, 0.0
    %v2569 = vmax.f32 %v2441, 0.0
    %v2570 = vmax.f32 %v2442, 0.0
    %v2571 = vmax.f32 %v2443, 0.0
    %v2572 = vmax.f32 %v2444, 0.0
    %v2573 = vpack.c.bf16 %v2449, %v2445
    %v2574 = vpack.c.bf16 %v2450, %v2446
    %v2575 = vpack.c.bf16 %v2451, %v2447
    %v2576 = vpack.c.bf16 %v2452, %v2448
    %v2577 = vpack.c.bf16 %v2457, %v2453
    %v2578 = vpack.c.bf16 %v2458, %v2454
    %v2579 = vpack.c.bf16 %v2459, %v2455
    %v2580 = vpack.c.bf16 %v2460, %v2456
    %v2581 = vpack.c.bf16 %v2465, %v2461
    %v2582 = vpack.c.bf16 %v2466, %v2462
    %v2583 = vpack.c.bf16 %v2467, %v2463
    %v2584 = vpack.c.bf16 %v2468, %v2464
    %v2585 = vpack.c.bf16 %v2473, %v2469
    %v2586 = vpack.c.bf16 %v2474, %v2470
    %v2587 = vpack.c.bf16 %v2475, %v2471
    %v2588 = vpack.c.bf16 %v2476, %v2472
    %v2589 = vpack.c.bf16 %v2481, %v2477
    %v2590 = vpack.c.bf16 %v2482, %v2478
    %v2591 = vpack.c.bf16 %v2483, %v2479
    %v2592 = vpack.c.bf16 %v2484, %v2480
    %v2593 = vpack.c.bf16 %v2489, %v2485
    %v2594 = vpack.c.bf16 %v2490, %v2486
    %v2595 = vpack.c.bf16 %v2491, %v2487
    %v2596 = vpack.c.bf16 %v2492, %v2488
    %v2597 = vpack.c.bf16 %v2497, %v2493
    %v2598 = vpack.c.bf16 %v2498, %v2494
    %v2599 = vpack.c.bf16 %v2499, %v2495
    %v2600 = vpack.c.bf16 %v2500, %v2496
    %v2601 = vpack.c.bf16 %v2505, %v2501
    %v2602 = vpack.c.bf16 %v2506, %v2502
    %v2603 = vpack.c.bf16 %v2507, %v2503
    %v2604 = vpack.c.bf16 %v2508, %v2504
    %v2605 = vpack.c.bf16 %v2513, %v2509
    %v2606 = vpack.c.bf16 %v2514, %v2510
    %v2607 = vpack.c.bf16 %v2515, %v2511
    %v2608 = vpack.c.bf16 %v2516, %v2512
    %v2609 = vpack.c.bf16 %v2521, %v2517
    %v2610 = vpack.c.bf16 %v2522, %v2518
    %v2611 = vpack.c.bf16 %v2523, %v2519
    %v2612 = vpack.c.bf16 %v2524, %v2520
    %v2613 = vpack.c.bf16 %v2529, %v2525
    %v2614 = vpack.c.bf16 %v2530, %v2526
    %v2615 = vpack.c.bf16 %v2531, %v2527
    %v2616 = vpack.c.bf16 %v2532, %v2528
    %v2617 = vpack.c.bf16 %v2537, %v2533
    %v2618 = vpack.c.bf16 %v2538, %v2534
    %v2619 = vpack.c.bf16 %v2539, %v2535
    %v2620 = vpack.c.bf16 %v2540, %v2536
    %v2621 = vpack.c.bf16 %v2545, %v2541
    %v2622 = vpack.c.bf16 %v2546, %v2542
    %v2623 = vpack.c.bf16 %v2547, %v2543
    %v2624 = vpack.c.bf16 %v2548, %v2544
    %v2625 = vpack.c.bf16 %v2553, %v2549
    %v2626 = vpack.c.bf16 %v2554, %v2550
    %v2627 = vpack.c.bf16 %v2555, %v2551
    %v2628 = vpack.c.bf16 %v2556, %v2552
    %v2629 = vpack.c.bf16 %v2561, %v2557
    %v2630 = vpack.c.bf16 %v2562, %v2558
    %v2631 = vpack.c.bf16 %v2563, %v2559
    %v2632 = vpack.c.bf16 %v2564, %v2560
    %v2633 = vpack.c.bf16 %v2569, %v2565
    %v2634 = vpack.c.bf16 %v2570, %v2566
    %v2635 = vpack.c.bf16 %v2571, %v2567
    %v2636 = vpack.c.bf16 %v2572, %v2568
    %s2637 = smul.u32 4, 64
    %s2638 = smul.u32 %s2637, 8
    %s2639 = sshll.u32 %s2638, 4
    %2640 = dma.done [#allocation5], %s2639
    %v2641 = vld [vmem:[#allocation2] sm:$0xff]
    %v2642 = vld [vmem:[#allocation2 + $0x8] sm:$0xff]
    %v2643 = vld [vmem:[#allocation2 + $0x10] sm:$0xff]
    %v2644 = vld [vmem:[#allocation2 + $0x18] sm:$0xff]
    %v2645 = vld [vmem:[#allocation2 + $0x20] sm:$0xff]
    %v2646 = vld [vmem:[#allocation2 + $0x28] sm:$0xff]
    %v2647 = vld [vmem:[#allocation2 + $0x30] sm:$0xff]
    %v2648 = vld [vmem:[#allocation2 + $0x38] sm:$0xff]
    %v2649 = vld [vmem:[#allocation2 + $0x40] sm:$0xff]
    %v2650 = vld [vmem:[#allocation2 + $0x48] sm:$0xff]
    %v2651 = vld [vmem:[#allocation2 + $0x50] sm:$0xff]
    %v2652 = vld [vmem:[#allocation2 + $0x58] sm:$0xff]
    %v2653 = vld [vmem:[#allocation2 + $0x60] sm:$0xff]
    %v2654 = vld [vmem:[#allocation2 + $0x68] sm:$0xff]
    %v2655 = vld [vmem:[#allocation2 + $0x70] sm:$0xff]
    %v2656 = vld [vmem:[#allocation2 + $0x78] sm:$0xff]
    %v2657 = vld [vmem:[#allocation2 + $0x80] sm:$0xff]
    %v2658 = vld [vmem:[#allocation2 + $0x88] sm:$0xff]
    %v2659 = vld [vmem:[#allocation2 + $0x90] sm:$0xff]
    %v2660 = vld [vmem:[#allocation2 + $0x98] sm:$0xff]
    %v2661 = vld [vmem:[#allocation2 + $0xa0] sm:$0xff]
    %v2662 = vld [vmem:[#allocation2 + $0xa8] sm:$0xff]
    %v2663 = vld [vmem:[#allocation2 + $0xb0] sm:$0xff]
    %v2664 = vld [vmem:[#allocation2 + $0xb8] sm:$0xff]
    %v2665 = vld [vmem:[#allocation2 + $0xc0] sm:$0xff]
    %v2666 = vld [vmem:[#allocation2 + $0xc8] sm:$0xff]
    %v2667 = vld [vmem:[#allocation2 + $0xd0] sm:$0xff]
    %v2668 = vld [vmem:[#allocation2 + $0xd8] sm:$0xff]
    %v2669 = vld [vmem:[#allocation2 + $0xe0] sm:$0xff]
    %v2670 = vld [vmem:[#allocation2 + $0xe8] sm:$0xff]
    %v2671 = vld [vmem:[#allocation2 + $0xf0] sm:$0xff]
    %v2672 = vld [vmem:[#allocation2 + $0xf8] sm:$0xff]
    %v2673 = vld [vmem:[#allocation2 + $0x100] sm:$0xff]
    %v2674 = vld [vmem:[#allocation2 + $0x108] sm:$0xff]
    %v2675 = vld [vmem:[#allocation2 + $0x110] sm:$0xff]
    %v2676 = vld [vmem:[#allocation2 + $0x118] sm:$0xff]
    %v2677 = vld [vmem:[#allocation2 + $0x120] sm:$0xff]
    %v2678 = vld [vmem:[#allocation2 + $0x128] sm:$0xff]
    %v2679 = vld [vmem:[#allocation2 + $0x130] sm:$0xff]
    %v2680 = vld [vmem:[#allocation2 + $0x138] sm:$0xff]
    %v2681 = vld [vmem:[#allocation2 + $0x140] sm:$0xff]
    %v2682 = vld [vmem:[#allocation2 + $0x148] sm:$0xff]
    %v2683 = vld [vmem:[#allocation2 + $0x150] sm:$0xff]
    %v2684 = vld [vmem:[#allocation2 + $0x158] sm:$0xff]
    %v2685 = vld [vmem:[#allocation2 + $0x160] sm:$0xff]
    %v2686 = vld [vmem:[#allocation2 + $0x168] sm:$0xff]
    %v2687 = vld [vmem:[#allocation2 + $0x170] sm:$0xff]
    %v2688 = vld [vmem:[#allocation2 + $0x178] sm:$0xff]
    %v2689 = vld [vmem:[#allocation2 + $0x180] sm:$0xff]
    %v2690 = vld [vmem:[#allocation2 + $0x188] sm:$0xff]
    %v2691 = vld [vmem:[#allocation2 + $0x190] sm:$0xff]
    %v2692 = vld [vmem:[#allocation2 + $0x198] sm:$0xff]
    %v2693 = vld [vmem:[#allocation2 + $0x1a0] sm:$0xff]
    %v2694 = vld [vmem:[#allocation2 + $0x1a8] sm:$0xff]
    %v2695 = vld [vmem:[#allocation2 + $0x1b0] sm:$0xff]
    %v2696 = vld [vmem:[#allocation2 + $0x1b8] sm:$0xff]
    %v2697 = vld [vmem:[#allocation2 + $0x1c0] sm:$0xff]
    %v2698 = vld [vmem:[#allocation2 + $0x1c8] sm:$0xff]
    %v2699 = vld [vmem:[#allocation2 + $0x1d0] sm:$0xff]
    %v2700 = vld [vmem:[#allocation2 + $0x1d8] sm:$0xff]
    %v2701 = vld [vmem:[#allocation2 + $0x1e0] sm:$0xff]
    %v2702 = vld [vmem:[#allocation2 + $0x1e8] sm:$0xff]
    %v2703 = vld [vmem:[#allocation2 + $0x1f0] sm:$0xff]
    %v2704 = vld [vmem:[#allocation2 + $0x1f8] sm:$0xff]
    %v2705 = vld [vmem:[#allocation2 + $0x200] sm:$0xff]
    %v2706 = vld [vmem:[#allocation2 + $0x208] sm:$0xff]
    %v2707 = vld [vmem:[#allocation2 + $0x210] sm:$0xff]
    %v2708 = vld [vmem:[#allocation2 + $0x218] sm:$0xff]
    %v2709 = vld [vmem:[#allocation2 + $0x220] sm:$0xff]
    %v2710 = vld [vmem:[#allocation2 + $0x228] sm:$0xff]
    %v2711 = vld [vmem:[#allocation2 + $0x230] sm:$0xff]
    %v2712 = vld [vmem:[#allocation2 + $0x238] sm:$0xff]
    %v2713 = vld [vmem:[#allocation2 + $0x240] sm:$0xff]
    %v2714 = vld [vmem:[#allocation2 + $0x248] sm:$0xff]
    %v2715 = vld [vmem:[#allocation2 + $0x250] sm:$0xff]
    %v2716 = vld [vmem:[#allocation2 + $0x258] sm:$0xff]
    %v2717 = vld [vmem:[#allocation2 + $0x260] sm:$0xff]
    %v2718 = vld [vmem:[#allocation2 + $0x268] sm:$0xff]
    %v2719 = vld [vmem:[#allocation2 + $0x270] sm:$0xff]
    %v2720 = vld [vmem:[#allocation2 + $0x278] sm:$0xff]
    %v2721 = vld [vmem:[#allocation2 + $0x280] sm:$0xff]
    %v2722 = vld [vmem:[#allocation2 + $0x288] sm:$0xff]
    %v2723 = vld [vmem:[#allocation2 + $0x290] sm:$0xff]
    %v2724 = vld [vmem:[#allocation2 + $0x298] sm:$0xff]
    %v2725 = vld [vmem:[#allocation2 + $0x2a0] sm:$0xff]
    %v2726 = vld [vmem:[#allocation2 + $0x2a8] sm:$0xff]
    %v2727 = vld [vmem:[#allocation2 + $0x2b0] sm:$0xff]
    %v2728 = vld [vmem:[#allocation2 + $0x2b8] sm:$0xff]
    %v2729 = vld [vmem:[#allocation2 + $0x2c0] sm:$0xff]
    %v2730 = vld [vmem:[#allocation2 + $0x2c8] sm:$0xff]
    %v2731 = vld [vmem:[#allocation2 + $0x2d0] sm:$0xff]
    %v2732 = vld [vmem:[#allocation2 + $0x2d8] sm:$0xff]
    %v2733 = vld [vmem:[#allocation2 + $0x2e0] sm:$0xff]
    %v2734 = vld [vmem:[#allocation2 + $0x2e8] sm:$0xff]
    %v2735 = vld [vmem:[#allocation2 + $0x2f0] sm:$0xff]
    %v2736 = vld [vmem:[#allocation2 + $0x2f8] sm:$0xff]
    %v2737 = vld [vmem:[#allocation2 + $0x300] sm:$0xff]
    %v2738 = vld [vmem:[#allocation2 + $0x308] sm:$0xff]
    %v2739 = vld [vmem:[#allocation2 + $0x310] sm:$0xff]
    %v2740 = vld [vmem:[#allocation2 + $0x318] sm:$0xff]
    %v2741 = vld [vmem:[#allocation2 + $0x320] sm:$0xff]
    %v2742 = vld [vmem:[#allocation2 + $0x328] sm:$0xff]
    %v2743 = vld [vmem:[#allocation2 + $0x330] sm:$0xff]
    %v2744 = vld [vmem:[#allocation2 + $0x338] sm:$0xff]
    %v2745 = vld [vmem:[#allocation2 + $0x340] sm:$0xff]
    %v2746 = vld [vmem:[#allocation2 + $0x348] sm:$0xff]
    %v2747 = vld [vmem:[#allocation2 + $0x350] sm:$0xff]
    %v2748 = vld [vmem:[#allocation2 + $0x358] sm:$0xff]
    %v2749 = vld [vmem:[#allocation2 + $0x360] sm:$0xff]
    %v2750 = vld [vmem:[#allocation2 + $0x368] sm:$0xff]
    %v2751 = vld [vmem:[#allocation2 + $0x370] sm:$0xff]
    %v2752 = vld [vmem:[#allocation2 + $0x378] sm:$0xff]
    %v2753 = vld [vmem:[#allocation2 + $0x380] sm:$0xff]
    %v2754 = vld [vmem:[#allocation2 + $0x388] sm:$0xff]
    %v2755 = vld [vmem:[#allocation2 + $0x390] sm:$0xff]
    %v2756 = vld [vmem:[#allocation2 + $0x398] sm:$0xff]
    %v2757 = vld [vmem:[#allocation2 + $0x3a0] sm:$0xff]
    %v2758 = vld [vmem:[#allocation2 + $0x3a8] sm:$0xff]
    %v2759 = vld [vmem:[#allocation2 + $0x3b0] sm:$0xff]
    %v2760 = vld [vmem:[#allocation2 + $0x3b8] sm:$0xff]
    %v2761 = vld [vmem:[#allocation2 + $0x3c0] sm:$0xff]
    %v2762 = vld [vmem:[#allocation2 + $0x3c8] sm:$0xff]
    %v2763 = vld [vmem:[#allocation2 + $0x3d0] sm:$0xff]
    %v2764 = vld [vmem:[#allocation2 + $0x3d8] sm:$0xff]
    %v2765 = vld [vmem:[#allocation2 + $0x3e0] sm:$0xff]
    %v2766 = vld [vmem:[#allocation2 + $0x3e8] sm:$0xff]
    %v2767 = vld [vmem:[#allocation2 + $0x3f0] sm:$0xff]
    %v2768 = vld [vmem:[#allocation2 + $0x3f8] sm:$0xff]
    %v2769 = vld [vmem:[#allocation2 + $0x400] sm:$0xff]
    %v2770 = vld [vmem:[#allocation2 + $0x408] sm:$0xff]
    %v2771 = vld [vmem:[#allocation2 + $0x410] sm:$0xff]
    %v2772 = vld [vmem:[#allocation2 + $0x418] sm:$0xff]
    %v2773 = vld [vmem:[#allocation2 + $0x420] sm:$0xff]
    %v2774 = vld [vmem:[#allocation2 + $0x428] sm:$0xff]
    %v2775 = vld [vmem:[#allocation2 + $0x430] sm:$0xff]
    %v2776 = vld [vmem:[#allocation2 + $0x438] sm:$0xff]
    %v2777 = vld [vmem:[#allocation2 + $0x440] sm:$0xff]
    %v2778 = vld [vmem:[#allocation2 + $0x448] sm:$0xff]
    %v2779 = vld [vmem:[#allocation2 + $0x450] sm:$0xff]
    %v2780 = vld [vmem:[#allocation2 + $0x458] sm:$0xff]
    %v2781 = vld [vmem:[#allocation2 + $0x460] sm:$0xff]
    %v2782 = vld [vmem:[#allocation2 + $0x468] sm:$0xff]
    %v2783 = vld [vmem:[#allocation2 + $0x470] sm:$0xff]
    %v2784 = vld [vmem:[#allocation2 + $0x478] sm:$0xff]
    %v2785 = vld [vmem:[#allocation2 + $0x480] sm:$0xff]
    %v2786 = vld [vmem:[#allocation2 + $0x488] sm:$0xff]
    %v2787 = vld [vmem:[#allocation2 + $0x490] sm:$0xff]
    %v2788 = vld [vmem:[#allocation2 + $0x498] sm:$0xff]
    %v2789 = vld [vmem:[#allocation2 + $0x4a0] sm:$0xff]
    %v2790 = vld [vmem:[#allocation2 + $0x4a8] sm:$0xff]
    %v2791 = vld [vmem:[#allocation2 + $0x4b0] sm:$0xff]
    %v2792 = vld [vmem:[#allocation2 + $0x4b8] sm:$0xff]
    %v2793 = vld [vmem:[#allocation2 + $0x4c0] sm:$0xff]
    %v2794 = vld [vmem:[#allocation2 + $0x4c8] sm:$0xff]
    %v2795 = vld [vmem:[#allocation2 + $0x4d0] sm:$0xff]
    %v2796 = vld [vmem:[#allocation2 + $0x4d8] sm:$0xff]
    %v2797 = vld [vmem:[#allocation2 + $0x4e0] sm:$0xff]
    %v2798 = vld [vmem:[#allocation2 + $0x4e8] sm:$0xff]
    %v2799 = vld [vmem:[#allocation2 + $0x4f0] sm:$0xff]
    %v2800 = vld [vmem:[#allocation2 + $0x4f8] sm:$0xff]
    %v2801 = vld [vmem:[#allocation2 + $0x500] sm:$0xff]
    %v2802 = vld [vmem:[#allocation2 + $0x508] sm:$0xff]
    %v2803 = vld [vmem:[#allocation2 + $0x510] sm:$0xff]
    %v2804 = vld [vmem:[#allocation2 + $0x518] sm:$0xff]
    %v2805 = vld [vmem:[#allocation2 + $0x520] sm:$0xff]
    %v2806 = vld [vmem:[#allocation2 + $0x528] sm:$0xff]
    %v2807 = vld [vmem:[#allocation2 + $0x530] sm:$0xff]
    %v2808 = vld [vmem:[#allocation2 + $0x538] sm:$0xff]
    %v2809 = vld [vmem:[#allocation2 + $0x540] sm:$0xff]
    %v2810 = vld [vmem:[#allocation2 + $0x548] sm:$0xff]
    %v2811 = vld [vmem:[#allocation2 + $0x550] sm:$0xff]
    %v2812 = vld [vmem:[#allocation2 + $0x558] sm:$0xff]
    %v2813 = vld [vmem:[#allocation2 + $0x560] sm:$0xff]
    %v2814 = vld [vmem:[#allocation2 + $0x568] sm:$0xff]
    %v2815 = vld [vmem:[#allocation2 + $0x570] sm:$0xff]
    %v2816 = vld [vmem:[#allocation2 + $0x578] sm:$0xff]
    %v2817 = vld [vmem:[#allocation2 + $0x580] sm:$0xff]
    %v2818 = vld [vmem:[#allocation2 + $0x588] sm:$0xff]
    %v2819 = vld [vmem:[#allocation2 + $0x590] sm:$0xff]
    %v2820 = vld [vmem:[#allocation2 + $0x598] sm:$0xff]
    %v2821 = vld [vmem:[#allocation2 + $0x5a0] sm:$0xff]
    %v2822 = vld [vmem:[#allocation2 + $0x5a8] sm:$0xff]
    %v2823 = vld [vmem:[#allocation2 + $0x5b0] sm:$0xff]
    %v2824 = vld [vmem:[#allocation2 + $0x5b8] sm:$0xff]
    %v2825 = vld [vmem:[#allocation2 + $0x5c0] sm:$0xff]
    %v2826 = vld [vmem:[#allocation2 + $0x5c8] sm:$0xff]
    %v2827 = vld [vmem:[#allocation2 + $0x5d0] sm:$0xff]
    %v2828 = vld [vmem:[#allocation2 + $0x5d8] sm:$0xff]
    %v2829 = vld [vmem:[#allocation2 + $0x5e0] sm:$0xff]
    %v2830 = vld [vmem:[#allocation2 + $0x5e8] sm:$0xff]
    %v2831 = vld [vmem:[#allocation2 + $0x5f0] sm:$0xff]
    %v2832 = vld [vmem:[#allocation2 + $0x5f8] sm:$0xff]
    %v2833 = vld [vmem:[#allocation2 + $0x600] sm:$0xff]
    %v2834 = vld [vmem:[#allocation2 + $0x608] sm:$0xff]
    %v2835 = vld [vmem:[#allocation2 + $0x610] sm:$0xff]
    %v2836 = vld [vmem:[#allocation2 + $0x618] sm:$0xff]
    %v2837 = vld [vmem:[#allocation2 + $0x620] sm:$0xff]
    %v2838 = vld [vmem:[#allocation2 + $0x628] sm:$0xff]
    %v2839 = vld [vmem:[#allocation2 + $0x630] sm:$0xff]
    %v2840 = vld [vmem:[#allocation2 + $0x638] sm:$0xff]
    %v2841 = vld [vmem:[#allocation2 + $0x640] sm:$0xff]
    %v2842 = vld [vmem:[#allocation2 + $0x648] sm:$0xff]
    %v2843 = vld [vmem:[#allocation2 + $0x650] sm:$0xff]
    %v2844 = vld [vmem:[#allocation2 + $0x658] sm:$0xff]
    %v2845 = vld [vmem:[#allocation2 + $0x660] sm:$0xff]
    %v2846 = vld [vmem:[#allocation2 + $0x668] sm:$0xff]
    %v2847 = vld [vmem:[#allocation2 + $0x670] sm:$0xff]
    %v2848 = vld [vmem:[#allocation2 + $0x678] sm:$0xff]
    %v2849 = vld [vmem:[#allocation2 + $0x680] sm:$0xff]
    %v2850 = vld [vmem:[#allocation2 + $0x688] sm:$0xff]
    %v2851 = vld [vmem:[#allocation2 + $0x690] sm:$0xff]
    %v2852 = vld [vmem:[#allocation2 + $0x698] sm:$0xff]
    %v2853 = vld [vmem:[#allocation2 + $0x6a0] sm:$0xff]
    %v2854 = vld [vmem:[#allocation2 + $0x6a8] sm:$0xff]
    %v2855 = vld [vmem:[#allocation2 + $0x6b0] sm:$0xff]
    %v2856 = vld [vmem:[#allocation2 + $0x6b8] sm:$0xff]
    %v2857 = vld [vmem:[#allocation2 + $0x6c0] sm:$0xff]
    %v2858 = vld [vmem:[#allocation2 + $0x6c8] sm:$0xff]
    %v2859 = vld [vmem:[#allocation2 + $0x6d0] sm:$0xff]
    %v2860 = vld [vmem:[#allocation2 + $0x6d8] sm:$0xff]
    %v2861 = vld [vmem:[#allocation2 + $0x6e0] sm:$0xff]
    %v2862 = vld [vmem:[#allocation2 + $0x6e8] sm:$0xff]
    %v2863 = vld [vmem:[#allocation2 + $0x6f0] sm:$0xff]
    %v2864 = vld [vmem:[#allocation2 + $0x6f8] sm:$0xff]
    %v2865 = vld [vmem:[#allocation2 + $0x700] sm:$0xff]
    %v2866 = vld [vmem:[#allocation2 + $0x708] sm:$0xff]
    %v2867 = vld [vmem:[#allocation2 + $0x710] sm:$0xff]
    %v2868 = vld [vmem:[#allocation2 + $0x718] sm:$0xff]
    %v2869 = vld [vmem:[#allocation2 + $0x720] sm:$0xff]
    %v2870 = vld [vmem:[#allocation2 + $0x728] sm:$0xff]
    %v2871 = vld [vmem:[#allocation2 + $0x730] sm:$0xff]
    %v2872 = vld [vmem:[#allocation2 + $0x738] sm:$0xff]
    %v2873 = vld [vmem:[#allocation2 + $0x740] sm:$0xff]
    %v2874 = vld [vmem:[#allocation2 + $0x748] sm:$0xff]
    %v2875 = vld [vmem:[#allocation2 + $0x750] sm:$0xff]
    %v2876 = vld [vmem:[#allocation2 + $0x758] sm:$0xff]
    %v2877 = vld [vmem:[#allocation2 + $0x760] sm:$0xff]
    %v2878 = vld [vmem:[#allocation2 + $0x768] sm:$0xff]
    %v2879 = vld [vmem:[#allocation2 + $0x770] sm:$0xff]
    %v2880 = vld [vmem:[#allocation2 + $0x778] sm:$0xff]
    %v2881 = vld [vmem:[#allocation2 + $0x780] sm:$0xff]
    %v2882 = vld [vmem:[#allocation2 + $0x788] sm:$0xff]
    %v2883 = vld [vmem:[#allocation2 + $0x790] sm:$0xff]
    %v2884 = vld [vmem:[#allocation2 + $0x798] sm:$0xff]
    %v2885 = vld [vmem:[#allocation2 + $0x7a0] sm:$0xff]
    %v2886 = vld [vmem:[#allocation2 + $0x7a8] sm:$0xff]
    %v2887 = vld [vmem:[#allocation2 + $0x7b0] sm:$0xff]
    %v2888 = vld [vmem:[#allocation2 + $0x7b8] sm:$0xff]
    %v2889 = vld [vmem:[#allocation2 + $0x7c0] sm:$0xff]
    %v2890 = vld [vmem:[#allocation2 + $0x7c8] sm:$0xff]
    %v2891 = vld [vmem:[#allocation2 + $0x7d0] sm:$0xff]
    %v2892 = vld [vmem:[#allocation2 + $0x7d8] sm:$0xff]
    %v2893 = vld [vmem:[#allocation2 + $0x7e0] sm:$0xff]
    %v2894 = vld [vmem:[#allocation2 + $0x7e8] sm:$0xff]
    %v2895 = vld [vmem:[#allocation2 + $0x7f0] sm:$0xff]
    %v2896 = vld [vmem:[#allocation2 + $0x7f8] sm:$0xff]
    %s2897 = scalar_lea.vmem [#allocation14], 2
    %v2898 = vld [vmem:[%s2897] ss:$8 sm:$0xf]
    %v2899 = vld [vmem:[%s2897] ss:$8 sm:$0xf0]
    %v2900 = vor.u32 %v2898, %v2899
    %v2902 = vlaneseq
    %v2903 = vshrl.u32 %v2902, 7
    %v2904 = vsub.s32 0, %v2903
    %v2905 = vrot.slane %v2900, %v2904
    %v2906 = vlaneseq
    %v2907 = vshrl.u32 %v2906, 7
    %v2908 = vsub.s32 1, %v2907
    %v2909 = vrot.slane %v2900, %v2908
    %v2910 = vlaneseq
    %v2911 = vshrl.u32 %v2910, 7
    %v2912 = vsub.s32 2, %v2911
    %v2913 = vrot.slane %v2900, %v2912
    %v2914 = vlaneseq
    %v2915 = vshrl.u32 %v2914, 7
    %v2916 = vsub.s32 3, %v2915
    %v2917 = vrot.slane %v2900, %v2916
    %v2918 = vlaneseq
    %v2919 = vshrl.u32 %v2918, 7
    %v2920 = vsub.s32 4, %v2919
    %v2921 = vrot.slane %v2900, %v2920
    %v2922 = vlaneseq
    %v2923 = vshrl.u32 %v2922, 7
    %v2924 = vsub.s32 5, %v2923
    %v2925 = vrot.slane %v2900, %v2924
    %v2926 = vlaneseq
    %v2927 = vshrl.u32 %v2926, 7
    %v2928 = vsub.s32 6, %v2927
    %v2929 = vrot.slane %v2900, %v2928
    %v2930 = vlaneseq
    %v2931 = vshrl.u32 %v2930, 7
    %v2932 = vsub.s32 7, %v2931
    %v2933 = vrot.slane %v2900, %v2932
    %v3198 = vunpack.c.l.b16 %v2641
    %v3199 = vunpack.c.h.b16 %v2641
    %v3200 = vunpack.c.l.b16 %v2642
    %v3201 = vunpack.c.h.b16 %v2642
    %v3202 = vunpack.c.l.b16 %v2643
    %v3203 = vunpack.c.h.b16 %v2643
    %v3204 = vunpack.c.l.b16 %v2644
    %v3205 = vunpack.c.h.b16 %v2644
    %v3206 = vunpack.c.l.b16 %v2645
    %v3207 = vunpack.c.h.b16 %v2645
    %v3208 = vunpack.c.l.b16 %v2646
    %v3209 = vunpack.c.h.b16 %v2646
    %v3210 = vunpack.c.l.b16 %v2647
    %v3211 = vunpack.c.h.b16 %v2647
    %v3212 = vunpack.c.l.b16 %v2648
    %v3213 = vunpack.c.h.b16 %v2648
    %v3214 = vunpack.c.l.b16 %v2649
    %v3215 = vunpack.c.h.b16 %v2649
    %v3216 = vunpack.c.l.b16 %v2650
    %v3217 = vunpack.c.h.b16 %v2650
    %v3218 = vunpack.c.l.b16 %v2651
    %v3219 = vunpack.c.h.b16 %v2651
    %v3220 = vunpack.c.l.b16 %v2652
    %v3221 = vunpack.c.h.b16 %v2652
    %v3222 = vunpack.c.l.b16 %v2653
    %v3223 = vunpack.c.h.b16 %v2653
    %v3224 = vunpack.c.l.b16 %v2654
    %v3225 = vunpack.c.h.b16 %v2654
    %v3226 = vunpack.c.l.b16 %v2655
    %v3227 = vunpack.c.h.b16 %v2655
    %v3228 = vunpack.c.l.b16 %v2656
    %v3229 = vunpack.c.h.b16 %v2656
    %v3230 = vunpack.c.l.b16 %v2657
    %v3231 = vunpack.c.h.b16 %v2657
    %v3232 = vunpack.c.l.b16 %v2658
    %v3233 = vunpack.c.h.b16 %v2658
    %v3234 = vunpack.c.l.b16 %v2659
    %v3235 = vunpack.c.h.b16 %v2659
    %v3236 = vunpack.c.l.b16 %v2660
    %v3237 = vunpack.c.h.b16 %v2660
    %v3238 = vunpack.c.l.b16 %v2661
    %v3239 = vunpack.c.h.b16 %v2661
    %v3240 = vunpack.c.l.b16 %v2662
    %v3241 = vunpack.c.h.b16 %v2662
    %v3242 = vunpack.c.l.b16 %v2663
    %v3243 = vunpack.c.h.b16 %v2663
    %v3244 = vunpack.c.l.b16 %v2664
    %v3245 = vunpack.c.h.b16 %v2664
    %v3246 = vunpack.c.l.b16 %v2665
    %v3247 = vunpack.c.h.b16 %v2665
    %v3248 = vunpack.c.l.b16 %v2666
    %v3249 = vunpack.c.h.b16 %v2666
    %v3250 = vunpack.c.l.b16 %v2667
    %v3251 = vunpack.c.h.b16 %v2667
    %v3252 = vunpack.c.l.b16 %v2668
    %v3253 = vunpack.c.h.b16 %v2668
    %v3254 = vunpack.c.l.b16 %v2669
    %v3255 = vunpack.c.h.b16 %v2669
    %v3256 = vunpack.c.l.b16 %v2670
    %v3257 = vunpack.c.h.b16 %v2670
    %v3258 = vunpack.c.l.b16 %v2671
    %v3259 = vunpack.c.h.b16 %v2671
    %v3260 = vunpack.c.l.b16 %v2672
    %v3261 = vunpack.c.h.b16 %v2672
    %v3262 = vunpack.c.l.b16 %v2673
    %v3263 = vunpack.c.h.b16 %v2673
    %v3264 = vunpack.c.l.b16 %v2674
    %v3265 = vunpack.c.h.b16 %v2674
    %v3266 = vunpack.c.l.b16 %v2675
    %v3267 = vunpack.c.h.b16 %v2675
    %v3268 = vunpack.c.l.b16 %v2676
    %v3269 = vunpack.c.h.b16 %v2676
    %v3270 = vunpack.c.l.b16 %v2677
    %v3271 = vunpack.c.h.b16 %v2677
    %v3272 = vunpack.c.l.b16 %v2678
    %v3273 = vunpack.c.h.b16 %v2678
    %v3274 = vunpack.c.l.b16 %v2679
    %v3275 = vunpack.c.h.b16 %v2679
    %v3276 = vunpack.c.l.b16 %v2680
    %v3277 = vunpack.c.h.b16 %v2680
    %v3278 = vunpack.c.l.b16 %v2681
    %v3279 = vunpack.c.h.b16 %v2681
    %v3280 = vunpack.c.l.b16 %v2682
    %v3281 = vunpack.c.h.b16 %v2682
    %v3282 = vunpack.c.l.b16 %v2683
    %v3283 = vunpack.c.h.b16 %v2683
    %v3284 = vunpack.c.l.b16 %v2684
    %v3285 = vunpack.c.h.b16 %v2684
    %v3286 = vunpack.c.l.b16 %v2685
    %v3287 = vunpack.c.h.b16 %v2685
    %v3288 = vunpack.c.l.b16 %v2686
    %v3289 = vunpack.c.h.b16 %v2686
    %v3290 = vunpack.c.l.b16 %v2687
    %v3291 = vunpack.c.h.b16 %v2687
    %v3292 = vunpack.c.l.b16 %v2688
    %v3293 = vunpack.c.h.b16 %v2688
    %v3294 = vunpack.c.l.b16 %v2689
    %v3295 = vunpack.c.h.b16 %v2689
    %v3296 = vunpack.c.l.b16 %v2690
    %v3297 = vunpack.c.h.b16 %v2690
    %v3298 = vunpack.c.l.b16 %v2691
    %v3299 = vunpack.c.h.b16 %v2691
    %v3300 = vunpack.c.l.b16 %v2692
    %v3301 = vunpack.c.h.b16 %v2692
    %v3302 = vunpack.c.l.b16 %v2693
    %v3303 = vunpack.c.h.b16 %v2693
    %v3304 = vunpack.c.l.b16 %v2694
    %v3305 = vunpack.c.h.b16 %v2694
    %v3306 = vunpack.c.l.b16 %v2695
    %v3307 = vunpack.c.h.b16 %v2695
    %v3308 = vunpack.c.l.b16 %v2696
    %v3309 = vunpack.c.h.b16 %v2696
    %v3310 = vunpack.c.l.b16 %v2697
    %v3311 = vunpack.c.h.b16 %v2697
    %v3312 = vunpack.c.l.b16 %v2698
    %v3313 = vunpack.c.h.b16 %v2698
    %v3314 = vunpack.c.l.b16 %v2699
    %v3315 = vunpack.c.h.b16 %v2699
    %v3316 = vunpack.c.l.b16 %v2700
    %v3317 = vunpack.c.h.b16 %v2700
    %v3318 = vunpack.c.l.b16 %v2701
    %v3319 = vunpack.c.h.b16 %v2701
    %v3320 = vunpack.c.l.b16 %v2702
    %v3321 = vunpack.c.h.b16 %v2702
    %v3322 = vunpack.c.l.b16 %v2703
    %v3323 = vunpack.c.h.b16 %v2703
    %v3324 = vunpack.c.l.b16 %v2704
    %v3325 = vunpack.c.h.b16 %v2704
    %v3326 = vunpack.c.l.b16 %v2705
    %v3327 = vunpack.c.h.b16 %v2705
    %v3328 = vunpack.c.l.b16 %v2706
    %v3329 = vunpack.c.h.b16 %v2706
    %v3330 = vunpack.c.l.b16 %v2707
    %v3331 = vunpack.c.h.b16 %v2707
    %v3332 = vunpack.c.l.b16 %v2708
    %v3333 = vunpack.c.h.b16 %v2708
    %v3334 = vunpack.c.l.b16 %v2709
    %v3335 = vunpack.c.h.b16 %v2709
    %v3336 = vunpack.c.l.b16 %v2710
    %v3337 = vunpack.c.h.b16 %v2710
    %v3338 = vunpack.c.l.b16 %v2711
    %v3339 = vunpack.c.h.b16 %v2711
    %v3340 = vunpack.c.l.b16 %v2712
    %v3341 = vunpack.c.h.b16 %v2712
    %v3342 = vunpack.c.l.b16 %v2713
    %v3343 = vunpack.c.h.b16 %v2713
    %v3344 = vunpack.c.l.b16 %v2714
    %v3345 = vunpack.c.h.b16 %v2714
    %v3346 = vunpack.c.l.b16 %v2715
    %v3347 = vunpack.c.h.b16 %v2715
    %v3348 = vunpack.c.l.b16 %v2716
    %v3349 = vunpack.c.h.b16 %v2716
    %v3350 = vunpack.c.l.b16 %v2717
    %v3351 = vunpack.c.h.b16 %v2717
    %v3352 = vunpack.c.l.b16 %v2718
    %v3353 = vunpack.c.h.b16 %v2718
    %v3354 = vunpack.c.l.b16 %v2719
    %v3355 = vunpack.c.h.b16 %v2719
    %v3356 = vunpack.c.l.b16 %v2720
    %v3357 = vunpack.c.h.b16 %v2720
    %v3358 = vunpack.c.l.b16 %v2721
    %v3359 = vunpack.c.h.b16 %v2721
    %v3360 = vunpack.c.l.b16 %v2722
    %v3361 = vunpack.c.h.b16 %v2722
    %v3362 = vunpack.c.l.b16 %v2723
    %v3363 = vunpack.c.h.b16 %v2723
    %v3364 = vunpack.c.l.b16 %v2724
    %v3365 = vunpack.c.h.b16 %v2724
    %v3366 = vunpack.c.l.b16 %v2725
    %v3367 = vunpack.c.h.b16 %v2725
    %v3368 = vunpack.c.l.b16 %v2726
    %v3369 = vunpack.c.h.b16 %v2726
    %v3370 = vunpack.c.l.b16 %v2727
    %v3371 = vunpack.c.h.b16 %v2727
    %v3372 = vunpack.c.l.b16 %v2728
    %v3373 = vunpack.c.h.b16 %v2728
    %v3374 = vunpack.c.l.b16 %v2729
    %v3375 = vunpack.c.h.b16 %v2729
    %v3376 = vunpack.c.l.b16 %v2730
    %v3377 = vunpack.c.h.b16 %v2730
    %v3378 = vunpack.c.l.b16 %v2731
    %v3379 = vunpack.c.h.b16 %v2731
    %v3380 = vunpack.c.l.b16 %v2732
    %v3381 = vunpack.c.h.b16 %v2732
    %v3382 = vunpack.c.l.b16 %v2733
    %v3383 = vunpack.c.h.b16 %v2733
    %v3384 = vunpack.c.l.b16 %v2734
    %v3385 = vunpack.c.h.b16 %v2734
    %v3386 = vunpack.c.l.b16 %v2735
    %v3387 = vunpack.c.h.b16 %v2735
    %v3388 = vunpack.c.l.b16 %v2736
    %v3389 = vunpack.c.h.b16 %v2736
    %v3390 = vunpack.c.l.b16 %v2737
    %v3391 = vunpack.c.h.b16 %v2737
    %v3392 = vunpack.c.l.b16 %v2738
    %v3393 = vunpack.c.h.b16 %v2738
    %v3394 = vunpack.c.l.b16 %v2739
    %v3395 = vunpack.c.h.b16 %v2739
    %v3396 = vunpack.c.l.b16 %v2740
    %v3397 = vunpack.c.h.b16 %v2740
    %v3398 = vunpack.c.l.b16 %v2741
    %v3399 = vunpack.c.h.b16 %v2741
    %v3400 = vunpack.c.l.b16 %v2742
    %v3401 = vunpack.c.h.b16 %v2742
    %v3402 = vunpack.c.l.b16 %v2743
    %v3403 = vunpack.c.h.b16 %v2743
    %v3404 = vunpack.c.l.b16 %v2744
    %v3405 = vunpack.c.h.b16 %v2744
    %v3406 = vunpack.c.l.b16 %v2745
    %v3407 = vunpack.c.h.b16 %v2745
    %v3408 = vunpack.c.l.b16 %v2746
    %v3409 = vunpack.c.h.b16 %v2746
    %v3410 = vunpack.c.l.b16 %v2747
    %v3411 = vunpack.c.h.b16 %v2747
    %v3412 = vunpack.c.l.b16 %v2748
    %v3413 = vunpack.c.h.b16 %v2748
    %v3414 = vunpack.c.l.b16 %v2749
    %v3415 = vunpack.c.h.b16 %v2749
    %v3416 = vunpack.c.l.b16 %v2750
    %v3417 = vunpack.c.h.b16 %v2750
    %v3418 = vunpack.c.l.b16 %v2751
    %v3419 = vunpack.c.h.b16 %v2751
    %v3420 = vunpack.c.l.b16 %v2752
    %v3421 = vunpack.c.h.b16 %v2752
    %v3422 = vunpack.c.l.b16 %v2753
    %v3423 = vunpack.c.h.b16 %v2753
    %v3424 = vunpack.c.l.b16 %v2754
    %v3425 = vunpack.c.h.b16 %v2754
    %v3426 = vunpack.c.l.b16 %v2755
    %v3427 = vunpack.c.h.b16 %v2755
    %v3428 = vunpack.c.l.b16 %v2756
    %v3429 = vunpack.c.h.b16 %v2756
    %v3430 = vunpack.c.l.b16 %v2757
    %v3431 = vunpack.c.h.b16 %v2757
    %v3432 = vunpack.c.l.b16 %v2758
    %v3433 = vunpack.c.h.b16 %v2758
    %v3434 = vunpack.c.l.b16 %v2759
    %v3435 = vunpack.c.h.b16 %v2759
    %v3436 = vunpack.c.l.b16 %v2760
    %v3437 = vunpack.c.h.b16 %v2760
    %v3438 = vunpack.c.l.b16 %v2761
    %v3439 = vunpack.c.h.b16 %v2761
    %v3440 = vunpack.c.l.b16 %v2762
    %v3441 = vunpack.c.h.b16 %v2762
    %v3442 = vunpack.c.l.b16 %v2763
    %v3443 = vunpack.c.h.b16 %v2763
    %v3444 = vunpack.c.l.b16 %v2764
    %v3445 = vunpack.c.h.b16 %v2764
    %v3446 = vunpack.c.l.b16 %v2765
    %v3447 = vunpack.c.h.b16 %v2765
    %v3448 = vunpack.c.l.b16 %v2766
    %v3449 = vunpack.c.h.b16 %v2766
    %v3450 = vunpack.c.l.b16 %v2767
    %v3451 = vunpack.c.h.b16 %v2767
    %v3452 = vunpack.c.l.b16 %v2768
    %v3453 = vunpack.c.h.b16 %v2768
    %v3454 = vunpack.c.l.b16 %v2769
    %v3455 = vunpack.c.h.b16 %v2769
    %v3456 = vunpack.c.l.b16 %v2770
    %v3457 = vunpack.c.h.b16 %v2770
    %v3458 = vunpack.c.l.b16 %v2771
    %v3459 = vunpack.c.h.b16 %v2771
    %v3460 = vunpack.c.l.b16 %v2772
    %v3461 = vunpack.c.h.b16 %v2772
    %v3462 = vunpack.c.l.b16 %v2773
    %v3463 = vunpack.c.h.b16 %v2773
    %v3464 = vunpack.c.l.b16 %v2774
    %v3465 = vunpack.c.h.b16 %v2774
    %v3466 = vunpack.c.l.b16 %v2775
    %v3467 = vunpack.c.h.b16 %v2775
    %v3468 = vunpack.c.l.b16 %v2776
    %v3469 = vunpack.c.h.b16 %v2776
    %v3470 = vunpack.c.l.b16 %v2777
    %v3471 = vunpack.c.h.b16 %v2777
    %v3472 = vunpack.c.l.b16 %v2778
    %v3473 = vunpack.c.h.b16 %v2778
    %v3474 = vunpack.c.l.b16 %v2779
    %v3475 = vunpack.c.h.b16 %v2779
    %v3476 = vunpack.c.l.b16 %v2780
    %v3477 = vunpack.c.h.b16 %v2780
    %v3478 = vunpack.c.l.b16 %v2781
    %v3479 = vunpack.c.h.b16 %v2781
    %v3480 = vunpack.c.l.b16 %v2782
    %v3481 = vunpack.c.h.b16 %v2782
    %v3482 = vunpack.c.l.b16 %v2783
    %v3483 = vunpack.c.h.b16 %v2783
    %v3484 = vunpack.c.l.b16 %v2784
    %v3485 = vunpack.c.h.b16 %v2784
    %v3486 = vunpack.c.l.b16 %v2785
    %v3487 = vunpack.c.h.b16 %v2785
    %v3488 = vunpack.c.l.b16 %v2786
    %v3489 = vunpack.c.h.b16 %v2786
    %v3490 = vunpack.c.l.b16 %v2787
    %v3491 = vunpack.c.h.b16 %v2787
    %v3492 = vunpack.c.l.b16 %v2788
    %v3493 = vunpack.c.h.b16 %v2788
    %v3494 = vunpack.c.l.b16 %v2789
    %v3495 = vunpack.c.h.b16 %v2789
    %v3496 = vunpack.c.l.b16 %v2790
    %v3497 = vunpack.c.h.b16 %v2790
    %v3498 = vunpack.c.l.b16 %v2791
    %v3499 = vunpack.c.h.b16 %v2791
    %v3500 = vunpack.c.l.b16 %v2792
    %v3501 = vunpack.c.h.b16 %v2792
    %v3502 = vunpack.c.l.b16 %v2793
    %v3503 = vunpack.c.h.b16 %v2793
    %v3504 = vunpack.c.l.b16 %v2794
    %v3505 = vunpack.c.h.b16 %v2794
    %v3506 = vunpack.c.l.b16 %v2795
    %v3507 = vunpack.c.h.b16 %v2795
    %v3508 = vunpack.c.l.b16 %v2796
    %v3509 = vunpack.c.h.b16 %v2796
    %v3510 = vunpack.c.l.b16 %v2797
    %v3511 = vunpack.c.h.b16 %v2797
    %v3512 = vunpack.c.l.b16 %v2798
    %v3513 = vunpack.c.h.b16 %v2798
    %v3514 = vunpack.c.l.b16 %v2799
    %v3515 = vunpack.c.h.b16 %v2799
    %v3516 = vunpack.c.l.b16 %v2800
    %v3517 = vunpack.c.h.b16 %v2800
    %v3518 = vunpack.c.l.b16 %v2801
    %v3519 = vunpack.c.h.b16 %v2801
    %v3520 = vunpack.c.l.b16 %v2802
    %v3521 = vunpack.c.h.b16 %v2802
    %v3522 = vunpack.c.l.b16 %v2803
    %v3523 = vunpack.c.h.b16 %v2803
    %v3524 = vunpack.c.l.b16 %v2804
    %v3525 = vunpack.c.h.b16 %v2804
    %v3526 = vunpack.c.l.b16 %v2805
    %v3527 = vunpack.c.h.b16 %v2805
    %v3528 = vunpack.c.l.b16 %v2806
    %v3529 = vunpack.c.h.b16 %v2806
    %v3530 = vunpack.c.l.b16 %v2807
    %v3531 = vunpack.c.h.b16 %v2807
    %v3532 = vunpack.c.l.b16 %v2808
    %v3533 = vunpack.c.h.b16 %v2808
    %v3534 = vunpack.c.l.b16 %v2809
    %v3535 = vunpack.c.h.b16 %v2809
    %v3536 = vunpack.c.l.b16 %v2810
    %v3537 = vunpack.c.h.b16 %v2810
    %v3538 = vunpack.c.l.b16 %v2811
    %v3539 = vunpack.c.h.b16 %v2811
    %v3540 = vunpack.c.l.b16 %v2812
    %v3541 = vunpack.c.h.b16 %v2812
    %v3542 = vunpack.c.l.b16 %v2813
    %v3543 = vunpack.c.h.b16 %v2813
    %v3544 = vunpack.c.l.b16 %v2814
    %v3545 = vunpack.c.h.b16 %v2814
    %v3546 = vunpack.c.l.b16 %v2815
    %v3547 = vunpack.c.h.b16 %v2815
    %v3548 = vunpack.c.l.b16 %v2816
    %v3549 = vunpack.c.h.b16 %v2816
    %v3550 = vunpack.c.l.b16 %v2817
    %v3551 = vunpack.c.h.b16 %v2817
    %v3552 = vunpack.c.l.b16 %v2818
    %v3553 = vunpack.c.h.b16 %v2818
    %v3554 = vunpack.c.l.b16 %v2819
    %v3555 = vunpack.c.h.b16 %v2819
    %v3556 = vunpack.c.l.b16 %v2820
    %v3557 = vunpack.c.h.b16 %v2820
    %v3558 = vunpack.c.l.b16 %v2821
    %v3559 = vunpack.c.h.b16 %v2821
    %v3560 = vunpack.c.l.b16 %v2822
    %v3561 = vunpack.c.h.b16 %v2822
    %v3562 = vunpack.c.l.b16 %v2823
    %v3563 = vunpack.c.h.b16 %v2823
    %v3564 = vunpack.c.l.b16 %v2824
    %v3565 = vunpack.c.h.b16 %v2824
    %v3566 = vunpack.c.l.b16 %v2825
    %v3567 = vunpack.c.h.b16 %v2825
    %v3568 = vunpack.c.l.b16 %v2826
    %v3569 = vunpack.c.h.b16 %v2826
    %v3570 = vunpack.c.l.b16 %v2827
    %v3571 = vunpack.c.h.b16 %v2827
    %v3572 = vunpack.c.l.b16 %v2828
    %v3573 = vunpack.c.h.b16 %v2828
    %v3574 = vunpack.c.l.b16 %v2829
    %v3575 = vunpack.c.h.b16 %v2829
    %v3576 = vunpack.c.l.b16 %v2830
    %v3577 = vunpack.c.h.b16 %v2830
    %v3578 = vunpack.c.l.b16 %v2831
    %v3579 = vunpack.c.h.b16 %v2831
    %v3580 = vunpack.c.l.b16 %v2832
    %v3581 = vunpack.c.h.b16 %v2832
    %v3582 = vunpack.c.l.b16 %v2833
    %v3583 = vunpack.c.h.b16 %v2833
    %v3584 = vunpack.c.l.b16 %v2834
    %v3585 = vunpack.c.h.b16 %v2834
    %v3586 = vunpack.c.l.b16 %v2835
    %v3587 = vunpack.c.h.b16 %v2835
    %v3588 = vunpack.c.l.b16 %v2836
    %v3589 = vunpack.c.h.b16 %v2836
    %v3590 = vunpack.c.l.b16 %v2837
    %v3591 = vunpack.c.h.b16 %v2837
    %v3592 = vunpack.c.l.b16 %v2838
    %v3593 = vunpack.c.h.b16 %v2838
    %v3594 = vunpack.c.l.b16 %v2839
    %v3595 = vunpack.c.h.b16 %v2839
    %v3596 = vunpack.c.l.b16 %v2840
    %v3597 = vunpack.c.h.b16 %v2840
    %v3598 = vunpack.c.l.b16 %v2841
    %v3599 = vunpack.c.h.b16 %v2841
    %v3600 = vunpack.c.l.b16 %v2842
    %v3601 = vunpack.c.h.b16 %v2842
    %v3602 = vunpack.c.l.b16 %v2843
    %v3603 = vunpack.c.h.b16 %v2843
    %v3604 = vunpack.c.l.b16 %v2844
    %v3605 = vunpack.c.h.b16 %v2844
    %v3606 = vunpack.c.l.b16 %v2845
    %v3607 = vunpack.c.h.b16 %v2845
    %v3608 = vunpack.c.l.b16 %v2846
    %v3609 = vunpack.c.h.b16 %v2846
    %v3610 = vunpack.c.l.b16 %v2847
    %v3611 = vunpack.c.h.b16 %v2847
    %v3612 = vunpack.c.l.b16 %v2848
    %v3613 = vunpack.c.h.b16 %v2848
    %v3614 = vunpack.c.l.b16 %v2849
    %v3615 = vunpack.c.h.b16 %v2849
    %v3616 = vunpack.c.l.b16 %v2850
    %v3617 = vunpack.c.h.b16 %v2850
    %v3618 = vunpack.c.l.b16 %v2851
    %v3619 = vunpack.c.h.b16 %v2851
    %v3620 = vunpack.c.l.b16 %v2852
    %v3621 = vunpack.c.h.b16 %v2852
    %v3622 = vunpack.c.l.b16 %v2853
    %v3623 = vunpack.c.h.b16 %v2853
    %v3624 = vunpack.c.l.b16 %v2854
    %v3625 = vunpack.c.h.b16 %v2854
    %v3626 = vunpack.c.l.b16 %v2855
    %v3627 = vunpack.c.h.b16 %v2855
    %v3628 = vunpack.c.l.b16 %v2856
    %v3629 = vunpack.c.h.b16 %v2856
    %v3630 = vunpack.c.l.b16 %v2857
    %v3631 = vunpack.c.h.b16 %v2857
    %v3632 = vunpack.c.l.b16 %v2858
    %v3633 = vunpack.c.h.b16 %v2858
    %v3634 = vunpack.c.l.b16 %v2859
    %v3635 = vunpack.c.h.b16 %v2859
    %v3636 = vunpack.c.l.b16 %v2860
    %v3637 = vunpack.c.h.b16 %v2860
    %v3638 = vunpack.c.l.b16 %v2861
    %v3639 = vunpack.c.h.b16 %v2861
    %v3640 = vunpack.c.l.b16 %v2862
    %v3641 = vunpack.c.h.b16 %v2862
    %v3642 = vunpack.c.l.b16 %v2863
    %v3643 = vunpack.c.h.b16 %v2863
    %v3644 = vunpack.c.l.b16 %v2864
    %v3645 = vunpack.c.h.b16 %v2864
    %v3646 = vunpack.c.l.b16 %v2865
    %v3647 = vunpack.c.h.b16 %v2865
    %v3648 = vunpack.c.l.b16 %v2866
    %v3649 = vunpack.c.h.b16 %v2866
    %v3650 = vunpack.c.l.b16 %v2867
    %v3651 = vunpack.c.h.b16 %v2867
    %v3652 = vunpack.c.l.b16 %v2868
    %v3653 = vunpack.c.h.b16 %v2868
    %v3654 = vunpack.c.l.b16 %v2869
    %v3655 = vunpack.c.h.b16 %v2869
    %v3656 = vunpack.c.l.b16 %v2870
    %v3657 = vunpack.c.h.b16 %v2870
    %v3658 = vunpack.c.l.b16 %v2871
    %v3659 = vunpack.c.h.b16 %v2871
    %v3660 = vunpack.c.l.b16 %v2872
    %v3661 = vunpack.c.h.b16 %v2872
    %v3662 = vunpack.c.l.b16 %v2873
    %v3663 = vunpack.c.h.b16 %v2873
    %v3664 = vunpack.c.l.b16 %v2874
    %v3665 = vunpack.c.h.b16 %v2874
    %v3666 = vunpack.c.l.b16 %v2875
    %v3667 = vunpack.c.h.b16 %v2875
    %v3668 = vunpack.c.l.b16 %v2876
    %v3669 = vunpack.c.h.b16 %v2876
    %v3670 = vunpack.c.l.b16 %v2877
    %v3671 = vunpack.c.h.b16 %v2877
    %v3672 = vunpack.c.l.b16 %v2878
    %v3673 = vunpack.c.h.b16 %v2878
    %v3674 = vunpack.c.l.b16 %v2879
    %v3675 = vunpack.c.h.b16 %v2879
    %v3676 = vunpack.c.l.b16 %v2880
    %v3677 = vunpack.c.h.b16 %v2880
    %v3678 = vunpack.c.l.b16 %v2881
    %v3679 = vunpack.c.h.b16 %v2881
    %v3680 = vunpack.c.l.b16 %v2882
    %v3681 = vunpack.c.h.b16 %v2882
    %v3682 = vunpack.c.l.b16 %v2883
    %v3683 = vunpack.c.h.b16 %v2883
    %v3684 = vunpack.c.l.b16 %v2884
    %v3685 = vunpack.c.h.b16 %v2884
    %v3686 = vunpack.c.l.b16 %v2885
    %v3687 = vunpack.c.h.b16 %v2885
    %v3688 = vunpack.c.l.b16 %v2886
    %v3689 = vunpack.c.h.b16 %v2886
    %v3690 = vunpack.c.l.b16 %v2887
    %v3691 = vunpack.c.h.b16 %v2887
    %v3692 = vunpack.c.l.b16 %v2888
    %v3693 = vunpack.c.h.b16 %v2888
    %v3694 = vunpack.c.l.b16 %v2889
    %v3695 = vunpack.c.h.b16 %v2889
    %v3696 = vunpack.c.l.b16 %v2890
    %v3697 = vunpack.c.h.b16 %v2890
    %v3698 = vunpack.c.l.b16 %v2891
    %v3699 = vunpack.c.h.b16 %v2891
    %v3700 = vunpack.c.l.b16 %v2892
    %v3701 = vunpack.c.h.b16 %v2892
    %v3702 = vunpack.c.l.b16 %v2893
    %v3703 = vunpack.c.h.b16 %v2893
    %v3704 = vunpack.c.l.b16 %v2894
    %v3705 = vunpack.c.h.b16 %v2894
    %v3706 = vunpack.c.l.b16 %v2895
    %v3707 = vunpack.c.h.b16 %v2895
    %v3708 = vunpack.c.l.b16 %v2896
    %v3709 = vunpack.c.h.b16 %v2896
    %v3710 = vpack.c.b16 %v3206, %v3198
    %v3711 = vpack.c.b16 %v3207, %v3199
    %v3712 = vpack.c.b16 %v3208, %v3200
    %v3713 = vpack.c.b16 %v3209, %v3201
    %v3714 = vpack.c.b16 %v3210, %v3202
    %v3715 = vpack.c.b16 %v3211, %v3203
    %v3716 = vpack.c.b16 %v3212, %v3204
    %v3717 = vpack.c.b16 %v3213, %v3205
    %v3718 = vpack.c.b16 %v3222, %v3214
    %v3719 = vpack.c.b16 %v3223, %v3215
    %v3720 = vpack.c.b16 %v3224, %v3216
    %v3721 = vpack.c.b16 %v3225, %v3217
    %v3722 = vpack.c.b16 %v3226, %v3218
    %v3723 = vpack.c.b16 %v3227, %v3219
    %v3724 = vpack.c.b16 %v3228, %v3220
    %v3725 = vpack.c.b16 %v3229, %v3221
    %v3726 = vpack.c.b16 %v3238, %v3230
    %v3727 = vpack.c.b16 %v3239, %v3231
    %v3728 = vpack.c.b16 %v3240, %v3232
    %v3729 = vpack.c.b16 %v3241, %v3233
    %v3730 = vpack.c.b16 %v3242, %v3234
    %v3731 = vpack.c.b16 %v3243, %v3235
    %v3732 = vpack.c.b16 %v3244, %v3236
    %v3733 = vpack.c.b16 %v3245, %v3237
    %v3734 = vpack.c.b16 %v3254, %v3246
    %v3735 = vpack.c.b16 %v3255, %v3247
    %v3736 = vpack.c.b16 %v3256, %v3248
    %v3737 = vpack.c.b16 %v3257, %v3249
    %v3738 = vpack.c.b16 %v3258, %v3250
    %v3739 = vpack.c.b16 %v3259, %v3251
    %v3740 = vpack.c.b16 %v3260, %v3252
    %v3741 = vpack.c.b16 %v3261, %v3253
    %v3742 = vpack.c.b16 %v3270, %v3262
    %v3743 = vpack.c.b16 %v3271, %v3263
    %v3744 = vpack.c.b16 %v3272, %v3264
    %v3745 = vpack.c.b16 %v3273, %v3265
    %v3746 = vpack.c.b16 %v3274, %v3266
    %v3747 = vpack.c.b16 %v3275, %v3267
    %v3748 = vpack.c.b16 %v3276, %v3268
    %v3749 = vpack.c.b16 %v3277, %v3269
    %v3750 = vpack.c.b16 %v3286, %v3278
    %v3751 = vpack.c.b16 %v3287, %v3279
    %v3752 = vpack.c.b16 %v3288, %v3280
    %v3753 = vpack.c.b16 %v3289, %v3281
    %v3754 = vpack.c.b16 %v3290, %v3282
    %v3755 = vpack.c.b16 %v3291, %v3283
    %v3756 = vpack.c.b16 %v3292, %v3284
    %v3757 = vpack.c.b16 %v3293, %v3285
    %v3758 = vpack.c.b16 %v3302, %v3294
    %v3759 = vpack.c.b16 %v3303, %v3295
    %v3760 = vpack.c.b16 %v3304, %v3296
    %v3761 = vpack.c.b16 %v3305, %v3297
    %v3762 = vpack.c.b16 %v3306, %v3298
    %v3763 = vpack.c.b16 %v3307, %v3299
    %v3764 = vpack.c.b16 %v3308, %v3300
    %v3765 = vpack.c.b16 %v3309, %v3301
    %v3766 = vpack.c.b16 %v3318, %v3310
    %v3767 = vpack.c.b16 %v3319, %v3311
    %v3768 = vpack.c.b16 %v3320, %v3312
    %v3769 = vpack.c.b16 %v3321, %v3313
    %v3770 = vpack.c.b16 %v3322, %v3314
    %v3771 = vpack.c.b16 %v3323, %v3315
    %v3772 = vpack.c.b16 %v3324, %v3316
    %v3773 = vpack.c.b16 %v3325, %v3317
    %v3774 = vpack.c.b16 %v3334, %v3326
    %v3775 = vpack.c.b16 %v3335, %v3327
    %v3776 = vpack.c.b16 %v3336, %v3328
    %v3777 = vpack.c.b16 %v3337, %v3329
    %v3778 = vpack.c.b16 %v3338, %v3330
    %v3779 = vpack.c.b16 %v3339, %v3331
    %v3780 = vpack.c.b16 %v3340, %v3332
    %v3781 = vpack.c.b16 %v3341, %v3333
    %v3782 = vpack.c.b16 %v3350, %v3342
    %v3783 = vpack.c.b16 %v3351, %v3343
    %v3784 = vpack.c.b16 %v3352, %v3344
    %v3785 = vpack.c.b16 %v3353, %v3345
    %v3786 = vpack.c.b16 %v3354, %v3346
    %v3787 = vpack.c.b16 %v3355, %v3347
    %v3788 = vpack.c.b16 %v3356, %v3348
    %v3789 = vpack.c.b16 %v3357, %v3349
    %v3790 = vpack.c.b16 %v3366, %v3358
    %v3791 = vpack.c.b16 %v3367, %v3359
    %v3792 = vpack.c.b16 %v3368, %v3360
    %v3793 = vpack.c.b16 %v3369, %v3361
    %v3794 = vpack.c.b16 %v3370, %v3362
    %v3795 = vpack.c.b16 %v3371, %v3363
    %v3796 = vpack.c.b16 %v3372, %v3364
    %v3797 = vpack.c.b16 %v3373, %v3365
    %v3798 = vpack.c.b16 %v3382, %v3374
    %v3799 = vpack.c.b16 %v3383, %v3375
    %v3800 = vpack.c.b16 %v3384, %v3376
    %v3801 = vpack.c.b16 %v3385, %v3377
    %v3802 = vpack.c.b16 %v3386, %v3378
    %v3803 = vpack.c.b16 %v3387, %v3379
    %v3804 = vpack.c.b16 %v3388, %v3380
    %v3805 = vpack.c.b16 %v3389, %v3381
    %v3806 = vpack.c.b16 %v3398, %v3390
    %v3807 = vpack.c.b16 %v3399, %v3391
    %v3808 = vpack.c.b16 %v3400, %v3392
    %v3809 = vpack.c.b16 %v3401, %v3393
    %v3810 = vpack.c.b16 %v3402, %v3394
    %v3811 = vpack.c.b16 %v3403, %v3395
    %v3812 = vpack.c.b16 %v3404, %v3396
    %v3813 = vpack.c.b16 %v3405, %v3397
    %v3814 = vpack.c.b16 %v3414, %v3406
    %v3815 = vpack.c.b16 %v3415, %v3407
    %v3816 = vpack.c.b16 %v3416, %v3408
    %v3817 = vpack.c.b16 %v3417, %v3409
    %v3818 = vpack.c.b16 %v3418, %v3410
    %v3819 = vpack.c.b16 %v3419, %v3411
    %v3820 = vpack.c.b16 %v3420, %v3412
    %v3821 = vpack.c.b16 %v3421, %v3413
    %v3822 = vpack.c.b16 %v3430, %v3422
    %v3823 = vpack.c.b16 %v3431, %v3423
    %v3824 = vpack.c.b16 %v3432, %v3424
    %v3825 = vpack.c.b16 %v3433, %v3425
    %v3826 = vpack.c.b16 %v3434, %v3426
    %v3827 = vpack.c.b16 %v3435, %v3427
    %v3828 = vpack.c.b16 %v3436, %v3428
    %v3829 = vpack.c.b16 %v3437, %v3429
    %v3830 = vpack.c.b16 %v3446, %v3438
    %v3831 = vpack.c.b16 %v3447, %v3439
    %v3832 = vpack.c.b16 %v3448, %v3440
    %v3833 = vpack.c.b16 %v3449, %v3441
    %v3834 = vpack.c.b16 %v3450, %v3442
    %v3835 = vpack.c.b16 %v3451, %v3443
    %v3836 = vpack.c.b16 %v3452, %v3444
    %v3837 = vpack.c.b16 %v3453, %v3445
    %v3838 = vpack.c.b16 %v3462, %v3454
    %v3839 = vpack.c.b16 %v3463, %v3455
    %v3840 = vpack.c.b16 %v3464, %v3456
    %v3841 = vpack.c.b16 %v3465, %v3457
    %v3842 = vpack.c.b16 %v3466, %v3458
    %v3843 = vpack.c.b16 %v3467, %v3459
    %v3844 = vpack.c.b16 %v3468, %v3460
    %v3845 = vpack.c.b16 %v3469, %v3461
    %v3846 = vpack.c.b16 %v3478, %v3470
    %v3847 = vpack.c.b16 %v3479, %v3471
    %v3848 = vpack.c.b16 %v3480, %v3472
    %v3849 = vpack.c.b16 %v3481, %v3473
    %v3850 = vpack.c.b16 %v3482, %v3474
    %v3851 = vpack.c.b16 %v3483, %v3475
    %v3852 = vpack.c.b16 %v3484, %v3476
    %v3853 = vpack.c.b16 %v3485, %v3477
    %v3854 = vpack.c.b16 %v3494, %v3486
    %v3855 = vpack.c.b16 %v3495, %v3487
    %v3856 = vpack.c.b16 %v3496, %v3488
    %v3857 = vpack.c.b16 %v3497, %v3489
    %v3858 = vpack.c.b16 %v3498, %v3490
    %v3859 = vpack.c.b16 %v3499, %v3491
    %v3860 = vpack.c.b16 %v3500, %v3492
    %v3861 = vpack.c.b16 %v3501, %v3493
    %v3862 = vpack.c.b16 %v3510, %v3502
    %v3863 = vpack.c.b16 %v3511, %v3503
    %v3864 = vpack.c.b16 %v3512, %v3504
    %v3865 = vpack.c.b16 %v3513, %v3505
    %v3866 = vpack.c.b16 %v3514, %v3506
    %v3867 = vpack.c.b16 %v3515, %v3507
    %v3868 = vpack.c.b16 %v3516, %v3508
    %v3869 = vpack.c.b16 %v3517, %v3509
    %v3870 = vpack.c.b16 %v3526, %v3518
    %v3871 = vpack.c.b16 %v3527, %v3519
    %v3872 = vpack.c.b16 %v3528, %v3520
    %v3873 = vpack.c.b16 %v3529, %v3521
    %v3874 = vpack.c.b16 %v3530, %v3522
    %v3875 = vpack.c.b16 %v3531, %v3523
    %v3876 = vpack.c.b16 %v3532, %v3524
    %v3877 = vpack.c.b16 %v3533, %v3525
    %v3878 = vpack.c.b16 %v3542, %v3534
    %v3879 = vpack.c.b16 %v3543, %v3535
    %v3880 = vpack.c.b16 %v3544, %v3536
    %v3881 = vpack.c.b16 %v3545, %v3537
    %v3882 = vpack.c.b16 %v3546, %v3538
    %v3883 = vpack.c.b16 %v3547, %v3539
    %v3884 = vpack.c.b16 %v3548, %v3540
    %v3885 = vpack.c.b16 %v3549, %v3541
    %v3886 = vpack.c.b16 %v3558, %v3550
    %v3887 = vpack.c.b16 %v3559, %v3551
    %v3888 = vpack.c.b16 %v3560, %v3552
    %v3889 = vpack.c.b16 %v3561, %v3553
    %v3890 = vpack.c.b16 %v3562, %v3554
    %v3891 = vpack.c.b16 %v3563, %v3555
    %v3892 = vpack.c.b16 %v3564, %v3556
    %v3893 = vpack.c.b16 %v3565, %v3557
    %v3894 = vpack.c.b16 %v3574, %v3566
    %v3895 = vpack.c.b16 %v3575, %v3567
    %v3896 = vpack.c.b16 %v3576, %v3568
    %v3897 = vpack.c.b16 %v3577, %v3569
    %v3898 = vpack.c.b16 %v3578, %v3570
    %v3899 = vpack.c.b16 %v3579, %v3571
    %v3900 = vpack.c.b16 %v3580, %v3572
    %v3901 = vpack.c.b16 %v3581, %v3573
    %v3902 = vpack.c.b16 %v3590, %v3582
    %v3903 = vpack.c.b16 %v3591, %v3583
    %v3904 = vpack.c.b16 %v3592, %v3584
    %v3905 = vpack.c.b16 %v3593, %v3585
    %v3906 = vpack.c.b16 %v3594, %v3586
    %v3907 = vpack.c.b16 %v3595, %v3587
    %v3908 = vpack.c.b16 %v3596, %v3588
    %v3909 = vpack.c.b16 %v3597, %v3589
    %v3910 = vpack.c.b16 %v3606, %v3598
    %v3911 = vpack.c.b16 %v3607, %v3599
    %v3912 = vpack.c.b16 %v3608, %v3600
    %v3913 = vpack.c.b16 %v3609, %v3601
    %v3914 = vpack.c.b16 %v3610, %v3602
    %v3915 = vpack.c.b16 %v3611, %v3603
    %v3916 = vpack.c.b16 %v3612, %v3604
    %v3917 = vpack.c.b16 %v3613, %v3605
    %v3918 = vpack.c.b16 %v3622, %v3614
    %v3919 = vpack.c.b16 %v3623, %v3615
    %v3920 = vpack.c.b16 %v3624, %v3616
    %v3921 = vpack.c.b16 %v3625, %v3617
    %v3922 = vpack.c.b16 %v3626, %v3618
    %v3923 = vpack.c.b16 %v3627, %v3619
    %v3924 = vpack.c.b16 %v3628, %v3620
    %v3925 = vpack.c.b16 %v3629, %v3621
    %v3926 = vpack.c.b16 %v3638, %v3630
    %v3927 = vpack.c.b16 %v3639, %v3631
    %v3928 = vpack.c.b16 %v3640, %v3632
    %v3929 = vpack.c.b16 %v3641, %v3633
    %v3930 = vpack.c.b16 %v3642, %v3634
    %v3931 = vpack.c.b16 %v3643, %v3635
    %v3932 = vpack.c.b16 %v3644, %v3636
    %v3933 = vpack.c.b16 %v3645, %v3637
    %v3934 = vpack.c.b16 %v3654, %v3646
    %v3935 = vpack.c.b16 %v3655, %v3647
    %v3936 = vpack.c.b16 %v3656, %v3648
    %v3937 = vpack.c.b16 %v3657, %v3649
    %v3938 = vpack.c.b16 %v3658, %v3650
    %v3939 = vpack.c.b16 %v3659, %v3651
    %v3940 = vpack.c.b16 %v3660, %v3652
    %v3941 = vpack.c.b16 %v3661, %v3653
    %v3942 = vpack.c.b16 %v3670, %v3662
    %v3943 = vpack.c.b16 %v3671, %v3663
    %v3944 = vpack.c.b16 %v3672, %v3664
    %v3945 = vpack.c.b16 %v3673, %v3665
    %v3946 = vpack.c.b16 %v3674, %v3666
    %v3947 = vpack.c.b16 %v3675, %v3667
    %v3948 = vpack.c.b16 %v3676, %v3668
    %v3949 = vpack.c.b16 %v3677, %v3669
    %v3950 = vpack.c.b16 %v3686, %v3678
    %v3951 = vpack.c.b16 %v3687, %v3679
    %v3952 = vpack.c.b16 %v3688, %v3680
    %v3953 = vpack.c.b16 %v3689, %v3681
    %v3954 = vpack.c.b16 %v3690, %v3682
    %v3955 = vpack.c.b16 %v3691, %v3683
    %v3956 = vpack.c.b16 %v3692, %v3684
    %v3957 = vpack.c.b16 %v3693, %v3685
    %v3958 = vpack.c.b16 %v3702, %v3694
    %v3959 = vpack.c.b16 %v3703, %v3695
    %v3960 = vpack.c.b16 %v3704, %v3696
    %v3961 = vpack.c.b16 %v3705, %v3697
    %v3962 = vpack.c.b16 %v3706, %v3698
    %v3963 = vpack.c.b16 %v3707, %v3699
    %v3964 = vpack.c.b16 %v3708, %v3700
    %v3965 = vpack.c.b16 %v3709, %v3701
    %4222 = vmatprep.subr.bf16.mxu0 %v3767
    %4223 = vmatpush1.bf16.msra.mxu0 %v3766
    %4224 = vmatprep.subr.bf16.mxu0 %v3759
    %4225 = vmatpush1.bf16.msra.mxu0 %v3758
    %4226 = vmatprep.subr.bf16.mxu0 %v3751
    %4227 = vmatpush1.bf16.msra.mxu0 %v3750
    %4228 = vmatprep.subr.bf16.mxu0 %v3743
    %4229 = vmatpush1.bf16.msra.mxu0 %v3742
    %4230 = vmatprep.subr.bf16.mxu0 %v3735
    %4231 = vmatpush1.bf16.msra.mxu0 %v3734
    %4232 = vmatprep.subr.bf16.mxu0 %v3727
    %4233 = vmatpush1.bf16.msra.mxu0 %v3726
    %4234 = vmatprep.subr.bf16.mxu0 %v3719
    %4235 = vmatpush1.bf16.msra.mxu0 %v3718
    %4236 = vmatprep.subr.bf16.mxu0 %v3711
    %4237 = vmatpush1.bf16.msra.mxu0 %v3710
    %4238 = vmatprep.subr.bf16.mxu0 %v3831
    %4239 = vmatpush2.bf16.msra.mxu0 %v3830
    %4240 = vmatprep.subr.bf16.mxu0 %v3823
    %4241 = vmatpush2.bf16.msra.mxu0 %v3822
    %4242 = vmatprep.subr.bf16.mxu0 %v3815
    %4243 = vmatpush2.bf16.msra.mxu0 %v3814
    %4244 = vmatprep.subr.bf16.mxu0 %v3807
    %4245 = vmatpush2.bf16.msra.mxu0 %v3806
    %4246 = vmatprep.subr.bf16.mxu0 %v3799
    %4247 = vmatpush2.bf16.msra.mxu0 %v3798
    %4248 = vmatprep.subr.bf16.mxu0 %v3791
    %4249 = vmatpush2.bf16.msra.mxu0 %v3790
    %4250 = vmatprep.subr.bf16.mxu0 %v3783
    %4251 = vmatpush2.bf16.msra.mxu0 %v3782
    %4252 = vmatprep.subr.bf16.mxu0 %v3775
    %4253 = vmatpush2.bf16.msra.mxu0 %v3774
    %4254 = vmatprep.mubr.bf16.mxu0 %v2574
    %4255 = vmatmul.mubr.bf16.gmra.mxu0 %v2573
    %v4256 = vpop.f32.mrf.mxu0
    %v4257 = vadd.f32 %v2905, %v4256
    %v4258 = vpop.f32.mrf.mxu0
    %v4259 = vadd.f32 %v2909, %v4258
    %v4260 = vpop.f32.mrf.mxu0
    %v4261 = vadd.f32 %v2905, %v4260
    %v4262 = vpop.f32.mrf.mxu0
    %v4263 = vadd.f32 %v2909, %v4262
    %4264 = vmatprep.mubr.bf16.mxu0 %v2578
    %4265 = vmatmul.mubr.bf16.gmra.mxu0 %v2577
    %v4266 = vpop.f32.mrf.mxu0
    %v4267 = vadd.f32 %v2905, %v4266
    %v4268 = vpop.f32.mrf.mxu0
    %v4269 = vadd.f32 %v2909, %v4268
    %v4270 = vpop.f32.mrf.mxu0
    %v4271 = vadd.f32 %v2905, %v4270
    %v4272 = vpop.f32.mrf.mxu0
    %v4273 = vadd.f32 %v2909, %v4272
    %4274 = vmatprep.mubr.bf16.mxu0 %v2582
    %4275 = vmatmul.mubr.bf16.gmra.mxu0 %v2581
    %v4276 = vpop.f32.mrf.mxu0
    %v4277 = vadd.f32 %v2905, %v4276
    %v4278 = vpop.f32.mrf.mxu0
    %v4279 = vadd.f32 %v2909, %v4278
    %v4280 = vpop.f32.mrf.mxu0
    %v4281 = vadd.f32 %v2905, %v4280
    %v4282 = vpop.f32.mrf.mxu0
    %v4283 = vadd.f32 %v2909, %v4282
    %4284 = vmatprep.mubr.bf16.mxu0 %v2586
    %4285 = vmatmul.mubr.bf16.gmra.mxu0 %v2585
    %v4286 = vpop.f32.mrf.mxu0
    %v4287 = vadd.f32 %v2905, %v4286
    %v4288 = vpop.f32.mrf.mxu0
    %v4289 = vadd.f32 %v2909, %v4288
    %v4290 = vpop.f32.mrf.mxu0
    %v4291 = vadd.f32 %v2905, %v4290
    %v4292 = vpop.f32.mrf.mxu0
    %v4293 = vadd.f32 %v2909, %v4292
    %4294 = vmatprep.mubr.bf16.mxu0 %v2590
    %4295 = vmatmul.mubr.bf16.gmra.mxu0 %v2589
    %v4296 = vpop.f32.mrf.mxu0
    %v4297 = vadd.f32 %v2905, %v4296
    %v4298 = vpop.f32.mrf.mxu0
    %v4299 = vadd.f32 %v2909, %v4298
    %v4300 = vpop.f32.mrf.mxu0
    %v4301 = vadd.f32 %v2905, %v4300
    %v4302 = vpop.f32.mrf.mxu0
    %v4303 = vadd.f32 %v2909, %v4302
    %4304 = vmatprep.mubr.bf16.mxu0 %v2594
    %4305 = vmatmul.mubr.bf16.gmra.mxu0 %v2593
    %v4306 = vpop.f32.mrf.mxu0
    %v4307 = vadd.f32 %v2905, %v4306
    %v4308 = vpop.f32.mrf.mxu0
    %v4309 = vadd.f32 %v2909, %v4308
    %v4310 = vpop.f32.mrf.mxu0
    %v4311 = vadd.f32 %v2905, %v4310
    %v4312 = vpop.f32.mrf.mxu0
    %v4313 = vadd.f32 %v2909, %v4312
    %4314 = vmatprep.mubr.bf16.mxu0 %v2598
    %4315 = vmatmul.mubr.bf16.gmra.mxu0 %v2597
    %v4316 = vpop.f32.mrf.mxu0
    %v4317 = vadd.f32 %v2905, %v4316
    %v4318 = vpop.f32.mrf.mxu0
    %v4319 = vadd.f32 %v2909, %v4318
    %v4320 = vpop.f32.mrf.mxu0
    %v4321 = vadd.f32 %v2905, %v4320
    %v4322 = vpop.f32.mrf.mxu0
    %v4323 = vadd.f32 %v2909, %v4322
    %4324 = vmatprep.mubr.bf16.mxu0 %v2602
    %4325 = vmatmul.mubr.bf16.gmra.mxu0 %v2601
    %v4326 = vpop.f32.mrf.mxu0
    %v4327 = vadd.f32 %v2905, %v4326
    %v4328 = vpop.f32.mrf.mxu0
    %v4329 = vadd.f32 %v2909, %v4328
    %v4330 = vpop.f32.mrf.mxu0
    %v4331 = vadd.f32 %v2905, %v4330
    %v4332 = vpop.f32.mrf.mxu0
    %v4333 = vadd.f32 %v2909, %v4332
    %4334 = vmatprep.mubr.bf16.mxu0 %v2606
    %4335 = vmatmul.mubr.bf16.gmra.mxu0 %v2605
    %v4336 = vpop.f32.mrf.mxu0
    %v4337 = vadd.f32 %v2905, %v4336
    %v4338 = vpop.f32.mrf.mxu0
    %v4339 = vadd.f32 %v2909, %v4338
    %v4340 = vpop.f32.mrf.mxu0
    %v4341 = vadd.f32 %v2905, %v4340
    %v4342 = vpop.f32.mrf.mxu0
    %v4343 = vadd.f32 %v2909, %v4342
    %4344 = vmatprep.mubr.bf16.mxu0 %v2610
    %4345 = vmatmul.mubr.bf16.gmra.mxu0 %v2609
    %v4346 = vpop.f32.mrf.mxu0
    %v4347 = vadd.f32 %v2905, %v4346
    %v4348 = vpop.f32.mrf.mxu0
    %v4349 = vadd.f32 %v2909, %v4348
    %v4350 = vpop.f32.mrf.mxu0
    %v4351 = vadd.f32 %v2905, %v4350
    %v4352 = vpop.f32.mrf.mxu0
    %v4353 = vadd.f32 %v2909, %v4352
    %4354 = vmatprep.mubr.bf16.mxu0 %v2614
    %4355 = vmatmul.mubr.bf16.gmra.mxu0 %v2613
    %v4356 = vpop.f32.mrf.mxu0
    %v4357 = vadd.f32 %v2905, %v4356
    %v4358 = vpop.f32.mrf.mxu0
    %v4359 = vadd.f32 %v2909, %v4358
    %v4360 = vpop.f32.mrf.mxu0
    %v4361 = vadd.f32 %v2905, %v4360
    %v4362 = vpop.f32.mrf.mxu0
    %v4363 = vadd.f32 %v2909, %v4362
    %4364 = vmatprep.mubr.bf16.mxu0 %v2618
    %4365 = vmatmul.mubr.bf16.gmra.mxu0 %v2617
    %v4366 = vpop.f32.mrf.mxu0
    %v4367 = vadd.f32 %v2905, %v4366
    %v4368 = vpop.f32.mrf.mxu0
    %v4369 = vadd.f32 %v2909, %v4368
    %v4370 = vpop.f32.mrf.mxu0
    %v4371 = vadd.f32 %v2905, %v4370
    %v4372 = vpop.f32.mrf.mxu0
    %v4373 = vadd.f32 %v2909, %v4372
    %4374 = vmatprep.mubr.bf16.mxu0 %v2622
    %4375 = vmatmul.mubr.bf16.gmra.mxu0 %v2621
    %v4376 = vpop.f32.mrf.mxu0
    %v4377 = vadd.f32 %v2905, %v4376
    %v4378 = vpop.f32.mrf.mxu0
    %v4379 = vadd.f32 %v2909, %v4378
    %v4380 = vpop.f32.mrf.mxu0
    %v4381 = vadd.f32 %v2905, %v4380
    %v4382 = vpop.f32.mrf.mxu0
    %v4383 = vadd.f32 %v2909, %v4382
    %4384 = vmatprep.mubr.bf16.mxu0 %v2626
    %4385 = vmatmul.mubr.bf16.gmra.mxu0 %v2625
    %v4386 = vpop.f32.mrf.mxu0
    %v4387 = vadd.f32 %v2905, %v4386
    %v4388 = vpop.f32.mrf.mxu0
    %v4389 = vadd.f32 %v2909, %v4388
    %v4390 = vpop.f32.mrf.mxu0
    %v4391 = vadd.f32 %v2905, %v4390
    %v4392 = vpop.f32.mrf.mxu0
    %v4393 = vadd.f32 %v2909, %v4392
    %4394 = vmatprep.mubr.bf16.mxu0 %v2630
    %4395 = vmatmul.mubr.bf16.gmra.mxu0 %v2629
    %v4396 = vpop.f32.mrf.mxu0
    %v4397 = vadd.f32 %v2905, %v4396
    %v4398 = vpop.f32.mrf.mxu0
    %v4399 = vadd.f32 %v2909, %v4398
    %v4400 = vpop.f32.mrf.mxu0
    %v4401 = vadd.f32 %v2905, %v4400
    %v4402 = vpop.f32.mrf.mxu0
    %v4403 = vadd.f32 %v2909, %v4402
    %4404 = vmatprep.mubr.bf16.mxu0 %v2634
    %4405 = vmatmul.mubr.bf16.gmra.mxu0 %v2633
    %v4406 = vpop.f32.mrf.mxu0
    %v4407 = vadd.f32 %v2905, %v4406
    %v4408 = vpop.f32.mrf.mxu0
    %v4409 = vadd.f32 %v2909, %v4408
    %v4410 = vpop.f32.mrf.mxu0
    %v4411 = vadd.f32 %v2905, %v4410
    %v4412 = vpop.f32.mrf.mxu0
    %v4413 = vadd.f32 %v2909, %v4412
    %4414 = vdwg.mxu0
    %4415 = vmatprep.subr.bf16.mxu0 %v3895
    %4416 = vmatpush1.bf16.msra.mxu0 %v3894
    %4417 = vmatprep.subr.bf16.mxu0 %v3887
    %4418 = vmatpush1.bf16.msra.mxu0 %v3886
    %4419 = vmatprep.subr.bf16.mxu0 %v3879
    %4420 = vmatpush1.bf16.msra.mxu0 %v3878
    %4421 = vmatprep.subr.bf16.mxu0 %v3871
    %4422 = vmatpush1.bf16.msra.mxu0 %v3870
    %4423 = vmatprep.subr.bf16.mxu0 %v3863
    %4424 = vmatpush1.bf16.msra.mxu0 %v3862
    %4425 = vmatprep.subr.bf16.mxu0 %v3855
    %4426 = vmatpush1.bf16.msra.mxu0 %v3854
    %4427 = vmatprep.subr.bf16.mxu0 %v3847
    %4428 = vmatpush1.bf16.msra.mxu0 %v3846
    %4429 = vmatprep.subr.bf16.mxu0 %v3839
    %4430 = vmatpush1.bf16.msra.mxu0 %v3838
    %4431 = vmatprep.subr.bf16.mxu0 %v3959
    %4432 = vmatpush2.bf16.msra.mxu0 %v3958
    %4433 = vmatprep.subr.bf16.mxu0 %v3951
    %4434 = vmatpush2.bf16.msra.mxu0 %v3950
    %4435 = vmatprep.subr.bf16.mxu0 %v3943
    %4436 = vmatpush2.bf16.msra.mxu0 %v3942
    %4437 = vmatprep.subr.bf16.mxu0 %v3935
    %4438 = vmatpush2.bf16.msra.mxu0 %v3934
    %4439 = vmatprep.subr.bf16.mxu0 %v3927
    %4440 = vmatpush2.bf16.msra.mxu0 %v3926
    %4441 = vmatprep.subr.bf16.mxu0 %v3919
    %4442 = vmatpush2.bf16.msra.mxu0 %v3918
    %4443 = vmatprep.subr.bf16.mxu0 %v3911
    %4444 = vmatpush2.bf16.msra.mxu0 %v3910
    %4445 = vmatprep.subr.bf16.mxu0 %v3903
    %4446 = vmatpush2.bf16.msra.mxu0 %v3902
    %4447 = vmatprep.mubr.bf16.mxu0 %v2576
    %4448 = vmatmul.mubr.bf16.gmra.mxu0 %v2575
    %v4449 = vpop.f32.mrf.mxu0
    %v4450 = vadd.f32 %v4257, %v4449
    %v4451 = vpop.f32.mrf.mxu0
    %v4452 = vadd.f32 %v4259, %v4451
    %v4453 = vpop.f32.mrf.mxu0
    %v4454 = vadd.f32 %v4261, %v4453
    %v4455 = vpop.f32.mrf.mxu0
    %v4456 = vadd.f32 %v4263, %v4455
    %4457 = vmatprep.mubr.bf16.mxu0 %v2580
    %4458 = vmatmul.mubr.bf16.gmra.mxu0 %v2579
    %v4459 = vpop.f32.mrf.mxu0
    %v4460 = vadd.f32 %v4267, %v4459
    %v4461 = vpop.f32.mrf.mxu0
    %v4462 = vadd.f32 %v4269, %v4461
    %v4463 = vpop.f32.mrf.mxu0
    %v4464 = vadd.f32 %v4271, %v4463
    %v4465 = vpop.f32.mrf.mxu0
    %v4466 = vadd.f32 %v4273, %v4465
    %4467 = vmatprep.mubr.bf16.mxu0 %v2584
    %4468 = vmatmul.mubr.bf16.gmra.mxu0 %v2583
    %v4469 = vpop.f32.mrf.mxu0
    %v4470 = vadd.f32 %v4277, %v4469
    %v4471 = vpop.f32.mrf.mxu0
    %v4472 = vadd.f32 %v4279, %v4471
    %v4473 = vpop.f32.mrf.mxu0
    %v4474 = vadd.f32 %v4281, %v4473
    %v4475 = vpop.f32.mrf.mxu0
    %v4476 = vadd.f32 %v4283, %v4475
    %4477 = vmatprep.mubr.bf16.mxu0 %v2588
    %4478 = vmatmul.mubr.bf16.gmra.mxu0 %v2587
    %v4479 = vpop.f32.mrf.mxu0
    %v4480 = vadd.f32 %v4287, %v4479
    %v4481 = vpop.f32.mrf.mxu0
    %v4482 = vadd.f32 %v4289, %v4481
    %v4483 = vpop.f32.mrf.mxu0
    %v4484 = vadd.f32 %v4291, %v4483
    %v4485 = vpop.f32.mrf.mxu0
    %v4486 = vadd.f32 %v4293, %v4485
    %4487 = vmatprep.mubr.bf16.mxu0 %v2592
    %4488 = vmatmul.mubr.bf16.gmra.mxu0 %v2591
    %v4489 = vpop.f32.mrf.mxu0
    %v4490 = vadd.f32 %v4297, %v4489
    %v4491 = vpop.f32.mrf.mxu0
    %v4492 = vadd.f32 %v4299, %v4491
    %v4493 = vpop.f32.mrf.mxu0
    %v4494 = vadd.f32 %v4301, %v4493
    %v4495 = vpop.f32.mrf.mxu0
    %v4496 = vadd.f32 %v4303, %v4495
    %4497 = vmatprep.mubr.bf16.mxu0 %v2596
    %4498 = vmatmul.mubr.bf16.gmra.mxu0 %v2595
    %v4499 = vpop.f32.mrf.mxu0
    %v4500 = vadd.f32 %v4307, %v4499
    %v4501 = vpop.f32.mrf.mxu0
    %v4502 = vadd.f32 %v4309, %v4501
    %v4503 = vpop.f32.mrf.mxu0
    %v4504 = vadd.f32 %v4311, %v4503
    %v4505 = vpop.f32.mrf.mxu0
    %v4506 = vadd.f32 %v4313, %v4505
    %4507 = vmatprep.mubr.bf16.mxu0 %v2600
    %4508 = vmatmul.mubr.bf16.gmra.mxu0 %v2599
    %v4509 = vpop.f32.mrf.mxu0
    %v4510 = vadd.f32 %v4317, %v4509
    %v4511 = vpop.f32.mrf.mxu0
    %v4512 = vadd.f32 %v4319, %v4511
    %v4513 = vpop.f32.mrf.mxu0
    %v4514 = vadd.f32 %v4321, %v4513
    %v4515 = vpop.f32.mrf.mxu0
    %v4516 = vadd.f32 %v4323, %v4515
    %4517 = vmatprep.mubr.bf16.mxu0 %v2604
    %4518 = vmatmul.mubr.bf16.gmra.mxu0 %v2603
    %v4519 = vpop.f32.mrf.mxu0
    %v4520 = vadd.f32 %v4327, %v4519
    %v4521 = vpop.f32.mrf.mxu0
    %v4522 = vadd.f32 %v4329, %v4521
    %v4523 = vpop.f32.mrf.mxu0
    %v4524 = vadd.f32 %v4331, %v4523
    %v4525 = vpop.f32.mrf.mxu0
    %v4526 = vadd.f32 %v4333, %v4525
    %4527 = vmatprep.mubr.bf16.mxu0 %v2608
    %4528 = vmatmul.mubr.bf16.gmra.mxu0 %v2607
    %v4529 = vpop.f32.mrf.mxu0
    %v4530 = vadd.f32 %v4337, %v4529
    %v4531 = vpop.f32.mrf.mxu0
    %v4532 = vadd.f32 %v4339, %v4531
    %v4533 = vpop.f32.mrf.mxu0
    %v4534 = vadd.f32 %v4341, %v4533
    %v4535 = vpop.f32.mrf.mxu0
    %v4536 = vadd.f32 %v4343, %v4535
    %4537 = vmatprep.mubr.bf16.mxu0 %v2612
    %4538 = vmatmul.mubr.bf16.gmra.mxu0 %v2611
    %v4539 = vpop.f32.mrf.mxu0
    %v4540 = vadd.f32 %v4347, %v4539
    %v4541 = vpop.f32.mrf.mxu0
    %v4542 = vadd.f32 %v4349, %v4541
    %v4543 = vpop.f32.mrf.mxu0
    %v4544 = vadd.f32 %v4351, %v4543
    %v4545 = vpop.f32.mrf.mxu0
    %v4546 = vadd.f32 %v4353, %v4545
    %4547 = vmatprep.mubr.bf16.mxu0 %v2616
    %4548 = vmatmul.mubr.bf16.gmra.mxu0 %v2615
    %v4549 = vpop.f32.mrf.mxu0
    %v4550 = vadd.f32 %v4357, %v4549
    %v4551 = vpop.f32.mrf.mxu0
    %v4552 = vadd.f32 %v4359, %v4551
    %v4553 = vpop.f32.mrf.mxu0
    %v4554 = vadd.f32 %v4361, %v4553
    %v4555 = vpop.f32.mrf.mxu0
    %v4556 = vadd.f32 %v4363, %v4555
    %4557 = vmatprep.mubr.bf16.mxu0 %v2620
    %4558 = vmatmul.mubr.bf16.gmra.mxu0 %v2619
    %v4559 = vpop.f32.mrf.mxu0
    %v4560 = vadd.f32 %v4367, %v4559
    %v4561 = vpop.f32.mrf.mxu0
    %v4562 = vadd.f32 %v4369, %v4561
    %v4563 = vpop.f32.mrf.mxu0
    %v4564 = vadd.f32 %v4371, %v4563
    %v4565 = vpop.f32.mrf.mxu0
    %v4566 = vadd.f32 %v4373, %v4565
    %4567 = vmatprep.mubr.bf16.mxu0 %v2624
    %4568 = vmatmul.mubr.bf16.gmra.mxu0 %v2623
    %v4569 = vpop.f32.mrf.mxu0
    %v4570 = vadd.f32 %v4377, %v4569
    %v4571 = vpop.f32.mrf.mxu0
    %v4572 = vadd.f32 %v4379, %v4571
    %v4573 = vpop.f32.mrf.mxu0
    %v4574 = vadd.f32 %v4381, %v4573
    %v4575 = vpop.f32.mrf.mxu0
    %v4576 = vadd.f32 %v4383, %v4575
    %4577 = vmatprep.mubr.bf16.mxu0 %v2628
    %4578 = vmatmul.mubr.bf16.gmra.mxu0 %v2627
    %v4579 = vpop.f32.mrf.mxu0
    %v4580 = vadd.f32 %v4387, %v4579
    %v4581 = vpop.f32.mrf.mxu0
    %v4582 = vadd.f32 %v4389, %v4581
    %v4583 = vpop.f32.mrf.mxu0
    %v4584 = vadd.f32 %v4391, %v4583
    %v4585 = vpop.f32.mrf.mxu0
    %v4586 = vadd.f32 %v4393, %v4585
    %4587 = vmatprep.mubr.bf16.mxu0 %v2632
    %4588 = vmatmul.mubr.bf16.gmra.mxu0 %v2631
    %v4589 = vpop.f32.mrf.mxu0
    %v4590 = vadd.f32 %v4397, %v4589
    %v4591 = vpop.f32.mrf.mxu0
    %v4592 = vadd.f32 %v4399, %v4591
    %v4593 = vpop.f32.mrf.mxu0
    %v4594 = vadd.f32 %v4401, %v4593
    %v4595 = vpop.f32.mrf.mxu0
    %v4596 = vadd.f32 %v4403, %v4595
    %4597 = vmatprep.mubr.bf16.mxu0 %v2636
    %4598 = vmatmul.mubr.bf16.gmra.mxu0 %v2635
    %v4599 = vpop.f32.mrf.mxu0
    %v4600 = vadd.f32 %v4407, %v4599
    %v4601 = vpop.f32.mrf.mxu0
    %v4602 = vadd.f32 %v4409, %v4601
    %v4603 = vpop.f32.mrf.mxu0
    %v4604 = vadd.f32 %v4411, %v4603
    %v4605 = vpop.f32.mrf.mxu0
    %v4606 = vadd.f32 %v4413, %v4605
    %4607 = vdwg.mxu0
    %4608 = vmatprep.subr.bf16.mxu0 %v3769
    %4609 = vmatpush1.bf16.msra.mxu0 %v3768
    %4610 = vmatprep.subr.bf16.mxu0 %v3761
    %4611 = vmatpush1.bf16.msra.mxu0 %v3760
    %4612 = vmatprep.subr.bf16.mxu0 %v3753
    %4613 = vmatpush1.bf16.msra.mxu0 %v3752
    %4614 = vmatprep.subr.bf16.mxu0 %v3745
    %4615 = vmatpush1.bf16.msra.mxu0 %v3744
    %4616 = vmatprep.subr.bf16.mxu0 %v3737
    %4617 = vmatpush1.bf16.msra.mxu0 %v3736
    %4618 = vmatprep.subr.bf16.mxu0 %v3729
    %4619 = vmatpush1.bf16.msra.mxu0 %v3728
    %4620 = vmatprep.subr.bf16.mxu0 %v3721
    %4621 = vmatpush1.bf16.msra.mxu0 %v3720
    %4622 = vmatprep.subr.bf16.mxu0 %v3713
    %4623 = vmatpush1.bf16.msra.mxu0 %v3712
    %4624 = vmatprep.subr.bf16.mxu0 %v3833
    %4625 = vmatpush2.bf16.msra.mxu0 %v3832
    %4626 = vmatprep.subr.bf16.mxu0 %v3825
    %4627 = vmatpush2.bf16.msra.mxu0 %v3824
    %4628 = vmatprep.subr.bf16.mxu0 %v3817
    %4629 = vmatpush2.bf16.msra.mxu0 %v3816
    %4630 = vmatprep.subr.bf16.mxu0 %v3809
    %4631 = vmatpush2.bf16.msra.mxu0 %v3808
    %4632 = vmatprep.subr.bf16.mxu0 %v3801
    %4633 = vmatpush2.bf16.msra.mxu0 %v3800
    %4634 = vmatprep.subr.bf16.mxu0 %v3793
    %4635 = vmatpush2.bf16.msra.mxu0 %v3792
    %4636 = vmatprep.subr.bf16.mxu0 %v3785
    %4637 = vmatpush2.bf16.msra.mxu0 %v3784
    %4638 = vmatprep.subr.bf16.mxu0 %v3777
    %4639 = vmatpush2.bf16.msra.mxu0 %v3776
    %4640 = vmatprep.mubr.bf16.mxu0 %v2574
    %4641 = vmatmul.mubr.bf16.gmra.mxu0 %v2573
    %v4642 = vpop.f32.mrf.mxu0
    %v4643 = vadd.f32 %v2913, %v4642
    %v4644 = vpop.f32.mrf.mxu0
    %v4645 = vadd.f32 %v2917, %v4644
    %v4646 = vpop.f32.mrf.mxu0
    %v4647 = vadd.f32 %v2913, %v4646
    %v4648 = vpop.f32.mrf.mxu0
    %v4649 = vadd.f32 %v2917, %v4648
    %4650 = vmatprep.mubr.bf16.mxu0 %v2578
    %4651 = vmatmul.mubr.bf16.gmra.mxu0 %v2577
    %v4652 = vpop.f32.mrf.mxu0
    %v4653 = vadd.f32 %v2913, %v4652
    %v4654 = vpop.f32.mrf.mxu0
    %v4655 = vadd.f32 %v2917, %v4654
    %v4656 = vpop.f32.mrf.mxu0
    %v4657 = vadd.f32 %v2913, %v4656
    %v4658 = vpop.f32.mrf.mxu0
    %v4659 = vadd.f32 %v2917, %v4658
    %4660 = vmatprep.mubr.bf16.mxu0 %v2582
    %4661 = vmatmul.mubr.bf16.gmra.mxu0 %v2581
    %v4662 = vpop.f32.mrf.mxu0
    %v4663 = vadd.f32 %v2913, %v4662
    %v4664 = vpop.f32.mrf.mxu0
    %v4665 = vadd.f32 %v2917, %v4664
    %v4666 = vpop.f32.mrf.mxu0
    %v4667 = vadd.f32 %v2913, %v4666
    %v4668 = vpop.f32.mrf.mxu0
    %v4669 = vadd.f32 %v2917, %v4668
    %4670 = vmatprep.mubr.bf16.mxu0 %v2586
    %4671 = vmatmul.mubr.bf16.gmra.mxu0 %v2585
    %v4672 = vpop.f32.mrf.mxu0
    %v4673 = vadd.f32 %v2913, %v4672
    %v4674 = vpop.f32.mrf.mxu0
    %v4675 = vadd.f32 %v2917, %v4674
    %v4676 = vpop.f32.mrf.mxu0
    %v4677 = vadd.f32 %v2913, %v4676
    %v4678 = vpop.f32.mrf.mxu0
    %v4679 = vadd.f32 %v2917, %v4678
    %4680 = vmatprep.mubr.bf16.mxu0 %v2590
    %4681 = vmatmul.mubr.bf16.gmra.mxu0 %v2589
    %v4682 = vpop.f32.mrf.mxu0
    %v4683 = vadd.f32 %v2913, %v4682
    %v4684 = vpop.f32.mrf.mxu0
    %v4685 = vadd.f32 %v2917, %v4684
    %v4686 = vpop.f32.mrf.mxu0
    %v4687 = vadd.f32 %v2913, %v4686
    %v4688 = vpop.f32.mrf.mxu0
    %v4689 = vadd.f32 %v2917, %v4688
    %4690 = vmatprep.mubr.bf16.mxu0 %v2594
    %4691 = vmatmul.mubr.bf16.gmra.mxu0 %v2593
    %v4692 = vpop.f32.mrf.mxu0
    %v4693 = vadd.f32 %v2913, %v4692
    %v4694 = vpop.f32.mrf.mxu0
    %v4695 = vadd.f32 %v2917, %v4694
    %v4696 = vpop.f32.mrf.mxu0
    %v4697 = vadd.f32 %v2913, %v4696
    %v4698 = vpop.f32.mrf.mxu0
    %v4699 = vadd.f32 %v2917, %v4698
    %4700 = vmatprep.mubr.bf16.mxu0 %v2598
    %4701 = vmatmul.mubr.bf16.gmra.mxu0 %v2597
    %v4702 = vpop.f32.mrf.mxu0
    %v4703 = vadd.f32 %v2913, %v4702
    %v4704 = vpop.f32.mrf.mxu0
    %v4705 = vadd.f32 %v2917, %v4704
    %v4706 = vpop.f32.mrf.mxu0
    %v4707 = vadd.f32 %v2913, %v4706
    %v4708 = vpop.f32.mrf.mxu0
    %v4709 = vadd.f32 %v2917, %v4708
    %4710 = vmatprep.mubr.bf16.mxu0 %v2602
    %4711 = vmatmul.mubr.bf16.gmra.mxu0 %v2601
    %v4712 = vpop.f32.mrf.mxu0
    %v4713 = vadd.f32 %v2913, %v4712
    %v4714 = vpop.f32.mrf.mxu0
    %v4715 = vadd.f32 %v2917, %v4714
    %v4716 = vpop.f32.mrf.mxu0
    %v4717 = vadd.f32 %v2913, %v4716
    %v4718 = vpop.f32.mrf.mxu0
    %v4719 = vadd.f32 %v2917, %v4718
    %4720 = vmatprep.mubr.bf16.mxu0 %v2606
    %4721 = vmatmul.mubr.bf16.gmra.mxu0 %v2605
    %v4722 = vpop.f32.mrf.mxu0
    %v4723 = vadd.f32 %v2913, %v4722
    %v4724 = vpop.f32.mrf.mxu0
    %v4725 = vadd.f32 %v2917, %v4724
    %v4726 = vpop.f32.mrf.mxu0
    %v4727 = vadd.f32 %v2913, %v4726
    %v4728 = vpop.f32.mrf.mxu0
    %v4729 = vadd.f32 %v2917, %v4728
    %4730 = vmatprep.mubr.bf16.mxu0 %v2610
    %4731 = vmatmul.mubr.bf16.gmra.mxu0 %v2609
    %v4732 = vpop.f32.mrf.mxu0
    %v4733 = vadd.f32 %v2913, %v4732
    %v4734 = vpop.f32.mrf.mxu0
    %v4735 = vadd.f32 %v2917, %v4734
    %v4736 = vpop.f32.mrf.mxu0
    %v4737 = vadd.f32 %v2913, %v4736
    %v4738 = vpop.f32.mrf.mxu0
    %v4739 = vadd.f32 %v2917, %v4738
    %4740 = vmatprep.mubr.bf16.mxu0 %v2614
    %4741 = vmatmul.mubr.bf16.gmra.mxu0 %v2613
    %v4742 = vpop.f32.mrf.mxu0
    %v4743 = vadd.f32 %v2913, %v4742
    %v4744 = vpop.f32.mrf.mxu0
    %v4745 = vadd.f32 %v2917, %v4744
    %v4746 = vpop.f32.mrf.mxu0
    %v4747 = vadd.f32 %v2913, %v4746
    %v4748 = vpop.f32.mrf.mxu0
    %v4749 = vadd.f32 %v2917, %v4748
    %4750 = vmatprep.mubr.bf16.mxu0 %v2618
    %4751 = vmatmul.mubr.bf16.gmra.mxu0 %v2617
    %v4752 = vpop.f32.mrf.mxu0
    %v4753 = vadd.f32 %v2913, %v4752
    %v4754 = vpop.f32.mrf.mxu0
    %v4755 = vadd.f32 %v2917, %v4754
    %v4756 = vpop.f32.mrf.mxu0
    %v4757 = vadd.f32 %v2913, %v4756
    %v4758 = vpop.f32.mrf.mxu0
    %v4759 = vadd.f32 %v2917, %v4758
    %4760 = vmatprep.mubr.bf16.mxu0 %v2622
    %4761 = vmatmul.mubr.bf16.gmra.mxu0 %v2621
    %v4762 = vpop.f32.mrf.mxu0
    %v4763 = vadd.f32 %v2913, %v4762
    %v4764 = vpop.f32.mrf.mxu0
    %v4765 = vadd.f32 %v2917, %v4764
    %v4766 = vpop.f32.mrf.mxu0
    %v4767 = vadd.f32 %v2913, %v4766
    %v4768 = vpop.f32.mrf.mxu0
    %v4769 = vadd.f32 %v2917, %v4768
    %4770 = vmatprep.mubr.bf16.mxu0 %v2626
    %4771 = vmatmul.mubr.bf16.gmra.mxu0 %v2625
    %v4772 = vpop.f32.mrf.mxu0
    %v4773 = vadd.f32 %v2913, %v4772
    %v4774 = vpop.f32.mrf.mxu0
    %v4775 = vadd.f32 %v2917, %v4774
    %v4776 = vpop.f32.mrf.mxu0
    %v4777 = vadd.f32 %v2913, %v4776
    %v4778 = vpop.f32.mrf.mxu0
    %v4779 = vadd.f32 %v2917, %v4778
    %4780 = vmatprep.mubr.bf16.mxu0 %v2630
    %4781 = vmatmul.mubr.bf16.gmra.mxu0 %v2629
    %v4782 = vpop.f32.mrf.mxu0
    %v4783 = vadd.f32 %v2913, %v4782
    %v4784 = vpop.f32.mrf.mxu0
    %v4785 = vadd.f32 %v2917, %v4784
    %v4786 = vpop.f32.mrf.mxu0
    %v4787 = vadd.f32 %v2913, %v4786
    %v4788 = vpop.f32.mrf.mxu0
    %v4789 = vadd.f32 %v2917, %v4788
    %4790 = vmatprep.mubr.bf16.mxu0 %v2634
    %4791 = vmatmul.mubr.bf16.gmra.mxu0 %v2633
    %v4792 = vpop.f32.mrf.mxu0
    %v4793 = vadd.f32 %v2913, %v4792
    %v4794 = vpop.f32.mrf.mxu0
    %v4795 = vadd.f32 %v2917, %v4794
    %v4796 = vpop.f32.mrf.mxu0
    %v4797 = vadd.f32 %v2913, %v4796
    %v4798 = vpop.f32.mrf.mxu0
    %v4799 = vadd.f32 %v2917, %v4798
    %4800 = vdwg.mxu0
    %4801 = vmatprep.subr.bf16.mxu0 %v3897
    %4802 = vmatpush1.bf16.msra.mxu0 %v3896
    %4803 = vmatprep.subr.bf16.mxu0 %v3889
    %4804 = vmatpush1.bf16.msra.mxu0 %v3888
    %4805 = vmatprep.subr.bf16.mxu0 %v3881
    %4806 = vmatpush1.bf16.msra.mxu0 %v3880
    %4807 = vmatprep.subr.bf16.mxu0 %v3873
    %4808 = vmatpush1.bf16.msra.mxu0 %v3872
    %4809 = vmatprep.subr.bf16.mxu0 %v3865
    %4810 = vmatpush1.bf16.msra.mxu0 %v3864
    %4811 = vmatprep.subr.bf16.mxu0 %v3857
    %4812 = vmatpush1.bf16.msra.mxu0 %v3856
    %4813 = vmatprep.subr.bf16.mxu0 %v3849
    %4814 = vmatpush1.bf16.msra.mxu0 %v3848
    %4815 = vmatprep.subr.bf16.mxu0 %v3841
    %4816 = vmatpush1.bf16.msra.mxu0 %v3840
    %4817 = vmatprep.subr.bf16.mxu0 %v3961
    %4818 = vmatpush2.bf16.msra.mxu0 %v3960
    %4819 = vmatprep.subr.bf16.mxu0 %v3953
    %4820 = vmatpush2.bf16.msra.mxu0 %v3952
    %4821 = vmatprep.subr.bf16.mxu0 %v3945
    %4822 = vmatpush2.bf16.msra.mxu0 %v3944
    %4823 = vmatprep.subr.bf16.mxu0 %v3937
    %4824 = vmatpush2.bf16.msra.mxu0 %v3936
    %4825 = vmatprep.subr.bf16.mxu0 %v3929
    %4826 = vmatpush2.bf16.msra.mxu0 %v3928
    %4827 = vmatprep.subr.bf16.mxu0 %v3921
    %4828 = vmatpush2.bf16.msra.mxu0 %v3920
    %4829 = vmatprep.subr.bf16.mxu0 %v3913
    %4830 = vmatpush2.bf16.msra.mxu0 %v3912
    %4831 = vmatprep.subr.bf16.mxu0 %v3905
    %4832 = vmatpush2.bf16.msra.mxu0 %v3904
    %4833 = vmatprep.mubr.bf16.mxu0 %v2576
    %4834 = vmatmul.mubr.bf16.gmra.mxu0 %v2575
    %v4835 = vpop.f32.mrf.mxu0
    %v4836 = vadd.f32 %v4643, %v4835
    %v4837 = vpop.f32.mrf.mxu0
    %v4838 = vadd.f32 %v4645, %v4837
    %v4839 = vpop.f32.mrf.mxu0
    %v4840 = vadd.f32 %v4647, %v4839
    %v4841 = vpop.f32.mrf.mxu0
    %v4842 = vadd.f32 %v4649, %v4841
    %4843 = vmatprep.mubr.bf16.mxu0 %v2580
    %4844 = vmatmul.mubr.bf16.gmra.mxu0 %v2579
    %v4845 = vpop.f32.mrf.mxu0
    %v4846 = vadd.f32 %v4653, %v4845
    %v4847 = vpop.f32.mrf.mxu0
    %v4848 = vadd.f32 %v4655, %v4847
    %v4849 = vpop.f32.mrf.mxu0
    %v4850 = vadd.f32 %v4657, %v4849
    %v4851 = vpop.f32.mrf.mxu0
    %v4852 = vadd.f32 %v4659, %v4851
    %4853 = vmatprep.mubr.bf16.mxu0 %v2584
    %4854 = vmatmul.mubr.bf16.gmra.mxu0 %v2583
    %v4855 = vpop.f32.mrf.mxu0
    %v4856 = vadd.f32 %v4663, %v4855
    %v4857 = vpop.f32.mrf.mxu0
    %v4858 = vadd.f32 %v4665, %v4857
    %v4859 = vpop.f32.mrf.mxu0
    %v4860 = vadd.f32 %v4667, %v4859
    %v4861 = vpop.f32.mrf.mxu0
    %v4862 = vadd.f32 %v4669, %v4861
    %4863 = vmatprep.mubr.bf16.mxu0 %v2588
    %4864 = vmatmul.mubr.bf16.gmra.mxu0 %v2587
    %v4865 = vpop.f32.mrf.mxu0
    %v4866 = vadd.f32 %v4673, %v4865
    %v4867 = vpop.f32.mrf.mxu0
    %v4868 = vadd.f32 %v4675, %v4867
    %v4869 = vpop.f32.mrf.mxu0
    %v4870 = vadd.f32 %v4677, %v4869
    %v4871 = vpop.f32.mrf.mxu0
    %v4872 = vadd.f32 %v4679, %v4871
    %4873 = vmatprep.mubr.bf16.mxu0 %v2592
    %4874 = vmatmul.mubr.bf16.gmra.mxu0 %v2591
    %v4875 = vpop.f32.mrf.mxu0
    %v4876 = vadd.f32 %v4683, %v4875
    %v4877 = vpop.f32.mrf.mxu0
    %v4878 = vadd.f32 %v4685, %v4877
    %v4879 = vpop.f32.mrf.mxu0
    %v4880 = vadd.f32 %v4687, %v4879
    %v4881 = vpop.f32.mrf.mxu0
    %v4882 = vadd.f32 %v4689, %v4881
    %4883 = vmatprep.mubr.bf16.mxu0 %v2596
    %4884 = vmatmul.mubr.bf16.gmra.mxu0 %v2595
    %v4885 = vpop.f32.mrf.mxu0
    %v4886 = vadd.f32 %v4693, %v4885
    %v4887 = vpop.f32.mrf.mxu0
    %v4888 = vadd.f32 %v4695, %v4887
    %v4889 = vpop.f32.mrf.mxu0
    %v4890 = vadd.f32 %v4697, %v4889
    %v4891 = vpop.f32.mrf.mxu0
    %v4892 = vadd.f32 %v4699, %v4891
    %4893 = vmatprep.mubr.bf16.mxu0 %v2600
    %4894 = vmatmul.mubr.bf16.gmra.mxu0 %v2599
    %v4895 = vpop.f32.mrf.mxu0
    %v4896 = vadd.f32 %v4703, %v4895
    %v4897 = vpop.f32.mrf.mxu0
    %v4898 = vadd.f32 %v4705, %v4897
    %v4899 = vpop.f32.mrf.mxu0
    %v4900 = vadd.f32 %v4707, %v4899
    %v4901 = vpop.f32.mrf.mxu0
    %v4902 = vadd.f32 %v4709, %v4901
    %4903 = vmatprep.mubr.bf16.mxu0 %v2604
    %4904 = vmatmul.mubr.bf16.gmra.mxu0 %v2603
    %v4905 = vpop.f32.mrf.mxu0
    %v4906 = vadd.f32 %v4713, %v4905
    %v4907 = vpop.f32.mrf.mxu0
    %v4908 = vadd.f32 %v4715, %v4907
    %v4909 = vpop.f32.mrf.mxu0
    %v4910 = vadd.f32 %v4717, %v4909
    %v4911 = vpop.f32.mrf.mxu0
    %v4912 = vadd.f32 %v4719, %v4911
    %4913 = vmatprep.mubr.bf16.mxu0 %v2608
    %4914 = vmatmul.mubr.bf16.gmra.mxu0 %v2607
    %v4915 = vpop.f32.mrf.mxu0
    %v4916 = vadd.f32 %v4723, %v4915
    %v4917 = vpop.f32.mrf.mxu0
    %v4918 = vadd.f32 %v4725, %v4917
    %v4919 = vpop.f32.mrf.mxu0
    %v4920 = vadd.f32 %v4727, %v4919
    %v4921 = vpop.f32.mrf.mxu0
    %v4922 = vadd.f32 %v4729, %v4921
    %4923 = vmatprep.mubr.bf16.mxu0 %v2612
    %4924 = vmatmul.mubr.bf16.gmra.mxu0 %v2611
    %v4925 = vpop.f32.mrf.mxu0
    %v4926 = vadd.f32 %v4733, %v4925
    %v4927 = vpop.f32.mrf.mxu0
    %v4928 = vadd.f32 %v4735, %v4927
    %v4929 = vpop.f32.mrf.mxu0
    %v4930 = vadd.f32 %v4737, %v4929
    %v4931 = vpop.f32.mrf.mxu0
    %v4932 = vadd.f32 %v4739, %v4931
    %4933 = vmatprep.mubr.bf16.mxu0 %v2616
    %4934 = vmatmul.mubr.bf16.gmra.mxu0 %v2615
    %v4935 = vpop.f32.mrf.mxu0
    %v4936 = vadd.f32 %v4743, %v4935
    %v4937 = vpop.f32.mrf.mxu0
    %v4938 = vadd.f32 %v4745, %v4937
    %v4939 = vpop.f32.mrf.mxu0
    %v4940 = vadd.f32 %v4747, %v4939
    %v4941 = vpop.f32.mrf.mxu0
    %v4942 = vadd.f32 %v4749, %v4941
    %4943 = vmatprep.mubr.bf16.mxu0 %v2620
    %4944 = vmatmul.mubr.bf16.gmra.mxu0 %v2619
    %v4945 = vpop.f32.mrf.mxu0
    %v4946 = vadd.f32 %v4753, %v4945
    %v4947 = vpop.f32.mrf.mxu0
    %v4948 = vadd.f32 %v4755, %v4947
    %v4949 = vpop.f32.mrf.mxu0
    %v4950 = vadd.f32 %v4757, %v4949
    %v4951 = vpop.f32.mrf.mxu0
    %v4952 = vadd.f32 %v4759, %v4951
    %4953 = vmatprep.mubr.bf16.mxu0 %v2624
    %4954 = vmatmul.mubr.bf16.gmra.mxu0 %v2623
    %v4955 = vpop.f32.mrf.mxu0
    %v4956 = vadd.f32 %v4763, %v4955
    %v4957 = vpop.f32.mrf.mxu0
    %v4958 = vadd.f32 %v4765, %v4957
    %v4959 = vpop.f32.mrf.mxu0
    %v4960 = vadd.f32 %v4767, %v4959
    %v4961 = vpop.f32.mrf.mxu0
    %v4962 = vadd.f32 %v4769, %v4961
    %4963 = vmatprep.mubr.bf16.mxu0 %v2628
    %4964 = vmatmul.mubr.bf16.gmra.mxu0 %v2627
    %v4965 = vpop.f32.mrf.mxu0
    %v4966 = vadd.f32 %v4773, %v4965
    %v4967 = vpop.f32.mrf.mxu0
    %v4968 = vadd.f32 %v4775, %v4967
    %v4969 = vpop.f32.mrf.mxu0
    %v4970 = vadd.f32 %v4777, %v4969
    %v4971 = vpop.f32.mrf.mxu0
    %v4972 = vadd.f32 %v4779, %v4971
    %4973 = vmatprep.mubr.bf16.mxu0 %v2632
    %4974 = vmatmul.mubr.bf16.gmra.mxu0 %v2631
    %v4975 = vpop.f32.mrf.mxu0
    %v4976 = vadd.f32 %v4783, %v4975
    %v4977 = vpop.f32.mrf.mxu0
    %v4978 = vadd.f32 %v4785, %v4977
    %v4979 = vpop.f32.mrf.mxu0
    %v4980 = vadd.f32 %v4787, %v4979
    %v4981 = vpop.f32.mrf.mxu0
    %v4982 = vadd.f32 %v4789, %v4981
    %4983 = vmatprep.mubr.bf16.mxu0 %v2636
    %4984 = vmatmul.mubr.bf16.gmra.mxu0 %v2635
    %v4985 = vpop.f32.mrf.mxu0
    %v4986 = vadd.f32 %v4793, %v4985
    %v4987 = vpop.f32.mrf.mxu0
    %v4988 = vadd.f32 %v4795, %v4987
    %v4989 = vpop.f32.mrf.mxu0
    %v4990 = vadd.f32 %v4797, %v4989
    %v4991 = vpop.f32.mrf.mxu0
    %v4992 = vadd.f32 %v4799, %v4991
    %4993 = vdwg.mxu0
    %4994 = vmatprep.subr.bf16.mxu0 %v3771
    %4995 = vmatpush1.bf16.msra.mxu0 %v3770
    %4996 = vmatprep.subr.bf16.mxu0 %v3763
    %4997 = vmatpush1.bf16.msra.mxu0 %v3762
    %4998 = vmatprep.subr.bf16.mxu0 %v3755
    %4999 = vmatpush1.bf16.msra.mxu0 %v3754
    %5000 = vmatprep.subr.bf16.mxu0 %v3747
    %5001 = vmatpush1.bf16.msra.mxu0 %v3746
    %5002 = vmatprep.subr.bf16.mxu0 %v3739
    %5003 = vmatpush1.bf16.msra.mxu0 %v3738
    %5004 = vmatprep.subr.bf16.mxu0 %v3731
    %5005 = vmatpush1.bf16.msra.mxu0 %v3730
    %5006 = vmatprep.subr.bf16.mxu0 %v3723
    %5007 = vmatpush1.bf16.msra.mxu0 %v3722
    %5008 = vmatprep.subr.bf16.mxu0 %v3715
    %5009 = vmatpush1.bf16.msra.mxu0 %v3714
    %5010 = vmatprep.subr.bf16.mxu0 %v3835
    %5011 = vmatpush2.bf16.msra.mxu0 %v3834
    %5012 = vmatprep.subr.bf16.mxu0 %v3827
    %5013 = vmatpush2.bf16.msra.mxu0 %v3826
    %5014 = vmatprep.subr.bf16.mxu0 %v3819
    %5015 = vmatpush2.bf16.msra.mxu0 %v3818
    %5016 = vmatprep.subr.bf16.mxu0 %v3811
    %5017 = vmatpush2.bf16.msra.mxu0 %v3810
    %5018 = vmatprep.subr.bf16.mxu0 %v3803
    %5019 = vmatpush2.bf16.msra.mxu0 %v3802
    %5020 = vmatprep.subr.bf16.mxu0 %v3795
    %5021 = vmatpush2.bf16.msra.mxu0 %v3794
    %5022 = vmatprep.subr.bf16.mxu0 %v3787
    %5023 = vmatpush2.bf16.msra.mxu0 %v3786
    %5024 = vmatprep.subr.bf16.mxu0 %v3779
    %5025 = vmatpush2.bf16.msra.mxu0 %v3778
    %5026 = vmatprep.mubr.bf16.mxu0 %v2574
    %5027 = vmatmul.mubr.bf16.gmra.mxu0 %v2573
    %v5028 = vpop.f32.mrf.mxu0
    %v5029 = vadd.f32 %v2921, %v5028
    %v5030 = vpop.f32.mrf.mxu0
    %v5031 = vadd.f32 %v2925, %v5030
    %v5032 = vpop.f32.mrf.mxu0
    %v5033 = vadd.f32 %v2921, %v5032
    %v5034 = vpop.f32.mrf.mxu0
    %v5035 = vadd.f32 %v2925, %v5034
    %5036 = vmatprep.mubr.bf16.mxu0 %v2578
    %5037 = vmatmul.mubr.bf16.gmra.mxu0 %v2577
    %v5038 = vpop.f32.mrf.mxu0
    %v5039 = vadd.f32 %v2921, %v5038
    %v5040 = vpop.f32.mrf.mxu0
    %v5041 = vadd.f32 %v2925, %v5040
    %v5042 = vpop.f32.mrf.mxu0
    %v5043 = vadd.f32 %v2921, %v5042
    %v5044 = vpop.f32.mrf.mxu0
    %v5045 = vadd.f32 %v2925, %v5044
    %5046 = vmatprep.mubr.bf16.mxu0 %v2582
    %5047 = vmatmul.mubr.bf16.gmra.mxu0 %v2581
    %v5048 = vpop.f32.mrf.mxu0
    %v5049 = vadd.f32 %v2921, %v5048
    %v5050 = vpop.f32.mrf.mxu0
    %v5051 = vadd.f32 %v2925, %v5050
    %v5052 = vpop.f32.mrf.mxu0
    %v5053 = vadd.f32 %v2921, %v5052
    %v5054 = vpop.f32.mrf.mxu0
    %v5055 = vadd.f32 %v2925, %v5054
    %5056 = vmatprep.mubr.bf16.mxu0 %v2586
    %5057 = vmatmul.mubr.bf16.gmra.mxu0 %v2585
    %v5058 = vpop.f32.mrf.mxu0
    %v5059 = vadd.f32 %v2921, %v5058
    %v5060 = vpop.f32.mrf.mxu0
    %v5061 = vadd.f32 %v2925, %v5060
    %v5062 = vpop.f32.mrf.mxu0
    %v5063 = vadd.f32 %v2921, %v5062
    %v5064 = vpop.f32.mrf.mxu0
    %v5065 = vadd.f32 %v2925, %v5064
    %5066 = vmatprep.mubr.bf16.mxu0 %v2590
    %5067 = vmatmul.mubr.bf16.gmra.mxu0 %v2589
    %v5068 = vpop.f32.mrf.mxu0
    %v5069 = vadd.f32 %v2921, %v5068
    %v5070 = vpop.f32.mrf.mxu0
    %v5071 = vadd.f32 %v2925, %v5070
    %v5072 = vpop.f32.mrf.mxu0
    %v5073 = vadd.f32 %v2921, %v5072
    %v5074 = vpop.f32.mrf.mxu0
    %v5075 = vadd.f32 %v2925, %v5074
    %5076 = vmatprep.mubr.bf16.mxu0 %v2594
    %5077 = vmatmul.mubr.bf16.gmra.mxu0 %v2593
    %v5078 = vpop.f32.mrf.mxu0
    %v5079 = vadd.f32 %v2921, %v5078
    %v5080 = vpop.f32.mrf.mxu0
    %v5081 = vadd.f32 %v2925, %v5080
    %v5082 = vpop.f32.mrf.mxu0
    %v5083 = vadd.f32 %v2921, %v5082
    %v5084 = vpop.f32.mrf.mxu0
    %v5085 = vadd.f32 %v2925, %v5084
    %5086 = vmatprep.mubr.bf16.mxu0 %v2598
    %5087 = vmatmul.mubr.bf16.gmra.mxu0 %v2597
    %v5088 = vpop.f32.mrf.mxu0
    %v5089 = vadd.f32 %v2921, %v5088
    %v5090 = vpop.f32.mrf.mxu0
    %v5091 = vadd.f32 %v2925, %v5090
    %v5092 = vpop.f32.mrf.mxu0
    %v5093 = vadd.f32 %v2921, %v5092
    %v5094 = vpop.f32.mrf.mxu0
    %v5095 = vadd.f32 %v2925, %v5094
    %5096 = vmatprep.mubr.bf16.mxu0 %v2602
    %5097 = vmatmul.mubr.bf16.gmra.mxu0 %v2601
    %v5098 = vpop.f32.mrf.mxu0
    %v5099 = vadd.f32 %v2921, %v5098
    %v5100 = vpop.f32.mrf.mxu0
    %v5101 = vadd.f32 %v2925, %v5100
    %v5102 = vpop.f32.mrf.mxu0
    %v5103 = vadd.f32 %v2921, %v5102
    %v5104 = vpop.f32.mrf.mxu0
    %v5105 = vadd.f32 %v2925, %v5104
    %5106 = vmatprep.mubr.bf16.mxu0 %v2606
    %5107 = vmatmul.mubr.bf16.gmra.mxu0 %v2605
    %v5108 = vpop.f32.mrf.mxu0
    %v5109 = vadd.f32 %v2921, %v5108
    %v5110 = vpop.f32.mrf.mxu0
    %v5111 = vadd.f32 %v2925, %v5110
    %v5112 = vpop.f32.mrf.mxu0
    %v5113 = vadd.f32 %v2921, %v5112
    %v5114 = vpop.f32.mrf.mxu0
    %v5115 = vadd.f32 %v2925, %v5114
    %5116 = vmatprep.mubr.bf16.mxu0 %v2610
    %5117 = vmatmul.mubr.bf16.gmra.mxu0 %v2609
    %v5118 = vpop.f32.mrf.mxu0
    %v5119 = vadd.f32 %v2921, %v5118
    %v5120 = vpop.f32.mrf.mxu0
    %v5121 = vadd.f32 %v2925, %v5120
    %v5122 = vpop.f32.mrf.mxu0
    %v5123 = vadd.f32 %v2921, %v5122
    %v5124 = vpop.f32.mrf.mxu0
    %v5125 = vadd.f32 %v2925, %v5124
    %5126 = vmatprep.mubr.bf16.mxu0 %v2614
    %5127 = vmatmul.mubr.bf16.gmra.mxu0 %v2613
    %v5128 = vpop.f32.mrf.mxu0
    %v5129 = vadd.f32 %v2921, %v5128
    %v5130 = vpop.f32.mrf.mxu0
    %v5131 = vadd.f32 %v2925, %v5130
    %v5132 = vpop.f32.mrf.mxu0
    %v5133 = vadd.f32 %v2921, %v5132
    %v5134 = vpop.f32.mrf.mxu0
    %v5135 = vadd.f32 %v2925, %v5134
    %5136 = vmatprep.mubr.bf16.mxu0 %v2618
    %5137 = vmatmul.mubr.bf16.gmra.mxu0 %v2617
    %v5138 = vpop.f32.mrf.mxu0
    %v5139 = vadd.f32 %v2921, %v5138
    %v5140 = vpop.f32.mrf.mxu0
    %v5141 = vadd.f32 %v2925, %v5140
    %v5142 = vpop.f32.mrf.mxu0
    %v5143 = vadd.f32 %v2921, %v5142
    %v5144 = vpop.f32.mrf.mxu0
    %v5145 = vadd.f32 %v2925, %v5144
    %5146 = vmatprep.mubr.bf16.mxu0 %v2622
    %5147 = vmatmul.mubr.bf16.gmra.mxu0 %v2621
    %v5148 = vpop.f32.mrf.mxu0
    %v5149 = vadd.f32 %v2921, %v5148
    %v5150 = vpop.f32.mrf.mxu0
    %v5151 = vadd.f32 %v2925, %v5150
    %v5152 = vpop.f32.mrf.mxu0
    %v5153 = vadd.f32 %v2921, %v5152
    %v5154 = vpop.f32.mrf.mxu0
    %v5155 = vadd.f32 %v2925, %v5154
    %5156 = vmatprep.mubr.bf16.mxu0 %v2626
    %5157 = vmatmul.mubr.bf16.gmra.mxu0 %v2625
    %v5158 = vpop.f32.mrf.mxu0
    %v5159 = vadd.f32 %v2921, %v5158
    %v5160 = vpop.f32.mrf.mxu0
    %v5161 = vadd.f32 %v2925, %v5160
    %v5162 = vpop.f32.mrf.mxu0
    %v5163 = vadd.f32 %v2921, %v5162
    %v5164 = vpop.f32.mrf.mxu0
    %v5165 = vadd.f32 %v2925, %v5164
    %5166 = vmatprep.mubr.bf16.mxu0 %v2630
    %5167 = vmatmul.mubr.bf16.gmra.mxu0 %v2629
    %v5168 = vpop.f32.mrf.mxu0
    %v5169 = vadd.f32 %v2921, %v5168
    %v5170 = vpop.f32.mrf.mxu0
    %v5171 = vadd.f32 %v2925, %v5170
    %v5172 = vpop.f32.mrf.mxu0
    %v5173 = vadd.f32 %v2921, %v5172
    %v5174 = vpop.f32.mrf.mxu0
    %v5175 = vadd.f32 %v2925, %v5174
    %5176 = vmatprep.mubr.bf16.mxu0 %v2634
    %5177 = vmatmul.mubr.bf16.gmra.mxu0 %v2633
    %v5178 = vpop.f32.mrf.mxu0
    %v5179 = vadd.f32 %v2921, %v5178
    %v5180 = vpop.f32.mrf.mxu0
    %v5181 = vadd.f32 %v2925, %v5180
    %v5182 = vpop.f32.mrf.mxu0
    %v5183 = vadd.f32 %v2921, %v5182
    %v5184 = vpop.f32.mrf.mxu0
    %v5185 = vadd.f32 %v2925, %v5184
    %5186 = vdwg.mxu0
    %5187 = vmatprep.subr.bf16.mxu0 %v3899
    %5188 = vmatpush1.bf16.msra.mxu0 %v3898
    %5189 = vmatprep.subr.bf16.mxu0 %v3891
    %5190 = vmatpush1.bf16.msra.mxu0 %v3890
    %5191 = vmatprep.subr.bf16.mxu0 %v3883
    %5192 = vmatpush1.bf16.msra.mxu0 %v3882
    %5193 = vmatprep.subr.bf16.mxu0 %v3875
    %5194 = vmatpush1.bf16.msra.mxu0 %v3874
    %5195 = vmatprep.subr.bf16.mxu0 %v3867
    %5196 = vmatpush1.bf16.msra.mxu0 %v3866
    %5197 = vmatprep.subr.bf16.mxu0 %v3859
    %5198 = vmatpush1.bf16.msra.mxu0 %v3858
    %5199 = vmatprep.subr.bf16.mxu0 %v3851
    %5200 = vmatpush1.bf16.msra.mxu0 %v3850
    %5201 = vmatprep.subr.bf16.mxu0 %v3843
    %5202 = vmatpush1.bf16.msra.mxu0 %v3842
    %5203 = vmatprep.subr.bf16.mxu0 %v3963
    %5204 = vmatpush2.bf16.msra.mxu0 %v3962
    %5205 = vmatprep.subr.bf16.mxu0 %v3955
    %5206 = vmatpush2.bf16.msra.mxu0 %v3954
    %5207 = vmatprep.subr.bf16.mxu0 %v3947
    %5208 = vmatpush2.bf16.msra.mxu0 %v3946
    %5209 = vmatprep.subr.bf16.mxu0 %v3939
    %5210 = vmatpush2.bf16.msra.mxu0 %v3938
    %5211 = vmatprep.subr.bf16.mxu0 %v3931
    %5212 = vmatpush2.bf16.msra.mxu0 %v3930
    %5213 = vmatprep.subr.bf16.mxu0 %v3923
    %5214 = vmatpush2.bf16.msra.mxu0 %v3922
    %5215 = vmatprep.subr.bf16.mxu0 %v3915
    %5216 = vmatpush2.bf16.msra.mxu0 %v3914
    %5217 = vmatprep.subr.bf16.mxu0 %v3907
    %5218 = vmatpush2.bf16.msra.mxu0 %v3906
    %5219 = vmatprep.mubr.bf16.mxu0 %v2576
    %5220 = vmatmul.mubr.bf16.gmra.mxu0 %v2575
    %v5221 = vpop.f32.mrf.mxu0
    %v5222 = vadd.f32 %v5029, %v5221
    %v5223 = vpop.f32.mrf.mxu0
    %v5224 = vadd.f32 %v5031, %v5223
    %v5225 = vpop.f32.mrf.mxu0
    %v5226 = vadd.f32 %v5033, %v5225
    %v5227 = vpop.f32.mrf.mxu0
    %v5228 = vadd.f32 %v5035, %v5227
    %5229 = vmatprep.mubr.bf16.mxu0 %v2580
    %5230 = vmatmul.mubr.bf16.gmra.mxu0 %v2579
    %v5231 = vpop.f32.mrf.mxu0
    %v5232 = vadd.f32 %v5039, %v5231
    %v5233 = vpop.f32.mrf.mxu0
    %v5234 = vadd.f32 %v5041, %v5233
    %v5235 = vpop.f32.mrf.mxu0
    %v5236 = vadd.f32 %v5043, %v5235
    %v5237 = vpop.f32.mrf.mxu0
    %v5238 = vadd.f32 %v5045, %v5237
    %5239 = vmatprep.mubr.bf16.mxu0 %v2584
    %5240 = vmatmul.mubr.bf16.gmra.mxu0 %v2583
    %v5241 = vpop.f32.mrf.mxu0
    %v5242 = vadd.f32 %v5049, %v5241
    %v5243 = vpop.f32.mrf.mxu0
    %v5244 = vadd.f32 %v5051, %v5243
    %v5245 = vpop.f32.mrf.mxu0
    %v5246 = vadd.f32 %v5053, %v5245
    %v5247 = vpop.f32.mrf.mxu0
    %v5248 = vadd.f32 %v5055, %v5247
    %5249 = vmatprep.mubr.bf16.mxu0 %v2588
    %5250 = vmatmul.mubr.bf16.gmra.mxu0 %v2587
    %v5251 = vpop.f32.mrf.mxu0
    %v5252 = vadd.f32 %v5059, %v5251
    %v5253 = vpop.f32.mrf.mxu0
    %v5254 = vadd.f32 %v5061, %v5253
    %v5255 = vpop.f32.mrf.mxu0
    %v5256 = vadd.f32 %v5063, %v5255
    %v5257 = vpop.f32.mrf.mxu0
    %v5258 = vadd.f32 %v5065, %v5257
    %5259 = vmatprep.mubr.bf16.mxu0 %v2592
    %5260 = vmatmul.mubr.bf16.gmra.mxu0 %v2591
    %v5261 = vpop.f32.mrf.mxu0
    %v5262 = vadd.f32 %v5069, %v5261
    %v5263 = vpop.f32.mrf.mxu0
    %v5264 = vadd.f32 %v5071, %v5263
    %v5265 = vpop.f32.mrf.mxu0
    %v5266 = vadd.f32 %v5073, %v5265
    %v5267 = vpop.f32.mrf.mxu0
    %v5268 = vadd.f32 %v5075, %v5267
    %5269 = vmatprep.mubr.bf16.mxu0 %v2596
    %5270 = vmatmul.mubr.bf16.gmra.mxu0 %v2595
    %v5271 = vpop.f32.mrf.mxu0
    %v5272 = vadd.f32 %v5079, %v5271
    %v5273 = vpop.f32.mrf.mxu0
    %v5274 = vadd.f32 %v5081, %v5273
    %v5275 = vpop.f32.mrf.mxu0
    %v5276 = vadd.f32 %v5083, %v5275
    %v5277 = vpop.f32.mrf.mxu0
    %v5278 = vadd.f32 %v5085, %v5277
    %5279 = vmatprep.mubr.bf16.mxu0 %v2600
    %5280 = vmatmul.mubr.bf16.gmra.mxu0 %v2599
    %v5281 = vpop.f32.mrf.mxu0
    %v5282 = vadd.f32 %v5089, %v5281
    %v5283 = vpop.f32.mrf.mxu0
    %v5284 = vadd.f32 %v5091, %v5283
    %v5285 = vpop.f32.mrf.mxu0
    %v5286 = vadd.f32 %v5093, %v5285
    %v5287 = vpop.f32.mrf.mxu0
    %v5288 = vadd.f32 %v5095, %v5287
    %5289 = vmatprep.mubr.bf16.mxu0 %v2604
    %5290 = vmatmul.mubr.bf16.gmra.mxu0 %v2603
    %v5291 = vpop.f32.mrf.mxu0
    %v5292 = vadd.f32 %v5099, %v5291
    %v5293 = vpop.f32.mrf.mxu0
    %v5294 = vadd.f32 %v5101, %v5293
    %v5295 = vpop.f32.mrf.mxu0
    %v5296 = vadd.f32 %v5103, %v5295
    %v5297 = vpop.f32.mrf.mxu0
    %v5298 = vadd.f32 %v5105, %v5297
    %5299 = vmatprep.mubr.bf16.mxu0 %v2608
    %5300 = vmatmul.mubr.bf16.gmra.mxu0 %v2607
    %v5301 = vpop.f32.mrf.mxu0
    %v5302 = vadd.f32 %v5109, %v5301
    %v5303 = vpop.f32.mrf.mxu0
    %v5304 = vadd.f32 %v5111, %v5303
    %v5305 = vpop.f32.mrf.mxu0
    %v5306 = vadd.f32 %v5113, %v5305
    %v5307 = vpop.f32.mrf.mxu0
    %v5308 = vadd.f32 %v5115, %v5307
    %5309 = vmatprep.mubr.bf16.mxu0 %v2612
    %5310 = vmatmul.mubr.bf16.gmra.mxu0 %v2611
    %v5311 = vpop.f32.mrf.mxu0
    %v5312 = vadd.f32 %v5119, %v5311
    %v5313 = vpop.f32.mrf.mxu0
    %v5314 = vadd.f32 %v5121, %v5313
    %v5315 = vpop.f32.mrf.mxu0
    %v5316 = vadd.f32 %v5123, %v5315
    %v5317 = vpop.f32.mrf.mxu0
    %v5318 = vadd.f32 %v5125, %v5317
    %5319 = vmatprep.mubr.bf16.mxu0 %v2616
    %5320 = vmatmul.mubr.bf16.gmra.mxu0 %v2615
    %v5321 = vpop.f32.mrf.mxu0
    %v5322 = vadd.f32 %v5129, %v5321
    %v5323 = vpop.f32.mrf.mxu0
    %v5324 = vadd.f32 %v5131, %v5323
    %v5325 = vpop.f32.mrf.mxu0
    %v5326 = vadd.f32 %v5133, %v5325
    %v5327 = vpop.f32.mrf.mxu0
    %v5328 = vadd.f32 %v5135, %v5327
    %5329 = vmatprep.mubr.bf16.mxu0 %v2620
    %5330 = vmatmul.mubr.bf16.gmra.mxu0 %v2619
    %v5331 = vpop.f32.mrf.mxu0
    %v5332 = vadd.f32 %v5139, %v5331
    %v5333 = vpop.f32.mrf.mxu0
    %v5334 = vadd.f32 %v5141, %v5333
    %v5335 = vpop.f32.mrf.mxu0
    %v5336 = vadd.f32 %v5143, %v5335
    %v5337 = vpop.f32.mrf.mxu0
    %v5338 = vadd.f32 %v5145, %v5337
    %5339 = vmatprep.mubr.bf16.mxu0 %v2624
    %5340 = vmatmul.mubr.bf16.gmra.mxu0 %v2623
    %v5341 = vpop.f32.mrf.mxu0
    %v5342 = vadd.f32 %v5149, %v5341
    %v5343 = vpop.f32.mrf.mxu0
    %v5344 = vadd.f32 %v5151, %v5343
    %v5345 = vpop.f32.mrf.mxu0
    %v5346 = vadd.f32 %v5153, %v5345
    %v5347 = vpop.f32.mrf.mxu0
    %v5348 = vadd.f32 %v5155, %v5347
    %5349 = vmatprep.mubr.bf16.mxu0 %v2628
    %5350 = vmatmul.mubr.bf16.gmra.mxu0 %v2627
    %v5351 = vpop.f32.mrf.mxu0
    %v5352 = vadd.f32 %v5159, %v5351
    %v5353 = vpop.f32.mrf.mxu0
    %v5354 = vadd.f32 %v5161, %v5353
    %v5355 = vpop.f32.mrf.mxu0
    %v5356 = vadd.f32 %v5163, %v5355
    %v5357 = vpop.f32.mrf.mxu0
    %v5358 = vadd.f32 %v5165, %v5357
    %5359 = vmatprep.mubr.bf16.mxu0 %v2632
    %5360 = vmatmul.mubr.bf16.gmra.mxu0 %v2631
    %v5361 = vpop.f32.mrf.mxu0
    %v5362 = vadd.f32 %v5169, %v5361
    %v5363 = vpop.f32.mrf.mxu0
    %v5364 = vadd.f32 %v5171, %v5363
    %v5365 = vpop.f32.mrf.mxu0
    %v5366 = vadd.f32 %v5173, %v5365
    %v5367 = vpop.f32.mrf.mxu0
    %v5368 = vadd.f32 %v5175, %v5367
    %5369 = vmatprep.mubr.bf16.mxu0 %v2636
    %5370 = vmatmul.mubr.bf16.gmra.mxu0 %v2635
    %v5371 = vpop.f32.mrf.mxu0
    %v5372 = vadd.f32 %v5179, %v5371
    %v5373 = vpop.f32.mrf.mxu0
    %v5374 = vadd.f32 %v5181, %v5373
    %v5375 = vpop.f32.mrf.mxu0
    %v5376 = vadd.f32 %v5183, %v5375
    %v5377 = vpop.f32.mrf.mxu0
    %v5378 = vadd.f32 %v5185, %v5377
    %5379 = vdwg.mxu0
    %5380 = vmatprep.subr.bf16.mxu0 %v3773
    %5381 = vmatpush1.bf16.msra.mxu0 %v3772
    %5382 = vmatprep.subr.bf16.mxu0 %v3765
    %5383 = vmatpush1.bf16.msra.mxu0 %v3764
    %5384 = vmatprep.subr.bf16.mxu0 %v3757
    %5385 = vmatpush1.bf16.msra.mxu0 %v3756
    %5386 = vmatprep.subr.bf16.mxu0 %v3749
    %5387 = vmatpush1.bf16.msra.mxu0 %v3748
    %5388 = vmatprep.subr.bf16.mxu0 %v3741
    %5389 = vmatpush1.bf16.msra.mxu0 %v3740
    %5390 = vmatprep.subr.bf16.mxu0 %v3733
    %5391 = vmatpush1.bf16.msra.mxu0 %v3732
    %5392 = vmatprep.subr.bf16.mxu0 %v3725
    %5393 = vmatpush1.bf16.msra.mxu0 %v3724
    %5394 = vmatprep.subr.bf16.mxu0 %v3717
    %5395 = vmatpush1.bf16.msra.mxu0 %v3716
    %5396 = vmatprep.subr.bf16.mxu0 %v3837
    %5397 = vmatpush2.bf16.msra.mxu0 %v3836
    %5398 = vmatprep.subr.bf16.mxu0 %v3829
    %5399 = vmatpush2.bf16.msra.mxu0 %v3828
    %5400 = vmatprep.subr.bf16.mxu0 %v3821
    %5401 = vmatpush2.bf16.msra.mxu0 %v3820
    %5402 = vmatprep.subr.bf16.mxu0 %v3813
    %5403 = vmatpush2.bf16.msra.mxu0 %v3812
    %5404 = vmatprep.subr.bf16.mxu0 %v3805
    %5405 = vmatpush2.bf16.msra.mxu0 %v3804
    %5406 = vmatprep.subr.bf16.mxu0 %v3797
    %5407 = vmatpush2.bf16.msra.mxu0 %v3796
    %5408 = vmatprep.subr.bf16.mxu0 %v3789
    %5409 = vmatpush2.bf16.msra.mxu0 %v3788
    %5410 = vmatprep.subr.bf16.mxu0 %v3781
    %5411 = vmatpush2.bf16.msra.mxu0 %v3780
    %5412 = vmatprep.mubr.bf16.mxu0 %v2574
    %5413 = vmatmul.mubr.bf16.gmra.mxu0 %v2573
    %v5414 = vpop.f32.mrf.mxu0
    %v5415 = vadd.f32 %v2929, %v5414
    %v5416 = vpop.f32.mrf.mxu0
    %v5417 = vadd.f32 %v2933, %v5416
    %v5418 = vpop.f32.mrf.mxu0
    %v5419 = vadd.f32 %v2929, %v5418
    %v5420 = vpop.f32.mrf.mxu0
    %v5421 = vadd.f32 %v2933, %v5420
    %5422 = vmatprep.mubr.bf16.mxu0 %v2578
    %5423 = vmatmul.mubr.bf16.gmra.mxu0 %v2577
    %v5424 = vpop.f32.mrf.mxu0
    %v5425 = vadd.f32 %v2929, %v5424
    %v5426 = vpop.f32.mrf.mxu0
    %v5427 = vadd.f32 %v2933, %v5426
    %v5428 = vpop.f32.mrf.mxu0
    %v5429 = vadd.f32 %v2929, %v5428
    %v5430 = vpop.f32.mrf.mxu0
    %v5431 = vadd.f32 %v2933, %v5430
    %5432 = vmatprep.mubr.bf16.mxu0 %v2582
    %5433 = vmatmul.mubr.bf16.gmra.mxu0 %v2581
    %v5434 = vpop.f32.mrf.mxu0
    %v5435 = vadd.f32 %v2929, %v5434
    %v5436 = vpop.f32.mrf.mxu0
    %v5437 = vadd.f32 %v2933, %v5436
    %v5438 = vpop.f32.mrf.mxu0
    %v5439 = vadd.f32 %v2929, %v5438
    %v5440 = vpop.f32.mrf.mxu0
    %v5441 = vadd.f32 %v2933, %v5440
    %5442 = vmatprep.mubr.bf16.mxu0 %v2586
    %5443 = vmatmul.mubr.bf16.gmra.mxu0 %v2585
    %v5444 = vpop.f32.mrf.mxu0
    %v5445 = vadd.f32 %v2929, %v5444
    %v5446 = vpop.f32.mrf.mxu0
    %v5447 = vadd.f32 %v2933, %v5446
    %v5448 = vpop.f32.mrf.mxu0
    %v5449 = vadd.f32 %v2929, %v5448
    %v5450 = vpop.f32.mrf.mxu0
    %v5451 = vadd.f32 %v2933, %v5450
    %5452 = vmatprep.mubr.bf16.mxu0 %v2590
    %5453 = vmatmul.mubr.bf16.gmra.mxu0 %v2589
    %v5454 = vpop.f32.mrf.mxu0
    %v5455 = vadd.f32 %v2929, %v5454
    %v5456 = vpop.f32.mrf.mxu0
    %v5457 = vadd.f32 %v2933, %v5456
    %v5458 = vpop.f32.mrf.mxu0
    %v5459 = vadd.f32 %v2929, %v5458
    %v5460 = vpop.f32.mrf.mxu0
    %v5461 = vadd.f32 %v2933, %v5460
    %5462 = vmatprep.mubr.bf16.mxu0 %v2594
    %5463 = vmatmul.mubr.bf16.gmra.mxu0 %v2593
    %v5464 = vpop.f32.mrf.mxu0
    %v5465 = vadd.f32 %v2929, %v5464
    %v5466 = vpop.f32.mrf.mxu0
    %v5467 = vadd.f32 %v2933, %v5466
    %v5468 = vpop.f32.mrf.mxu0
    %v5469 = vadd.f32 %v2929, %v5468
    %v5470 = vpop.f32.mrf.mxu0
    %v5471 = vadd.f32 %v2933, %v5470
    %5472 = vmatprep.mubr.bf16.mxu0 %v2598
    %5473 = vmatmul.mubr.bf16.gmra.mxu0 %v2597
    %v5474 = vpop.f32.mrf.mxu0
    %v5475 = vadd.f32 %v2929, %v5474
    %v5476 = vpop.f32.mrf.mxu0
    %v5477 = vadd.f32 %v2933, %v5476
    %v5478 = vpop.f32.mrf.mxu0
    %v5479 = vadd.f32 %v2929, %v5478
    %v5480 = vpop.f32.mrf.mxu0
    %v5481 = vadd.f32 %v2933, %v5480
    %5482 = vmatprep.mubr.bf16.mxu0 %v2602
    %5483 = vmatmul.mubr.bf16.gmra.mxu0 %v2601
    %v5484 = vpop.f32.mrf.mxu0
    %v5485 = vadd.f32 %v2929, %v5484
    %v5486 = vpop.f32.mrf.mxu0
    %v5487 = vadd.f32 %v2933, %v5486
    %v5488 = vpop.f32.mrf.mxu0
    %v5489 = vadd.f32 %v2929, %v5488
    %v5490 = vpop.f32.mrf.mxu0
    %v5491 = vadd.f32 %v2933, %v5490
    %5492 = vmatprep.mubr.bf16.mxu0 %v2606
    %5493 = vmatmul.mubr.bf16.gmra.mxu0 %v2605
    %v5494 = vpop.f32.mrf.mxu0
    %v5495 = vadd.f32 %v2929, %v5494
    %v5496 = vpop.f32.mrf.mxu0
    %v5497 = vadd.f32 %v2933, %v5496
    %v5498 = vpop.f32.mrf.mxu0
    %v5499 = vadd.f32 %v2929, %v5498
    %v5500 = vpop.f32.mrf.mxu0
    %v5501 = vadd.f32 %v2933, %v5500
    %5502 = vmatprep.mubr.bf16.mxu0 %v2610
    %5503 = vmatmul.mubr.bf16.gmra.mxu0 %v2609
    %v5504 = vpop.f32.mrf.mxu0
    %v5505 = vadd.f32 %v2929, %v5504
    %v5506 = vpop.f32.mrf.mxu0
    %v5507 = vadd.f32 %v2933, %v5506
    %v5508 = vpop.f32.mrf.mxu0
    %v5509 = vadd.f32 %v2929, %v5508
    %v5510 = vpop.f32.mrf.mxu0
    %v5511 = vadd.f32 %v2933, %v5510
    %5512 = vmatprep.mubr.bf16.mxu0 %v2614
    %5513 = vmatmul.mubr.bf16.gmra.mxu0 %v2613
    %v5514 = vpop.f32.mrf.mxu0
    %v5515 = vadd.f32 %v2929, %v5514
    %v5516 = vpop.f32.mrf.mxu0
    %v5517 = vadd.f32 %v2933, %v5516
    %v5518 = vpop.f32.mrf.mxu0
    %v5519 = vadd.f32 %v2929, %v5518
    %v5520 = vpop.f32.mrf.mxu0
    %v5521 = vadd.f32 %v2933, %v5520
    %5522 = vmatprep.mubr.bf16.mxu0 %v2618
    %5523 = vmatmul.mubr.bf16.gmra.mxu0 %v2617
    %v5524 = vpop.f32.mrf.mxu0
    %v5525 = vadd.f32 %v2929, %v5524
    %v5526 = vpop.f32.mrf.mxu0
    %v5527 = vadd.f32 %v2933, %v5526
    %v5528 = vpop.f32.mrf.mxu0
    %v5529 = vadd.f32 %v2929, %v5528
    %v5530 = vpop.f32.mrf.mxu0
    %v5531 = vadd.f32 %v2933, %v5530
    %5532 = vmatprep.mubr.bf16.mxu0 %v2622
    %5533 = vmatmul.mubr.bf16.gmra.mxu0 %v2621
    %v5534 = vpop.f32.mrf.mxu0
    %v5535 = vadd.f32 %v2929, %v5534
    %v5536 = vpop.f32.mrf.mxu0
    %v5537 = vadd.f32 %v2933, %v5536
    %v5538 = vpop.f32.mrf.mxu0
    %v5539 = vadd.f32 %v2929, %v5538
    %v5540 = vpop.f32.mrf.mxu0
    %v5541 = vadd.f32 %v2933, %v5540
    %5542 = vmatprep.mubr.bf16.mxu0 %v2626
    %5543 = vmatmul.mubr.bf16.gmra.mxu0 %v2625
    %v5544 = vpop.f32.mrf.mxu0
    %v5545 = vadd.f32 %v2929, %v5544
    %v5546 = vpop.f32.mrf.mxu0
    %v5547 = vadd.f32 %v2933, %v5546
    %v5548 = vpop.f32.mrf.mxu0
    %v5549 = vadd.f32 %v2929, %v5548
    %v5550 = vpop.f32.mrf.mxu0
    %v5551 = vadd.f32 %v2933, %v5550
    %5552 = vmatprep.mubr.bf16.mxu0 %v2630
    %5553 = vmatmul.mubr.bf16.gmra.mxu0 %v2629
    %v5554 = vpop.f32.mrf.mxu0
    %v5555 = vadd.f32 %v2929, %v5554
    %v5556 = vpop.f32.mrf.mxu0
    %v5557 = vadd.f32 %v2933, %v5556
    %v5558 = vpop.f32.mrf.mxu0
    %v5559 = vadd.f32 %v2929, %v5558
    %v5560 = vpop.f32.mrf.mxu0
    %v5561 = vadd.f32 %v2933, %v5560
    %5562 = vmatprep.mubr.bf16.mxu0 %v2634
    %5563 = vmatmul.mubr.bf16.gmra.mxu0 %v2633
    %v5564 = vpop.f32.mrf.mxu0
    %v5565 = vadd.f32 %v2929, %v5564
    %v5566 = vpop.f32.mrf.mxu0
    %v5567 = vadd.f32 %v2933, %v5566
    %v5568 = vpop.f32.mrf.mxu0
    %v5569 = vadd.f32 %v2929, %v5568
    %v5570 = vpop.f32.mrf.mxu0
    %v5571 = vadd.f32 %v2933, %v5570
    %5572 = vdwg.mxu0
    %5573 = vmatprep.subr.bf16.mxu0 %v3901
    %5574 = vmatpush1.bf16.msra.mxu0 %v3900
    %5575 = vmatprep.subr.bf16.mxu0 %v3893
    %5576 = vmatpush1.bf16.msra.mxu0 %v3892
    %5577 = vmatprep.subr.bf16.mxu0 %v3885
    %5578 = vmatpush1.bf16.msra.mxu0 %v3884
    %5579 = vmatprep.subr.bf16.mxu0 %v3877
    %5580 = vmatpush1.bf16.msra.mxu0 %v3876
    %5581 = vmatprep.subr.bf16.mxu0 %v3869
    %5582 = vmatpush1.bf16.msra.mxu0 %v3868
    %5583 = vmatprep.subr.bf16.mxu0 %v3861
    %5584 = vmatpush1.bf16.msra.mxu0 %v3860
    %5585 = vmatprep.subr.bf16.mxu0 %v3853
    %5586 = vmatpush1.bf16.msra.mxu0 %v3852
    %5587 = vmatprep.subr.bf16.mxu0 %v3845
    %5588 = vmatpush1.bf16.msra.mxu0 %v3844
    %5589 = vmatprep.subr.bf16.mxu0 %v3965
    %5590 = vmatpush2.bf16.msra.mxu0 %v3964
    %5591 = vmatprep.subr.bf16.mxu0 %v3957
    %5592 = vmatpush2.bf16.msra.mxu0 %v3956
    %5593 = vmatprep.subr.bf16.mxu0 %v3949
    %5594 = vmatpush2.bf16.msra.mxu0 %v3948
    %5595 = vmatprep.subr.bf16.mxu0 %v3941
    %5596 = vmatpush2.bf16.msra.mxu0 %v3940
    %5597 = vmatprep.subr.bf16.mxu0 %v3933
    %5598 = vmatpush2.bf16.msra.mxu0 %v3932
    %5599 = vmatprep.subr.bf16.mxu0 %v3925
    %5600 = vmatpush2.bf16.msra.mxu0 %v3924
    %5601 = vmatprep.subr.bf16.mxu0 %v3917
    %5602 = vmatpush2.bf16.msra.mxu0 %v3916
    %5603 = vmatprep.subr.bf16.mxu0 %v3909
    %5604 = vmatpush2.bf16.msra.mxu0 %v3908
    %5605 = vmatprep.mubr.bf16.mxu0 %v2576
    %5606 = vmatmul.mubr.bf16.gmra.mxu0 %v2575
    %v5607 = vpop.f32.mrf.mxu0
    %v5608 = vadd.f32 %v5415, %v5607
    %v5609 = vpop.f32.mrf.mxu0
    %v5610 = vadd.f32 %v5417, %v5609
    %v5611 = vpop.f32.mrf.mxu0
    %v5612 = vadd.f32 %v5419, %v5611
    %v5613 = vpop.f32.mrf.mxu0
    %v5614 = vadd.f32 %v5421, %v5613
    %5615 = vmatprep.mubr.bf16.mxu0 %v2580
    %5616 = vmatmul.mubr.bf16.gmra.mxu0 %v2579
    %v5617 = vpop.f32.mrf.mxu0
    %v5618 = vadd.f32 %v5425, %v5617
    %v5619 = vpop.f32.mrf.mxu0
    %v5620 = vadd.f32 %v5427, %v5619
    %v5621 = vpop.f32.mrf.mxu0
    %v5622 = vadd.f32 %v5429, %v5621
    %v5623 = vpop.f32.mrf.mxu0
    %v5624 = vadd.f32 %v5431, %v5623
    %5625 = vmatprep.mubr.bf16.mxu0 %v2584
    %5626 = vmatmul.mubr.bf16.gmra.mxu0 %v2583
    %v5627 = vpop.f32.mrf.mxu0
    %v5628 = vadd.f32 %v5435, %v5627
    %v5629 = vpop.f32.mrf.mxu0
    %v5630 = vadd.f32 %v5437, %v5629
    %v5631 = vpop.f32.mrf.mxu0
    %v5632 = vadd.f32 %v5439, %v5631
    %v5633 = vpop.f32.mrf.mxu0
    %v5634 = vadd.f32 %v5441, %v5633
    %5635 = vmatprep.mubr.bf16.mxu0 %v2588
    %5636 = vmatmul.mubr.bf16.gmra.mxu0 %v2587
    %v5637 = vpop.f32.mrf.mxu0
    %v5638 = vadd.f32 %v5445, %v5637
    %v5639 = vpop.f32.mrf.mxu0
    %v5640 = vadd.f32 %v5447, %v5639
    %v5641 = vpop.f32.mrf.mxu0
    %v5642 = vadd.f32 %v5449, %v5641
    %v5643 = vpop.f32.mrf.mxu0
    %v5644 = vadd.f32 %v5451, %v5643
    %5645 = vmatprep.mubr.bf16.mxu0 %v2592
    %5646 = vmatmul.mubr.bf16.gmra.mxu0 %v2591
    %v5647 = vpop.f32.mrf.mxu0
    %v5648 = vadd.f32 %v5455, %v5647
    %v5649 = vpop.f32.mrf.mxu0
    %v5650 = vadd.f32 %v5457, %v5649
    %v5651 = vpop.f32.mrf.mxu0
    %v5652 = vadd.f32 %v5459, %v5651
    %v5653 = vpop.f32.mrf.mxu0
    %v5654 = vadd.f32 %v5461, %v5653
    %5655 = vmatprep.mubr.bf16.mxu0 %v2596
    %5656 = vmatmul.mubr.bf16.gmra.mxu0 %v2595
    %v5657 = vpop.f32.mrf.mxu0
    %v5658 = vadd.f32 %v5465, %v5657
    %v5659 = vpop.f32.mrf.mxu0
    %v5660 = vadd.f32 %v5467, %v5659
    %v5661 = vpop.f32.mrf.mxu0
    %v5662 = vadd.f32 %v5469, %v5661
    %v5663 = vpop.f32.mrf.mxu0
    %v5664 = vadd.f32 %v5471, %v5663
    %5665 = vmatprep.mubr.bf16.mxu0 %v2600
    %5666 = vmatmul.mubr.bf16.gmra.mxu0 %v2599
    %v5667 = vpop.f32.mrf.mxu0
    %v5668 = vadd.f32 %v5475, %v5667
    %v5669 = vpop.f32.mrf.mxu0
    %v5670 = vadd.f32 %v5477, %v5669
    %v5671 = vpop.f32.mrf.mxu0
    %v5672 = vadd.f32 %v5479, %v5671
    %v5673 = vpop.f32.mrf.mxu0
    %v5674 = vadd.f32 %v5481, %v5673
    %5675 = vmatprep.mubr.bf16.mxu0 %v2604
    %5676 = vmatmul.mubr.bf16.gmra.mxu0 %v2603
    %v5677 = vpop.f32.mrf.mxu0
    %v5678 = vadd.f32 %v5485, %v5677
    %v5679 = vpop.f32.mrf.mxu0
    %v5680 = vadd.f32 %v5487, %v5679
    %v5681 = vpop.f32.mrf.mxu0
    %v5682 = vadd.f32 %v5489, %v5681
    %v5683 = vpop.f32.mrf.mxu0
    %v5684 = vadd.f32 %v5491, %v5683
    %5685 = vmatprep.mubr.bf16.mxu0 %v2608
    %5686 = vmatmul.mubr.bf16.gmra.mxu0 %v2607
    %v5687 = vpop.f32.mrf.mxu0
    %v5688 = vadd.f32 %v5495, %v5687
    %v5689 = vpop.f32.mrf.mxu0
    %v5690 = vadd.f32 %v5497, %v5689
    %v5691 = vpop.f32.mrf.mxu0
    %v5692 = vadd.f32 %v5499, %v5691
    %v5693 = vpop.f32.mrf.mxu0
    %v5694 = vadd.f32 %v5501, %v5693
    %5695 = vmatprep.mubr.bf16.mxu0 %v2612
    %5696 = vmatmul.mubr.bf16.gmra.mxu0 %v2611
    %v5697 = vpop.f32.mrf.mxu0
    %v5698 = vadd.f32 %v5505, %v5697
    %v5699 = vpop.f32.mrf.mxu0
    %v5700 = vadd.f32 %v5507, %v5699
    %v5701 = vpop.f32.mrf.mxu0
    %v5702 = vadd.f32 %v5509, %v5701
    %v5703 = vpop.f32.mrf.mxu0
    %v5704 = vadd.f32 %v5511, %v5703
    %5705 = vmatprep.mubr.bf16.mxu0 %v2616
    %5706 = vmatmul.mubr.bf16.gmra.mxu0 %v2615
    %v5707 = vpop.f32.mrf.mxu0
    %v5708 = vadd.f32 %v5515, %v5707
    %v5709 = vpop.f32.mrf.mxu0
    %v5710 = vadd.f32 %v5517, %v5709
    %v5711 = vpop.f32.mrf.mxu0
    %v5712 = vadd.f32 %v5519, %v5711
    %v5713 = vpop.f32.mrf.mxu0
    %v5714 = vadd.f32 %v5521, %v5713
    %5715 = vmatprep.mubr.bf16.mxu0 %v2620
    %5716 = vmatmul.mubr.bf16.gmra.mxu0 %v2619
    %v5717 = vpop.f32.mrf.mxu0
    %v5718 = vadd.f32 %v5525, %v5717
    %v5719 = vpop.f32.mrf.mxu0
    %v5720 = vadd.f32 %v5527, %v5719
    %v5721 = vpop.f32.mrf.mxu0
    %v5722 = vadd.f32 %v5529, %v5721
    %v5723 = vpop.f32.mrf.mxu0
    %v5724 = vadd.f32 %v5531, %v5723
    %5725 = vmatprep.mubr.bf16.mxu0 %v2624
    %5726 = vmatmul.mubr.bf16.gmra.mxu0 %v2623
    %v5727 = vpop.f32.mrf.mxu0
    %v5728 = vadd.f32 %v5535, %v5727
    %v5729 = vpop.f32.mrf.mxu0
    %v5730 = vadd.f32 %v5537, %v5729
    %v5731 = vpop.f32.mrf.mxu0
    %v5732 = vadd.f32 %v5539, %v5731
    %v5733 = vpop.f32.mrf.mxu0
    %v5734 = vadd.f32 %v5541, %v5733
    %5735 = vmatprep.mubr.bf16.mxu0 %v2628
    %5736 = vmatmul.mubr.bf16.gmra.mxu0 %v2627
    %v5737 = vpop.f32.mrf.mxu0
    %v5738 = vadd.f32 %v5545, %v5737
    %v5739 = vpop.f32.mrf.mxu0
    %v5740 = vadd.f32 %v5547, %v5739
    %v5741 = vpop.f32.mrf.mxu0
    %v5742 = vadd.f32 %v5549, %v5741
    %v5743 = vpop.f32.mrf.mxu0
    %v5744 = vadd.f32 %v5551, %v5743
    %5745 = vmatprep.mubr.bf16.mxu0 %v2632
    %5746 = vmatmul.mubr.bf16.gmra.mxu0 %v2631
    %v5747 = vpop.f32.mrf.mxu0
    %v5748 = vadd.f32 %v5555, %v5747
    %v5749 = vpop.f32.mrf.mxu0
    %v5750 = vadd.f32 %v5557, %v5749
    %v5751 = vpop.f32.mrf.mxu0
    %v5752 = vadd.f32 %v5559, %v5751
    %v5753 = vpop.f32.mrf.mxu0
    %v5754 = vadd.f32 %v5561, %v5753
    %5755 = vmatprep.mubr.bf16.mxu0 %v2636
    %5756 = vmatmul.mubr.bf16.gmra.mxu0 %v2635
    %v5757 = vpop.f32.mrf.mxu0
    %v5758 = vadd.f32 %v5565, %v5757
    %v5759 = vpop.f32.mrf.mxu0
    %v5760 = vadd.f32 %v5567, %v5759
    %v5761 = vpop.f32.mrf.mxu0
    %v5762 = vadd.f32 %v5569, %v5761
    %v5763 = vpop.f32.mrf.mxu0
    %v5764 = vadd.f32 %v5571, %v5763
    %5765 = vdwg.mxu0
    %v5766 = vmax.f32 %v4450, 0.0
    %v5767 = vmax.f32 %v4452, 0.0
    %v5768 = vmax.f32 %v4836, 0.0
    %v5769 = vmax.f32 %v4838, 0.0
    %v5770 = vmax.f32 %v5222, 0.0
    %v5771 = vmax.f32 %v5224, 0.0
    %v5772 = vmax.f32 %v5608, 0.0
    %v5773 = vmax.f32 %v5610, 0.0
    %v5774 = vmax.f32 %v4454, 0.0
    %v5775 = vmax.f32 %v4456, 0.0
    %v5776 = vmax.f32 %v4840, 0.0
    %v5777 = vmax.f32 %v4842, 0.0
    %v5778 = vmax.f32 %v5226, 0.0
    %v5779 = vmax.f32 %v5228, 0.0
    %v5780 = vmax.f32 %v5612, 0.0
    %v5781 = vmax.f32 %v5614, 0.0
    %v5782 = vmax.f32 %v4460, 0.0
    %v5783 = vmax.f32 %v4462, 0.0
    %v5784 = vmax.f32 %v4846, 0.0
    %v5785 = vmax.f32 %v4848, 0.0
    %v5786 = vmax.f32 %v5232, 0.0
    %v5787 = vmax.f32 %v5234, 0.0
    %v5788 = vmax.f32 %v5618, 0.0
    %v5789 = vmax.f32 %v5620, 0.0
    %v5790 = vmax.f32 %v4464, 0.0
    %v5791 = vmax.f32 %v4466, 0.0
    %v5792 = vmax.f32 %v4850, 0.0
    %v5793 = vmax.f32 %v4852, 0.0
    %v5794 = vmax.f32 %v5236, 0.0
    %v5795 = vmax.f32 %v5238, 0.0
    %v5796 = vmax.f32 %v5622, 0.0
    %v5797 = vmax.f32 %v5624, 0.0
    %v5798 = vmax.f32 %v4470, 0.0
    %v5799 = vmax.f32 %v4472, 0.0
    %v5800 = vmax.f32 %v4856, 0.0
    %v5801 = vmax.f32 %v4858, 0.0
    %v5802 = vmax.f32 %v5242, 0.0
    %v5803 = vmax.f32 %v5244, 0.0
    %v5804 = vmax.f32 %v5628, 0.0
    %v5805 = vmax.f32 %v5630, 0.0
    %v5806 = vmax.f32 %v4474, 0.0
    %v5807 = vmax.f32 %v4476, 0.0
    %v5808 = vmax.f32 %v4860, 0.0
    %v5809 = vmax.f32 %v4862, 0.0
    %v5810 = vmax.f32 %v5246, 0.0
    %v5811 = vmax.f32 %v5248, 0.0
    %v5812 = vmax.f32 %v5632, 0.0
    %v5813 = vmax.f32 %v5634, 0.0
    %v5814 = vmax.f32 %v4480, 0.0
    %v5815 = vmax.f32 %v4482, 0.0
    %v5816 = vmax.f32 %v4866, 0.0
    %v5817 = vmax.f32 %v4868, 0.0
    %v5818 = vmax.f32 %v5252, 0.0
    %v5819 = vmax.f32 %v5254, 0.0
    %v5820 = vmax.f32 %v5638, 0.0
    %v5821 = vmax.f32 %v5640, 0.0
    %v5822 = vmax.f32 %v4484, 0.0
    %v5823 = vmax.f32 %v4486, 0.0
    %v5824 = vmax.f32 %v4870, 0.0
    %v5825 = vmax.f32 %v4872, 0.0
    %v5826 = vmax.f32 %v5256, 0.0
    %v5827 = vmax.f32 %v5258, 0.0
    %v5828 = vmax.f32 %v5642, 0.0
    %v5829 = vmax.f32 %v5644, 0.0
    %v5830 = vmax.f32 %v4490, 0.0
    %v5831 = vmax.f32 %v4492, 0.0
    %v5832 = vmax.f32 %v4876, 0.0
    %v5833 = vmax.f32 %v4878, 0.0
    %v5834 = vmax.f32 %v5262, 0.0
    %v5835 = vmax.f32 %v5264, 0.0
    %v5836 = vmax.f32 %v5648, 0.0
    %v5837 = vmax.f32 %v5650, 0.0
    %v5838 = vmax.f32 %v4494, 0.0
    %v5839 = vmax.f32 %v4496, 0.0
    %v5840 = vmax.f32 %v4880, 0.0
    %v5841 = vmax.f32 %v4882, 0.0
    %v5842 = vmax.f32 %v5266, 0.0
    %v5843 = vmax.f32 %v5268, 0.0
    %v5844 = vmax.f32 %v5652, 0.0
    %v5845 = vmax.f32 %v5654, 0.0
    %v5846 = vmax.f32 %v4500, 0.0
    %v5847 = vmax.f32 %v4502, 0.0
    %v5848 = vmax.f32 %v4886, 0.0
    %v5849 = vmax.f32 %v4888, 0.0
    %v5850 = vmax.f32 %v5272, 0.0
    %v5851 = vmax.f32 %v5274, 0.0
    %v5852 = vmax.f32 %v5658, 0.0
    %v5853 = vmax.f32 %v5660, 0.0
    %v5854 = vmax.f32 %v4504, 0.0
    %v5855 = vmax.f32 %v4506, 0.0
    %v5856 = vmax.f32 %v4890, 0.0
    %v5857 = vmax.f32 %v4892, 0.0
    %v5858 = vmax.f32 %v5276, 0.0
    %v5859 = vmax.f32 %v5278, 0.0
    %v5860 = vmax.f32 %v5662, 0.0
    %v5861 = vmax.f32 %v5664, 0.0
    %v5862 = vmax.f32 %v4510, 0.0
    %v5863 = vmax.f32 %v4512, 0.0
    %v5864 = vmax.f32 %v4896, 0.0
    %v5865 = vmax.f32 %v4898, 0.0
    %v5866 = vmax.f32 %v5282, 0.0
    %v5867 = vmax.f32 %v5284, 0.0
    %v5868 = vmax.f32 %v5668, 0.0
    %v5869 = vmax.f32 %v5670, 0.0
    %v5870 = vmax.f32 %v4514, 0.0
    %v5871 = vmax.f32 %v4516, 0.0
    %v5872 = vmax.f32 %v4900, 0.0
    %v5873 = vmax.f32 %v4902, 0.0
    %v5874 = vmax.f32 %v5286, 0.0
    %v5875 = vmax.f32 %v5288, 0.0
    %v5876 = vmax.f32 %v5672, 0.0
    %v5877 = vmax.f32 %v5674, 0.0
    %v5878 = vmax.f32 %v4520, 0.0
    %v5879 = vmax.f32 %v4522, 0.0
    %v5880 = vmax.f32 %v4906, 0.0
    %v5881 = vmax.f32 %v4908, 0.0
    %v5882 = vmax.f32 %v5292, 0.0
    %v5883 = vmax.f32 %v5294, 0.0
    %v5884 = vmax.f32 %v5678, 0.0
    %v5885 = vmax.f32 %v5680, 0.0
    %v5886 = vmax.f32 %v4524, 0.0
    %v5887 = vmax.f32 %v4526, 0.0
    %v5888 = vmax.f32 %v4910, 0.0
    %v5889 = vmax.f32 %v4912, 0.0
    %v5890 = vmax.f32 %v5296, 0.0
    %v5891 = vmax.f32 %v5298, 0.0
    %v5892 = vmax.f32 %v5682, 0.0
    %v5893 = vmax.f32 %v5684, 0.0
    %v5894 = vmax.f32 %v4530, 0.0
    %v5895 = vmax.f32 %v4532, 0.0
    %v5896 = vmax.f32 %v4916, 0.0
    %v5897 = vmax.f32 %v4918, 0.0
    %v5898 = vmax.f32 %v5302, 0.0
    %v5899 = vmax.f32 %v5304, 0.0
    %v5900 = vmax.f32 %v5688, 0.0
    %v5901 = vmax.f32 %v5690, 0.0
    %v5902 = vmax.f32 %v4534, 0.0
    %v5903 = vmax.f32 %v4536, 0.0
    %v5904 = vmax.f32 %v4920, 0.0
    %v5905 = vmax.f32 %v4922, 0.0
    %v5906 = vmax.f32 %v5306, 0.0
    %v5907 = vmax.f32 %v5308, 0.0
    %v5908 = vmax.f32 %v5692, 0.0
    %v5909 = vmax.f32 %v5694, 0.0
    %v5910 = vmax.f32 %v4540, 0.0
    %v5911 = vmax.f32 %v4542, 0.0
    %v5912 = vmax.f32 %v4926, 0.0
    %v5913 = vmax.f32 %v4928, 0.0
    %v5914 = vmax.f32 %v5312, 0.0
    %v5915 = vmax.f32 %v5314, 0.0
    %v5916 = vmax.f32 %v5698, 0.0
    %v5917 = vmax.f32 %v5700, 0.0
    %v5918 = vmax.f32 %v4544, 0.0
    %v5919 = vmax.f32 %v4546, 0.0
    %v5920 = vmax.f32 %v4930, 0.0
    %v5921 = vmax.f32 %v4932, 0.0
    %v5922 = vmax.f32 %v5316, 0.0
    %v5923 = vmax.f32 %v5318, 0.0
    %v5924 = vmax.f32 %v5702, 0.0
    %v5925 = vmax.f32 %v5704, 0.0
    %v5926 = vmax.f32 %v4550, 0.0
    %v5927 = vmax.f32 %v4552, 0.0
    %v5928 = vmax.f32 %v4936, 0.0
    %v5929 = vmax.f32 %v4938, 0.0
    %v5930 = vmax.f32 %v5322, 0.0
    %v5931 = vmax.f32 %v5324, 0.0
    %v5932 = vmax.f32 %v5708, 0.0
    %v5933 = vmax.f32 %v5710, 0.0
    %v5934 = vmax.f32 %v4554, 0.0
    %v5935 = vmax.f32 %v4556, 0.0
    %v5936 = vmax.f32 %v4940, 0.0
    %v5937 = vmax.f32 %v4942, 0.0
    %v5938 = vmax.f32 %v5326, 0.0
    %v5939 = vmax.f32 %v5328, 0.0
    %v5940 = vmax.f32 %v5712, 0.0
    %v5941 = vmax.f32 %v5714, 0.0
    %v5942 = vmax.f32 %v4560, 0.0
    %v5943 = vmax.f32 %v4562, 0.0
    %v5944 = vmax.f32 %v4946, 0.0
    %v5945 = vmax.f32 %v4948, 0.0
    %v5946 = vmax.f32 %v5332, 0.0
    %v5947 = vmax.f32 %v5334, 0.0
    %v5948 = vmax.f32 %v5718, 0.0
    %v5949 = vmax.f32 %v5720, 0.0
    %v5950 = vmax.f32 %v4564, 0.0
    %v5951 = vmax.f32 %v4566, 0.0
    %v5952 = vmax.f32 %v4950, 0.0
    %v5953 = vmax.f32 %v4952, 0.0
    %v5954 = vmax.f32 %v5336, 0.0
    %v5955 = vmax.f32 %v5338, 0.0
    %v5956 = vmax.f32 %v5722, 0.0
    %v5957 = vmax.f32 %v5724, 0.0
    %v5958 = vmax.f32 %v4570, 0.0
    %v5959 = vmax.f32 %v4572, 0.0
    %v5960 = vmax.f32 %v4956, 0.0
    %v5961 = vmax.f32 %v4958, 0.0
    %v5962 = vmax.f32 %v5342, 0.0
    %v5963 = vmax.f32 %v5344, 0.0
    %v5964 = vmax.f32 %v5728, 0.0
    %v5965 = vmax.f32 %v5730, 0.0
    %v5966 = vmax.f32 %v4574, 0.0
    %v5967 = vmax.f32 %v4576, 0.0
    %v5968 = vmax.f32 %v4960, 0.0
    %v5969 = vmax.f32 %v4962, 0.0
    %v5970 = vmax.f32 %v5346, 0.0
    %v5971 = vmax.f32 %v5348, 0.0
    %v5972 = vmax.f32 %v5732, 0.0
    %v5973 = vmax.f32 %v5734, 0.0
    %v5974 = vmax.f32 %v4580, 0.0
    %v5975 = vmax.f32 %v4582, 0.0
    %v5976 = vmax.f32 %v4966, 0.0
    %v5977 = vmax.f32 %v4968, 0.0
    %v5978 = vmax.f32 %v5352, 0.0
    %v5979 = vmax.f32 %v5354, 0.0
    %v5980 = vmax.f32 %v5738, 0.0
    %v5981 = vmax.f32 %v5740, 0.0
    %v5982 = vmax.f32 %v4584, 0.0
    %v5983 = vmax.f32 %v4586, 0.0
    %v5984 = vmax.f32 %v4970, 0.0
    %v5985 = vmax.f32 %v4972, 0.0
    %v5986 = vmax.f32 %v5356, 0.0
    %v5987 = vmax.f32 %v5358, 0.0
    %v5988 = vmax.f32 %v5742, 0.0
    %v5989 = vmax.f32 %v5744, 0.0
    %v5990 = vmax.f32 %v4590, 0.0
    %v5991 = vmax.f32 %v4592, 0.0
    %v5992 = vmax.f32 %v4976, 0.0
    %v5993 = vmax.f32 %v4978, 0.0
    %v5994 = vmax.f32 %v5362, 0.0
    %v5995 = vmax.f32 %v5364, 0.0
    %v5996 = vmax.f32 %v5748, 0.0
    %v5997 = vmax.f32 %v5750, 0.0
    %v5998 = vmax.f32 %v4594, 0.0
    %v5999 = vmax.f32 %v4596, 0.0
    %v6000 = vmax.f32 %v4980, 0.0
    %v6001 = vmax.f32 %v4982, 0.0
    %v6002 = vmax.f32 %v5366, 0.0
    %v6003 = vmax.f32 %v5368, 0.0
    %v6004 = vmax.f32 %v5752, 0.0
    %v6005 = vmax.f32 %v5754, 0.0
    %v6006 = vmax.f32 %v4600, 0.0
    %v6007 = vmax.f32 %v4602, 0.0
    %v6008 = vmax.f32 %v4986, 0.0
    %v6009 = vmax.f32 %v4988, 0.0
    %v6010 = vmax.f32 %v5372, 0.0
    %v6011 = vmax.f32 %v5374, 0.0
    %v6012 = vmax.f32 %v5758, 0.0
    %v6013 = vmax.f32 %v5760, 0.0
    %v6014 = vmax.f32 %v4604, 0.0
    %v6015 = vmax.f32 %v4606, 0.0
    %v6016 = vmax.f32 %v4990, 0.0
    %v6017 = vmax.f32 %v4992, 0.0
    %v6018 = vmax.f32 %v5376, 0.0
    %v6019 = vmax.f32 %v5378, 0.0
    %v6020 = vmax.f32 %v5762, 0.0
    %v6021 = vmax.f32 %v5764, 0.0
    %v6022 = vpack.c.bf16 %v5774, %v5766
    %v6023 = vpack.c.bf16 %v5775, %v5767
    %v6024 = vpack.c.bf16 %v5776, %v5768
    %v6025 = vpack.c.bf16 %v5777, %v5769
    %v6026 = vpack.c.bf16 %v5778, %v5770
    %v6027 = vpack.c.bf16 %v5779, %v5771
    %v6028 = vpack.c.bf16 %v5780, %v5772
    %v6029 = vpack.c.bf16 %v5781, %v5773
    %v6030 = vpack.c.bf16 %v5790, %v5782
    %v6031 = vpack.c.bf16 %v5791, %v5783
    %v6032 = vpack.c.bf16 %v5792, %v5784
    %v6033 = vpack.c.bf16 %v5793, %v5785
    %v6034 = vpack.c.bf16 %v5794, %v5786
    %v6035 = vpack.c.bf16 %v5795, %v5787
    %v6036 = vpack.c.bf16 %v5796, %v5788
    %v6037 = vpack.c.bf16 %v5797, %v5789
    %v6038 = vpack.c.bf16 %v5806, %v5798
    %v6039 = vpack.c.bf16 %v5807, %v5799
    %v6040 = vpack.c.bf16 %v5808, %v5800
    %v6041 = vpack.c.bf16 %v5809, %v5801
    %v6042 = vpack.c.bf16 %v5810, %v5802
    %v6043 = vpack.c.bf16 %v5811, %v5803
    %v6044 = vpack.c.bf16 %v5812, %v5804
    %v6045 = vpack.c.bf16 %v5813, %v5805
    %v6046 = vpack.c.bf16 %v5822, %v5814
    %v6047 = vpack.c.bf16 %v5823, %v5815
    %v6048 = vpack.c.bf16 %v5824, %v5816
    %v6049 = vpack.c.bf16 %v5825, %v5817
    %v6050 = vpack.c.bf16 %v5826, %v5818
    %v6051 = vpack.c.bf16 %v5827, %v5819
    %v6052 = vpack.c.bf16 %v5828, %v5820
    %v6053 = vpack.c.bf16 %v5829, %v5821
    %v6054 = vpack.c.bf16 %v5838, %v5830
    %v6055 = vpack.c.bf16 %v5839, %v5831
    %v6056 = vpack.c.bf16 %v5840, %v5832
    %v6057 = vpack.c.bf16 %v5841, %v5833
    %v6058 = vpack.c.bf16 %v5842, %v5834
    %v6059 = vpack.c.bf16 %v5843, %v5835
    %v6060 = vpack.c.bf16 %v5844, %v5836
    %v6061 = vpack.c.bf16 %v5845, %v5837
    %v6062 = vpack.c.bf16 %v5854, %v5846
    %v6063 = vpack.c.bf16 %v5855, %v5847
    %v6064 = vpack.c.bf16 %v5856, %v5848
    %v6065 = vpack.c.bf16 %v5857, %v5849
    %v6066 = vpack.c.bf16 %v5858, %v5850
    %v6067 = vpack.c.bf16 %v5859, %v5851
    %v6068 = vpack.c.bf16 %v5860, %v5852
    %v6069 = vpack.c.bf16 %v5861, %v5853
    %v6070 = vpack.c.bf16 %v5870, %v5862
    %v6071 = vpack.c.bf16 %v5871, %v5863
    %v6072 = vpack.c.bf16 %v5872, %v5864
    %v6073 = vpack.c.bf16 %v5873, %v5865
    %v6074 = vpack.c.bf16 %v5874, %v5866
    %v6075 = vpack.c.bf16 %v5875, %v5867
    %v6076 = vpack.c.bf16 %v5876, %v5868
    %v6077 = vpack.c.bf16 %v5877, %v5869
    %v6078 = vpack.c.bf16 %v5886, %v5878
    %v6079 = vpack.c.bf16 %v5887, %v5879
    %v6080 = vpack.c.bf16 %v5888, %v5880
    %v6081 = vpack.c.bf16 %v5889, %v5881
    %v6082 = vpack.c.bf16 %v5890, %v5882
    %v6083 = vpack.c.bf16 %v5891, %v5883
    %v6084 = vpack.c.bf16 %v5892, %v5884
    %v6085 = vpack.c.bf16 %v5893, %v5885
    %v6086 = vpack.c.bf16 %v5902, %v5894
    %v6087 = vpack.c.bf16 %v5903, %v5895
    %v6088 = vpack.c.bf16 %v5904, %v5896
    %v6089 = vpack.c.bf16 %v5905, %v5897
    %v6090 = vpack.c.bf16 %v5906, %v5898
    %v6091 = vpack.c.bf16 %v5907, %v5899
    %v6092 = vpack.c.bf16 %v5908, %v5900
    %v6093 = vpack.c.bf16 %v5909, %v5901
    %v6094 = vpack.c.bf16 %v5918, %v5910
    %v6095 = vpack.c.bf16 %v5919, %v5911
    %v6096 = vpack.c.bf16 %v5920, %v5912
    %v6097 = vpack.c.bf16 %v5921, %v5913
    %v6098 = vpack.c.bf16 %v5922, %v5914
    %v6099 = vpack.c.bf16 %v5923, %v5915
    %v6100 = vpack.c.bf16 %v5924, %v5916
    %v6101 = vpack.c.bf16 %v5925, %v5917
    %v6102 = vpack.c.bf16 %v5934, %v5926
    %v6103 = vpack.c.bf16 %v5935, %v5927
    %v6104 = vpack.c.bf16 %v5936, %v5928
    %v6105 = vpack.c.bf16 %v5937, %v5929
    %v6106 = vpack.c.bf16 %v5938, %v5930
    %v6107 = vpack.c.bf16 %v5939, %v5931
    %v6108 = vpack.c.bf16 %v5940, %v5932
    %v6109 = vpack.c.bf16 %v5941, %v5933
    %v6110 = vpack.c.bf16 %v5950, %v5942
    %v6111 = vpack.c.bf16 %v5951, %v5943
    %v6112 = vpack.c.bf16 %v5952, %v5944
    %v6113 = vpack.c.bf16 %v5953, %v5945
    %v6114 = vpack.c.bf16 %v5954, %v5946
    %v6115 = vpack.c.bf16 %v5955, %v5947
    %v6116 = vpack.c.bf16 %v5956, %v5948
    %v6117 = vpack.c.bf16 %v5957, %v5949
    %v6118 = vpack.c.bf16 %v5966, %v5958
    %v6119 = vpack.c.bf16 %v5967, %v5959
    %v6120 = vpack.c.bf16 %v5968, %v5960
    %v6121 = vpack.c.bf16 %v5969, %v5961
    %v6122 = vpack.c.bf16 %v5970, %v5962
    %v6123 = vpack.c.bf16 %v5971, %v5963
    %v6124 = vpack.c.bf16 %v5972, %v5964
    %v6125 = vpack.c.bf16 %v5973, %v5965
    %v6126 = vpack.c.bf16 %v5982, %v5974
    %v6127 = vpack.c.bf16 %v5983, %v5975
    %v6128 = vpack.c.bf16 %v5984, %v5976
    %v6129 = vpack.c.bf16 %v5985, %v5977
    %v6130 = vpack.c.bf16 %v5986, %v5978
    %v6131 = vpack.c.bf16 %v5987, %v5979
    %v6132 = vpack.c.bf16 %v5988, %v5980
    %v6133 = vpack.c.bf16 %v5989, %v5981
    %v6134 = vpack.c.bf16 %v5998, %v5990
    %v6135 = vpack.c.bf16 %v5999, %v5991
    %v6136 = vpack.c.bf16 %v6000, %v5992
    %v6137 = vpack.c.bf16 %v6001, %v5993
    %v6138 = vpack.c.bf16 %v6002, %v5994
    %v6139 = vpack.c.bf16 %v6003, %v5995
    %v6140 = vpack.c.bf16 %v6004, %v5996
    %v6141 = vpack.c.bf16 %v6005, %v5997
    %v6142 = vpack.c.bf16 %v6014, %v6006
    %v6143 = vpack.c.bf16 %v6015, %v6007
    %v6144 = vpack.c.bf16 %v6016, %v6008
    %v6145 = vpack.c.bf16 %v6017, %v6009
    %v6146 = vpack.c.bf16 %v6018, %v6010
    %v6147 = vpack.c.bf16 %v6019, %v6011
    %v6148 = vpack.c.bf16 %v6020, %v6012
    %v6149 = vpack.c.bf16 %v6021, %v6013
    %v6150 = vld [vmem:[%s1] sm:$0x3]
    %v6153 = vunpack.c.l.s4 1966171168
    %v6154 = vunpack.c.0.s8 %v6153
    %v6155 = vlaneseq
    %v6156 = vshrl.u32 %v6155, 7
    %v6157 = vsub.s32 %v6154, %v6156
    %v6158 = vrot.slane %v6150, %v6157
    %v6159 = vcombine.high %v6158, %v6158
    %v6161 = vunpack.c.l.s4 1966171168
    %v6162 = vunpack.c.0.s8 %v6161
    %v6163 = vlaneseq
    %v6164 = vshrl.u32 %v6163, 7
    %v6165 = vsub.s32 %v6162, %v6164
    %v6166 = vrot.slane %v6158, %v6165
    %v6168 = vunpack.c.l.s4 1966171168
    %v6169 = vunpack.c.0.s8 %v6168
    %v6170 = vlaneseq
    %v6171 = vshrl.u32 %v6170, 7
    %v6172 = vsub.s32 %v6169, %v6171
    %v6173 = vrot.slane %v6159, %v6172
    %6176 = vmatprep.subr.bf16.mxu0 %v6079
    %6177 = vmatpush1.bf16.msra.mxu0 %v6078
    %6178 = vmatprep.subr.bf16.mxu0 %v6071
    %6179 = vmatpush1.bf16.msra.mxu0 %v6070
    %6180 = vmatprep.subr.bf16.mxu0 %v6063
    %6181 = vmatpush1.bf16.msra.mxu0 %v6062
    %6182 = vmatprep.subr.bf16.mxu0 %v6055
    %6183 = vmatpush1.bf16.msra.mxu0 %v6054
    %6184 = vmatprep.subr.bf16.mxu0 %v6047
    %6185 = vmatpush1.bf16.msra.mxu0 %v6046
    %6186 = vmatprep.subr.bf16.mxu0 %v6039
    %6187 = vmatpush1.bf16.msra.mxu0 %v6038
    %6188 = vmatprep.subr.bf16.mxu0 %v6031
    %6189 = vmatpush1.bf16.msra.mxu0 %v6030
    %6190 = vmatprep.subr.bf16.mxu0 %v6023
    %6191 = vmatpush1.bf16.msra.mxu0 %v6022
    %6192 = vmatprep.subr.bf16.mxu0 %v6143
    %6193 = vmatpush2.bf16.msra.mxu0 %v6142
    %6194 = vmatprep.subr.bf16.mxu0 %v6135
    %6195 = vmatpush2.bf16.msra.mxu0 %v6134
    %6196 = vmatprep.subr.bf16.mxu0 %v6127
    %6197 = vmatpush2.bf16.msra.mxu0 %v6126
    %6198 = vmatprep.subr.bf16.mxu0 %v6119
    %6199 = vmatpush2.bf16.msra.mxu0 %v6118
    %6200 = vmatprep.subr.bf16.mxu0 %v6111
    %6201 = vmatpush2.bf16.msra.mxu0 %v6110
    %6202 = vmatprep.subr.bf16.mxu0 %v6103
    %6203 = vmatpush2.bf16.msra.mxu0 %v6102
    %6204 = vmatprep.subr.bf16.mxu0 %v6095
    %6205 = vmatpush2.bf16.msra.mxu0 %v6094
    %6206 = vmatprep.subr.bf16.mxu0 %v6087
    %6207 = vmatpush2.bf16.msra.mxu0 %v6086
    %6208 = vmatprep.mubr.bf16.mxu0 %v6173
    %6209 = vmatmul.mubr.bf16.gmra.mxu0 %v6166
    %v6210 = vpop.f32.mrf.mxu0
    %v6211 = vadd.f32 0.0, %v6210
    %v6212 = vpop.f32.mrf.mxu0
    %v6213 = vadd.f32 0.0, %v6212
    %v6214 = vpop.f32.mrf.mxu0
    %v6215 = vpop.f32.mrf.mxu0
    %6216 = vdwg.mxu0
    %6217 = vmatprep.subr.bf16.mxu0 %v6081
    %6218 = vmatpush1.bf16.msra.mxu0 %v6080
    %6219 = vmatprep.subr.bf16.mxu0 %v6073
    %6220 = vmatpush1.bf16.msra.mxu0 %v6072
    %6221 = vmatprep.subr.bf16.mxu0 %v6065
    %6222 = vmatpush1.bf16.msra.mxu0 %v6064
    %6223 = vmatprep.subr.bf16.mxu0 %v6057
    %6224 = vmatpush1.bf16.msra.mxu0 %v6056
    %6225 = vmatprep.subr.bf16.mxu0 %v6049
    %6226 = vmatpush1.bf16.msra.mxu0 %v6048
    %6227 = vmatprep.subr.bf16.mxu0 %v6041
    %6228 = vmatpush1.bf16.msra.mxu0 %v6040
    %6229 = vmatprep.subr.bf16.mxu0 %v6033
    %6230 = vmatpush1.bf16.msra.mxu0 %v6032
    %6231 = vmatprep.subr.bf16.mxu0 %v6025
    %6232 = vmatpush1.bf16.msra.mxu0 %v6024
    %6233 = vmatprep.subr.bf16.mxu0 %v6145
    %6234 = vmatpush2.bf16.msra.mxu0 %v6144
    %6235 = vmatprep.subr.bf16.mxu0 %v6137
    %6236 = vmatpush2.bf16.msra.mxu0 %v6136
    %6237 = vmatprep.subr.bf16.mxu0 %v6129
    %6238 = vmatpush2.bf16.msra.mxu0 %v6128
    %6239 = vmatprep.subr.bf16.mxu0 %v6121
    %6240 = vmatpush2.bf16.msra.mxu0 %v6120
    %6241 = vmatprep.subr.bf16.mxu0 %v6113
    %6242 = vmatpush2.bf16.msra.mxu0 %v6112
    %6243 = vmatprep.subr.bf16.mxu0 %v6105
    %6244 = vmatpush2.bf16.msra.mxu0 %v6104
    %6245 = vmatprep.subr.bf16.mxu0 %v6097
    %6246 = vmatpush2.bf16.msra.mxu0 %v6096
    %6247 = vmatprep.subr.bf16.mxu0 %v6089
    %6248 = vmatpush2.bf16.msra.mxu0 %v6088
    %6249 = vmatprep.mubr.bf16.mxu0 %v6173
    %6250 = vmatmul.mubr.bf16.gmra.mxu0 %v6166
    %v6251 = vpop.f32.mrf.mxu0
    %v6252 = vadd.f32 0.0, %v6251
    %v6253 = vpop.f32.mrf.mxu0
    %v6254 = vadd.f32 0.0, %v6253
    %v6255 = vpop.f32.mrf.mxu0
    %v6256 = vpop.f32.mrf.mxu0
    %6257 = vdwg.mxu0
    %6258 = vmatprep.subr.bf16.mxu0 %v6083
    %6259 = vmatpush1.bf16.msra.mxu0 %v6082
    %6260 = vmatprep.subr.bf16.mxu0 %v6075
    %6261 = vmatpush1.bf16.msra.mxu0 %v6074
    %6262 = vmatprep.subr.bf16.mxu0 %v6067
    %6263 = vmatpush1.bf16.msra.mxu0 %v6066
    %6264 = vmatprep.subr.bf16.mxu0 %v6059
    %6265 = vmatpush1.bf16.msra.mxu0 %v6058
    %6266 = vmatprep.subr.bf16.mxu0 %v6051
    %6267 = vmatpush1.bf16.msra.mxu0 %v6050
    %6268 = vmatprep.subr.bf16.mxu0 %v6043
    %6269 = vmatpush1.bf16.msra.mxu0 %v6042
    %6270 = vmatprep.subr.bf16.mxu0 %v6035
    %6271 = vmatpush1.bf16.msra.mxu0 %v6034
    %6272 = vmatprep.subr.bf16.mxu0 %v6027
    %6273 = vmatpush1.bf16.msra.mxu0 %v6026
    %6274 = vmatprep.subr.bf16.mxu0 %v6147
    %6275 = vmatpush2.bf16.msra.mxu0 %v6146
    %6276 = vmatprep.subr.bf16.mxu0 %v6139
    %6277 = vmatpush2.bf16.msra.mxu0 %v6138
    %6278 = vmatprep.subr.bf16.mxu0 %v6131
    %6279 = vmatpush2.bf16.msra.mxu0 %v6130
    %6280 = vmatprep.subr.bf16.mxu0 %v6123
    %6281 = vmatpush2.bf16.msra.mxu0 %v6122
    %6282 = vmatprep.subr.bf16.mxu0 %v6115
    %6283 = vmatpush2.bf16.msra.mxu0 %v6114
    %6284 = vmatprep.subr.bf16.mxu0 %v6107
    %6285 = vmatpush2.bf16.msra.mxu0 %v6106
    %6286 = vmatprep.subr.bf16.mxu0 %v6099
    %6287 = vmatpush2.bf16.msra.mxu0 %v6098
    %6288 = vmatprep.subr.bf16.mxu0 %v6091
    %6289 = vmatpush2.bf16.msra.mxu0 %v6090
    %6290 = vmatprep.mubr.bf16.mxu0 %v6173
    %6291 = vmatmul.mubr.bf16.gmra.mxu0 %v6166
    %v6292 = vpop.f32.mrf.mxu0
    %v6293 = vadd.f32 0.0, %v6292
    %v6294 = vpop.f32.mrf.mxu0
    %v6295 = vadd.f32 0.0, %v6294
    %v6296 = vpop.f32.mrf.mxu0
    %v6297 = vpop.f32.mrf.mxu0
    %6298 = vdwg.mxu0
    %6299 = vmatprep.subr.bf16.mxu0 %v6085
    %6300 = vmatpush1.bf16.msra.mxu0 %v6084
    %6301 = vmatprep.subr.bf16.mxu0 %v6077
    %6302 = vmatpush1.bf16.msra.mxu0 %v6076
    %6303 = vmatprep.subr.bf16.mxu0 %v6069
    %6304 = vmatpush1.bf16.msra.mxu0 %v6068
    %6305 = vmatprep.subr.bf16.mxu0 %v6061
    %6306 = vmatpush1.bf16.msra.mxu0 %v6060
    %6307 = vmatprep.subr.bf16.mxu0 %v6053
    %6308 = vmatpush1.bf16.msra.mxu0 %v6052
    %6309 = vmatprep.subr.bf16.mxu0 %v6045
    %6310 = vmatpush1.bf16.msra.mxu0 %v6044
    %6311 = vmatprep.subr.bf16.mxu0 %v6037
    %6312 = vmatpush1.bf16.msra.mxu0 %v6036
    %6313 = vmatprep.subr.bf16.mxu0 %v6029
    %6314 = vmatpush1.bf16.msra.mxu0 %v6028
    %6315 = vmatprep.subr.bf16.mxu0 %v6149
    %6316 = vmatpush2.bf16.msra.mxu0 %v6148
    %6317 = vmatprep.subr.bf16.mxu0 %v6141
    %6318 = vmatpush2.bf16.msra.mxu0 %v6140
    %6319 = vmatprep.subr.bf16.mxu0 %v6133
    %6320 = vmatpush2.bf16.msra.mxu0 %v6132
    %6321 = vmatprep.subr.bf16.mxu0 %v6125
    %6322 = vmatpush2.bf16.msra.mxu0 %v6124
    %6323 = vmatprep.subr.bf16.mxu0 %v6117
    %6324 = vmatpush2.bf16.msra.mxu0 %v6116
    %6325 = vmatprep.subr.bf16.mxu0 %v6109
    %6326 = vmatpush2.bf16.msra.mxu0 %v6108
    %6327 = vmatprep.subr.bf16.mxu0 %v6101
    %6328 = vmatpush2.bf16.msra.mxu0 %v6100
    %6329 = vmatprep.subr.bf16.mxu0 %v6093
    %6330 = vmatpush2.bf16.msra.mxu0 %v6092
    %6331 = vmatprep.mubr.bf16.mxu0 %v6173
    %6332 = vmatmul.mubr.bf16.gmra.mxu0 %v6166
    %v6333 = vpop.f32.mrf.mxu0
    %v6334 = vadd.f32 0.0, %v6333
    %v6335 = vpop.f32.mrf.mxu0
    %v6336 = vadd.f32 0.0, %v6335
    %v6337 = vpop.f32.mrf.mxu0
    %v6338 = vpop.f32.mrf.mxu0
    %6339 = vdwg.mxu0
    %v6340 = vmul.f32 %v6211, 0.0078125
    %v6341 = vmul.f32 %v6213, 0.0078125
    %v6342 = vmul.f32 %v6252, 0.0078125
    %v6343 = vmul.f32 %v6254, 0.0078125
    %v6344 = vmul.f32 %v6293, 0.0078125
    %v6345 = vmul.f32 %v6295, 0.0078125
    %v6346 = vmul.f32 %v6334, 0.0078125
    %v6347 = vmul.f32 %v6336, 0.0078125
    %v6348 = vpack.c.bf16 %v6340, %v6340
    %v6349 = vpack.c.bf16 %v6341, %v6341
    %v6350 = vpack.c.bf16 %v6342, %v6342
    %v6351 = vpack.c.bf16 %v6343, %v6343
    %v6352 = vpack.c.bf16 %v6344, %v6344
    %v6353 = vpack.c.bf16 %v6345, %v6345
    %v6354 = vpack.c.bf16 %v6346, %v6346
    %v6355 = vpack.c.bf16 %v6347, %v6347
    %s6356 = smul.u32 4, 128
    %s6357 = smul.u32 %s6356, 8
    %s6358 = sshll.u32 %s6357, 4
    %6359 = dma.done %s124, %s6358
    %v6360 = vld [vmem:[#allocation3] sm:$0xff]
    %v6361 = vld [vmem:[#allocation3 + $0x8] sm:$0xff]
    %v6362 = vld [vmem:[#allocation3 + $0x10] sm:$0xff]
    %v6363 = vld [vmem:[#allocation3 + $0x18] sm:$0xff]
    %v6364 = vld [vmem:[#allocation3 + $0x20] sm:$0xff]
    %v6365 = vld [vmem:[#allocation3 + $0x28] sm:$0xff]
    %v6366 = vld [vmem:[#allocation3 + $0x30] sm:$0xff]
    %v6367 = vld [vmem:[#allocation3 + $0x38] sm:$0xff]
    %v6368 = vld [vmem:[#allocation3 + $0x40] sm:$0xff]
    %v6369 = vld [vmem:[#allocation3 + $0x48] sm:$0xff]
    %v6370 = vld [vmem:[#allocation3 + $0x50] sm:$0xff]
    %v6371 = vld [vmem:[#allocation3 + $0x58] sm:$0xff]
    %v6372 = vld [vmem:[#allocation3 + $0x60] sm:$0xff]
    %v6373 = vld [vmem:[#allocation3 + $0x68] sm:$0xff]
    %v6374 = vld [vmem:[#allocation3 + $0x70] sm:$0xff]
    %v6375 = vld [vmem:[#allocation3 + $0x78] sm:$0xff]
    %v6376 = vld [vmem:[#allocation3 + $0x80] sm:$0xff]
    %v6377 = vld [vmem:[#allocation3 + $0x88] sm:$0xff]
    %v6378 = vld [vmem:[#allocation3 + $0x90] sm:$0xff]
    %v6379 = vld [vmem:[#allocation3 + $0x98] sm:$0xff]
    %v6380 = vld [vmem:[#allocation3 + $0xa0] sm:$0xff]
    %v6381 = vld [vmem:[#allocation3 + $0xa8] sm:$0xff]
    %v6382 = vld [vmem:[#allocation3 + $0xb0] sm:$0xff]
    %v6383 = vld [vmem:[#allocation3 + $0xb8] sm:$0xff]
    %v6384 = vld [vmem:[#allocation3 + $0xc0] sm:$0xff]
    %v6385 = vld [vmem:[#allocation3 + $0xc8] sm:$0xff]
    %v6386 = vld [vmem:[#allocation3 + $0xd0] sm:$0xff]
    %v6387 = vld [vmem:[#allocation3 + $0xd8] sm:$0xff]
    %v6388 = vld [vmem:[#allocation3 + $0xe0] sm:$0xff]
    %v6389 = vld [vmem:[#allocation3 + $0xe8] sm:$0xff]
    %v6390 = vld [vmem:[#allocation3 + $0xf0] sm:$0xff]
    %v6391 = vld [vmem:[#allocation3 + $0xf8] sm:$0xff]
    %v6392 = vld [vmem:[#allocation3 + $0x100] sm:$0xff]
    %v6393 = vld [vmem:[#allocation3 + $0x108] sm:$0xff]
    %v6394 = vld [vmem:[#allocation3 + $0x110] sm:$0xff]
    %v6395 = vld [vmem:[#allocation3 + $0x118] sm:$0xff]
    %v6396 = vld [vmem:[#allocation3 + $0x120] sm:$0xff]
    %v6397 = vld [vmem:[#allocation3 + $0x128] sm:$0xff]
    %v6398 = vld [vmem:[#allocation3 + $0x130] sm:$0xff]
    %v6399 = vld [vmem:[#allocation3 + $0x138] sm:$0xff]
    %v6400 = vld [vmem:[#allocation3 + $0x140] sm:$0xff]
    %v6401 = vld [vmem:[#allocation3 + $0x148] sm:$0xff]
    %v6402 = vld [vmem:[#allocation3 + $0x150] sm:$0xff]
    %v6403 = vld [vmem:[#allocation3 + $0x158] sm:$0xff]
    %v6404 = vld [vmem:[#allocation3 + $0x160] sm:$0xff]
    %v6405 = vld [vmem:[#allocation3 + $0x168] sm:$0xff]
    %v6406 = vld [vmem:[#allocation3 + $0x170] sm:$0xff]
    %v6407 = vld [vmem:[#allocation3 + $0x178] sm:$0xff]
    %v6408 = vld [vmem:[#allocation3 + $0x180] sm:$0xff]
    %v6409 = vld [vmem:[#allocation3 + $0x188] sm:$0xff]
    %v6410 = vld [vmem:[#allocation3 + $0x190] sm:$0xff]
    %v6411 = vld [vmem:[#allocation3 + $0x198] sm:$0xff]
    %v6412 = vld [vmem:[#allocation3 + $0x1a0] sm:$0xff]
    %v6413 = vld [vmem:[#allocation3 + $0x1a8] sm:$0xff]
    %v6414 = vld [vmem:[#allocation3 + $0x1b0] sm:$0xff]
    %v6415 = vld [vmem:[#allocation3 + $0x1b8] sm:$0xff]
    %v6416 = vld [vmem:[#allocation3 + $0x1c0] sm:$0xff]
    %v6417 = vld [vmem:[#allocation3 + $0x1c8] sm:$0xff]
    %v6418 = vld [vmem:[#allocation3 + $0x1d0] sm:$0xff]
    %v6419 = vld [vmem:[#allocation3 + $0x1d8] sm:$0xff]
    %v6420 = vld [vmem:[#allocation3 + $0x1e0] sm:$0xff]
    %v6421 = vld [vmem:[#allocation3 + $0x1e8] sm:$0xff]
    %v6422 = vld [vmem:[#allocation3 + $0x1f0] sm:$0xff]
    %v6423 = vld [vmem:[#allocation3 + $0x1f8] sm:$0xff]
    %v6424 = vld [vmem:[#allocation3 + $0x200] sm:$0xff]
    %v6425 = vld [vmem:[#allocation3 + $0x208] sm:$0xff]
    %v6426 = vld [vmem:[#allocation3 + $0x210] sm:$0xff]
    %v6427 = vld [vmem:[#allocation3 + $0x218] sm:$0xff]
    %v6428 = vld [vmem:[#allocation3 + $0x220] sm:$0xff]
    %v6429 = vld [vmem:[#allocation3 + $0x228] sm:$0xff]
    %v6430 = vld [vmem:[#allocation3 + $0x230] sm:$0xff]
    %v6431 = vld [vmem:[#allocation3 + $0x238] sm:$0xff]
    %v6432 = vld [vmem:[#allocation3 + $0x240] sm:$0xff]
    %v6433 = vld [vmem:[#allocation3 + $0x248] sm:$0xff]
    %v6434 = vld [vmem:[#allocation3 + $0x250] sm:$0xff]
    %v6435 = vld [vmem:[#allocation3 + $0x258] sm:$0xff]
    %v6436 = vld [vmem:[#allocation3 + $0x260] sm:$0xff]
    %v6437 = vld [vmem:[#allocation3 + $0x268] sm:$0xff]
    %v6438 = vld [vmem:[#allocation3 + $0x270] sm:$0xff]
    %v6439 = vld [vmem:[#allocation3 + $0x278] sm:$0xff]
    %v6440 = vld [vmem:[#allocation3 + $0x280] sm:$0xff]
    %v6441 = vld [vmem:[#allocation3 + $0x288] sm:$0xff]
    %v6442 = vld [vmem:[#allocation3 + $0x290] sm:$0xff]
    %v6443 = vld [vmem:[#allocation3 + $0x298] sm:$0xff]
    %v6444 = vld [vmem:[#allocation3 + $0x2a0] sm:$0xff]
    %v6445 = vld [vmem:[#allocation3 + $0x2a8] sm:$0xff]
    %v6446 = vld [vmem:[#allocation3 + $0x2b0] sm:$0xff]
    %v6447 = vld [vmem:[#allocation3 + $0x2b8] sm:$0xff]
    %v6448 = vld [vmem:[#allocation3 + $0x2c0] sm:$0xff]
    %v6449 = vld [vmem:[#allocation3 + $0x2c8] sm:$0xff]
    %v6450 = vld [vmem:[#allocation3 + $0x2d0] sm:$0xff]
    %v6451 = vld [vmem:[#allocation3 + $0x2d8] sm:$0xff]
    %v6452 = vld [vmem:[#allocation3 + $0x2e0] sm:$0xff]
    %v6453 = vld [vmem:[#allocation3 + $0x2e8] sm:$0xff]
    %v6454 = vld [vmem:[#allocation3 + $0x2f0] sm:$0xff]
    %v6455 = vld [vmem:[#allocation3 + $0x2f8] sm:$0xff]
    %v6456 = vld [vmem:[#allocation3 + $0x300] sm:$0xff]
    %v6457 = vld [vmem:[#allocation3 + $0x308] sm:$0xff]
    %v6458 = vld [vmem:[#allocation3 + $0x310] sm:$0xff]
    %v6459 = vld [vmem:[#allocation3 + $0x318] sm:$0xff]
    %v6460 = vld [vmem:[#allocation3 + $0x320] sm:$0xff]
    %v6461 = vld [vmem:[#allocation3 + $0x328] sm:$0xff]
    %v6462 = vld [vmem:[#allocation3 + $0x330] sm:$0xff]
    %v6463 = vld [vmem:[#allocation3 + $0x338] sm:$0xff]
    %v6464 = vld [vmem:[#allocation3 + $0x340] sm:$0xff]
    %v6465 = vld [vmem:[#allocation3 + $0x348] sm:$0xff]
    %v6466 = vld [vmem:[#allocation3 + $0x350] sm:$0xff]
    %v6467 = vld [vmem:[#allocation3 + $0x358] sm:$0xff]
    %v6468 = vld [vmem:[#allocation3 + $0x360] sm:$0xff]
    %v6469 = vld [vmem:[#allocation3 + $0x368] sm:$0xff]
    %v6470 = vld [vmem:[#allocation3 + $0x370] sm:$0xff]
    %v6471 = vld [vmem:[#allocation3 + $0x378] sm:$0xff]
    %v6472 = vld [vmem:[#allocation3 + $0x380] sm:$0xff]
    %v6473 = vld [vmem:[#allocation3 + $0x388] sm:$0xff]
    %v6474 = vld [vmem:[#allocation3 + $0x390] sm:$0xff]
    %v6475 = vld [vmem:[#allocation3 + $0x398] sm:$0xff]
    %v6476 = vld [vmem:[#allocation3 + $0x3a0] sm:$0xff]
    %v6477 = vld [vmem:[#allocation3 + $0x3a8] sm:$0xff]
    %v6478 = vld [vmem:[#allocation3 + $0x3b0] sm:$0xff]
    %v6479 = vld [vmem:[#allocation3 + $0x3b8] sm:$0xff]
    %v6480 = vld [vmem:[#allocation3 + $0x3c0] sm:$0xff]
    %v6481 = vld [vmem:[#allocation3 + $0x3c8] sm:$0xff]
    %v6482 = vld [vmem:[#allocation3 + $0x3d0] sm:$0xff]
    %v6483 = vld [vmem:[#allocation3 + $0x3d8] sm:$0xff]
    %v6484 = vld [vmem:[#allocation3 + $0x3e0] sm:$0xff]
    %v6485 = vld [vmem:[#allocation3 + $0x3e8] sm:$0xff]
    %v6486 = vld [vmem:[#allocation3 + $0x3f0] sm:$0xff]
    %v6487 = vld [vmem:[#allocation3 + $0x3f8] sm:$0xff]
    %v6488 = vld [vmem:[#allocation3 + $0x400] sm:$0xff]
    %v6489 = vld [vmem:[#allocation3 + $0x408] sm:$0xff]
    %v6490 = vld [vmem:[#allocation3 + $0x410] sm:$0xff]
    %v6491 = vld [vmem:[#allocation3 + $0x418] sm:$0xff]
    %v6492 = vld [vmem:[#allocation3 + $0x420] sm:$0xff]
    %v6493 = vld [vmem:[#allocation3 + $0x428] sm:$0xff]
    %v6494 = vld [vmem:[#allocation3 + $0x430] sm:$0xff]
    %v6495 = vld [vmem:[#allocation3 + $0x438] sm:$0xff]
    %v6496 = vld [vmem:[#allocation3 + $0x440] sm:$0xff]
    %v6497 = vld [vmem:[#allocation3 + $0x448] sm:$0xff]
    %v6498 = vld [vmem:[#allocation3 + $0x450] sm:$0xff]
    %v6499 = vld [vmem:[#allocation3 + $0x458] sm:$0xff]
    %v6500 = vld [vmem:[#allocation3 + $0x460] sm:$0xff]
    %v6501 = vld [vmem:[#allocation3 + $0x468] sm:$0xff]
    %v6502 = vld [vmem:[#allocation3 + $0x470] sm:$0xff]
    %v6503 = vld [vmem:[#allocation3 + $0x478] sm:$0xff]
    %v6504 = vld [vmem:[#allocation3 + $0x480] sm:$0xff]
    %v6505 = vld [vmem:[#allocation3 + $0x488] sm:$0xff]
    %v6506 = vld [vmem:[#allocation3 + $0x490] sm:$0xff]
    %v6507 = vld [vmem:[#allocation3 + $0x498] sm:$0xff]
    %v6508 = vld [vmem:[#allocation3 + $0x4a0] sm:$0xff]
    %v6509 = vld [vmem:[#allocation3 + $0x4a8] sm:$0xff]
    %v6510 = vld [vmem:[#allocation3 + $0x4b0] sm:$0xff]
    %v6511 = vld [vmem:[#allocation3 + $0x4b8] sm:$0xff]
    %v6512 = vld [vmem:[#allocation3 + $0x4c0] sm:$0xff]
    %v6513 = vld [vmem:[#allocation3 + $0x4c8] sm:$0xff]
    %v6514 = vld [vmem:[#allocation3 + $0x4d0] sm:$0xff]
    %v6515 = vld [vmem:[#allocation3 + $0x4d8] sm:$0xff]
    %v6516 = vld [vmem:[#allocation3 + $0x4e0] sm:$0xff]
    %v6517 = vld [vmem:[#allocation3 + $0x4e8] sm:$0xff]
    %v6518 = vld [vmem:[#allocation3 + $0x4f0] sm:$0xff]
    %v6519 = vld [vmem:[#allocation3 + $0x4f8] sm:$0xff]
    %v6520 = vld [vmem:[#allocation3 + $0x500] sm:$0xff]
    %v6521 = vld [vmem:[#allocation3 + $0x508] sm:$0xff]
    %v6522 = vld [vmem:[#allocation3 + $0x510] sm:$0xff]
    %v6523 = vld [vmem:[#allocation3 + $0x518] sm:$0xff]
    %v6524 = vld [vmem:[#allocation3 + $0x520] sm:$0xff]
    %v6525 = vld [vmem:[#allocation3 + $0x528] sm:$0xff]
    %v6526 = vld [vmem:[#allocation3 + $0x530] sm:$0xff]
    %v6527 = vld [vmem:[#allocation3 + $0x538] sm:$0xff]
    %v6528 = vld [vmem:[#allocation3 + $0x540] sm:$0xff]
    %v6529 = vld [vmem:[#allocation3 + $0x548] sm:$0xff]
    %v6530 = vld [vmem:[#allocation3 + $0x550] sm:$0xff]
    %v6531 = vld [vmem:[#allocation3 + $0x558] sm:$0xff]
    %v6532 = vld [vmem:[#allocation3 + $0x560] sm:$0xff]
    %v6533 = vld [vmem:[#allocation3 + $0x568] sm:$0xff]
    %v6534 = vld [vmem:[#allocation3 + $0x570] sm:$0xff]
    %v6535 = vld [vmem:[#allocation3 + $0x578] sm:$0xff]
    %v6536 = vld [vmem:[#allocation3 + $0x580] sm:$0xff]
    %v6537 = vld [vmem:[#allocation3 + $0x588] sm:$0xff]
    %v6538 = vld [vmem:[#allocation3 + $0x590] sm:$0xff]
    %v6539 = vld [vmem:[#allocation3 + $0x598] sm:$0xff]
    %v6540 = vld [vmem:[#allocation3 + $0x5a0] sm:$0xff]
    %v6541 = vld [vmem:[#allocation3 + $0x5a8] sm:$0xff]
    %v6542 = vld [vmem:[#allocation3 + $0x5b0] sm:$0xff]
    %v6543 = vld [vmem:[#allocation3 + $0x5b8] sm:$0xff]
    %v6544 = vld [vmem:[#allocation3 + $0x5c0] sm:$0xff]
    %v6545 = vld [vmem:[#allocation3 + $0x5c8] sm:$0xff]
    %v6546 = vld [vmem:[#allocation3 + $0x5d0] sm:$0xff]
    %v6547 = vld [vmem:[#allocation3 + $0x5d8] sm:$0xff]
    %v6548 = vld [vmem:[#allocation3 + $0x5e0] sm:$0xff]
    %v6549 = vld [vmem:[#allocation3 + $0x5e8] sm:$0xff]
    %v6550 = vld [vmem:[#allocation3 + $0x5f0] sm:$0xff]
    %v6551 = vld [vmem:[#allocation3 + $0x5f8] sm:$0xff]
    %v6552 = vld [vmem:[#allocation3 + $0x600] sm:$0xff]
    %v6553 = vld [vmem:[#allocation3 + $0x608] sm:$0xff]
    %v6554 = vld [vmem:[#allocation3 + $0x610] sm:$0xff]
    %v6555 = vld [vmem:[#allocation3 + $0x618] sm:$0xff]
    %v6556 = vld [vmem:[#allocation3 + $0x620] sm:$0xff]
    %v6557 = vld [vmem:[#allocation3 + $0x628] sm:$0xff]
    %v6558 = vld [vmem:[#allocation3 + $0x630] sm:$0xff]
    %v6559 = vld [vmem:[#allocation3 + $0x638] sm:$0xff]
    %v6560 = vld [vmem:[#allocation3 + $0x640] sm:$0xff]
    %v6561 = vld [vmem:[#allocation3 + $0x648] sm:$0xff]
    %v6562 = vld [vmem:[#allocation3 + $0x650] sm:$0xff]
    %v6563 = vld [vmem:[#allocation3 + $0x658] sm:$0xff]
    %v6564 = vld [vmem:[#allocation3 + $0x660] sm:$0xff]
    %v6565 = vld [vmem:[#allocation3 + $0x668] sm:$0xff]
    %v6566 = vld [vmem:[#allocation3 + $0x670] sm:$0xff]
    %v6567 = vld [vmem:[#allocation3 + $0x678] sm:$0xff]
    %v6568 = vld [vmem:[#allocation3 + $0x680] sm:$0xff]
    %v6569 = vld [vmem:[#allocation3 + $0x688] sm:$0xff]
    %v6570 = vld [vmem:[#allocation3 + $0x690] sm:$0xff]
    %v6571 = vld [vmem:[#allocation3 + $0x698] sm:$0xff]
    %v6572 = vld [vmem:[#allocation3 + $0x6a0] sm:$0xff]
    %v6573 = vld [vmem:[#allocation3 + $0x6a8] sm:$0xff]
    %v6574 = vld [vmem:[#allocation3 + $0x6b0] sm:$0xff]
    %v6575 = vld [vmem:[#allocation3 + $0x6b8] sm:$0xff]
    %v6576 = vld [vmem:[#allocation3 + $0x6c0] sm:$0xff]
    %v6577 = vld [vmem:[#allocation3 + $0x6c8] sm:$0xff]
    %v6578 = vld [vmem:[#allocation3 + $0x6d0] sm:$0xff]
    %v6579 = vld [vmem:[#allocation3 + $0x6d8] sm:$0xff]
    %v6580 = vld [vmem:[#allocation3 + $0x6e0] sm:$0xff]
    %v6581 = vld [vmem:[#allocation3 + $0x6e8] sm:$0xff]
    %v6582 = vld [vmem:[#allocation3 + $0x6f0] sm:$0xff]
    %v6583 = vld [vmem:[#allocation3 + $0x6f8] sm:$0xff]
    %v6584 = vld [vmem:[#allocation3 + $0x700] sm:$0xff]
    %v6585 = vld [vmem:[#allocation3 + $0x708] sm:$0xff]
    %v6586 = vld [vmem:[#allocation3 + $0x710] sm:$0xff]
    %v6587 = vld [vmem:[#allocation3 + $0x718] sm:$0xff]
    %v6588 = vld [vmem:[#allocation3 + $0x720] sm:$0xff]
    %v6589 = vld [vmem:[#allocation3 + $0x728] sm:$0xff]
    %v6590 = vld [vmem:[#allocation3 + $0x730] sm:$0xff]
    %v6591 = vld [vmem:[#allocation3 + $0x738] sm:$0xff]
    %v6592 = vld [vmem:[#allocation3 + $0x740] sm:$0xff]
    %v6593 = vld [vmem:[#allocation3 + $0x748] sm:$0xff]
    %v6594 = vld [vmem:[#allocation3 + $0x750] sm:$0xff]
    %v6595 = vld [vmem:[#allocation3 + $0x758] sm:$0xff]
    %v6596 = vld [vmem:[#allocation3 + $0x760] sm:$0xff]
    %v6597 = vld [vmem:[#allocation3 + $0x768] sm:$0xff]
    %v6598 = vld [vmem:[#allocation3 + $0x770] sm:$0xff]
    %v6599 = vld [vmem:[#allocation3 + $0x778] sm:$0xff]
    %v6600 = vld [vmem:[#allocation3 + $0x780] sm:$0xff]
    %v6601 = vld [vmem:[#allocation3 + $0x788] sm:$0xff]
    %v6602 = vld [vmem:[#allocation3 + $0x790] sm:$0xff]
    %v6603 = vld [vmem:[#allocation3 + $0x798] sm:$0xff]
    %v6604 = vld [vmem:[#allocation3 + $0x7a0] sm:$0xff]
    %v6605 = vld [vmem:[#allocation3 + $0x7a8] sm:$0xff]
    %v6606 = vld [vmem:[#allocation3 + $0x7b0] sm:$0xff]
    %v6607 = vld [vmem:[#allocation3 + $0x7b8] sm:$0xff]
    %v6608 = vld [vmem:[#allocation3 + $0x7c0] sm:$0xff]
    %v6609 = vld [vmem:[#allocation3 + $0x7c8] sm:$0xff]
    %v6610 = vld [vmem:[#allocation3 + $0x7d0] sm:$0xff]
    %v6611 = vld [vmem:[#allocation3 + $0x7d8] sm:$0xff]
    %v6612 = vld [vmem:[#allocation3 + $0x7e0] sm:$0xff]
    %v6613 = vld [vmem:[#allocation3 + $0x7e8] sm:$0xff]
    %v6614 = vld [vmem:[#allocation3 + $0x7f0] sm:$0xff]
    %v6615 = vld [vmem:[#allocation3 + $0x7f8] sm:$0xff]
    %v6616 = vld [vmem:[#allocation3 + $0x800] sm:$0xff]
    %v6617 = vld [vmem:[#allocation3 + $0x808] sm:$0xff]
    %v6618 = vld [vmem:[#allocation3 + $0x810] sm:$0xff]
    %v6619 = vld [vmem:[#allocation3 + $0x818] sm:$0xff]
    %v6620 = vld [vmem:[#allocation3 + $0x820] sm:$0xff]
    %v6621 = vld [vmem:[#allocation3 + $0x828] sm:$0xff]
    %v6622 = vld [vmem:[#allocation3 + $0x830] sm:$0xff]
    %v6623 = vld [vmem:[#allocation3 + $0x838] sm:$0xff]
    %v6624 = vld [vmem:[#allocation3 + $0x840] sm:$0xff]
    %v6625 = vld [vmem:[#allocation3 + $0x848] sm:$0xff]
    %v6626 = vld [vmem:[#allocation3 + $0x850] sm:$0xff]
    %v6627 = vld [vmem:[#allocation3 + $0x858] sm:$0xff]
    %v6628 = vld [vmem:[#allocation3 + $0x860] sm:$0xff]
    %v6629 = vld [vmem:[#allocation3 + $0x868] sm:$0xff]
    %v6630 = vld [vmem:[#allocation3 + $0x870] sm:$0xff]
    %v6631 = vld [vmem:[#allocation3 + $0x878] sm:$0xff]
    %v6632 = vld [vmem:[#allocation3 + $0x880] sm:$0xff]
    %v6633 = vld [vmem:[#allocation3 + $0x888] sm:$0xff]
    %v6634 = vld [vmem:[#allocation3 + $0x890] sm:$0xff]
    %v6635 = vld [vmem:[#allocation3 + $0x898] sm:$0xff]
    %v6636 = vld [vmem:[#allocation3 + $0x8a0] sm:$0xff]
    %v6637 = vld [vmem:[#allocation3 + $0x8a8] sm:$0xff]
    %v6638 = vld [vmem:[#allocation3 + $0x8b0] sm:$0xff]
    %v6639 = vld [vmem:[#allocation3 + $0x8b8] sm:$0xff]
    %v6640 = vld [vmem:[#allocation3 + $0x8c0] sm:$0xff]
    %v6641 = vld [vmem:[#allocation3 + $0x8c8] sm:$0xff]
    %v6642 = vld [vmem:[#allocation3 + $0x8d0] sm:$0xff]
    %v6643 = vld [vmem:[#allocation3 + $0x8d8] sm:$0xff]
    %v6644 = vld [vmem:[#allocation3 + $0x8e0] sm:$0xff]
    %v6645 = vld [vmem:[#allocation3 + $0x8e8] sm:$0xff]
    %v6646 = vld [vmem:[#allocation3 + $0x8f0] sm:$0xff]
    %v6647 = vld [vmem:[#allocation3 + $0x8f8] sm:$0xff]
    %v6648 = vld [vmem:[#allocation3 + $0x900] sm:$0xff]
    %v6649 = vld [vmem:[#allocation3 + $0x908] sm:$0xff]
    %v6650 = vld [vmem:[#allocation3 + $0x910] sm:$0xff]
    %v6651 = vld [vmem:[#allocation3 + $0x918] sm:$0xff]
    %v6652 = vld [vmem:[#allocation3 + $0x920] sm:$0xff]
    %v6653 = vld [vmem:[#allocation3 + $0x928] sm:$0xff]
    %v6654 = vld [vmem:[#allocation3 + $0x930] sm:$0xff]
    %v6655 = vld [vmem:[#allocation3 + $0x938] sm:$0xff]
    %v6656 = vld [vmem:[#allocation3 + $0x940] sm:$0xff]
    %v6657 = vld [vmem:[#allocation3 + $0x948] sm:$0xff]
    %v6658 = vld [vmem:[#allocation3 + $0x950] sm:$0xff]
    %v6659 = vld [vmem:[#allocation3 + $0x958] sm:$0xff]
    %v6660 = vld [vmem:[#allocation3 + $0x960] sm:$0xff]
    %v6661 = vld [vmem:[#allocation3 + $0x968] sm:$0xff]
    %v6662 = vld [vmem:[#allocation3 + $0x970] sm:$0xff]
    %v6663 = vld [vmem:[#allocation3 + $0x978] sm:$0xff]
    %v6664 = vld [vmem:[#allocation3 + $0x980] sm:$0xff]
    %v6665 = vld [vmem:[#allocation3 + $0x988] sm:$0xff]
    %v6666 = vld [vmem:[#allocation3 + $0x990] sm:$0xff]
    %v6667 = vld [vmem:[#allocation3 + $0x998] sm:$0xff]
    %v6668 = vld [vmem:[#allocation3 + $0x9a0] sm:$0xff]
    %v6669 = vld [vmem:[#allocation3 + $0x9a8] sm:$0xff]
    %v6670 = vld [vmem:[#allocation3 + $0x9b0] sm:$0xff]
    %v6671 = vld [vmem:[#allocation3 + $0x9b8] sm:$0xff]
    %v6672 = vld [vmem:[#allocation3 + $0x9c0] sm:$0xff]
    %v6673 = vld [vmem:[#allocation3 + $0x9c8] sm:$0xff]
    %v6674 = vld [vmem:[#allocation3 + $0x9d0] sm:$0xff]
    %v6675 = vld [vmem:[#allocation3 + $0x9d8] sm:$0xff]
    %v6676 = vld [vmem:[#allocation3 + $0x9e0] sm:$0xff]
    %v6677 = vld [vmem:[#allocation3 + $0x9e8] sm:$0xff]
    %v6678 = vld [vmem:[#allocation3 + $0x9f0] sm:$0xff]
    %v6679 = vld [vmem:[#allocation3 + $0x9f8] sm:$0xff]
    %v6680 = vld [vmem:[#allocation3 + $0xa00] sm:$0xff]
    %v6681 = vld [vmem:[#allocation3 + $0xa08] sm:$0xff]
    %v6682 = vld [vmem:[#allocation3 + $0xa10] sm:$0xff]
    %v6683 = vld [vmem:[#allocation3 + $0xa18] sm:$0xff]
    %v6684 = vld [vmem:[#allocation3 + $0xa20] sm:$0xff]
    %v6685 = vld [vmem:[#allocation3 + $0xa28] sm:$0xff]
    %v6686 = vld [vmem:[#allocation3 + $0xa30] sm:$0xff]
    %v6687 = vld [vmem:[#allocation3 + $0xa38] sm:$0xff]
    %v6688 = vld [vmem:[#allocation3 + $0xa40] sm:$0xff]
    %v6689 = vld [vmem:[#allocation3 + $0xa48] sm:$0xff]
    %v6690 = vld [vmem:[#allocation3 + $0xa50] sm:$0xff]
    %v6691 = vld [vmem:[#allocation3 + $0xa58] sm:$0xff]
    %v6692 = vld [vmem:[#allocation3 + $0xa60] sm:$0xff]
    %v6693 = vld [vmem:[#allocation3 + $0xa68] sm:$0xff]
    %v6694 = vld [vmem:[#allocation3 + $0xa70] sm:$0xff]
    %v6695 = vld [vmem:[#allocation3 + $0xa78] sm:$0xff]
    %v6696 = vld [vmem:[#allocation3 + $0xa80] sm:$0xff]
    %v6697 = vld [vmem:[#allocation3 + $0xa88] sm:$0xff]
    %v6698 = vld [vmem:[#allocation3 + $0xa90] sm:$0xff]
    %v6699 = vld [vmem:[#allocation3 + $0xa98] sm:$0xff]
    %v6700 = vld [vmem:[#allocation3 + $0xaa0] sm:$0xff]
    %v6701 = vld [vmem:[#allocation3 + $0xaa8] sm:$0xff]
    %v6702 = vld [vmem:[#allocation3 + $0xab0] sm:$0xff]
    %v6703 = vld [vmem:[#allocation3 + $0xab8] sm:$0xff]
    %v6704 = vld [vmem:[#allocation3 + $0xac0] sm:$0xff]
    %v6705 = vld [vmem:[#allocation3 + $0xac8] sm:$0xff]
    %v6706 = vld [vmem:[#allocation3 + $0xad0] sm:$0xff]
    %v6707 = vld [vmem:[#allocation3 + $0xad8] sm:$0xff]
    %v6708 = vld [vmem:[#allocation3 + $0xae0] sm:$0xff]
    %v6709 = vld [vmem:[#allocation3 + $0xae8] sm:$0xff]
    %v6710 = vld [vmem:[#allocation3 + $0xaf0] sm:$0xff]
    %v6711 = vld [vmem:[#allocation3 + $0xaf8] sm:$0xff]
    %v6712 = vld [vmem:[#allocation3 + $0xb00] sm:$0xff]
    %v6713 = vld [vmem:[#allocation3 + $0xb08] sm:$0xff]
    %v6714 = vld [vmem:[#allocation3 + $0xb10] sm:$0xff]
    %v6715 = vld [vmem:[#allocation3 + $0xb18] sm:$0xff]
    %v6716 = vld [vmem:[#allocation3 + $0xb20] sm:$0xff]
    %v6717 = vld [vmem:[#allocation3 + $0xb28] sm:$0xff]
    %v6718 = vld [vmem:[#allocation3 + $0xb30] sm:$0xff]
    %v6719 = vld [vmem:[#allocation3 + $0xb38] sm:$0xff]
    %v6720 = vld [vmem:[#allocation3 + $0xb40] sm:$0xff]
    %v6721 = vld [vmem:[#allocation3 + $0xb48] sm:$0xff]
    %v6722 = vld [vmem:[#allocation3 + $0xb50] sm:$0xff]
    %v6723 = vld [vmem:[#allocation3 + $0xb58] sm:$0xff]
    %v6724 = vld [vmem:[#allocation3 + $0xb60] sm:$0xff]
    %v6725 = vld [vmem:[#allocation3 + $0xb68] sm:$0xff]
    %v6726 = vld [vmem:[#allocation3 + $0xb70] sm:$0xff]
    %v6727 = vld [vmem:[#allocation3 + $0xb78] sm:$0xff]
    %v6728 = vld [vmem:[#allocation3 + $0xb80] sm:$0xff]
    %v6729 = vld [vmem:[#allocation3 + $0xb88] sm:$0xff]
    %v6730 = vld [vmem:[#allocation3 + $0xb90] sm:$0xff]
    %v6731 = vld [vmem:[#allocation3 + $0xb98] sm:$0xff]
    %v6732 = vld [vmem:[#allocation3 + $0xba0] sm:$0xff]
    %v6733 = vld [vmem:[#allocation3 + $0xba8] sm:$0xff]
    %v6734 = vld [vmem:[#allocation3 + $0xbb0] sm:$0xff]
    %v6735 = vld [vmem:[#allocation3 + $0xbb8] sm:$0xff]
    %v6736 = vld [vmem:[#allocation3 + $0xbc0] sm:$0xff]
    %v6737 = vld [vmem:[#allocation3 + $0xbc8] sm:$0xff]
    %v6738 = vld [vmem:[#allocation3 + $0xbd0] sm:$0xff]
    %v6739 = vld [vmem:[#allocation3 + $0xbd8] sm:$0xff]
    %v6740 = vld [vmem:[#allocation3 + $0xbe0] sm:$0xff]
    %v6741 = vld [vmem:[#allocation3 + $0xbe8] sm:$0xff]
    %v6742 = vld [vmem:[#allocation3 + $0xbf0] sm:$0xff]
    %v6743 = vld [vmem:[#allocation3 + $0xbf8] sm:$0xff]
    %v6744 = vld [vmem:[#allocation3 + $0xc00] sm:$0xff]
    %v6745 = vld [vmem:[#allocation3 + $0xc08] sm:$0xff]
    %v6746 = vld [vmem:[#allocation3 + $0xc10] sm:$0xff]
    %v6747 = vld [vmem:[#allocation3 + $0xc18] sm:$0xff]
    %v6748 = vld [vmem:[#allocation3 + $0xc20] sm:$0xff]
    %v6749 = vld [vmem:[#allocation3 + $0xc28] sm:$0xff]
    %v6750 = vld [vmem:[#allocation3 + $0xc30] sm:$0xff]
    %v6751 = vld [vmem:[#allocation3 + $0xc38] sm:$0xff]
    %v6752 = vld [vmem:[#allocation3 + $0xc40] sm:$0xff]
    %v6753 = vld [vmem:[#allocation3 + $0xc48] sm:$0xff]
    %v6754 = vld [vmem:[#allocation3 + $0xc50] sm:$0xff]
    %v6755 = vld [vmem:[#allocation3 + $0xc58] sm:$0xff]
    %v6756 = vld [vmem:[#allocation3 + $0xc60] sm:$0xff]
    %v6757 = vld [vmem:[#allocation3 + $0xc68] sm:$0xff]
    %v6758 = vld [vmem:[#allocation3 + $0xc70] sm:$0xff]
    %v6759 = vld [vmem:[#allocation3 + $0xc78] sm:$0xff]
    %v6760 = vld [vmem:[#allocation3 + $0xc80] sm:$0xff]
    %v6761 = vld [vmem:[#allocation3 + $0xc88] sm:$0xff]
    %v6762 = vld [vmem:[#allocation3 + $0xc90] sm:$0xff]
    %v6763 = vld [vmem:[#allocation3 + $0xc98] sm:$0xff]
    %v6764 = vld [vmem:[#allocation3 + $0xca0] sm:$0xff]
    %v6765 = vld [vmem:[#allocation3 + $0xca8] sm:$0xff]
    %v6766 = vld [vmem:[#allocation3 + $0xcb0] sm:$0xff]
    %v6767 = vld [vmem:[#allocation3 + $0xcb8] sm:$0xff]
    %v6768 = vld [vmem:[#allocation3 + $0xcc0] sm:$0xff]
    %v6769 = vld [vmem:[#allocation3 + $0xcc8] sm:$0xff]
    %v6770 = vld [vmem:[#allocation3 + $0xcd0] sm:$0xff]
    %v6771 = vld [vmem:[#allocation3 + $0xcd8] sm:$0xff]
    %v6772 = vld [vmem:[#allocation3 + $0xce0] sm:$0xff]
    %v6773 = vld [vmem:[#allocation3 + $0xce8] sm:$0xff]
    %v6774 = vld [vmem:[#allocation3 + $0xcf0] sm:$0xff]
    %v6775 = vld [vmem:[#allocation3 + $0xcf8] sm:$0xff]
    %v6776 = vld [vmem:[#allocation3 + $0xd00] sm:$0xff]
    %v6777 = vld [vmem:[#allocation3 + $0xd08] sm:$0xff]
    %v6778 = vld [vmem:[#allocation3 + $0xd10] sm:$0xff]
    %v6779 = vld [vmem:[#allocation3 + $0xd18] sm:$0xff]
    %v6780 = vld [vmem:[#allocation3 + $0xd20] sm:$0xff]
    %v6781 = vld [vmem:[#allocation3 + $0xd28] sm:$0xff]
    %v6782 = vld [vmem:[#allocation3 + $0xd30] sm:$0xff]
    %v6783 = vld [vmem:[#allocation3 + $0xd38] sm:$0xff]
    %v6784 = vld [vmem:[#allocation3 + $0xd40] sm:$0xff]
    %v6785 = vld [vmem:[#allocation3 + $0xd48] sm:$0xff]
    %v6786 = vld [vmem:[#allocation3 + $0xd50] sm:$0xff]
    %v6787 = vld [vmem:[#allocation3 + $0xd58] sm:$0xff]
    %v6788 = vld [vmem:[#allocation3 + $0xd60] sm:$0xff]
    %v6789 = vld [vmem:[#allocation3 + $0xd68] sm:$0xff]
    %v6790 = vld [vmem:[#allocation3 + $0xd70] sm:$0xff]
    %v6791 = vld [vmem:[#allocation3 + $0xd78] sm:$0xff]
    %v6792 = vld [vmem:[#allocation3 + $0xd80] sm:$0xff]
    %v6793 = vld [vmem:[#allocation3 + $0xd88] sm:$0xff]
    %v6794 = vld [vmem:[#allocation3 + $0xd90] sm:$0xff]
    %v6795 = vld [vmem:[#allocation3 + $0xd98] sm:$0xff]
    %v6796 = vld [vmem:[#allocation3 + $0xda0] sm:$0xff]
    %v6797 = vld [vmem:[#allocation3 + $0xda8] sm:$0xff]
    %v6798 = vld [vmem:[#allocation3 + $0xdb0] sm:$0xff]
    %v6799 = vld [vmem:[#allocation3 + $0xdb8] sm:$0xff]
    %v6800 = vld [vmem:[#allocation3 + $0xdc0] sm:$0xff]
    %v6801 = vld [vmem:[#allocation3 + $0xdc8] sm:$0xff]
    %v6802 = vld [vmem:[#allocation3 + $0xdd0] sm:$0xff]
    %v6803 = vld [vmem:[#allocation3 + $0xdd8] sm:$0xff]
    %v6804 = vld [vmem:[#allocation3 + $0xde0] sm:$0xff]
    %v6805 = vld [vmem:[#allocation3 + $0xde8] sm:$0xff]
    %v6806 = vld [vmem:[#allocation3 + $0xdf0] sm:$0xff]
    %v6807 = vld [vmem:[#allocation3 + $0xdf8] sm:$0xff]
    %v6808 = vld [vmem:[#allocation3 + $0xe00] sm:$0xff]
    %v6809 = vld [vmem:[#allocation3 + $0xe08] sm:$0xff]
    %v6810 = vld [vmem:[#allocation3 + $0xe10] sm:$0xff]
    %v6811 = vld [vmem:[#allocation3 + $0xe18] sm:$0xff]
    %v6812 = vld [vmem:[#allocation3 + $0xe20] sm:$0xff]
    %v6813 = vld [vmem:[#allocation3 + $0xe28] sm:$0xff]
    %v6814 = vld [vmem:[#allocation3 + $0xe30] sm:$0xff]
    %v6815 = vld [vmem:[#allocation3 + $0xe38] sm:$0xff]
    %v6816 = vld [vmem:[#allocation3 + $0xe40] sm:$0xff]
    %v6817 = vld [vmem:[#allocation3 + $0xe48] sm:$0xff]
    %v6818 = vld [vmem:[#allocation3 + $0xe50] sm:$0xff]
    %v6819 = vld [vmem:[#allocation3 + $0xe58] sm:$0xff]
    %v6820 = vld [vmem:[#allocation3 + $0xe60] sm:$0xff]
    %v6821 = vld [vmem:[#allocation3 + $0xe68] sm:$0xff]
    %v6822 = vld [vmem:[#allocation3 + $0xe70] sm:$0xff]
    %v6823 = vld [vmem:[#allocation3 + $0xe78] sm:$0xff]
    %v6824 = vld [vmem:[#allocation3 + $0xe80] sm:$0xff]
    %v6825 = vld [vmem:[#allocation3 + $0xe88] sm:$0xff]
    %v6826 = vld [vmem:[#allocation3 + $0xe90] sm:$0xff]
    %v6827 = vld [vmem:[#allocation3 + $0xe98] sm:$0xff]
    %v6828 = vld [vmem:[#allocation3 + $0xea0] sm:$0xff]
    %v6829 = vld [vmem:[#allocation3 + $0xea8] sm:$0xff]
    %v6830 = vld [vmem:[#allocation3 + $0xeb0] sm:$0xff]
    %v6831 = vld [vmem:[#allocation3 + $0xeb8] sm:$0xff]
    %v6832 = vld [vmem:[#allocation3 + $0xec0] sm:$0xff]
    %v6833 = vld [vmem:[#allocation3 + $0xec8] sm:$0xff]
    %v6834 = vld [vmem:[#allocation3 + $0xed0] sm:$0xff]
    %v6835 = vld [vmem:[#allocation3 + $0xed8] sm:$0xff]
    %v6836 = vld [vmem:[#allocation3 + $0xee0] sm:$0xff]
    %v6837 = vld [vmem:[#allocation3 + $0xee8] sm:$0xff]
    %v6838 = vld [vmem:[#allocation3 + $0xef0] sm:$0xff]
    %v6839 = vld [vmem:[#allocation3 + $0xef8] sm:$0xff]
    %v6840 = vld [vmem:[#allocation3 + $0xf00] sm:$0xff]
    %v6841 = vld [vmem:[#allocation3 + $0xf08] sm:$0xff]
    %v6842 = vld [vmem:[#allocation3 + $0xf10] sm:$0xff]
    %v6843 = vld [vmem:[#allocation3 + $0xf18] sm:$0xff]
    %v6844 = vld [vmem:[#allocation3 + $0xf20] sm:$0xff]
    %v6845 = vld [vmem:[#allocation3 + $0xf28] sm:$0xff]
    %v6846 = vld [vmem:[#allocation3 + $0xf30] sm:$0xff]
    %v6847 = vld [vmem:[#allocation3 + $0xf38] sm:$0xff]
    %v6848 = vld [vmem:[#allocation3 + $0xf40] sm:$0xff]
    %v6849 = vld [vmem:[#allocation3 + $0xf48] sm:$0xff]
    %v6850 = vld [vmem:[#allocation3 + $0xf50] sm:$0xff]
    %v6851 = vld [vmem:[#allocation3 + $0xf58] sm:$0xff]
    %v6852 = vld [vmem:[#allocation3 + $0xf60] sm:$0xff]
    %v6853 = vld [vmem:[#allocation3 + $0xf68] sm:$0xff]
    %v6854 = vld [vmem:[#allocation3 + $0xf70] sm:$0xff]
    %v6855 = vld [vmem:[#allocation3 + $0xf78] sm:$0xff]
    %v6856 = vld [vmem:[#allocation3 + $0xf80] sm:$0xff]
    %v6857 = vld [vmem:[#allocation3 + $0xf88] sm:$0xff]
    %v6858 = vld [vmem:[#allocation3 + $0xf90] sm:$0xff]
    %v6859 = vld [vmem:[#allocation3 + $0xf98] sm:$0xff]
    %v6860 = vld [vmem:[#allocation3 + $0xfa0] sm:$0xff]
    %v6861 = vld [vmem:[#allocation3 + $0xfa8] sm:$0xff]
    %v6862 = vld [vmem:[#allocation3 + $0xfb0] sm:$0xff]
    %v6863 = vld [vmem:[#allocation3 + $0xfb8] sm:$0xff]
    %v6864 = vld [vmem:[#allocation3 + $0xfc0] sm:$0xff]
    %v6865 = vld [vmem:[#allocation3 + $0xfc8] sm:$0xff]
    %v6866 = vld [vmem:[#allocation3 + $0xfd0] sm:$0xff]
    %v6867 = vld [vmem:[#allocation3 + $0xfd8] sm:$0xff]
    %v6868 = vld [vmem:[#allocation3 + $0xfe0] sm:$0xff]
    %v6869 = vld [vmem:[#allocation3 + $0xfe8] sm:$0xff]
    %v6870 = vld [vmem:[#allocation3 + $0xff0] sm:$0xff]
    %v6871 = vld [vmem:[#allocation3 + $0xff8] sm:$0xff]
    %s6872 = scalar_lea.vmem [#allocation14], 3
    %v6873 = vld [vmem:[%s6872] ss:$8 sm:$0xf]
    %v6874 = vld [vmem:[%s6872] ss:$8 sm:$0xf0]
    %v6875 = vor.u32 %v6873, %v6874
    %v6877 = vlaneseq
    %v6878 = vshrl.u32 %v6877, 7
    %v6879 = vsub.s32 0, %v6878
    %v6880 = vrot.slane %v6875, %v6879
    %v6881 = vlaneseq
    %v6882 = vshrl.u32 %v6881, 7
    %v6883 = vsub.s32 1, %v6882
    %v6884 = vrot.slane %v6875, %v6883
    %v6885 = vlaneseq
    %v6886 = vshrl.u32 %v6885, 7
    %v6887 = vsub.s32 2, %v6886
    %v6888 = vrot.slane %v6875, %v6887
    %v6889 = vlaneseq
    %v6890 = vshrl.u32 %v6889, 7
    %v6891 = vsub.s32 3, %v6890
    %v6892 = vrot.slane %v6875, %v6891
    %v6893 = vlaneseq
    %v6894 = vshrl.u32 %v6893, 7
    %v6895 = vsub.s32 4, %v6894
    %v6896 = vrot.slane %v6875, %v6895
    %v6897 = vlaneseq
    %v6898 = vshrl.u32 %v6897, 7
    %v6899 = vsub.s32 5, %v6898
    %v6900 = vrot.slane %v6875, %v6899
    %v6901 = vlaneseq
    %v6902 = vshrl.u32 %v6901, 7
    %v6903 = vsub.s32 6, %v6902
    %v6904 = vrot.slane %v6875, %v6903
    %v6905 = vlaneseq
    %v6906 = vshrl.u32 %v6905, 7
    %v6907 = vsub.s32 7, %v6906
    %v6908 = vrot.slane %v6875, %v6907
    %v7429 = vunpack.c.l.b16 %v6360
    %v7430 = vunpack.c.h.b16 %v6360
    %v7431 = vunpack.c.l.b16 %v6361
    %v7432 = vunpack.c.h.b16 %v6361
    %v7433 = vunpack.c.l.b16 %v6362
    %v7434 = vunpack.c.h.b16 %v6362
    %v7435 = vunpack.c.l.b16 %v6363
    %v7436 = vunpack.c.h.b16 %v6363
    %v7437 = vunpack.c.l.b16 %v6364
    %v7438 = vunpack.c.h.b16 %v6364
    %v7439 = vunpack.c.l.b16 %v6365
    %v7440 = vunpack.c.h.b16 %v6365
    %v7441 = vunpack.c.l.b16 %v6366
    %v7442 = vunpack.c.h.b16 %v6366
    %v7443 = vunpack.c.l.b16 %v6367
    %v7444 = vunpack.c.h.b16 %v6367
    %v7445 = vunpack.c.l.b16 %v6368
    %v7446 = vunpack.c.h.b16 %v6368
    %v7447 = vunpack.c.l.b16 %v6369
    %v7448 = vunpack.c.h.b16 %v6369
    %v7449 = vunpack.c.l.b16 %v6370
    %v7450 = vunpack.c.h.b16 %v6370
    %v7451 = vunpack.c.l.b16 %v6371
    %v7452 = vunpack.c.h.b16 %v6371
    %v7453 = vunpack.c.l.b16 %v6372
    %v7454 = vunpack.c.h.b16 %v6372
    %v7455 = vunpack.c.l.b16 %v6373
    %v7456 = vunpack.c.h.b16 %v6373
    %v7457 = vunpack.c.l.b16 %v6374
    %v7458 = vunpack.c.h.b16 %v6374
    %v7459 = vunpack.c.l.b16 %v6375
    %v7460 = vunpack.c.h.b16 %v6375
    %v7461 = vunpack.c.l.b16 %v6376
    %v7462 = vunpack.c.h.b16 %v6376
    %v7463 = vunpack.c.l.b16 %v6377
    %v7464 = vunpack.c.h.b16 %v6377
    %v7465 = vunpack.c.l.b16 %v6378
    %v7466 = vunpack.c.h.b16 %v6378
    %v7467 = vunpack.c.l.b16 %v6379
    %v7468 = vunpack.c.h.b16 %v6379
    %v7469 = vunpack.c.l.b16 %v6380
    %v7470 = vunpack.c.h.b16 %v6380
    %v7471 = vunpack.c.l.b16 %v6381
    %v7472 = vunpack.c.h.b16 %v6381
    %v7473 = vunpack.c.l.b16 %v6382
    %v7474 = vunpack.c.h.b16 %v6382
    %v7475 = vunpack.c.l.b16 %v6383
    %v7476 = vunpack.c.h.b16 %v6383
    %v7477 = vunpack.c.l.b16 %v6384
    %v7478 = vunpack.c.h.b16 %v6384
    %v7479 = vunpack.c.l.b16 %v6385
    %v7480 = vunpack.c.h.b16 %v6385
    %v7481 = vunpack.c.l.b16 %v6386
    %v7482 = vunpack.c.h.b16 %v6386
    %v7483 = vunpack.c.l.b16 %v6387
    %v7484 = vunpack.c.h.b16 %v6387
    %v7485 = vunpack.c.l.b16 %v6388
    %v7486 = vunpack.c.h.b16 %v6388
    %v7487 = vunpack.c.l.b16 %v6389
    %v7488 = vunpack.c.h.b16 %v6389
    %v7489 = vunpack.c.l.b16 %v6390
    %v7490 = vunpack.c.h.b16 %v6390
    %v7491 = vunpack.c.l.b16 %v6391
    %v7492 = vunpack.c.h.b16 %v6391
    %v7493 = vunpack.c.l.b16 %v6392
    %v7494 = vunpack.c.h.b16 %v6392
    %v7495 = vunpack.c.l.b16 %v6393
    %v7496 = vunpack.c.h.b16 %v6393
    %v7497 = vunpack.c.l.b16 %v6394
    %v7498 = vunpack.c.h.b16 %v6394
    %v7499 = vunpack.c.l.b16 %v6395
    %v7500 = vunpack.c.h.b16 %v6395
    %v7501 = vunpack.c.l.b16 %v6396
    %v7502 = vunpack.c.h.b16 %v6396
    %v7503 = vunpack.c.l.b16 %v6397
    %v7504 = vunpack.c.h.b16 %v6397
    %v7505 = vunpack.c.l.b16 %v6398
    %v7506 = vunpack.c.h.b16 %v6398
    %v7507 = vunpack.c.l.b16 %v6399
    %v7508 = vunpack.c.h.b16 %v6399
    %v7509 = vunpack.c.l.b16 %v6400
    %v7510 = vunpack.c.h.b16 %v6400
    %v7511 = vunpack.c.l.b16 %v6401
    %v7512 = vunpack.c.h.b16 %v6401
    %v7513 = vunpack.c.l.b16 %v6402
    %v7514 = vunpack.c.h.b16 %v6402
    %v7515 = vunpack.c.l.b16 %v6403
    %v7516 = vunpack.c.h.b16 %v6403
    %v7517 = vunpack.c.l.b16 %v6404
    %v7518 = vunpack.c.h.b16 %v6404
    %v7519 = vunpack.c.l.b16 %v6405
    %v7520 = vunpack.c.h.b16 %v6405
    %v7521 = vunpack.c.l.b16 %v6406
    %v7522 = vunpack.c.h.b16 %v6406
    %v7523 = vunpack.c.l.b16 %v6407
    %v7524 = vunpack.c.h.b16 %v6407
    %v7525 = vunpack.c.l.b16 %v6408
    %v7526 = vunpack.c.h.b16 %v6408
    %v7527 = vunpack.c.l.b16 %v6409
    %v7528 = vunpack.c.h.b16 %v6409
    %v7529 = vunpack.c.l.b16 %v6410
    %v7530 = vunpack.c.h.b16 %v6410
    %v7531 = vunpack.c.l.b16 %v6411
    %v7532 = vunpack.c.h.b16 %v6411
    %v7533 = vunpack.c.l.b16 %v6412
    %v7534 = vunpack.c.h.b16 %v6412
    %v7535 = vunpack.c.l.b16 %v6413
    %v7536 = vunpack.c.h.b16 %v6413
    %v7537 = vunpack.c.l.b16 %v6414
    %v7538 = vunpack.c.h.b16 %v6414
    %v7539 = vunpack.c.l.b16 %v6415
    %v7540 = vunpack.c.h.b16 %v6415
    %v7541 = vunpack.c.l.b16 %v6416
    %v7542 = vunpack.c.h.b16 %v6416
    %v7543 = vunpack.c.l.b16 %v6417
    %v7544 = vunpack.c.h.b16 %v6417
    %v7545 = vunpack.c.l.b16 %v6418
    %v7546 = vunpack.c.h.b16 %v6418
    %v7547 = vunpack.c.l.b16 %v6419
    %v7548 = vunpack.c.h.b16 %v6419
    %v7549 = vunpack.c.l.b16 %v6420
    %v7550 = vunpack.c.h.b16 %v6420
    %v7551 = vunpack.c.l.b16 %v6421
    %v7552 = vunpack.c.h.b16 %v6421
    %v7553 = vunpack.c.l.b16 %v6422
    %v7554 = vunpack.c.h.b16 %v6422
    %v7555 = vunpack.c.l.b16 %v6423
    %v7556 = vunpack.c.h.b16 %v6423
    %v7557 = vunpack.c.l.b16 %v6424
    %v7558 = vunpack.c.h.b16 %v6424
    %v7559 = vunpack.c.l.b16 %v6425
    %v7560 = vunpack.c.h.b16 %v6425
    %v7561 = vunpack.c.l.b16 %v6426
    %v7562 = vunpack.c.h.b16 %v6426
    %v7563 = vunpack.c.l.b16 %v6427
    %v7564 = vunpack.c.h.b16 %v6427
    %v7565 = vunpack.c.l.b16 %v6428
    %v7566 = vunpack.c.h.b16 %v6428
    %v7567 = vunpack.c.l.b16 %v6429
    %v7568 = vunpack.c.h.b16 %v6429
    %v7569 = vunpack.c.l.b16 %v6430
    %v7570 = vunpack.c.h.b16 %v6430
    %v7571 = vunpack.c.l.b16 %v6431
    %v7572 = vunpack.c.h.b16 %v6431
    %v7573 = vunpack.c.l.b16 %v6432
    %v7574 = vunpack.c.h.b16 %v6432
    %v7575 = vunpack.c.l.b16 %v6433
    %v7576 = vunpack.c.h.b16 %v6433
    %v7577 = vunpack.c.l.b16 %v6434
    %v7578 = vunpack.c.h.b16 %v6434
    %v7579 = vunpack.c.l.b16 %v6435
    %v7580 = vunpack.c.h.b16 %v6435
    %v7581 = vunpack.c.l.b16 %v6436
    %v7582 = vunpack.c.h.b16 %v6436
    %v7583 = vunpack.c.l.b16 %v6437
    %v7584 = vunpack.c.h.b16 %v6437
    %v7585 = vunpack.c.l.b16 %v6438
    %v7586 = vunpack.c.h.b16 %v6438
    %v7587 = vunpack.c.l.b16 %v6439
    %v7588 = vunpack.c.h.b16 %v6439
    %v7589 = vunpack.c.l.b16 %v6440
    %v7590 = vunpack.c.h.b16 %v6440
    %v7591 = vunpack.c.l.b16 %v6441
    %v7592 = vunpack.c.h.b16 %v6441
    %v7593 = vunpack.c.l.b16 %v6442
    %v7594 = vunpack.c.h.b16 %v6442
    %v7595 = vunpack.c.l.b16 %v6443
    %v7596 = vunpack.c.h.b16 %v6443
    %v7597 = vunpack.c.l.b16 %v6444
    %v7598 = vunpack.c.h.b16 %v6444
    %v7599 = vunpack.c.l.b16 %v6445
    %v7600 = vunpack.c.h.b16 %v6445
    %v7601 = vunpack.c.l.b16 %v6446
    %v7602 = vunpack.c.h.b16 %v6446
    %v7603 = vunpack.c.l.b16 %v6447
    %v7604 = vunpack.c.h.b16 %v6447
    %v7605 = vunpack.c.l.b16 %v6448
    %v7606 = vunpack.c.h.b16 %v6448
    %v7607 = vunpack.c.l.b16 %v6449
    %v7608 = vunpack.c.h.b16 %v6449
    %v7609 = vunpack.c.l.b16 %v6450
    %v7610 = vunpack.c.h.b16 %v6450
    %v7611 = vunpack.c.l.b16 %v6451
    %v7612 = vunpack.c.h.b16 %v6451
    %v7613 = vunpack.c.l.b16 %v6452
    %v7614 = vunpack.c.h.b16 %v6452
    %v7615 = vunpack.c.l.b16 %v6453
    %v7616 = vunpack.c.h.b16 %v6453
    %v7617 = vunpack.c.l.b16 %v6454
    %v7618 = vunpack.c.h.b16 %v6454
    %v7619 = vunpack.c.l.b16 %v6455
    %v7620 = vunpack.c.h.b16 %v6455
    %v7621 = vunpack.c.l.b16 %v6456
    %v7622 = vunpack.c.h.b16 %v6456
    %v7623 = vunpack.c.l.b16 %v6457
    %v7624 = vunpack.c.h.b16 %v6457
    %v7625 = vunpack.c.l.b16 %v6458
    %v7626 = vunpack.c.h.b16 %v6458
    %v7627 = vunpack.c.l.b16 %v6459
    %v7628 = vunpack.c.h.b16 %v6459
    %v7629 = vunpack.c.l.b16 %v6460
    %v7630 = vunpack.c.h.b16 %v6460
    %v7631 = vunpack.c.l.b16 %v6461
    %v7632 = vunpack.c.h.b16 %v6461
    %v7633 = vunpack.c.l.b16 %v6462
    %v7634 = vunpack.c.h.b16 %v6462
    %v7635 = vunpack.c.l.b16 %v6463
    %v7636 = vunpack.c.h.b16 %v6463
    %v7637 = vunpack.c.l.b16 %v6464
    %v7638 = vunpack.c.h.b16 %v6464
    %v7639 = vunpack.c.l.b16 %v6465
    %v7640 = vunpack.c.h.b16 %v6465
    %v7641 = vunpack.c.l.b16 %v6466
    %v7642 = vunpack.c.h.b16 %v6466
    %v7643 = vunpack.c.l.b16 %v6467
    %v7644 = vunpack.c.h.b16 %v6467
    %v7645 = vunpack.c.l.b16 %v6468
    %v7646 = vunpack.c.h.b16 %v6468
    %v7647 = vunpack.c.l.b16 %v6469
    %v7648 = vunpack.c.h.b16 %v6469
    %v7649 = vunpack.c.l.b16 %v6470
    %v7650 = vunpack.c.h.b16 %v6470
    %v7651 = vunpack.c.l.b16 %v6471
    %v7652 = vunpack.c.h.b16 %v6471
    %v7653 = vunpack.c.l.b16 %v6472
    %v7654 = vunpack.c.h.b16 %v6472
    %v7655 = vunpack.c.l.b16 %v6473
    %v7656 = vunpack.c.h.b16 %v6473
    %v7657 = vunpack.c.l.b16 %v6474
    %v7658 = vunpack.c.h.b16 %v6474
    %v7659 = vunpack.c.l.b16 %v6475
    %v7660 = vunpack.c.h.b16 %v6475
    %v7661 = vunpack.c.l.b16 %v6476
    %v7662 = vunpack.c.h.b16 %v6476
    %v7663 = vunpack.c.l.b16 %v6477
    %v7664 = vunpack.c.h.b16 %v6477
    %v7665 = vunpack.c.l.b16 %v6478
    %v7666 = vunpack.c.h.b16 %v6478
    %v7667 = vunpack.c.l.b16 %v6479
    %v7668 = vunpack.c.h.b16 %v6479
    %v7669 = vunpack.c.l.b16 %v6480
    %v7670 = vunpack.c.h.b16 %v6480
    %v7671 = vunpack.c.l.b16 %v6481
    %v7672 = vunpack.c.h.b16 %v6481
    %v7673 = vunpack.c.l.b16 %v6482
    %v7674 = vunpack.c.h.b16 %v6482
    %v7675 = vunpack.c.l.b16 %v6483
    %v7676 = vunpack.c.h.b16 %v6483
    %v7677 = vunpack.c.l.b16 %v6484
    %v7678 = vunpack.c.h.b16 %v6484
    %v7679 = vunpack.c.l.b16 %v6485
    %v7680 = vunpack.c.h.b16 %v6485
    %v7681 = vunpack.c.l.b16 %v6486
    %v7682 = vunpack.c.h.b16 %v6486
    %v7683 = vunpack.c.l.b16 %v6487
    %v7684 = vunpack.c.h.b16 %v6487
    %v7685 = vunpack.c.l.b16 %v6488
    %v7686 = vunpack.c.h.b16 %v6488
    %v7687 = vunpack.c.l.b16 %v6489
    %v7688 = vunpack.c.h.b16 %v6489
    %v7689 = vunpack.c.l.b16 %v6490
    %v7690 = vunpack.c.h.b16 %v6490
    %v7691 = vunpack.c.l.b16 %v6491
    %v7692 = vunpack.c.h.b16 %v6491
    %v7693 = vunpack.c.l.b16 %v6492
    %v7694 = vunpack.c.h.b16 %v6492
    %v7695 = vunpack.c.l.b16 %v6493
    %v7696 = vunpack.c.h.b16 %v6493
    %v7697 = vunpack.c.l.b16 %v6494
    %v7698 = vunpack.c.h.b16 %v6494
    %v7699 = vunpack.c.l.b16 %v6495
    %v7700 = vunpack.c.h.b16 %v6495
    %v7701 = vunpack.c.l.b16 %v6496
    %v7702 = vunpack.c.h.b16 %v6496
    %v7703 = vunpack.c.l.b16 %v6497
    %v7704 = vunpack.c.h.b16 %v6497
    %v7705 = vunpack.c.l.b16 %v6498
    %v7706 = vunpack.c.h.b16 %v6498
    %v7707 = vunpack.c.l.b16 %v6499
    %v7708 = vunpack.c.h.b16 %v6499
    %v7709 = vunpack.c.l.b16 %v6500
    %v7710 = vunpack.c.h.b16 %v6500
    %v7711 = vunpack.c.l.b16 %v6501
    %v7712 = vunpack.c.h.b16 %v6501
    %v7713 = vunpack.c.l.b16 %v6502
    %v7714 = vunpack.c.h.b16 %v6502
    %v7715 = vunpack.c.l.b16 %v6503
    %v7716 = vunpack.c.h.b16 %v6503
    %v7717 = vunpack.c.l.b16 %v6504
    %v7718 = vunpack.c.h.b16 %v6504
    %v7719 = vunpack.c.l.b16 %v6505
    %v7720 = vunpack.c.h.b16 %v6505
    %v7721 = vunpack.c.l.b16 %v6506
    %v7722 = vunpack.c.h.b16 %v6506
    %v7723 = vunpack.c.l.b16 %v6507
    %v7724 = vunpack.c.h.b16 %v6507
    %v7725 = vunpack.c.l.b16 %v6508
    %v7726 = vunpack.c.h.b16 %v6508
    %v7727 = vunpack.c.l.b16 %v6509
    %v7728 = vunpack.c.h.b16 %v6509
    %v7729 = vunpack.c.l.b16 %v6510
    %v7730 = vunpack.c.h.b16 %v6510
    %v7731 = vunpack.c.l.b16 %v6511
    %v7732 = vunpack.c.h.b16 %v6511
    %v7733 = vunpack.c.l.b16 %v6512
    %v7734 = vunpack.c.h.b16 %v6512
    %v7735 = vunpack.c.l.b16 %v6513
    %v7736 = vunpack.c.h.b16 %v6513
    %v7737 = vunpack.c.l.b16 %v6514
    %v7738 = vunpack.c.h.b16 %v6514
    %v7739 = vunpack.c.l.b16 %v6515
    %v7740 = vunpack.c.h.b16 %v6515
    %v7741 = vunpack.c.l.b16 %v6516
    %v7742 = vunpack.c.h.b16 %v6516
    %v7743 = vunpack.c.l.b16 %v6517
    %v7744 = vunpack.c.h.b16 %v6517
    %v7745 = vunpack.c.l.b16 %v6518
    %v7746 = vunpack.c.h.b16 %v6518
    %v7747 = vunpack.c.l.b16 %v6519
    %v7748 = vunpack.c.h.b16 %v6519
    %v7749 = vunpack.c.l.b16 %v6520
    %v7750 = vunpack.c.h.b16 %v6520
    %v7751 = vunpack.c.l.b16 %v6521
    %v7752 = vunpack.c.h.b16 %v6521
    %v7753 = vunpack.c.l.b16 %v6522
    %v7754 = vunpack.c.h.b16 %v6522
    %v7755 = vunpack.c.l.b16 %v6523
    %v7756 = vunpack.c.h.b16 %v6523
    %v7757 = vunpack.c.l.b16 %v6524
    %v7758 = vunpack.c.h.b16 %v6524
    %v7759 = vunpack.c.l.b16 %v6525
    %v7760 = vunpack.c.h.b16 %v6525
    %v7761 = vunpack.c.l.b16 %v6526
    %v7762 = vunpack.c.h.b16 %v6526
    %v7763 = vunpack.c.l.b16 %v6527
    %v7764 = vunpack.c.h.b16 %v6527
    %v7765 = vunpack.c.l.b16 %v6528
    %v7766 = vunpack.c.h.b16 %v6528
    %v7767 = vunpack.c.l.b16 %v6529
    %v7768 = vunpack.c.h.b16 %v6529
    %v7769 = vunpack.c.l.b16 %v6530
    %v7770 = vunpack.c.h.b16 %v6530
    %v7771 = vunpack.c.l.b16 %v6531
    %v7772 = vunpack.c.h.b16 %v6531
    %v7773 = vunpack.c.l.b16 %v6532
    %v7774 = vunpack.c.h.b16 %v6532
    %v7775 = vunpack.c.l.b16 %v6533
    %v7776 = vunpack.c.h.b16 %v6533
    %v7777 = vunpack.c.l.b16 %v6534
    %v7778 = vunpack.c.h.b16 %v6534
    %v7779 = vunpack.c.l.b16 %v6535
    %v7780 = vunpack.c.h.b16 %v6535
    %v7781 = vunpack.c.l.b16 %v6536
    %v7782 = vunpack.c.h.b16 %v6536
    %v7783 = vunpack.c.l.b16 %v6537
    %v7784 = vunpack.c.h.b16 %v6537
    %v7785 = vunpack.c.l.b16 %v6538
    %v7786 = vunpack.c.h.b16 %v6538
    %v7787 = vunpack.c.l.b16 %v6539
    %v7788 = vunpack.c.h.b16 %v6539
    %v7789 = vunpack.c.l.b16 %v6540
    %v7790 = vunpack.c.h.b16 %v6540
    %v7791 = vunpack.c.l.b16 %v6541
    %v7792 = vunpack.c.h.b16 %v6541
    %v7793 = vunpack.c.l.b16 %v6542
    %v7794 = vunpack.c.h.b16 %v6542
    %v7795 = vunpack.c.l.b16 %v6543
    %v7796 = vunpack.c.h.b16 %v6543
    %v7797 = vunpack.c.l.b16 %v6544
    %v7798 = vunpack.c.h.b16 %v6544
    %v7799 = vunpack.c.l.b16 %v6545
    %v7800 = vunpack.c.h.b16 %v6545
    %v7801 = vunpack.c.l.b16 %v6546
    %v7802 = vunpack.c.h.b16 %v6546
    %v7803 = vunpack.c.l.b16 %v6547
    %v7804 = vunpack.c.h.b16 %v6547
    %v7805 = vunpack.c.l.b16 %v6548
    %v7806 = vunpack.c.h.b16 %v6548
    %v7807 = vunpack.c.l.b16 %v6549
    %v7808 = vunpack.c.h.b16 %v6549
    %v7809 = vunpack.c.l.b16 %v6550
    %v7810 = vunpack.c.h.b16 %v6550
    %v7811 = vunpack.c.l.b16 %v6551
    %v7812 = vunpack.c.h.b16 %v6551
    %v7813 = vunpack.c.l.b16 %v6552
    %v7814 = vunpack.c.h.b16 %v6552
    %v7815 = vunpack.c.l.b16 %v6553
    %v7816 = vunpack.c.h.b16 %v6553
    %v7817 = vunpack.c.l.b16 %v6554
    %v7818 = vunpack.c.h.b16 %v6554
    %v7819 = vunpack.c.l.b16 %v6555
    %v7820 = vunpack.c.h.b16 %v6555
    %v7821 = vunpack.c.l.b16 %v6556
    %v7822 = vunpack.c.h.b16 %v6556
    %v7823 = vunpack.c.l.b16 %v6557
    %v7824 = vunpack.c.h.b16 %v6557
    %v7825 = vunpack.c.l.b16 %v6558
    %v7826 = vunpack.c.h.b16 %v6558
    %v7827 = vunpack.c.l.b16 %v6559
    %v7828 = vunpack.c.h.b16 %v6559
    %v7829 = vunpack.c.l.b16 %v6560
    %v7830 = vunpack.c.h.b16 %v6560
    %v7831 = vunpack.c.l.b16 %v6561
    %v7832 = vunpack.c.h.b16 %v6561
    %v7833 = vunpack.c.l.b16 %v6562
    %v7834 = vunpack.c.h.b16 %v6562
    %v7835 = vunpack.c.l.b16 %v6563
    %v7836 = vunpack.c.h.b16 %v6563
    %v7837 = vunpack.c.l.b16 %v6564
    %v7838 = vunpack.c.h.b16 %v6564
    %v7839 = vunpack.c.l.b16 %v6565
    %v7840 = vunpack.c.h.b16 %v6565
    %v7841 = vunpack.c.l.b16 %v6566
    %v7842 = vunpack.c.h.b16 %v6566
    %v7843 = vunpack.c.l.b16 %v6567
    %v7844 = vunpack.c.h.b16 %v6567
    %v7845 = vunpack.c.l.b16 %v6568
    %v7846 = vunpack.c.h.b16 %v6568
    %v7847 = vunpack.c.l.b16 %v6569
    %v7848 = vunpack.c.h.b16 %v6569
    %v7849 = vunpack.c.l.b16 %v6570
    %v7850 = vunpack.c.h.b16 %v6570
    %v7851 = vunpack.c.l.b16 %v6571
    %v7852 = vunpack.c.h.b16 %v6571
    %v7853 = vunpack.c.l.b16 %v6572
    %v7854 = vunpack.c.h.b16 %v6572
    %v7855 = vunpack.c.l.b16 %v6573
    %v7856 = vunpack.c.h.b16 %v6573
    %v7857 = vunpack.c.l.b16 %v6574
    %v7858 = vunpack.c.h.b16 %v6574
    %v7859 = vunpack.c.l.b16 %v6575
    %v7860 = vunpack.c.h.b16 %v6575
    %v7861 = vunpack.c.l.b16 %v6576
    %v7862 = vunpack.c.h.b16 %v6576
    %v7863 = vunpack.c.l.b16 %v6577
    %v7864 = vunpack.c.h.b16 %v6577
    %v7865 = vunpack.c.l.b16 %v6578
    %v7866 = vunpack.c.h.b16 %v6578
    %v7867 = vunpack.c.l.b16 %v6579
    %v7868 = vunpack.c.h.b16 %v6579
    %v7869 = vunpack.c.l.b16 %v6580
    %v7870 = vunpack.c.h.b16 %v6580
    %v7871 = vunpack.c.l.b16 %v6581
    %v7872 = vunpack.c.h.b16 %v6581
    %v7873 = vunpack.c.l.b16 %v6582
    %v7874 = vunpack.c.h.b16 %v6582
    %v7875 = vunpack.c.l.b16 %v6583
    %v7876 = vunpack.c.h.b16 %v6583
    %v7877 = vunpack.c.l.b16 %v6584
    %v7878 = vunpack.c.h.b16 %v6584
    %v7879 = vunpack.c.l.b16 %v6585
    %v7880 = vunpack.c.h.b16 %v6585
    %v7881 = vunpack.c.l.b16 %v6586
    %v7882 = vunpack.c.h.b16 %v6586
    %v7883 = vunpack.c.l.b16 %v6587
    %v7884 = vunpack.c.h.b16 %v6587
    %v7885 = vunpack.c.l.b16 %v6588
    %v7886 = vunpack.c.h.b16 %v6588
    %v7887 = vunpack.c.l.b16 %v6589
    %v7888 = vunpack.c.h.b16 %v6589
    %v7889 = vunpack.c.l.b16 %v6590
    %v7890 = vunpack.c.h.b16 %v6590
    %v7891 = vunpack.c.l.b16 %v6591
    %v7892 = vunpack.c.h.b16 %v6591
    %v7893 = vunpack.c.l.b16 %v6592
    %v7894 = vunpack.c.h.b16 %v6592
    %v7895 = vunpack.c.l.b16 %v6593
    %v7896 = vunpack.c.h.b16 %v6593
    %v7897 = vunpack.c.l.b16 %v6594
    %v7898 = vunpack.c.h.b16 %v6594
    %v7899 = vunpack.c.l.b16 %v6595
    %v7900 = vunpack.c.h.b16 %v6595
    %v7901 = vunpack.c.l.b16 %v6596
    %v7902 = vunpack.c.h.b16 %v6596
    %v7903 = vunpack.c.l.b16 %v6597
    %v7904 = vunpack.c.h.b16 %v6597
    %v7905 = vunpack.c.l.b16 %v6598
    %v7906 = vunpack.c.h.b16 %v6598
    %v7907 = vunpack.c.l.b16 %v6599
    %v7908 = vunpack.c.h.b16 %v6599
    %v7909 = vunpack.c.l.b16 %v6600
    %v7910 = vunpack.c.h.b16 %v6600
    %v7911 = vunpack.c.l.b16 %v6601
    %v7912 = vunpack.c.h.b16 %v6601
    %v7913 = vunpack.c.l.b16 %v6602
    %v7914 = vunpack.c.h.b16 %v6602
    %v7915 = vunpack.c.l.b16 %v6603
    %v7916 = vunpack.c.h.b16 %v6603
    %v7917 = vunpack.c.l.b16 %v6604
    %v7918 = vunpack.c.h.b16 %v6604
    %v7919 = vunpack.c.l.b16 %v6605
    %v7920 = vunpack.c.h.b16 %v6605
    %v7921 = vunpack.c.l.b16 %v6606
    %v7922 = vunpack.c.h.b16 %v6606
    %v7923 = vunpack.c.l.b16 %v6607
    %v7924 = vunpack.c.h.b16 %v6607
    %v7925 = vunpack.c.l.b16 %v6608
    %v7926 = vunpack.c.h.b16 %v6608
    %v7927 = vunpack.c.l.b16 %v6609
    %v7928 = vunpack.c.h.b16 %v6609
    %v7929 = vunpack.c.l.b16 %v6610
    %v7930 = vunpack.c.h.b16 %v6610
    %v7931 = vunpack.c.l.b16 %v6611
    %v7932 = vunpack.c.h.b16 %v6611
    %v7933 = vunpack.c.l.b16 %v6612
    %v7934 = vunpack.c.h.b16 %v6612
    %v7935 = vunpack.c.l.b16 %v6613
    %v7936 = vunpack.c.h.b16 %v6613
    %v7937 = vunpack.c.l.b16 %v6614
    %v7938 = vunpack.c.h.b16 %v6614
    %v7939 = vunpack.c.l.b16 %v6615
    %v7940 = vunpack.c.h.b16 %v6615
    %v7941 = vunpack.c.l.b16 %v6616
    %v7942 = vunpack.c.h.b16 %v6616
    %v7943 = vunpack.c.l.b16 %v6617
    %v7944 = vunpack.c.h.b16 %v6617
    %v7945 = vunpack.c.l.b16 %v6618
    %v7946 = vunpack.c.h.b16 %v6618
    %v7947 = vunpack.c.l.b16 %v6619
    %v7948 = vunpack.c.h.b16 %v6619
    %v7949 = vunpack.c.l.b16 %v6620
    %v7950 = vunpack.c.h.b16 %v6620
    %v7951 = vunpack.c.l.b16 %v6621
    %v7952 = vunpack.c.h.b16 %v6621
    %v7953 = vunpack.c.l.b16 %v6622
    %v7954 = vunpack.c.h.b16 %v6622
    %v7955 = vunpack.c.l.b16 %v6623
    %v7956 = vunpack.c.h.b16 %v6623
    %v7957 = vunpack.c.l.b16 %v6624
    %v7958 = vunpack.c.h.b16 %v6624
    %v7959 = vunpack.c.l.b16 %v6625
    %v7960 = vunpack.c.h.b16 %v6625
    %v7961 = vunpack.c.l.b16 %v6626
    %v7962 = vunpack.c.h.b16 %v6626
    %v7963 = vunpack.c.l.b16 %v6627
    %v7964 = vunpack.c.h.b16 %v6627
    %v7965 = vunpack.c.l.b16 %v6628
    %v7966 = vunpack.c.h.b16 %v6628
    %v7967 = vunpack.c.l.b16 %v6629
    %v7968 = vunpack.c.h.b16 %v6629
    %v7969 = vunpack.c.l.b16 %v6630
    %v7970 = vunpack.c.h.b16 %v6630
    %v7971 = vunpack.c.l.b16 %v6631
    %v7972 = vunpack.c.h.b16 %v6631
    %v7973 = vunpack.c.l.b16 %v6632
    %v7974 = vunpack.c.h.b16 %v6632
    %v7975 = vunpack.c.l.b16 %v6633
    %v7976 = vunpack.c.h.b16 %v6633
    %v7977 = vunpack.c.l.b16 %v6634
    %v7978 = vunpack.c.h.b16 %v6634
    %v7979 = vunpack.c.l.b16 %v6635
    %v7980 = vunpack.c.h.b16 %v6635
    %v7981 = vunpack.c.l.b16 %v6636
    %v7982 = vunpack.c.h.b16 %v6636
    %v7983 = vunpack.c.l.b16 %v6637
    %v7984 = vunpack.c.h.b16 %v6637
    %v7985 = vunpack.c.l.b16 %v6638
    %v7986 = vunpack.c.h.b16 %v6638
    %v7987 = vunpack.c.l.b16 %v6639
    %v7988 = vunpack.c.h.b16 %v6639
    %v7989 = vunpack.c.l.b16 %v6640
    %v7990 = vunpack.c.h.b16 %v6640
    %v7991 = vunpack.c.l.b16 %v6641
    %v7992 = vunpack.c.h.b16 %v6641
    %v7993 = vunpack.c.l.b16 %v6642
    %v7994 = vunpack.c.h.b16 %v6642
    %v7995 = vunpack.c.l.b16 %v6643
    %v7996 = vunpack.c.h.b16 %v6643
    %v7997 = vunpack.c.l.b16 %v6644
    %v7998 = vunpack.c.h.b16 %v6644
    %v7999 = vunpack.c.l.b16 %v6645
    %v8000 = vunpack.c.h.b16 %v6645
    %v8001 = vunpack.c.l.b16 %v6646
    %v8002 = vunpack.c.h.b16 %v6646
    %v8003 = vunpack.c.l.b16 %v6647
    %v8004 = vunpack.c.h.b16 %v6647
    %v8005 = vunpack.c.l.b16 %v6648
    %v8006 = vunpack.c.h.b16 %v6648
    %v8007 = vunpack.c.l.b16 %v6649
    %v8008 = vunpack.c.h.b16 %v6649
    %v8009 = vunpack.c.l.b16 %v6650
    %v8010 = vunpack.c.h.b16 %v6650
    %v8011 = vunpack.c.l.b16 %v6651
    %v8012 = vunpack.c.h.b16 %v6651
    %v8013 = vunpack.c.l.b16 %v6652
    %v8014 = vunpack.c.h.b16 %v6652
    %v8015 = vunpack.c.l.b16 %v6653
    %v8016 = vunpack.c.h.b16 %v6653
    %v8017 = vunpack.c.l.b16 %v6654
    %v8018 = vunpack.c.h.b16 %v6654
    %v8019 = vunpack.c.l.b16 %v6655
    %v8020 = vunpack.c.h.b16 %v6655
    %v8021 = vunpack.c.l.b16 %v6656
    %v8022 = vunpack.c.h.b16 %v6656
    %v8023 = vunpack.c.l.b16 %v6657
    %v8024 = vunpack.c.h.b16 %v6657
    %v8025 = vunpack.c.l.b16 %v6658
    %v8026 = vunpack.c.h.b16 %v6658
    %v8027 = vunpack.c.l.b16 %v6659
    %v8028 = vunpack.c.h.b16 %v6659
    %v8029 = vunpack.c.l.b16 %v6660
    %v8030 = vunpack.c.h.b16 %v6660
    %v8031 = vunpack.c.l.b16 %v6661
    %v8032 = vunpack.c.h.b16 %v6661
    %v8033 = vunpack.c.l.b16 %v6662
    %v8034 = vunpack.c.h.b16 %v6662
    %v8035 = vunpack.c.l.b16 %v6663
    %v8036 = vunpack.c.h.b16 %v6663
    %v8037 = vunpack.c.l.b16 %v6664
    %v8038 = vunpack.c.h.b16 %v6664
    %v8039 = vunpack.c.l.b16 %v6665
    %v8040 = vunpack.c.h.b16 %v6665
    %v8041 = vunpack.c.l.b16 %v6666
    %v8042 = vunpack.c.h.b16 %v6666
    %v8043 = vunpack.c.l.b16 %v6667
    %v8044 = vunpack.c.h.b16 %v6667
    %v8045 = vunpack.c.l.b16 %v6668
    %v8046 = vunpack.c.h.b16 %v6668
    %v8047 = vunpack.c.l.b16 %v6669
    %v8048 = vunpack.c.h.b16 %v6669
    %v8049 = vunpack.c.l.b16 %v6670
    %v8050 = vunpack.c.h.b16 %v6670
    %v8051 = vunpack.c.l.b16 %v6671
    %v8052 = vunpack.c.h.b16 %v6671
    %v8053 = vunpack.c.l.b16 %v6672
    %v8054 = vunpack.c.h.b16 %v6672
    %v8055 = vunpack.c.l.b16 %v6673
    %v8056 = vunpack.c.h.b16 %v6673
    %v8057 = vunpack.c.l.b16 %v6674
    %v8058 = vunpack.c.h.b16 %v6674
    %v8059 = vunpack.c.l.b16 %v6675
    %v8060 = vunpack.c.h.b16 %v6675
    %v8061 = vunpack.c.l.b16 %v6676
    %v8062 = vunpack.c.h.b16 %v6676
    %v8063 = vunpack.c.l.b16 %v6677
    %v8064 = vunpack.c.h.b16 %v6677
    %v8065 = vunpack.c.l.b16 %v6678
    %v8066 = vunpack.c.h.b16 %v6678
    %v8067 = vunpack.c.l.b16 %v6679
    %v8068 = vunpack.c.h.b16 %v6679
    %v8069 = vunpack.c.l.b16 %v6680
    %v8070 = vunpack.c.h.b16 %v6680
    %v8071 = vunpack.c.l.b16 %v6681
    %v8072 = vunpack.c.h.b16 %v6681
    %v8073 = vunpack.c.l.b16 %v6682
    %v8074 = vunpack.c.h.b16 %v6682
    %v8075 = vunpack.c.l.b16 %v6683
    %v8076 = vunpack.c.h.b16 %v6683
    %v8077 = vunpack.c.l.b16 %v6684
    %v8078 = vunpack.c.h.b16 %v6684
    %v8079 = vunpack.c.l.b16 %v6685
    %v8080 = vunpack.c.h.b16 %v6685
    %v8081 = vunpack.c.l.b16 %v6686
    %v8082 = vunpack.c.h.b16 %v6686
    %v8083 = vunpack.c.l.b16 %v6687
    %v8084 = vunpack.c.h.b16 %v6687
    %v8085 = vunpack.c.l.b16 %v6688
    %v8086 = vunpack.c.h.b16 %v6688
    %v8087 = vunpack.c.l.b16 %v6689
    %v8088 = vunpack.c.h.b16 %v6689
    %v8089 = vunpack.c.l.b16 %v6690
    %v8090 = vunpack.c.h.b16 %v6690
    %v8091 = vunpack.c.l.b16 %v6691
    %v8092 = vunpack.c.h.b16 %v6691
    %v8093 = vunpack.c.l.b16 %v6692
    %v8094 = vunpack.c.h.b16 %v6692
    %v8095 = vunpack.c.l.b16 %v6693
    %v8096 = vunpack.c.h.b16 %v6693
    %v8097 = vunpack.c.l.b16 %v6694
    %v8098 = vunpack.c.h.b16 %v6694
    %v8099 = vunpack.c.l.b16 %v6695
    %v8100 = vunpack.c.h.b16 %v6695
    %v8101 = vunpack.c.l.b16 %v6696
    %v8102 = vunpack.c.h.b16 %v6696
    %v8103 = vunpack.c.l.b16 %v6697
    %v8104 = vunpack.c.h.b16 %v6697
    %v8105 = vunpack.c.l.b16 %v6698
    %v8106 = vunpack.c.h.b16 %v6698
    %v8107 = vunpack.c.l.b16 %v6699
    %v8108 = vunpack.c.h.b16 %v6699
    %v8109 = vunpack.c.l.b16 %v6700
    %v8110 = vunpack.c.h.b16 %v6700
    %v8111 = vunpack.c.l.b16 %v6701
    %v8112 = vunpack.c.h.b16 %v6701
    %v8113 = vunpack.c.l.b16 %v6702
    %v8114 = vunpack.c.h.b16 %v6702
    %v8115 = vunpack.c.l.b16 %v6703
    %v8116 = vunpack.c.h.b16 %v6703
    %v8117 = vunpack.c.l.b16 %v6704
    %v8118 = vunpack.c.h.b16 %v6704
    %v8119 = vunpack.c.l.b16 %v6705
    %v8120 = vunpack.c.h.b16 %v6705
    %v8121 = vunpack.c.l.b16 %v6706
    %v8122 = vunpack.c.h.b16 %v6706
    %v8123 = vunpack.c.l.b16 %v6707
    %v8124 = vunpack.c.h.b16 %v6707
    %v8125 = vunpack.c.l.b16 %v6708
    %v8126 = vunpack.c.h.b16 %v6708
    %v8127 = vunpack.c.l.b16 %v6709
    %v8128 = vunpack.c.h.b16 %v6709
    %v8129 = vunpack.c.l.b16 %v6710
    %v8130 = vunpack.c.h.b16 %v6710
    %v8131 = vunpack.c.l.b16 %v6711
    %v8132 = vunpack.c.h.b16 %v6711
    %v8133 = vunpack.c.l.b16 %v6712
    %v8134 = vunpack.c.h.b16 %v6712
    %v8135 = vunpack.c.l.b16 %v6713
    %v8136 = vunpack.c.h.b16 %v6713
    %v8137 = vunpack.c.l.b16 %v6714
    %v8138 = vunpack.c.h.b16 %v6714
    %v8139 = vunpack.c.l.b16 %v6715
    %v8140 = vunpack.c.h.b16 %v6715
    %v8141 = vunpack.c.l.b16 %v6716
    %v8142 = vunpack.c.h.b16 %v6716
    %v8143 = vunpack.c.l.b16 %v6717
    %v8144 = vunpack.c.h.b16 %v6717
    %v8145 = vunpack.c.l.b16 %v6718
    %v8146 = vunpack.c.h.b16 %v6718
    %v8147 = vunpack.c.l.b16 %v6719
    %v8148 = vunpack.c.h.b16 %v6719
    %v8149 = vunpack.c.l.b16 %v6720
    %v8150 = vunpack.c.h.b16 %v6720
    %v8151 = vunpack.c.l.b16 %v6721
    %v8152 = vunpack.c.h.b16 %v6721
    %v8153 = vunpack.c.l.b16 %v6722
    %v8154 = vunpack.c.h.b16 %v6722
    %v8155 = vunpack.c.l.b16 %v6723
    %v8156 = vunpack.c.h.b16 %v6723
    %v8157 = vunpack.c.l.b16 %v6724
    %v8158 = vunpack.c.h.b16 %v6724
    %v8159 = vunpack.c.l.b16 %v6725
    %v8160 = vunpack.c.h.b16 %v6725
    %v8161 = vunpack.c.l.b16 %v6726
    %v8162 = vunpack.c.h.b16 %v6726
    %v8163 = vunpack.c.l.b16 %v6727
    %v8164 = vunpack.c.h.b16 %v6727
    %v8165 = vunpack.c.l.b16 %v6728
    %v8166 = vunpack.c.h.b16 %v6728
    %v8167 = vunpack.c.l.b16 %v6729
    %v8168 = vunpack.c.h.b16 %v6729
    %v8169 = vunpack.c.l.b16 %v6730
    %v8170 = vunpack.c.h.b16 %v6730
    %v8171 = vunpack.c.l.b16 %v6731
    %v8172 = vunpack.c.h.b16 %v6731
    %v8173 = vunpack.c.l.b16 %v6732
    %v8174 = vunpack.c.h.b16 %v6732
    %v8175 = vunpack.c.l.b16 %v6733
    %v8176 = vunpack.c.h.b16 %v6733
    %v8177 = vunpack.c.l.b16 %v6734
    %v8178 = vunpack.c.h.b16 %v6734
    %v8179 = vunpack.c.l.b16 %v6735
    %v8180 = vunpack.c.h.b16 %v6735
    %v8181 = vunpack.c.l.b16 %v6736
    %v8182 = vunpack.c.h.b16 %v6736
    %v8183 = vunpack.c.l.b16 %v6737
    %v8184 = vunpack.c.h.b16 %v6737
    %v8185 = vunpack.c.l.b16 %v6738
    %v8186 = vunpack.c.h.b16 %v6738
    %v8187 = vunpack.c.l.b16 %v6739
    %v8188 = vunpack.c.h.b16 %v6739
    %v8189 = vunpack.c.l.b16 %v6740
    %v8190 = vunpack.c.h.b16 %v6740
    %v8191 = vunpack.c.l.b16 %v6741
    %v8192 = vunpack.c.h.b16 %v6741
    %v8193 = vunpack.c.l.b16 %v6742
    %v8194 = vunpack.c.h.b16 %v6742
    %v8195 = vunpack.c.l.b16 %v6743
    %v8196 = vunpack.c.h.b16 %v6743
    %v8197 = vunpack.c.l.b16 %v6744
    %v8198 = vunpack.c.h.b16 %v6744
    %v8199 = vunpack.c.l.b16 %v6745
    %v8200 = vunpack.c.h.b16 %v6745
    %v8201 = vunpack.c.l.b16 %v6746
    %v8202 = vunpack.c.h.b16 %v6746
    %v8203 = vunpack.c.l.b16 %v6747
    %v8204 = vunpack.c.h.b16 %v6747
    %v8205 = vunpack.c.l.b16 %v6748
    %v8206 = vunpack.c.h.b16 %v6748
    %v8207 = vunpack.c.l.b16 %v6749
    %v8208 = vunpack.c.h.b16 %v6749
    %v8209 = vunpack.c.l.b16 %v6750
    %v8210 = vunpack.c.h.b16 %v6750
    %v8211 = vunpack.c.l.b16 %v6751
    %v8212 = vunpack.c.h.b16 %v6751
    %v8213 = vunpack.c.l.b16 %v6752
    %v8214 = vunpack.c.h.b16 %v6752
    %v8215 = vunpack.c.l.b16 %v6753
    %v8216 = vunpack.c.h.b16 %v6753
    %v8217 = vunpack.c.l.b16 %v6754
    %v8218 = vunpack.c.h.b16 %v6754
    %v8219 = vunpack.c.l.b16 %v6755
    %v8220 = vunpack.c.h.b16 %v6755
    %v8221 = vunpack.c.l.b16 %v6756
    %v8222 = vunpack.c.h.b16 %v6756
    %v8223 = vunpack.c.l.b16 %v6757
    %v8224 = vunpack.c.h.b16 %v6757
    %v8225 = vunpack.c.l.b16 %v6758
    %v8226 = vunpack.c.h.b16 %v6758
    %v8227 = vunpack.c.l.b16 %v6759
    %v8228 = vunpack.c.h.b16 %v6759
    %v8229 = vunpack.c.l.b16 %v6760
    %v8230 = vunpack.c.h.b16 %v6760
    %v8231 = vunpack.c.l.b16 %v6761
    %v8232 = vunpack.c.h.b16 %v6761
    %v8233 = vunpack.c.l.b16 %v6762
    %v8234 = vunpack.c.h.b16 %v6762
    %v8235 = vunpack.c.l.b16 %v6763
    %v8236 = vunpack.c.h.b16 %v6763
    %v8237 = vunpack.c.l.b16 %v6764
    %v8238 = vunpack.c.h.b16 %v6764
    %v8239 = vunpack.c.l.b16 %v6765
    %v8240 = vunpack.c.h.b16 %v6765
    %v8241 = vunpack.c.l.b16 %v6766
    %v8242 = vunpack.c.h.b16 %v6766
    %v8243 = vunpack.c.l.b16 %v6767
    %v8244 = vunpack.c.h.b16 %v6767
    %v8245 = vunpack.c.l.b16 %v6768
    %v8246 = vunpack.c.h.b16 %v6768
    %v8247 = vunpack.c.l.b16 %v6769
    %v8248 = vunpack.c.h.b16 %v6769
    %v8249 = vunpack.c.l.b16 %v6770
    %v8250 = vunpack.c.h.b16 %v6770
    %v8251 = vunpack.c.l.b16 %v6771
    %v8252 = vunpack.c.h.b16 %v6771
    %v8253 = vunpack.c.l.b16 %v6772
    %v8254 = vunpack.c.h.b16 %v6772
    %v8255 = vunpack.c.l.b16 %v6773
    %v8256 = vunpack.c.h.b16 %v6773
    %v8257 = vunpack.c.l.b16 %v6774
    %v8258 = vunpack.c.h.b16 %v6774
    %v8259 = vunpack.c.l.b16 %v6775
    %v8260 = vunpack.c.h.b16 %v6775
    %v8261 = vunpack.c.l.b16 %v6776
    %v8262 = vunpack.c.h.b16 %v6776
    %v8263 = vunpack.c.l.b16 %v6777
    %v8264 = vunpack.c.h.b16 %v6777
    %v8265 = vunpack.c.l.b16 %v6778
    %v8266 = vunpack.c.h.b16 %v6778
    %v8267 = vunpack.c.l.b16 %v6779
    %v8268 = vunpack.c.h.b16 %v6779
    %v8269 = vunpack.c.l.b16 %v6780
    %v8270 = vunpack.c.h.b16 %v6780
    %v8271 = vunpack.c.l.b16 %v6781
    %v8272 = vunpack.c.h.b16 %v6781
    %v8273 = vunpack.c.l.b16 %v6782
    %v8274 = vunpack.c.h.b16 %v6782
    %v8275 = vunpack.c.l.b16 %v6783
    %v8276 = vunpack.c.h.b16 %v6783
    %v8277 = vunpack.c.l.b16 %v6784
    %v8278 = vunpack.c.h.b16 %v6784
    %v8279 = vunpack.c.l.b16 %v6785
    %v8280 = vunpack.c.h.b16 %v6785
    %v8281 = vunpack.c.l.b16 %v6786
    %v8282 = vunpack.c.h.b16 %v6786
    %v8283 = vunpack.c.l.b16 %v6787
    %v8284 = vunpack.c.h.b16 %v6787
    %v8285 = vunpack.c.l.b16 %v6788
    %v8286 = vunpack.c.h.b16 %v6788
    %v8287 = vunpack.c.l.b16 %v6789
    %v8288 = vunpack.c.h.b16 %v6789
    %v8289 = vunpack.c.l.b16 %v6790
    %v8290 = vunpack.c.h.b16 %v6790
    %v8291 = vunpack.c.l.b16 %v6791
    %v8292 = vunpack.c.h.b16 %v6791
    %v8293 = vunpack.c.l.b16 %v6792
    %v8294 = vunpack.c.h.b16 %v6792
    %v8295 = vunpack.c.l.b16 %v6793
    %v8296 = vunpack.c.h.b16 %v6793
    %v8297 = vunpack.c.l.b16 %v6794
    %v8298 = vunpack.c.h.b16 %v6794
    %v8299 = vunpack.c.l.b16 %v6795
    %v8300 = vunpack.c.h.b16 %v6795
    %v8301 = vunpack.c.l.b16 %v6796
    %v8302 = vunpack.c.h.b16 %v6796
    %v8303 = vunpack.c.l.b16 %v6797
    %v8304 = vunpack.c.h.b16 %v6797
    %v8305 = vunpack.c.l.b16 %v6798
    %v8306 = vunpack.c.h.b16 %v6798
    %v8307 = vunpack.c.l.b16 %v6799
    %v8308 = vunpack.c.h.b16 %v6799
    %v8309 = vunpack.c.l.b16 %v6800
    %v8310 = vunpack.c.h.b16 %v6800
    %v8311 = vunpack.c.l.b16 %v6801
    %v8312 = vunpack.c.h.b16 %v6801
    %v8313 = vunpack.c.l.b16 %v6802
    %v8314 = vunpack.c.h.b16 %v6802
    %v8315 = vunpack.c.l.b16 %v6803
    %v8316 = vunpack.c.h.b16 %v6803
    %v8317 = vunpack.c.l.b16 %v6804
    %v8318 = vunpack.c.h.b16 %v6804
    %v8319 = vunpack.c.l.b16 %v6805
    %v8320 = vunpack.c.h.b16 %v6805
    %v8321 = vunpack.c.l.b16 %v6806
    %v8322 = vunpack.c.h.b16 %v6806
    %v8323 = vunpack.c.l.b16 %v6807
    %v8324 = vunpack.c.h.b16 %v6807
    %v8325 = vunpack.c.l.b16 %v6808
    %v8326 = vunpack.c.h.b16 %v6808
    %v8327 = vunpack.c.l.b16 %v6809
    %v8328 = vunpack.c.h.b16 %v6809
    %v8329 = vunpack.c.l.b16 %v6810
    %v8330 = vunpack.c.h.b16 %v6810
    %v8331 = vunpack.c.l.b16 %v6811
    %v8332 = vunpack.c.h.b16 %v6811
    %v8333 = vunpack.c.l.b16 %v6812
    %v8334 = vunpack.c.h.b16 %v6812
    %v8335 = vunpack.c.l.b16 %v6813
    %v8336 = vunpack.c.h.b16 %v6813
    %v8337 = vunpack.c.l.b16 %v6814
    %v8338 = vunpack.c.h.b16 %v6814
    %v8339 = vunpack.c.l.b16 %v6815
    %v8340 = vunpack.c.h.b16 %v6815
    %v8341 = vunpack.c.l.b16 %v6816
    %v8342 = vunpack.c.h.b16 %v6816
    %v8343 = vunpack.c.l.b16 %v6817
    %v8344 = vunpack.c.h.b16 %v6817
    %v8345 = vunpack.c.l.b16 %v6818
    %v8346 = vunpack.c.h.b16 %v6818
    %v8347 = vunpack.c.l.b16 %v6819
    %v8348 = vunpack.c.h.b16 %v6819
    %v8349 = vunpack.c.l.b16 %v6820
    %v8350 = vunpack.c.h.b16 %v6820
    %v8351 = vunpack.c.l.b16 %v6821
    %v8352 = vunpack.c.h.b16 %v6821
    %v8353 = vunpack.c.l.b16 %v6822
    %v8354 = vunpack.c.h.b16 %v6822
    %v8355 = vunpack.c.l.b16 %v6823
    %v8356 = vunpack.c.h.b16 %v6823
    %v8357 = vunpack.c.l.b16 %v6824
    %v8358 = vunpack.c.h.b16 %v6824
    %v8359 = vunpack.c.l.b16 %v6825
    %v8360 = vunpack.c.h.b16 %v6825
    %v8361 = vunpack.c.l.b16 %v6826
    %v8362 = vunpack.c.h.b16 %v6826
    %v8363 = vunpack.c.l.b16 %v6827
    %v8364 = vunpack.c.h.b16 %v6827
    %v8365 = vunpack.c.l.b16 %v6828
    %v8366 = vunpack.c.h.b16 %v6828
    %v8367 = vunpack.c.l.b16 %v6829
    %v8368 = vunpack.c.h.b16 %v6829
    %v8369 = vunpack.c.l.b16 %v6830
    %v8370 = vunpack.c.h.b16 %v6830
    %v8371 = vunpack.c.l.b16 %v6831
    %v8372 = vunpack.c.h.b16 %v6831
    %v8373 = vunpack.c.l.b16 %v6832
    %v8374 = vunpack.c.h.b16 %v6832
    %v8375 = vunpack.c.l.b16 %v6833
    %v8376 = vunpack.c.h.b16 %v6833
    %v8377 = vunpack.c.l.b16 %v6834
    %v8378 = vunpack.c.h.b16 %v6834
    %v8379 = vunpack.c.l.b16 %v6835
    %v8380 = vunpack.c.h.b16 %v6835
    %v8381 = vunpack.c.l.b16 %v6836
    %v8382 = vunpack.c.h.b16 %v6836
    %v8383 = vunpack.c.l.b16 %v6837
    %v8384 = vunpack.c.h.b16 %v6837
    %v8385 = vunpack.c.l.b16 %v6838
    %v8386 = vunpack.c.h.b16 %v6838
    %v8387 = vunpack.c.l.b16 %v6839
    %v8388 = vunpack.c.h.b16 %v6839
    %v8389 = vunpack.c.l.b16 %v6840
    %v8390 = vunpack.c.h.b16 %v6840
    %v8391 = vunpack.c.l.b16 %v6841
    %v8392 = vunpack.c.h.b16 %v6841
    %v8393 = vunpack.c.l.b16 %v6842
    %v8394 = vunpack.c.h.b16 %v6842
    %v8395 = vunpack.c.l.b16 %v6843
    %v8396 = vunpack.c.h.b16 %v6843
    %v8397 = vunpack.c.l.b16 %v6844
    %v8398 = vunpack.c.h.b16 %v6844
    %v8399 = vunpack.c.l.b16 %v6845
    %v8400 = vunpack.c.h.b16 %v6845
    %v8401 = vunpack.c.l.b16 %v6846
    %v8402 = vunpack.c.h.b16 %v6846
    %v8403 = vunpack.c.l.b16 %v6847
    %v8404 = vunpack.c.h.b16 %v6847
    %v8405 = vunpack.c.l.b16 %v6848
    %v8406 = vunpack.c.h.b16 %v6848
    %v8407 = vunpack.c.l.b16 %v6849
    %v8408 = vunpack.c.h.b16 %v6849
    %v8409 = vunpack.c.l.b16 %v6850
    %v8410 = vunpack.c.h.b16 %v6850
    %v8411 = vunpack.c.l.b16 %v6851
    %v8412 = vunpack.c.h.b16 %v6851
    %v8413 = vunpack.c.l.b16 %v6852
    %v8414 = vunpack.c.h.b16 %v6852
    %v8415 = vunpack.c.l.b16 %v6853
    %v8416 = vunpack.c.h.b16 %v6853
    %v8417 = vunpack.c.l.b16 %v6854
    %v8418 = vunpack.c.h.b16 %v6854
    %v8419 = vunpack.c.l.b16 %v6855
    %v8420 = vunpack.c.h.b16 %v6855
    %v8421 = vunpack.c.l.b16 %v6856
    %v8422 = vunpack.c.h.b16 %v6856
    %v8423 = vunpack.c.l.b16 %v6857
    %v8424 = vunpack.c.h.b16 %v6857
    %v8425 = vunpack.c.l.b16 %v6858
    %v8426 = vunpack.c.h.b16 %v6858
    %v8427 = vunpack.c.l.b16 %v6859
    %v8428 = vunpack.c.h.b16 %v6859
    %v8429 = vunpack.c.l.b16 %v6860
    %v8430 = vunpack.c.h.b16 %v6860
    %v8431 = vunpack.c.l.b16 %v6861
    %v8432 = vunpack.c.h.b16 %v6861
    %v8433 = vunpack.c.l.b16 %v6862
    %v8434 = vunpack.c.h.b16 %v6862
    %v8435 = vunpack.c.l.b16 %v6863
    %v8436 = vunpack.c.h.b16 %v6863
    %v8437 = vunpack.c.l.b16 %v6864
    %v8438 = vunpack.c.h.b16 %v6864
    %v8439 = vunpack.c.l.b16 %v6865
    %v8440 = vunpack.c.h.b16 %v6865
    %v8441 = vunpack.c.l.b16 %v6866
    %v8442 = vunpack.c.h.b16 %v6866
    %v8443 = vunpack.c.l.b16 %v6867
    %v8444 = vunpack.c.h.b16 %v6867
    %v8445 = vunpack.c.l.b16 %v6868
    %v8446 = vunpack.c.h.b16 %v6868
    %v8447 = vunpack.c.l.b16 %v6869
    %v8448 = vunpack.c.h.b16 %v6869
    %v8449 = vunpack.c.l.b16 %v6870
    %v8450 = vunpack.c.h.b16 %v6870
    %v8451 = vunpack.c.l.b16 %v6871
    %v8452 = vunpack.c.h.b16 %v6871
    %v8453 = vpack.c.b16 %v7437, %v7429
    %v8454 = vpack.c.b16 %v7438, %v7430
    %v8455 = vpack.c.b16 %v7439, %v7431
    %v8456 = vpack.c.b16 %v7440, %v7432
    %v8457 = vpack.c.b16 %v7441, %v7433
    %v8458 = vpack.c.b16 %v7442, %v7434
    %v8459 = vpack.c.b16 %v7443, %v7435
    %v8460 = vpack.c.b16 %v7444, %v7436
    %v8461 = vpack.c.b16 %v7453, %v7445
    %v8462 = vpack.c.b16 %v7454, %v7446
    %v8463 = vpack.c.b16 %v7455, %v7447
    %v8464 = vpack.c.b16 %v7456, %v7448
    %v8465 = vpack.c.b16 %v7457, %v7449
    %v8466 = vpack.c.b16 %v7458, %v7450
    %v8467 = vpack.c.b16 %v7459, %v7451
    %v8468 = vpack.c.b16 %v7460, %v7452
    %v8469 = vpack.c.b16 %v7469, %v7461
    %v8470 = vpack.c.b16 %v7470, %v7462
    %v8471 = vpack.c.b16 %v7471, %v7463
    %v8472 = vpack.c.b16 %v7472, %v7464
    %v8473 = vpack.c.b16 %v7473, %v7465
    %v8474 = vpack.c.b16 %v7474, %v7466
    %v8475 = vpack.c.b16 %v7475, %v7467
    %v8476 = vpack.c.b16 %v7476, %v7468
    %v8477 = vpack.c.b16 %v7485, %v7477
    %v8478 = vpack.c.b16 %v7486, %v7478
    %v8479 = vpack.c.b16 %v7487, %v7479
    %v8480 = vpack.c.b16 %v7488, %v7480
    %v8481 = vpack.c.b16 %v7489, %v7481
    %v8482 = vpack.c.b16 %v7490, %v7482
    %v8483 = vpack.c.b16 %v7491, %v7483
    %v8484 = vpack.c.b16 %v7492, %v7484
    %v8485 = vpack.c.b16 %v7501, %v7493
    %v8486 = vpack.c.b16 %v7502, %v7494
    %v8487 = vpack.c.b16 %v7503, %v7495
    %v8488 = vpack.c.b16 %v7504, %v7496
    %v8489 = vpack.c.b16 %v7505, %v7497
    %v8490 = vpack.c.b16 %v7506, %v7498
    %v8491 = vpack.c.b16 %v7507, %v7499
    %v8492 = vpack.c.b16 %v7508, %v7500
    %v8493 = vpack.c.b16 %v7517, %v7509
    %v8494 = vpack.c.b16 %v7518, %v7510
    %v8495 = vpack.c.b16 %v7519, %v7511
    %v8496 = vpack.c.b16 %v7520, %v7512
    %v8497 = vpack.c.b16 %v7521, %v7513
    %v8498 = vpack.c.b16 %v7522, %v7514
    %v8499 = vpack.c.b16 %v7523, %v7515
    %v8500 = vpack.c.b16 %v7524, %v7516
    %v8501 = vpack.c.b16 %v7533, %v7525
    %v8502 = vpack.c.b16 %v7534, %v7526
    %v8503 = vpack.c.b16 %v7535, %v7527
    %v8504 = vpack.c.b16 %v7536, %v7528
    %v8505 = vpack.c.b16 %v7537, %v7529
    %v8506 = vpack.c.b16 %v7538, %v7530
    %v8507 = vpack.c.b16 %v7539, %v7531
    %v8508 = vpack.c.b16 %v7540, %v7532
    %v8509 = vpack.c.b16 %v7549, %v7541
    %v8510 = vpack.c.b16 %v7550, %v7542
    %v8511 = vpack.c.b16 %v7551, %v7543
    %v8512 = vpack.c.b16 %v7552, %v7544
    %v8513 = vpack.c.b16 %v7553, %v7545
    %v8514 = vpack.c.b16 %v7554, %v7546
    %v8515 = vpack.c.b16 %v7555, %v7547
    %v8516 = vpack.c.b16 %v7556, %v7548
    %v8517 = vpack.c.b16 %v7565, %v7557
    %v8518 = vpack.c.b16 %v7566, %v7558
    %v8519 = vpack.c.b16 %v7567, %v7559
    %v8520 = vpack.c.b16 %v7568, %v7560
    %v8521 = vpack.c.b16 %v7569, %v7561
    %v8522 = vpack.c.b16 %v7570, %v7562
    %v8523 = vpack.c.b16 %v7571, %v7563
    %v8524 = vpack.c.b16 %v7572, %v7564
    %v8525 = vpack.c.b16 %v7581, %v7573
    %v8526 = vpack.c.b16 %v7582, %v7574
    %v8527 = vpack.c.b16 %v7583, %v7575
    %v8528 = vpack.c.b16 %v7584, %v7576
    %v8529 = vpack.c.b16 %v7585, %v7577
    %v8530 = vpack.c.b16 %v7586, %v7578
    %v8531 = vpack.c.b16 %v7587, %v7579
    %v8532 = vpack.c.b16 %v7588, %v7580
    %v8533 = vpack.c.b16 %v7597, %v7589
    %v8534 = vpack.c.b16 %v7598, %v7590
    %v8535 = vpack.c.b16 %v7599, %v7591
    %v8536 = vpack.c.b16 %v7600, %v7592
    %v8537 = vpack.c.b16 %v7601, %v7593
    %v8538 = vpack.c.b16 %v7602, %v7594
    %v8539 = vpack.c.b16 %v7603, %v7595
    %v8540 = vpack.c.b16 %v7604, %v7596
    %v8541 = vpack.c.b16 %v7613, %v7605
    %v8542 = vpack.c.b16 %v7614, %v7606
    %v8543 = vpack.c.b16 %v7615, %v7607
    %v8544 = vpack.c.b16 %v7616, %v7608
    %v8545 = vpack.c.b16 %v7617, %v7609
    %v8546 = vpack.c.b16 %v7618, %v7610
    %v8547 = vpack.c.b16 %v7619, %v7611
    %v8548 = vpack.c.b16 %v7620, %v7612
    %v8549 = vpack.c.b16 %v7629, %v7621
    %v8550 = vpack.c.b16 %v7630, %v7622
    %v8551 = vpack.c.b16 %v7631, %v7623
    %v8552 = vpack.c.b16 %v7632, %v7624
    %v8553 = vpack.c.b16 %v7633, %v7625
    %v8554 = vpack.c.b16 %v7634, %v7626
    %v8555 = vpack.c.b16 %v7635, %v7627
    %v8556 = vpack.c.b16 %v7636, %v7628
    %v8557 = vpack.c.b16 %v7645, %v7637
    %v8558 = vpack.c.b16 %v7646, %v7638
    %v8559 = vpack.c.b16 %v7647, %v7639
    %v8560 = vpack.c.b16 %v7648, %v7640
    %v8561 = vpack.c.b16 %v7649, %v7641
    %v8562 = vpack.c.b16 %v7650, %v7642
    %v8563 = vpack.c.b16 %v7651, %v7643
    %v8564 = vpack.c.b16 %v7652, %v7644
    %v8565 = vpack.c.b16 %v7661, %v7653
    %v8566 = vpack.c.b16 %v7662, %v7654
    %v8567 = vpack.c.b16 %v7663, %v7655
    %v8568 = vpack.c.b16 %v7664, %v7656
    %v8569 = vpack.c.b16 %v7665, %v7657
    %v8570 = vpack.c.b16 %v7666, %v7658
    %v8571 = vpack.c.b16 %v7667, %v7659
    %v8572 = vpack.c.b16 %v7668, %v7660
    %v8573 = vpack.c.b16 %v7677, %v7669
    %v8574 = vpack.c.b16 %v7678, %v7670
    %v8575 = vpack.c.b16 %v7679, %v7671
    %v8576 = vpack.c.b16 %v7680, %v7672
    %v8577 = vpack.c.b16 %v7681, %v7673
    %v8578 = vpack.c.b16 %v7682, %v7674
    %v8579 = vpack.c.b16 %v7683, %v7675
    %v8580 = vpack.c.b16 %v7684, %v7676
    %v8581 = vpack.c.b16 %v7693, %v7685
    %v8582 = vpack.c.b16 %v7694, %v7686
    %v8583 = vpack.c.b16 %v7695, %v7687
    %v8584 = vpack.c.b16 %v7696, %v7688
    %v8585 = vpack.c.b16 %v7697, %v7689
    %v8586 = vpack.c.b16 %v7698, %v7690
    %v8587 = vpack.c.b16 %v7699, %v7691
    %v8588 = vpack.c.b16 %v7700, %v7692
    %v8589 = vpack.c.b16 %v7709, %v7701
    %v8590 = vpack.c.b16 %v7710, %v7702
    %v8591 = vpack.c.b16 %v7711, %v7703
    %v8592 = vpack.c.b16 %v7712, %v7704
    %v8593 = vpack.c.b16 %v7713, %v7705
    %v8594 = vpack.c.b16 %v7714, %v7706
    %v8595 = vpack.c.b16 %v7715, %v7707
    %v8596 = vpack.c.b16 %v7716, %v7708
    %v8597 = vpack.c.b16 %v7725, %v7717
    %v8598 = vpack.c.b16 %v7726, %v7718
    %v8599 = vpack.c.b16 %v7727, %v7719
    %v8600 = vpack.c.b16 %v7728, %v7720
    %v8601 = vpack.c.b16 %v7729, %v7721
    %v8602 = vpack.c.b16 %v7730, %v7722
    %v8603 = vpack.c.b16 %v7731, %v7723
    %v8604 = vpack.c.b16 %v7732, %v7724
    %v8605 = vpack.c.b16 %v7741, %v7733
    %v8606 = vpack.c.b16 %v7742, %v7734
    %v8607 = vpack.c.b16 %v7743, %v7735
    %v8608 = vpack.c.b16 %v7744, %v7736
    %v8609 = vpack.c.b16 %v7745, %v7737
    %v8610 = vpack.c.b16 %v7746, %v7738
    %v8611 = vpack.c.b16 %v7747, %v7739
    %v8612 = vpack.c.b16 %v7748, %v7740
    %v8613 = vpack.c.b16 %v7757, %v7749
    %v8614 = vpack.c.b16 %v7758, %v7750
    %v8615 = vpack.c.b16 %v7759, %v7751
    %v8616 = vpack.c.b16 %v7760, %v7752
    %v8617 = vpack.c.b16 %v7761, %v7753
    %v8618 = vpack.c.b16 %v7762, %v7754
    %v8619 = vpack.c.b16 %v7763, %v7755
    %v8620 = vpack.c.b16 %v7764, %v7756
    %v8621 = vpack.c.b16 %v7773, %v7765
    %v8622 = vpack.c.b16 %v7774, %v7766
    %v8623 = vpack.c.b16 %v7775, %v7767
    %v8624 = vpack.c.b16 %v7776, %v7768
    %v8625 = vpack.c.b16 %v7777, %v7769
    %v8626 = vpack.c.b16 %v7778, %v7770
    %v8627 = vpack.c.b16 %v7779, %v7771
    %v8628 = vpack.c.b16 %v7780, %v7772
    %v8629 = vpack.c.b16 %v7789, %v7781
    %v8630 = vpack.c.b16 %v7790, %v7782
    %v8631 = vpack.c.b16 %v7791, %v7783
    %v8632 = vpack.c.b16 %v7792, %v7784
    %v8633 = vpack.c.b16 %v7793, %v7785
    %v8634 = vpack.c.b16 %v7794, %v7786
    %v8635 = vpack.c.b16 %v7795, %v7787
    %v8636 = vpack.c.b16 %v7796, %v7788
    %v8637 = vpack.c.b16 %v7805, %v7797
    %v8638 = vpack.c.b16 %v7806, %v7798
    %v8639 = vpack.c.b16 %v7807, %v7799
    %v8640 = vpack.c.b16 %v7808, %v7800
    %v8641 = vpack.c.b16 %v7809, %v7801
    %v8642 = vpack.c.b16 %v7810, %v7802
    %v8643 = vpack.c.b16 %v7811, %v7803
    %v8644 = vpack.c.b16 %v7812, %v7804
    %v8645 = vpack.c.b16 %v7821, %v7813
    %v8646 = vpack.c.b16 %v7822, %v7814
    %v8647 = vpack.c.b16 %v7823, %v7815
    %v8648 = vpack.c.b16 %v7824, %v7816
    %v8649 = vpack.c.b16 %v7825, %v7817
    %v8650 = vpack.c.b16 %v7826, %v7818
    %v8651 = vpack.c.b16 %v7827, %v7819
    %v8652 = vpack.c.b16 %v7828, %v7820
    %v8653 = vpack.c.b16 %v7837, %v7829
    %v8654 = vpack.c.b16 %v7838, %v7830
    %v8655 = vpack.c.b16 %v7839, %v7831
    %v8656 = vpack.c.b16 %v7840, %v7832
    %v8657 = vpack.c.b16 %v7841, %v7833
    %v8658 = vpack.c.b16 %v7842, %v7834
    %v8659 = vpack.c.b16 %v7843, %v7835
    %v8660 = vpack.c.b16 %v7844, %v7836
    %v8661 = vpack.c.b16 %v7853, %v7845
    %v8662 = vpack.c.b16 %v7854, %v7846
    %v8663 = vpack.c.b16 %v7855, %v7847
    %v8664 = vpack.c.b16 %v7856, %v7848
    %v8665 = vpack.c.b16 %v7857, %v7849
    %v8666 = vpack.c.b16 %v7858, %v7850
    %v8667 = vpack.c.b16 %v7859, %v7851
    %v8668 = vpack.c.b16 %v7860, %v7852
    %v8669 = vpack.c.b16 %v7869, %v7861
    %v8670 = vpack.c.b16 %v7870, %v7862
    %v8671 = vpack.c.b16 %v7871, %v7863
    %v8672 = vpack.c.b16 %v7872, %v7864
    %v8673 = vpack.c.b16 %v7873, %v7865
    %v8674 = vpack.c.b16 %v7874, %v7866
    %v8675 = vpack.c.b16 %v7875, %v7867
    %v8676 = vpack.c.b16 %v7876, %v7868
    %v8677 = vpack.c.b16 %v7885, %v7877
    %v8678 = vpack.c.b16 %v7886, %v7878
    %v8679 = vpack.c.b16 %v7887, %v7879
    %v8680 = vpack.c.b16 %v7888, %v7880
    %v8681 = vpack.c.b16 %v7889, %v7881
    %v8682 = vpack.c.b16 %v7890, %v7882
    %v8683 = vpack.c.b16 %v7891, %v7883
    %v8684 = vpack.c.b16 %v7892, %v7884
    %v8685 = vpack.c.b16 %v7901, %v7893
    %v8686 = vpack.c.b16 %v7902, %v7894
    %v8687 = vpack.c.b16 %v7903, %v7895
    %v8688 = vpack.c.b16 %v7904, %v7896
    %v8689 = vpack.c.b16 %v7905, %v7897
    %v8690 = vpack.c.b16 %v7906, %v7898
    %v8691 = vpack.c.b16 %v7907, %v7899
    %v8692 = vpack.c.b16 %v7908, %v7900
    %v8693 = vpack.c.b16 %v7917, %v7909
    %v8694 = vpack.c.b16 %v7918, %v7910
    %v8695 = vpack.c.b16 %v7919, %v7911
    %v8696 = vpack.c.b16 %v7920, %v7912
    %v8697 = vpack.c.b16 %v7921, %v7913
    %v8698 = vpack.c.b16 %v7922, %v7914
    %v8699 = vpack.c.b16 %v7923, %v7915
    %v8700 = vpack.c.b16 %v7924, %v7916
    %v8701 = vpack.c.b16 %v7933, %v7925
    %v8702 = vpack.c.b16 %v7934, %v7926
    %v8703 = vpack.c.b16 %v7935, %v7927
    %v8704 = vpack.c.b16 %v7936, %v7928
    %v8705 = vpack.c.b16 %v7937, %v7929
    %v8706 = vpack.c.b16 %v7938, %v7930
    %v8707 = vpack.c.b16 %v7939, %v7931
    %v8708 = vpack.c.b16 %v7940, %v7932
    %v8709 = vpack.c.b16 %v7949, %v7941
    %v8710 = vpack.c.b16 %v7950, %v7942
    %v8711 = vpack.c.b16 %v7951, %v7943
    %v8712 = vpack.c.b16 %v7952, %v7944
    %v8713 = vpack.c.b16 %v7953, %v7945
    %v8714 = vpack.c.b16 %v7954, %v7946
    %v8715 = vpack.c.b16 %v7955, %v7947
    %v8716 = vpack.c.b16 %v7956, %v7948
    %v8717 = vpack.c.b16 %v7965, %v7957
    %v8718 = vpack.c.b16 %v7966, %v7958
    %v8719 = vpack.c.b16 %v7967, %v7959
    %v8720 = vpack.c.b16 %v7968, %v7960
    %v8721 = vpack.c.b16 %v7969, %v7961
    %v8722 = vpack.c.b16 %v7970, %v7962
    %v8723 = vpack.c.b16 %v7971, %v7963
    %v8724 = vpack.c.b16 %v7972, %v7964
    %v8725 = vpack.c.b16 %v7981, %v7973
    %v8726 = vpack.c.b16 %v7982, %v7974
    %v8727 = vpack.c.b16 %v7983, %v7975
    %v8728 = vpack.c.b16 %v7984, %v7976
    %v8729 = vpack.c.b16 %v7985, %v7977
    %v8730 = vpack.c.b16 %v7986, %v7978
    %v8731 = vpack.c.b16 %v7987, %v7979
    %v8732 = vpack.c.b16 %v7988, %v7980
    %v8733 = vpack.c.b16 %v7997, %v7989
    %v8734 = vpack.c.b16 %v7998, %v7990
    %v8735 = vpack.c.b16 %v7999, %v7991
    %v8736 = vpack.c.b16 %v8000, %v7992
    %v8737 = vpack.c.b16 %v8001, %v7993
    %v8738 = vpack.c.b16 %v8002, %v7994
    %v8739 = vpack.c.b16 %v8003, %v7995
    %v8740 = vpack.c.b16 %v8004, %v7996
    %v8741 = vpack.c.b16 %v8013, %v8005
    %v8742 = vpack.c.b16 %v8014, %v8006
    %v8743 = vpack.c.b16 %v8015, %v8007
    %v8744 = vpack.c.b16 %v8016, %v8008
    %v8745 = vpack.c.b16 %v8017, %v8009
    %v8746 = vpack.c.b16 %v8018, %v8010
    %v8747 = vpack.c.b16 %v8019, %v8011
    %v8748 = vpack.c.b16 %v8020, %v8012
    %v8749 = vpack.c.b16 %v8029, %v8021
    %v8750 = vpack.c.b16 %v8030, %v8022
    %v8751 = vpack.c.b16 %v8031, %v8023
    %v8752 = vpack.c.b16 %v8032, %v8024
    %v8753 = vpack.c.b16 %v8033, %v8025
    %v8754 = vpack.c.b16 %v8034, %v8026
    %v8755 = vpack.c.b16 %v8035, %v8027
    %v8756 = vpack.c.b16 %v8036, %v8028
    %v8757 = vpack.c.b16 %v8045, %v8037
    %v8758 = vpack.c.b16 %v8046, %v8038
    %v8759 = vpack.c.b16 %v8047, %v8039
    %v8760 = vpack.c.b16 %v8048, %v8040
    %v8761 = vpack.c.b16 %v8049, %v8041
    %v8762 = vpack.c.b16 %v8050, %v8042
    %v8763 = vpack.c.b16 %v8051, %v8043
    %v8764 = vpack.c.b16 %v8052, %v8044
    %v8765 = vpack.c.b16 %v8061, %v8053
    %v8766 = vpack.c.b16 %v8062, %v8054
    %v8767 = vpack.c.b16 %v8063, %v8055
    %v8768 = vpack.c.b16 %v8064, %v8056
    %v8769 = vpack.c.b16 %v8065, %v8057
    %v8770 = vpack.c.b16 %v8066, %v8058
    %v8771 = vpack.c.b16 %v8067, %v8059
    %v8772 = vpack.c.b16 %v8068, %v8060
    %v8773 = vpack.c.b16 %v8077, %v8069
    %v8774 = vpack.c.b16 %v8078, %v8070
    %v8775 = vpack.c.b16 %v8079, %v8071
    %v8776 = vpack.c.b16 %v8080, %v8072
    %v8777 = vpack.c.b16 %v8081, %v8073
    %v8778 = vpack.c.b16 %v8082, %v8074
    %v8779 = vpack.c.b16 %v8083, %v8075
    %v8780 = vpack.c.b16 %v8084, %v8076
    %v8781 = vpack.c.b16 %v8093, %v8085
    %v8782 = vpack.c.b16 %v8094, %v8086
    %v8783 = vpack.c.b16 %v8095, %v8087
    %v8784 = vpack.c.b16 %v8096, %v8088
    %v8785 = vpack.c.b16 %v8097, %v8089
    %v8786 = vpack.c.b16 %v8098, %v8090
    %v8787 = vpack.c.b16 %v8099, %v8091
    %v8788 = vpack.c.b16 %v8100, %v8092
    %v8789 = vpack.c.b16 %v8109, %v8101
    %v8790 = vpack.c.b16 %v8110, %v8102
    %v8791 = vpack.c.b16 %v8111, %v8103
    %v8792 = vpack.c.b16 %v8112, %v8104
    %v8793 = vpack.c.b16 %v8113, %v8105
    %v8794 = vpack.c.b16 %v8114, %v8106
    %v8795 = vpack.c.b16 %v8115, %v8107
    %v8796 = vpack.c.b16 %v8116, %v8108
    %v8797 = vpack.c.b16 %v8125, %v8117
    %v8798 = vpack.c.b16 %v8126, %v8118
    %v8799 = vpack.c.b16 %v8127, %v8119
    %v8800 = vpack.c.b16 %v8128, %v8120
    %v8801 = vpack.c.b16 %v8129, %v8121
    %v8802 = vpack.c.b16 %v8130, %v8122
    %v8803 = vpack.c.b16 %v8131, %v8123
    %v8804 = vpack.c.b16 %v8132, %v8124
    %v8805 = vpack.c.b16 %v8141, %v8133
    %v8806 = vpack.c.b16 %v8142, %v8134
    %v8807 = vpack.c.b16 %v8143, %v8135
    %v8808 = vpack.c.b16 %v8144, %v8136
    %v8809 = vpack.c.b16 %v8145, %v8137
    %v8810 = vpack.c.b16 %v8146, %v8138
    %v8811 = vpack.c.b16 %v8147, %v8139
    %v8812 = vpack.c.b16 %v8148, %v8140
    %v8813 = vpack.c.b16 %v8157, %v8149
    %v8814 = vpack.c.b16 %v8158, %v8150
    %v8815 = vpack.c.b16 %v8159, %v8151
    %v8816 = vpack.c.b16 %v8160, %v8152
    %v8817 = vpack.c.b16 %v8161, %v8153
    %v8818 = vpack.c.b16 %v8162, %v8154
    %v8819 = vpack.c.b16 %v8163, %v8155
    %v8820 = vpack.c.b16 %v8164, %v8156
    %v8821 = vpack.c.b16 %v8173, %v8165
    %v8822 = vpack.c.b16 %v8174, %v8166
    %v8823 = vpack.c.b16 %v8175, %v8167
    %v8824 = vpack.c.b16 %v8176, %v8168
    %v8825 = vpack.c.b16 %v8177, %v8169
    %v8826 = vpack.c.b16 %v8178, %v8170
    %v8827 = vpack.c.b16 %v8179, %v8171
    %v8828 = vpack.c.b16 %v8180, %v8172
    %v8829 = vpack.c.b16 %v8189, %v8181
    %v8830 = vpack.c.b16 %v8190, %v8182
    %v8831 = vpack.c.b16 %v8191, %v8183
    %v8832 = vpack.c.b16 %v8192, %v8184
    %v8833 = vpack.c.b16 %v8193, %v8185
    %v8834 = vpack.c.b16 %v8194, %v8186
    %v8835 = vpack.c.b16 %v8195, %v8187
    %v8836 = vpack.c.b16 %v8196, %v8188
    %v8837 = vpack.c.b16 %v8205, %v8197
    %v8838 = vpack.c.b16 %v8206, %v8198
    %v8839 = vpack.c.b16 %v8207, %v8199
    %v8840 = vpack.c.b16 %v8208, %v8200
    %v8841 = vpack.c.b16 %v8209, %v8201
    %v8842 = vpack.c.b16 %v8210, %v8202
    %v8843 = vpack.c.b16 %v8211, %v8203
    %v8844 = vpack.c.b16 %v8212, %v8204
    %v8845 = vpack.c.b16 %v8221, %v8213
    %v8846 = vpack.c.b16 %v8222, %v8214
    %v8847 = vpack.c.b16 %v8223, %v8215
    %v8848 = vpack.c.b16 %v8224, %v8216
    %v8849 = vpack.c.b16 %v8225, %v8217
    %v8850 = vpack.c.b16 %v8226, %v8218
    %v8851 = vpack.c.b16 %v8227, %v8219
    %v8852 = vpack.c.b16 %v8228, %v8220
    %v8853 = vpack.c.b16 %v8237, %v8229
    %v8854 = vpack.c.b16 %v8238, %v8230
    %v8855 = vpack.c.b16 %v8239, %v8231
    %v8856 = vpack.c.b16 %v8240, %v8232
    %v8857 = vpack.c.b16 %v8241, %v8233
    %v8858 = vpack.c.b16 %v8242, %v8234
    %v8859 = vpack.c.b16 %v8243, %v8235
    %v8860 = vpack.c.b16 %v8244, %v8236
    %v8861 = vpack.c.b16 %v8253, %v8245
    %v8862 = vpack.c.b16 %v8254, %v8246
    %v8863 = vpack.c.b16 %v8255, %v8247
    %v8864 = vpack.c.b16 %v8256, %v8248
    %v8865 = vpack.c.b16 %v8257, %v8249
    %v8866 = vpack.c.b16 %v8258, %v8250
    %v8867 = vpack.c.b16 %v8259, %v8251
    %v8868 = vpack.c.b16 %v8260, %v8252
    %v8869 = vpack.c.b16 %v8269, %v8261
    %v8870 = vpack.c.b16 %v8270, %v8262
    %v8871 = vpack.c.b16 %v8271, %v8263
    %v8872 = vpack.c.b16 %v8272, %v8264
    %v8873 = vpack.c.b16 %v8273, %v8265
    %v8874 = vpack.c.b16 %v8274, %v8266
    %v8875 = vpack.c.b16 %v8275, %v8267
    %v8876 = vpack.c.b16 %v8276, %v8268
    %v8877 = vpack.c.b16 %v8285, %v8277
    %v8878 = vpack.c.b16 %v8286, %v8278
    %v8879 = vpack.c.b16 %v8287, %v8279
    %v8880 = vpack.c.b16 %v8288, %v8280
    %v8881 = vpack.c.b16 %v8289, %v8281
    %v8882 = vpack.c.b16 %v8290, %v8282
    %v8883 = vpack.c.b16 %v8291, %v8283
    %v8884 = vpack.c.b16 %v8292, %v8284
    %v8885 = vpack.c.b16 %v8301, %v8293
    %v8886 = vpack.c.b16 %v8302, %v8294
    %v8887 = vpack.c.b16 %v8303, %v8295
    %v8888 = vpack.c.b16 %v8304, %v8296
    %v8889 = vpack.c.b16 %v8305, %v8297
    %v8890 = vpack.c.b16 %v8306, %v8298
    %v8891 = vpack.c.b16 %v8307, %v8299
    %v8892 = vpack.c.b16 %v8308, %v8300
    %v8893 = vpack.c.b16 %v8317, %v8309
    %v8894 = vpack.c.b16 %v8318, %v8310
    %v8895 = vpack.c.b16 %v8319, %v8311
    %v8896 = vpack.c.b16 %v8320, %v8312
    %v8897 = vpack.c.b16 %v8321, %v8313
    %v8898 = vpack.c.b16 %v8322, %v8314
    %v8899 = vpack.c.b16 %v8323, %v8315
    %v8900 = vpack.c.b16 %v8324, %v8316
    %v8901 = vpack.c.b16 %v8333, %v8325
    %v8902 = vpack.c.b16 %v8334, %v8326
    %v8903 = vpack.c.b16 %v8335, %v8327
    %v8904 = vpack.c.b16 %v8336, %v8328
    %v8905 = vpack.c.b16 %v8337, %v8329
    %v8906 = vpack.c.b16 %v8338, %v8330
    %v8907 = vpack.c.b16 %v8339, %v8331
    %v8908 = vpack.c.b16 %v8340, %v8332
    %v8909 = vpack.c.b16 %v8349, %v8341
    %v8910 = vpack.c.b16 %v8350, %v8342
    %v8911 = vpack.c.b16 %v8351, %v8343
    %v8912 = vpack.c.b16 %v8352, %v8344
    %v8913 = vpack.c.b16 %v8353, %v8345
    %v8914 = vpack.c.b16 %v8354, %v8346
    %v8915 = vpack.c.b16 %v8355, %v8347
    %v8916 = vpack.c.b16 %v8356, %v8348
    %v8917 = vpack.c.b16 %v8365, %v8357
    %v8918 = vpack.c.b16 %v8366, %v8358
    %v8919 = vpack.c.b16 %v8367, %v8359
    %v8920 = vpack.c.b16 %v8368, %v8360
    %v8921 = vpack.c.b16 %v8369, %v8361
    %v8922 = vpack.c.b16 %v8370, %v8362
    %v8923 = vpack.c.b16 %v8371, %v8363
    %v8924 = vpack.c.b16 %v8372, %v8364
    %v8925 = vpack.c.b16 %v8381, %v8373
    %v8926 = vpack.c.b16 %v8382, %v8374
    %v8927 = vpack.c.b16 %v8383, %v8375
    %v8928 = vpack.c.b16 %v8384, %v8376
    %v8929 = vpack.c.b16 %v8385, %v8377
    %v8930 = vpack.c.b16 %v8386, %v8378
    %v8931 = vpack.c.b16 %v8387, %v8379
    %v8932 = vpack.c.b16 %v8388, %v8380
    %v8933 = vpack.c.b16 %v8397, %v8389
    %v8934 = vpack.c.b16 %v8398, %v8390
    %v8935 = vpack.c.b16 %v8399, %v8391
    %v8936 = vpack.c.b16 %v8400, %v8392
    %v8937 = vpack.c.b16 %v8401, %v8393
    %v8938 = vpack.c.b16 %v8402, %v8394
    %v8939 = vpack.c.b16 %v8403, %v8395
    %v8940 = vpack.c.b16 %v8404, %v8396
    %v8941 = vpack.c.b16 %v8413, %v8405
    %v8942 = vpack.c.b16 %v8414, %v8406
    %v8943 = vpack.c.b16 %v8415, %v8407
    %v8944 = vpack.c.b16 %v8416, %v8408
    %v8945 = vpack.c.b16 %v8417, %v8409
    %v8946 = vpack.c.b16 %v8418, %v8410
    %v8947 = vpack.c.b16 %v8419, %v8411
    %v8948 = vpack.c.b16 %v8420, %v8412
    %v8949 = vpack.c.b16 %v8429, %v8421
    %v8950 = vpack.c.b16 %v8430, %v8422
    %v8951 = vpack.c.b16 %v8431, %v8423
    %v8952 = vpack.c.b16 %v8432, %v8424
    %v8953 = vpack.c.b16 %v8433, %v8425
    %v8954 = vpack.c.b16 %v8434, %v8426
    %v8955 = vpack.c.b16 %v8435, %v8427
    %v8956 = vpack.c.b16 %v8436, %v8428
    %v8957 = vpack.c.b16 %v8445, %v8437
    %v8958 = vpack.c.b16 %v8446, %v8438
    %v8959 = vpack.c.b16 %v8447, %v8439
    %v8960 = vpack.c.b16 %v8448, %v8440
    %v8961 = vpack.c.b16 %v8449, %v8441
    %v8962 = vpack.c.b16 %v8450, %v8442
    %v8963 = vpack.c.b16 %v8451, %v8443
    %v8964 = vpack.c.b16 %v8452, %v8444
    %9477 = vmatprep.subr.bf16.mxu0 %v8510
    %9478 = vmatpush1.bf16.msra.mxu0 %v8509
    %9479 = vmatprep.subr.bf16.mxu0 %v8502
    %9480 = vmatpush1.bf16.msra.mxu0 %v8501
    %9481 = vmatprep.subr.bf16.mxu0 %v8494
    %9482 = vmatpush1.bf16.msra.mxu0 %v8493
    %9483 = vmatprep.subr.bf16.mxu0 %v8486
    %9484 = vmatpush1.bf16.msra.mxu0 %v8485
    %9485 = vmatprep.subr.bf16.mxu0 %v8478
    %9486 = vmatpush1.bf16.msra.mxu0 %v8477
    %9487 = vmatprep.subr.bf16.mxu0 %v8470
    %9488 = vmatpush1.bf16.msra.mxu0 %v8469
    %9489 = vmatprep.subr.bf16.mxu0 %v8462
    %9490 = vmatpush1.bf16.msra.mxu0 %v8461
    %9491 = vmatprep.subr.bf16.mxu0 %v8454
    %9492 = vmatpush1.bf16.msra.mxu0 %v8453
    %9493 = vmatprep.subr.bf16.mxu0 %v8574
    %9494 = vmatpush2.bf16.msra.mxu0 %v8573
    %9495 = vmatprep.subr.bf16.mxu0 %v8566
    %9496 = vmatpush2.bf16.msra.mxu0 %v8565
    %9497 = vmatprep.subr.bf16.mxu0 %v8558
    %9498 = vmatpush2.bf16.msra.mxu0 %v8557
    %9499 = vmatprep.subr.bf16.mxu0 %v8550
    %9500 = vmatpush2.bf16.msra.mxu0 %v8549
    %9501 = vmatprep.subr.bf16.mxu0 %v8542
    %9502 = vmatpush2.bf16.msra.mxu0 %v8541
    %9503 = vmatprep.subr.bf16.mxu0 %v8534
    %9504 = vmatpush2.bf16.msra.mxu0 %v8533
    %9505 = vmatprep.subr.bf16.mxu0 %v8526
    %9506 = vmatpush2.bf16.msra.mxu0 %v8525
    %9507 = vmatprep.subr.bf16.mxu0 %v8518
    %9508 = vmatpush2.bf16.msra.mxu0 %v8517
    %9509 = vmatprep.mubr.bf16.mxu0 %v6349
    %9510 = vmatmul.mubr.bf16.gmra.mxu0 %v6348
    %v9511 = vpop.f32.mrf.mxu0
    %v9512 = vadd.f32 %v6880, %v9511
    %v9513 = vpop.f32.mrf.mxu0
    %v9514 = vadd.f32 %v6884, %v9513
    %v9515 = vpop.f32.mrf.mxu0
    %v9516 = vpop.f32.mrf.mxu0
    %9517 = vdwg.mxu0
    %9518 = vmatprep.subr.bf16.mxu0 %v8638
    %9519 = vmatpush1.bf16.msra.mxu0 %v8637
    %9520 = vmatprep.subr.bf16.mxu0 %v8630
    %9521 = vmatpush1.bf16.msra.mxu0 %v8629
    %9522 = vmatprep.subr.bf16.mxu0 %v8622
    %9523 = vmatpush1.bf16.msra.mxu0 %v8621
    %9524 = vmatprep.subr.bf16.mxu0 %v8614
    %9525 = vmatpush1.bf16.msra.mxu0 %v8613
    %9526 = vmatprep.subr.bf16.mxu0 %v8606
    %9527 = vmatpush1.bf16.msra.mxu0 %v8605
    %9528 = vmatprep.subr.bf16.mxu0 %v8598
    %9529 = vmatpush1.bf16.msra.mxu0 %v8597
    %9530 = vmatprep.subr.bf16.mxu0 %v8590
    %9531 = vmatpush1.bf16.msra.mxu0 %v8589
    %9532 = vmatprep.subr.bf16.mxu0 %v8582
    %9533 = vmatpush1.bf16.msra.mxu0 %v8581
    %9534 = vmatprep.subr.bf16.mxu0 %v8702
    %9535 = vmatpush2.bf16.msra.mxu0 %v8701
    %9536 = vmatprep.subr.bf16.mxu0 %v8694
    %9537 = vmatpush2.bf16.msra.mxu0 %v8693
    %9538 = vmatprep.subr.bf16.mxu0 %v8686
    %9539 = vmatpush2.bf16.msra.mxu0 %v8685
    %9540 = vmatprep.subr.bf16.mxu0 %v8678
    %9541 = vmatpush2.bf16.msra.mxu0 %v8677
    %9542 = vmatprep.subr.bf16.mxu0 %v8670
    %9543 = vmatpush2.bf16.msra.mxu0 %v8669
    %9544 = vmatprep.subr.bf16.mxu0 %v8662
    %9545 = vmatpush2.bf16.msra.mxu0 %v8661
    %9546 = vmatprep.subr.bf16.mxu0 %v8654
    %9547 = vmatpush2.bf16.msra.mxu0 %v8653
    %9548 = vmatprep.subr.bf16.mxu0 %v8646
    %9549 = vmatpush2.bf16.msra.mxu0 %v8645
    %9550 = vmatprep.mubr.bf16.mxu0 %v6351
    %9551 = vmatmul.mubr.bf16.gmra.mxu0 %v6350
    %v9552 = vpop.f32.mrf.mxu0
    %v9553 = vadd.f32 %v9512, %v9552
    %v9554 = vpop.f32.mrf.mxu0
    %v9555 = vadd.f32 %v9514, %v9554
    %v9556 = vpop.f32.mrf.mxu0
    %v9557 = vpop.f32.mrf.mxu0
    %9558 = vdwg.mxu0
    %9559 = vmatprep.subr.bf16.mxu0 %v8766
    %9560 = vmatpush1.bf16.msra.mxu0 %v8765
    %9561 = vmatprep.subr.bf16.mxu0 %v8758
    %9562 = vmatpush1.bf16.msra.mxu0 %v8757
    %9563 = vmatprep.subr.bf16.mxu0 %v8750
    %9564 = vmatpush1.bf16.msra.mxu0 %v8749
    %9565 = vmatprep.subr.bf16.mxu0 %v8742
    %9566 = vmatpush1.bf16.msra.mxu0 %v8741
    %9567 = vmatprep.subr.bf16.mxu0 %v8734
    %9568 = vmatpush1.bf16.msra.mxu0 %v8733
    %9569 = vmatprep.subr.bf16.mxu0 %v8726
    %9570 = vmatpush1.bf16.msra.mxu0 %v8725
    %9571 = vmatprep.subr.bf16.mxu0 %v8718
    %9572 = vmatpush1.bf16.msra.mxu0 %v8717
    %9573 = vmatprep.subr.bf16.mxu0 %v8710
    %9574 = vmatpush1.bf16.msra.mxu0 %v8709
    %9575 = vmatprep.subr.bf16.mxu0 %v8830
    %9576 = vmatpush2.bf16.msra.mxu0 %v8829
    %9577 = vmatprep.subr.bf16.mxu0 %v8822
    %9578 = vmatpush2.bf16.msra.mxu0 %v8821
    %9579 = vmatprep.subr.bf16.mxu0 %v8814
    %9580 = vmatpush2.bf16.msra.mxu0 %v8813
    %9581 = vmatprep.subr.bf16.mxu0 %v8806
    %9582 = vmatpush2.bf16.msra.mxu0 %v8805
    %9583 = vmatprep.subr.bf16.mxu0 %v8798
    %9584 = vmatpush2.bf16.msra.mxu0 %v8797
    %9585 = vmatprep.subr.bf16.mxu0 %v8790
    %9586 = vmatpush2.bf16.msra.mxu0 %v8789
    %9587 = vmatprep.subr.bf16.mxu0 %v8782
    %9588 = vmatpush2.bf16.msra.mxu0 %v8781
    %9589 = vmatprep.subr.bf16.mxu0 %v8774
    %9590 = vmatpush2.bf16.msra.mxu0 %v8773
    %9591 = vmatprep.mubr.bf16.mxu0 %v6353
    %9592 = vmatmul.mubr.bf16.gmra.mxu0 %v6352
    %v9593 = vpop.f32.mrf.mxu0
    %v9594 = vadd.f32 %v9553, %v9593
    %v9595 = vpop.f32.mrf.mxu0
    %v9596 = vadd.f32 %v9555, %v9595
    %v9597 = vpop.f32.mrf.mxu0
    %v9598 = vpop.f32.mrf.mxu0
    %9599 = vdwg.mxu0
    %9600 = vmatprep.subr.bf16.mxu0 %v8894
    %9601 = vmatpush1.bf16.msra.mxu0 %v8893
    %9602 = vmatprep.subr.bf16.mxu0 %v8886
    %9603 = vmatpush1.bf16.msra.mxu0 %v8885
    %9604 = vmatprep.subr.bf16.mxu0 %v8878
    %9605 = vmatpush1.bf16.msra.mxu0 %v8877
    %9606 = vmatprep.subr.bf16.mxu0 %v8870
    %9607 = vmatpush1.bf16.msra.mxu0 %v8869
    %9608 = vmatprep.subr.bf16.mxu0 %v8862
    %9609 = vmatpush1.bf16.msra.mxu0 %v8861
    %9610 = vmatprep.subr.bf16.mxu0 %v8854
    %9611 = vmatpush1.bf16.msra.mxu0 %v8853
    %9612 = vmatprep.subr.bf16.mxu0 %v8846
    %9613 = vmatpush1.bf16.msra.mxu0 %v8845
    %9614 = vmatprep.subr.bf16.mxu0 %v8838
    %9615 = vmatpush1.bf16.msra.mxu0 %v8837
    %9616 = vmatprep.subr.bf16.mxu0 %v8958
    %9617 = vmatpush2.bf16.msra.mxu0 %v8957
    %9618 = vmatprep.subr.bf16.mxu0 %v8950
    %9619 = vmatpush2.bf16.msra.mxu0 %v8949
    %9620 = vmatprep.subr.bf16.mxu0 %v8942
    %9621 = vmatpush2.bf16.msra.mxu0 %v8941
    %9622 = vmatprep.subr.bf16.mxu0 %v8934
    %9623 = vmatpush2.bf16.msra.mxu0 %v8933
    %9624 = vmatprep.subr.bf16.mxu0 %v8926
    %9625 = vmatpush2.bf16.msra.mxu0 %v8925
    %9626 = vmatprep.subr.bf16.mxu0 %v8918
    %9627 = vmatpush2.bf16.msra.mxu0 %v8917
    %9628 = vmatprep.subr.bf16.mxu0 %v8910
    %9629 = vmatpush2.bf16.msra.mxu0 %v8909
    %9630 = vmatprep.subr.bf16.mxu0 %v8902
    %9631 = vmatpush2.bf16.msra.mxu0 %v8901
    %9632 = vmatprep.mubr.bf16.mxu0 %v6355
    %9633 = vmatmul.mubr.bf16.gmra.mxu0 %v6354
    %v9634 = vpop.f32.mrf.mxu0
    %v9635 = vadd.f32 %v9594, %v9634
    %v9636 = vpop.f32.mrf.mxu0
    %v9637 = vadd.f32 %v9596, %v9636
    %v9638 = vpop.f32.mrf.mxu0
    %v9639 = vpop.f32.mrf.mxu0
    %9640 = vdwg.mxu0
    %9641 = vmatprep.subr.bf16.mxu0 %v8512
    %9642 = vmatpush1.bf16.msra.mxu0 %v8511
    %9643 = vmatprep.subr.bf16.mxu0 %v8504
    %9644 = vmatpush1.bf16.msra.mxu0 %v8503
    %9645 = vmatprep.subr.bf16.mxu0 %v8496
    %9646 = vmatpush1.bf16.msra.mxu0 %v8495
    %9647 = vmatprep.subr.bf16.mxu0 %v8488
    %9648 = vmatpush1.bf16.msra.mxu0 %v8487
    %9649 = vmatprep.subr.bf16.mxu0 %v8480
    %9650 = vmatpush1.bf16.msra.mxu0 %v8479
    %9651 = vmatprep.subr.bf16.mxu0 %v8472
    %9652 = vmatpush1.bf16.msra.mxu0 %v8471
    %9653 = vmatprep.subr.bf16.mxu0 %v8464
    %9654 = vmatpush1.bf16.msra.mxu0 %v8463
    %9655 = vmatprep.subr.bf16.mxu0 %v8456
    %9656 = vmatpush1.bf16.msra.mxu0 %v8455
    %9657 = vmatprep.subr.bf16.mxu0 %v8576
    %9658 = vmatpush2.bf16.msra.mxu0 %v8575
    %9659 = vmatprep.subr.bf16.mxu0 %v8568
    %9660 = vmatpush2.bf16.msra.mxu0 %v8567
    %9661 = vmatprep.subr.bf16.mxu0 %v8560
    %9662 = vmatpush2.bf16.msra.mxu0 %v8559
    %9663 = vmatprep.subr.bf16.mxu0 %v8552
    %9664 = vmatpush2.bf16.msra.mxu0 %v8551
    %9665 = vmatprep.subr.bf16.mxu0 %v8544
    %9666 = vmatpush2.bf16.msra.mxu0 %v8543
    %9667 = vmatprep.subr.bf16.mxu0 %v8536
    %9668 = vmatpush2.bf16.msra.mxu0 %v8535
    %9669 = vmatprep.subr.bf16.mxu0 %v8528
    %9670 = vmatpush2.bf16.msra.mxu0 %v8527
    %9671 = vmatprep.subr.bf16.mxu0 %v8520
    %9672 = vmatpush2.bf16.msra.mxu0 %v8519
    %9673 = vmatprep.mubr.bf16.mxu0 %v6349
    %9674 = vmatmul.mubr.bf16.gmra.mxu0 %v6348
    %v9675 = vpop.f32.mrf.mxu0
    %v9676 = vadd.f32 %v6888, %v9675
    %v9677 = vpop.f32.mrf.mxu0
    %v9678 = vadd.f32 %v6892, %v9677
    %v9679 = vpop.f32.mrf.mxu0
    %v9680 = vpop.f32.mrf.mxu0
    %9681 = vdwg.mxu0
    %9682 = vmatprep.subr.bf16.mxu0 %v8640
    %9683 = vmatpush1.bf16.msra.mxu0 %v8639
    %9684 = vmatprep.subr.bf16.mxu0 %v8632
    %9685 = vmatpush1.bf16.msra.mxu0 %v8631
    %9686 = vmatprep.subr.bf16.mxu0 %v8624
    %9687 = vmatpush1.bf16.msra.mxu0 %v8623
    %9688 = vmatprep.subr.bf16.mxu0 %v8616
    %9689 = vmatpush1.bf16.msra.mxu0 %v8615
    %9690 = vmatprep.subr.bf16.mxu0 %v8608
    %9691 = vmatpush1.bf16.msra.mxu0 %v8607
    %9692 = vmatprep.subr.bf16.mxu0 %v8600
    %9693 = vmatpush1.bf16.msra.mxu0 %v8599
    %9694 = vmatprep.subr.bf16.mxu0 %v8592
    %9695 = vmatpush1.bf16.msra.mxu0 %v8591
    %9696 = vmatprep.subr.bf16.mxu0 %v8584
    %9697 = vmatpush1.bf16.msra.mxu0 %v8583
    %9698 = vmatprep.subr.bf16.mxu0 %v8704
    %9699 = vmatpush2.bf16.msra.mxu0 %v8703
    %9700 = vmatprep.subr.bf16.mxu0 %v8696
    %9701 = vmatpush2.bf16.msra.mxu0 %v8695
    %9702 = vmatprep.subr.bf16.mxu0 %v8688
    %9703 = vmatpush2.bf16.msra.mxu0 %v8687
    %9704 = vmatprep.subr.bf16.mxu0 %v8680
    %9705 = vmatpush2.bf16.msra.mxu0 %v8679
    %9706 = vmatprep.subr.bf16.mxu0 %v8672
    %9707 = vmatpush2.bf16.msra.mxu0 %v8671
    %9708 = vmatprep.subr.bf16.mxu0 %v8664
    %9709 = vmatpush2.bf16.msra.mxu0 %v8663
    %9710 = vmatprep.subr.bf16.mxu0 %v8656
    %9711 = vmatpush2.bf16.msra.mxu0 %v8655
    %9712 = vmatprep.subr.bf16.mxu0 %v8648
    %9713 = vmatpush2.bf16.msra.mxu0 %v8647
    %9714 = vmatprep.mubr.bf16.mxu0 %v6351
    %9715 = vmatmul.mubr.bf16.gmra.mxu0 %v6350
    %v9716 = vpop.f32.mrf.mxu0
    %v9717 = vadd.f32 %v9676, %v9716
    %v9718 = vpop.f32.mrf.mxu0
    %v9719 = vadd.f32 %v9678, %v9718
    %v9720 = vpop.f32.mrf.mxu0
    %v9721 = vpop.f32.mrf.mxu0
    %9722 = vdwg.mxu0
    %9723 = vmatprep.subr.bf16.mxu0 %v8768
    %9724 = vmatpush1.bf16.msra.mxu0 %v8767
    %9725 = vmatprep.subr.bf16.mxu0 %v8760
    %9726 = vmatpush1.bf16.msra.mxu0 %v8759
    %9727 = vmatprep.subr.bf16.mxu0 %v8752
    %9728 = vmatpush1.bf16.msra.mxu0 %v8751
    %9729 = vmatprep.subr.bf16.mxu0 %v8744
    %9730 = vmatpush1.bf16.msra.mxu0 %v8743
    %9731 = vmatprep.subr.bf16.mxu0 %v8736
    %9732 = vmatpush1.bf16.msra.mxu0 %v8735
    %9733 = vmatprep.subr.bf16.mxu0 %v8728
    %9734 = vmatpush1.bf16.msra.mxu0 %v8727
    %9735 = vmatprep.subr.bf16.mxu0 %v8720
    %9736 = vmatpush1.bf16.msra.mxu0 %v8719
    %9737 = vmatprep.subr.bf16.mxu0 %v8712
    %9738 = vmatpush1.bf16.msra.mxu0 %v8711
    %9739 = vmatprep.subr.bf16.mxu0 %v8832
    %9740 = vmatpush2.bf16.msra.mxu0 %v8831
    %9741 = vmatprep.subr.bf16.mxu0 %v8824
    %9742 = vmatpush2.bf16.msra.mxu0 %v8823
    %9743 = vmatprep.subr.bf16.mxu0 %v8816
    %9744 = vmatpush2.bf16.msra.mxu0 %v8815
    %9745 = vmatprep.subr.bf16.mxu0 %v8808
    %9746 = vmatpush2.bf16.msra.mxu0 %v8807
    %9747 = vmatprep.subr.bf16.mxu0 %v8800
    %9748 = vmatpush2.bf16.msra.mxu0 %v8799
    %9749 = vmatprep.subr.bf16.mxu0 %v8792
    %9750 = vmatpush2.bf16.msra.mxu0 %v8791
    %9751 = vmatprep.subr.bf16.mxu0 %v8784
    %9752 = vmatpush2.bf16.msra.mxu0 %v8783
    %9753 = vmatprep.subr.bf16.mxu0 %v8776
    %9754 = vmatpush2.bf16.msra.mxu0 %v8775
    %9755 = vmatprep.mubr.bf16.mxu0 %v6353
    %9756 = vmatmul.mubr.bf16.gmra.mxu0 %v6352
    %v9757 = vpop.f32.mrf.mxu0
    %v9758 = vadd.f32 %v9717, %v9757
    %v9759 = vpop.f32.mrf.mxu0
    %v9760 = vadd.f32 %v9719, %v9759
    %v9761 = vpop.f32.mrf.mxu0
    %v9762 = vpop.f32.mrf.mxu0
    %9763 = vdwg.mxu0
    %9764 = vmatprep.subr.bf16.mxu0 %v8896
    %9765 = vmatpush1.bf16.msra.mxu0 %v8895
    %9766 = vmatprep.subr.bf16.mxu0 %v8888
    %9767 = vmatpush1.bf16.msra.mxu0 %v8887
    %9768 = vmatprep.subr.bf16.mxu0 %v8880
    %9769 = vmatpush1.bf16.msra.mxu0 %v8879
    %9770 = vmatprep.subr.bf16.mxu0 %v8872
    %9771 = vmatpush1.bf16.msra.mxu0 %v8871
    %9772 = vmatprep.subr.bf16.mxu0 %v8864
    %9773 = vmatpush1.bf16.msra.mxu0 %v8863
    %9774 = vmatprep.subr.bf16.mxu0 %v8856
    %9775 = vmatpush1.bf16.msra.mxu0 %v8855
    %9776 = vmatprep.subr.bf16.mxu0 %v8848
    %9777 = vmatpush1.bf16.msra.mxu0 %v8847
    %9778 = vmatprep.subr.bf16.mxu0 %v8840
    %9779 = vmatpush1.bf16.msra.mxu0 %v8839
    %9780 = vmatprep.subr.bf16.mxu0 %v8960
    %9781 = vmatpush2.bf16.msra.mxu0 %v8959
    %9782 = vmatprep.subr.bf16.mxu0 %v8952
    %9783 = vmatpush2.bf16.msra.mxu0 %v8951
    %9784 = vmatprep.subr.bf16.mxu0 %v8944
    %9785 = vmatpush2.bf16.msra.mxu0 %v8943
    %9786 = vmatprep.subr.bf16.mxu0 %v8936
    %9787 = vmatpush2.bf16.msra.mxu0 %v8935
    %9788 = vmatprep.subr.bf16.mxu0 %v8928
    %9789 = vmatpush2.bf16.msra.mxu0 %v8927
    %9790 = vmatprep.subr.bf16.mxu0 %v8920
    %9791 = vmatpush2.bf16.msra.mxu0 %v8919
    %9792 = vmatprep.subr.bf16.mxu0 %v8912
    %9793 = vmatpush2.bf16.msra.mxu0 %v8911
    %9794 = vmatprep.subr.bf16.mxu0 %v8904
    %9795 = vmatpush2.bf16.msra.mxu0 %v8903
    %9796 = vmatprep.mubr.bf16.mxu0 %v6355
    %9797 = vmatmul.mubr.bf16.gmra.mxu0 %v6354
    %v9798 = vpop.f32.mrf.mxu0
    %v9799 = vadd.f32 %v9758, %v9798
    %v9800 = vpop.f32.mrf.mxu0
    %v9801 = vadd.f32 %v9760, %v9800
    %v9802 = vpop.f32.mrf.mxu0
    %v9803 = vpop.f32.mrf.mxu0
    %9804 = vdwg.mxu0
    %9805 = vmatprep.subr.bf16.mxu0 %v8514
    %9806 = vmatpush1.bf16.msra.mxu0 %v8513
    %9807 = vmatprep.subr.bf16.mxu0 %v8506
    %9808 = vmatpush1.bf16.msra.mxu0 %v8505
    %9809 = vmatprep.subr.bf16.mxu0 %v8498
    %9810 = vmatpush1.bf16.msra.mxu0 %v8497
    %9811 = vmatprep.subr.bf16.mxu0 %v8490
    %9812 = vmatpush1.bf16.msra.mxu0 %v8489
    %9813 = vmatprep.subr.bf16.mxu0 %v8482
    %9814 = vmatpush1.bf16.msra.mxu0 %v8481
    %9815 = vmatprep.subr.bf16.mxu0 %v8474
    %9816 = vmatpush1.bf16.msra.mxu0 %v8473
    %9817 = vmatprep.subr.bf16.mxu0 %v8466
    %9818 = vmatpush1.bf16.msra.mxu0 %v8465
    %9819 = vmatprep.subr.bf16.mxu0 %v8458
    %9820 = vmatpush1.bf16.msra.mxu0 %v8457
    %9821 = vmatprep.subr.bf16.mxu0 %v8578
    %9822 = vmatpush2.bf16.msra.mxu0 %v8577
    %9823 = vmatprep.subr.bf16.mxu0 %v8570
    %9824 = vmatpush2.bf16.msra.mxu0 %v8569
    %9825 = vmatprep.subr.bf16.mxu0 %v8562
    %9826 = vmatpush2.bf16.msra.mxu0 %v8561
    %9827 = vmatprep.subr.bf16.mxu0 %v8554
    %9828 = vmatpush2.bf16.msra.mxu0 %v8553
    %9829 = vmatprep.subr.bf16.mxu0 %v8546
    %9830 = vmatpush2.bf16.msra.mxu0 %v8545
    %9831 = vmatprep.subr.bf16.mxu0 %v8538
    %9832 = vmatpush2.bf16.msra.mxu0 %v8537
    %9833 = vmatprep.subr.bf16.mxu0 %v8530
    %9834 = vmatpush2.bf16.msra.mxu0 %v8529
    %9835 = vmatprep.subr.bf16.mxu0 %v8522
    %9836 = vmatpush2.bf16.msra.mxu0 %v8521
    %9837 = vmatprep.mubr.bf16.mxu0 %v6349
    %9838 = vmatmul.mubr.bf16.gmra.mxu0 %v6348
    %v9839 = vpop.f32.mrf.mxu0
    %v9840 = vadd.f32 %v6896, %v9839
    %v9841 = vpop.f32.mrf.mxu0
    %v9842 = vadd.f32 %v6900, %v9841
    %v9843 = vpop.f32.mrf.mxu0
    %v9844 = vpop.f32.mrf.mxu0
    %9845 = vdwg.mxu0
    %9846 = vmatprep.subr.bf16.mxu0 %v8642
    %9847 = vmatpush1.bf16.msra.mxu0 %v8641
    %9848 = vmatprep.subr.bf16.mxu0 %v8634
    %9849 = vmatpush1.bf16.msra.mxu0 %v8633
    %9850 = vmatprep.subr.bf16.mxu0 %v8626
    %9851 = vmatpush1.bf16.msra.mxu0 %v8625
    %9852 = vmatprep.subr.bf16.mxu0 %v8618
    %9853 = vmatpush1.bf16.msra.mxu0 %v8617
    %9854 = vmatprep.subr.bf16.mxu0 %v8610
    %9855 = vmatpush1.bf16.msra.mxu0 %v8609
    %9856 = vmatprep.subr.bf16.mxu0 %v8602
    %9857 = vmatpush1.bf16.msra.mxu0 %v8601
    %9858 = vmatprep.subr.bf16.mxu0 %v8594
    %9859 = vmatpush1.bf16.msra.mxu0 %v8593
    %9860 = vmatprep.subr.bf16.mxu0 %v8586
    %9861 = vmatpush1.bf16.msra.mxu0 %v8585
    %9862 = vmatprep.subr.bf16.mxu0 %v8706
    %9863 = vmatpush2.bf16.msra.mxu0 %v8705
    %9864 = vmatprep.subr.bf16.mxu0 %v8698
    %9865 = vmatpush2.bf16.msra.mxu0 %v8697
    %9866 = vmatprep.subr.bf16.mxu0 %v8690
    %9867 = vmatpush2.bf16.msra.mxu0 %v8689
    %9868 = vmatprep.subr.bf16.mxu0 %v8682
    %9869 = vmatpush2.bf16.msra.mxu0 %v8681
    %9870 = vmatprep.subr.bf16.mxu0 %v8674
    %9871 = vmatpush2.bf16.msra.mxu0 %v8673
    %9872 = vmatprep.subr.bf16.mxu0 %v8666
    %9873 = vmatpush2.bf16.msra.mxu0 %v8665
    %9874 = vmatprep.subr.bf16.mxu0 %v8658
    %9875 = vmatpush2.bf16.msra.mxu0 %v8657
    %9876 = vmatprep.subr.bf16.mxu0 %v8650
    %9877 = vmatpush2.bf16.msra.mxu0 %v8649
    %9878 = vmatprep.mubr.bf16.mxu0 %v6351
    %9879 = vmatmul.mubr.bf16.gmra.mxu0 %v6350
    %v9880 = vpop.f32.mrf.mxu0
    %v9881 = vadd.f32 %v9840, %v9880
    %v9882 = vpop.f32.mrf.mxu0
    %v9883 = vadd.f32 %v9842, %v9882
    %v9884 = vpop.f32.mrf.mxu0
    %v9885 = vpop.f32.mrf.mxu0
    %9886 = vdwg.mxu0
    %9887 = vmatprep.subr.bf16.mxu0 %v8770
    %9888 = vmatpush1.bf16.msra.mxu0 %v8769
    %9889 = vmatprep.subr.bf16.mxu0 %v8762
    %9890 = vmatpush1.bf16.msra.mxu0 %v8761
    %9891 = vmatprep.subr.bf16.mxu0 %v8754
    %9892 = vmatpush1.bf16.msra.mxu0 %v8753
    %9893 = vmatprep.subr.bf16.mxu0 %v8746
    %9894 = vmatpush1.bf16.msra.mxu0 %v8745
    %9895 = vmatprep.subr.bf16.mxu0 %v8738
    %9896 = vmatpush1.bf16.msra.mxu0 %v8737
    %9897 = vmatprep.subr.bf16.mxu0 %v8730
    %9898 = vmatpush1.bf16.msra.mxu0 %v8729
    %9899 = vmatprep.subr.bf16.mxu0 %v8722
    %9900 = vmatpush1.bf16.msra.mxu0 %v8721
    %9901 = vmatprep.subr.bf16.mxu0 %v8714
    %9902 = vmatpush1.bf16.msra.mxu0 %v8713
    %9903 = vmatprep.subr.bf16.mxu0 %v8834
    %9904 = vmatpush2.bf16.msra.mxu0 %v8833
    %9905 = vmatprep.subr.bf16.mxu0 %v8826
    %9906 = vmatpush2.bf16.msra.mxu0 %v8825
    %9907 = vmatprep.subr.bf16.mxu0 %v8818
    %9908 = vmatpush2.bf16.msra.mxu0 %v8817
    %9909 = vmatprep.subr.bf16.mxu0 %v8810
    %9910 = vmatpush2.bf16.msra.mxu0 %v8809
    %9911 = vmatprep.subr.bf16.mxu0 %v8802
    %9912 = vmatpush2.bf16.msra.mxu0 %v8801
    %9913 = vmatprep.subr.bf16.mxu0 %v8794
    %9914 = vmatpush2.bf16.msra.mxu0 %v8793
    %9915 = vmatprep.subr.bf16.mxu0 %v8786
    %9916 = vmatpush2.bf16.msra.mxu0 %v8785
    %9917 = vmatprep.subr.bf16.mxu0 %v8778
    %9918 = vmatpush2.bf16.msra.mxu0 %v8777
    %9919 = vmatprep.mubr.bf16.mxu0 %v6353
    %9920 = vmatmul.mubr.bf16.gmra.mxu0 %v6352
    %v9921 = vpop.f32.mrf.mxu0
    %v9922 = vadd.f32 %v9881, %v9921
    %v9923 = vpop.f32.mrf.mxu0
    %v9924 = vadd.f32 %v9883, %v9923
    %v9925 = vpop.f32.mrf.mxu0
    %v9926 = vpop.f32.mrf.mxu0
    %9927 = vdwg.mxu0
    %9928 = vmatprep.subr.bf16.mxu0 %v8898
    %9929 = vmatpush1.bf16.msra.mxu0 %v8897
    %9930 = vmatprep.subr.bf16.mxu0 %v8890
    %9931 = vmatpush1.bf16.msra.mxu0 %v8889
    %9932 = vmatprep.subr.bf16.mxu0 %v8882
    %9933 = vmatpush1.bf16.msra.mxu0 %v8881
    %9934 = vmatprep.subr.bf16.mxu0 %v8874
    %9935 = vmatpush1.bf16.msra.mxu0 %v8873
    %9936 = vmatprep.subr.bf16.mxu0 %v8866
    %9937 = vmatpush1.bf16.msra.mxu0 %v8865
    %9938 = vmatprep.subr.bf16.mxu0 %v8858
    %9939 = vmatpush1.bf16.msra.mxu0 %v8857
    %9940 = vmatprep.subr.bf16.mxu0 %v8850
    %9941 = vmatpush1.bf16.msra.mxu0 %v8849
    %9942 = vmatprep.subr.bf16.mxu0 %v8842
    %9943 = vmatpush1.bf16.msra.mxu0 %v8841
    %9944 = vmatprep.subr.bf16.mxu0 %v8962
    %9945 = vmatpush2.bf16.msra.mxu0 %v8961
    %9946 = vmatprep.subr.bf16.mxu0 %v8954
    %9947 = vmatpush2.bf16.msra.mxu0 %v8953
    %9948 = vmatprep.subr.bf16.mxu0 %v8946
    %9949 = vmatpush2.bf16.msra.mxu0 %v8945
    %9950 = vmatprep.subr.bf16.mxu0 %v8938
    %9951 = vmatpush2.bf16.msra.mxu0 %v8937
    %9952 = vmatprep.subr.bf16.mxu0 %v8930
    %9953 = vmatpush2.bf16.msra.mxu0 %v8929
    %9954 = vmatprep.subr.bf16.mxu0 %v8922
    %9955 = vmatpush2.bf16.msra.mxu0 %v8921
    %9956 = vmatprep.subr.bf16.mxu0 %v8914
    %9957 = vmatpush2.bf16.msra.mxu0 %v8913
    %9958 = vmatprep.subr.bf16.mxu0 %v8906
    %9959 = vmatpush2.bf16.msra.mxu0 %v8905
    %9960 = vmatprep.mubr.bf16.mxu0 %v6355
    %9961 = vmatmul.mubr.bf16.gmra.mxu0 %v6354
    %v9962 = vpop.f32.mrf.mxu0
    %v9963 = vadd.f32 %v9922, %v9962
    %v9964 = vpop.f32.mrf.mxu0
    %v9965 = vadd.f32 %v9924, %v9964
    %v9966 = vpop.f32.mrf.mxu0
    %v9967 = vpop.f32.mrf.mxu0
    %9968 = vdwg.mxu0
    %9969 = vmatprep.subr.bf16.mxu0 %v8516
    %9970 = vmatpush1.bf16.msra.mxu0 %v8515
    %9971 = vmatprep.subr.bf16.mxu0 %v8508
    %9972 = vmatpush1.bf16.msra.mxu0 %v8507
    %9973 = vmatprep.subr.bf16.mxu0 %v8500
    %9974 = vmatpush1.bf16.msra.mxu0 %v8499
    %9975 = vmatprep.subr.bf16.mxu0 %v8492
    %9976 = vmatpush1.bf16.msra.mxu0 %v8491
    %9977 = vmatprep.subr.bf16.mxu0 %v8484
    %9978 = vmatpush1.bf16.msra.mxu0 %v8483
    %9979 = vmatprep.subr.bf16.mxu0 %v8476
    %9980 = vmatpush1.bf16.msra.mxu0 %v8475
    %9981 = vmatprep.subr.bf16.mxu0 %v8468
    %9982 = vmatpush1.bf16.msra.mxu0 %v8467
    %9983 = vmatprep.subr.bf16.mxu0 %v8460
    %9984 = vmatpush1.bf16.msra.mxu0 %v8459
    %9985 = vmatprep.subr.bf16.mxu0 %v8580
    %9986 = vmatpush2.bf16.msra.mxu0 %v8579
    %9987 = vmatprep.subr.bf16.mxu0 %v8572
    %9988 = vmatpush2.bf16.msra.mxu0 %v8571
    %9989 = vmatprep.subr.bf16.mxu0 %v8564
    %9990 = vmatpush2.bf16.msra.mxu0 %v8563
    %9991 = vmatprep.subr.bf16.mxu0 %v8556
    %9992 = vmatpush2.bf16.msra.mxu0 %v8555
    %9993 = vmatprep.subr.bf16.mxu0 %v8548
    %9994 = vmatpush2.bf16.msra.mxu0 %v8547
    %9995 = vmatprep.subr.bf16.mxu0 %v8540
    %9996 = vmatpush2.bf16.msra.mxu0 %v8539
    %9997 = vmatprep.subr.bf16.mxu0 %v8532
    %9998 = vmatpush2.bf16.msra.mxu0 %v8531
    %9999 = vmatprep.subr.bf16.mxu0 %v8524
    %10000 = vmatpush2.bf16.msra.mxu0 %v8523
    %10001 = vmatprep.mubr.bf16.mxu0 %v6349
    %10002 = vmatmul.mubr.bf16.gmra.mxu0 %v6348
    %v10003 = vpop.f32.mrf.mxu0
    %v10004 = vadd.f32 %v6904, %v10003
    %v10005 = vpop.f32.mrf.mxu0
    %v10006 = vadd.f32 %v6908, %v10005
    %v10007 = vpop.f32.mrf.mxu0
    %v10008 = vpop.f32.mrf.mxu0
    %10009 = vdwg.mxu0
    %10010 = vmatprep.subr.bf16.mxu0 %v8644
    %10011 = vmatpush1.bf16.msra.mxu0 %v8643
    %10012 = vmatprep.subr.bf16.mxu0 %v8636
    %10013 = vmatpush1.bf16.msra.mxu0 %v8635
    %10014 = vmatprep.subr.bf16.mxu0 %v8628
    %10015 = vmatpush1.bf16.msra.mxu0 %v8627
    %10016 = vmatprep.subr.bf16.mxu0 %v8620
    %10017 = vmatpush1.bf16.msra.mxu0 %v8619
    %10018 = vmatprep.subr.bf16.mxu0 %v8612
    %10019 = vmatpush1.bf16.msra.mxu0 %v8611
    %10020 = vmatprep.subr.bf16.mxu0 %v8604
    %10021 = vmatpush1.bf16.msra.mxu0 %v8603
    %10022 = vmatprep.subr.bf16.mxu0 %v8596
    %10023 = vmatpush1.bf16.msra.mxu0 %v8595
    %10024 = vmatprep.subr.bf16.mxu0 %v8588
    %10025 = vmatpush1.bf16.msra.mxu0 %v8587
    %10026 = vmatprep.subr.bf16.mxu0 %v8708
    %10027 = vmatpush2.bf16.msra.mxu0 %v8707
    %10028 = vmatprep.subr.bf16.mxu0 %v8700
    %10029 = vmatpush2.bf16.msra.mxu0 %v8699
    %10030 = vmatprep.subr.bf16.mxu0 %v8692
    %10031 = vmatpush2.bf16.msra.mxu0 %v8691
    %10032 = vmatprep.subr.bf16.mxu0 %v8684
    %10033 = vmatpush2.bf16.msra.mxu0 %v8683
    %10034 = vmatprep.subr.bf16.mxu0 %v8676
    %10035 = vmatpush2.bf16.msra.mxu0 %v8675
    %10036 = vmatprep.subr.bf16.mxu0 %v8668
    %10037 = vmatpush2.bf16.msra.mxu0 %v8667
    %10038 = vmatprep.subr.bf16.mxu0 %v8660
    %10039 = vmatpush2.bf16.msra.mxu0 %v8659
    %10040 = vmatprep.subr.bf16.mxu0 %v8652
    %10041 = vmatpush2.bf16.msra.mxu0 %v8651
    %10042 = vmatprep.mubr.bf16.mxu0 %v6351
    %10043 = vmatmul.mubr.bf16.gmra.mxu0 %v6350
    %v10044 = vpop.f32.mrf.mxu0
    %v10045 = vadd.f32 %v10004, %v10044
    %v10046 = vpop.f32.mrf.mxu0
    %v10047 = vadd.f32 %v10006, %v10046
    %v10048 = vpop.f32.mrf.mxu0
    %v10049 = vpop.f32.mrf.mxu0
    %10050 = vdwg.mxu0
    %10051 = vmatprep.subr.bf16.mxu0 %v8772
    %10052 = vmatpush1.bf16.msra.mxu0 %v8771
    %10053 = vmatprep.subr.bf16.mxu0 %v8764
    %10054 = vmatpush1.bf16.msra.mxu0 %v8763
    %10055 = vmatprep.subr.bf16.mxu0 %v8756
    %10056 = vmatpush1.bf16.msra.mxu0 %v8755
    %10057 = vmatprep.subr.bf16.mxu0 %v8748
    %10058 = vmatpush1.bf16.msra.mxu0 %v8747
    %10059 = vmatprep.subr.bf16.mxu0 %v8740
    %10060 = vmatpush1.bf16.msra.mxu0 %v8739
    %10061 = vmatprep.subr.bf16.mxu0 %v8732
    %10062 = vmatpush1.bf16.msra.mxu0 %v8731
    %10063 = vmatprep.subr.bf16.mxu0 %v8724
    %10064 = vmatpush1.bf16.msra.mxu0 %v8723
    %10065 = vmatprep.subr.bf16.mxu0 %v8716
    %10066 = vmatpush1.bf16.msra.mxu0 %v8715
    %10067 = vmatprep.subr.bf16.mxu0 %v8836
    %10068 = vmatpush2.bf16.msra.mxu0 %v8835
    %10069 = vmatprep.subr.bf16.mxu0 %v8828
    %10070 = vmatpush2.bf16.msra.mxu0 %v8827
    %10071 = vmatprep.subr.bf16.mxu0 %v8820
    %10072 = vmatpush2.bf16.msra.mxu0 %v8819
    %10073 = vmatprep.subr.bf16.mxu0 %v8812
    %10074 = vmatpush2.bf16.msra.mxu0 %v8811
    %10075 = vmatprep.subr.bf16.mxu0 %v8804
    %10076 = vmatpush2.bf16.msra.mxu0 %v8803
    %10077 = vmatprep.subr.bf16.mxu0 %v8796
    %10078 = vmatpush2.bf16.msra.mxu0 %v8795
    %10079 = vmatprep.subr.bf16.mxu0 %v8788
    %10080 = vmatpush2.bf16.msra.mxu0 %v8787
    %10081 = vmatprep.subr.bf16.mxu0 %v8780
    %10082 = vmatpush2.bf16.msra.mxu0 %v8779
    %10083 = vmatprep.mubr.bf16.mxu0 %v6353
    %10084 = vmatmul.mubr.bf16.gmra.mxu0 %v6352
    %v10085 = vpop.f32.mrf.mxu0
    %v10086 = vadd.f32 %v10045, %v10085
    %v10087 = vpop.f32.mrf.mxu0
    %v10088 = vadd.f32 %v10047, %v10087
    %v10089 = vpop.f32.mrf.mxu0
    %v10090 = vpop.f32.mrf.mxu0
    %10091 = vdwg.mxu0
    %10092 = vmatprep.subr.bf16.mxu0 %v8900
    %10093 = vmatpush1.bf16.msra.mxu0 %v8899
    %10094 = vmatprep.subr.bf16.mxu0 %v8892
    %10095 = vmatpush1.bf16.msra.mxu0 %v8891
    %10096 = vmatprep.subr.bf16.mxu0 %v8884
    %10097 = vmatpush1.bf16.msra.mxu0 %v8883
    %10098 = vmatprep.subr.bf16.mxu0 %v8876
    %10099 = vmatpush1.bf16.msra.mxu0 %v8875
    %10100 = vmatprep.subr.bf16.mxu0 %v8868
    %10101 = vmatpush1.bf16.msra.mxu0 %v8867
    %10102 = vmatprep.subr.bf16.mxu0 %v8860
    %10103 = vmatpush1.bf16.msra.mxu0 %v8859
    %10104 = vmatprep.subr.bf16.mxu0 %v8852
    %10105 = vmatpush1.bf16.msra.mxu0 %v8851
    %10106 = vmatprep.subr.bf16.mxu0 %v8844
    %10107 = vmatpush1.bf16.msra.mxu0 %v8843
    %10108 = vmatprep.subr.bf16.mxu0 %v8964
    %10109 = vmatpush2.bf16.msra.mxu0 %v8963
    %10110 = vmatprep.subr.bf16.mxu0 %v8956
    %10111 = vmatpush2.bf16.msra.mxu0 %v8955
    %10112 = vmatprep.subr.bf16.mxu0 %v8948
    %10113 = vmatpush2.bf16.msra.mxu0 %v8947
    %10114 = vmatprep.subr.bf16.mxu0 %v8940
    %10115 = vmatpush2.bf16.msra.mxu0 %v8939
    %10116 = vmatprep.subr.bf16.mxu0 %v8932
    %10117 = vmatpush2.bf16.msra.mxu0 %v8931
    %10118 = vmatprep.subr.bf16.mxu0 %v8924
    %10119 = vmatpush2.bf16.msra.mxu0 %v8923
    %10120 = vmatprep.subr.bf16.mxu0 %v8916
    %10121 = vmatpush2.bf16.msra.mxu0 %v8915
    %10122 = vmatprep.subr.bf16.mxu0 %v8908
    %10123 = vmatpush2.bf16.msra.mxu0 %v8907
    %10124 = vmatprep.mubr.bf16.mxu0 %v6355
    %10125 = vmatmul.mubr.bf16.gmra.mxu0 %v6354
    %v10126 = vpop.f32.mrf.mxu0
    %v10127 = vadd.f32 %v10086, %v10126
    %v10128 = vpop.f32.mrf.mxu0
    %v10129 = vadd.f32 %v10088, %v10128
    %v10130 = vpop.f32.mrf.mxu0
    %v10131 = vpop.f32.mrf.mxu0
    %10132 = vdwg.mxu0
    %v10133 = vmax.f32 %v9635, 0.0
    %v10134 = vmax.f32 %v9637, 0.0
    %v10135 = vmax.f32 %v9799, 0.0
    %v10136 = vmax.f32 %v9801, 0.0
    %v10137 = vmax.f32 %v9963, 0.0
    %v10138 = vmax.f32 %v9965, 0.0
    %v10139 = vmax.f32 %v10127, 0.0
    %v10140 = vmax.f32 %v10129, 0.0
    %v10141 = vpack.c.bf16 %v10133, %v10133
    %v10142 = vpack.c.bf16 %v10134, %v10134
    %v10143 = vpack.c.bf16 %v10135, %v10135
    %v10144 = vpack.c.bf16 %v10136, %v10136
    %v10145 = vpack.c.bf16 %v10137, %v10137
    %v10146 = vpack.c.bf16 %v10138, %v10138
    %v10147 = vpack.c.bf16 %v10139, %v10139
    %v10148 = vpack.c.bf16 %v10140, %v10140
    %s10149 = smul.u32 %s2637, 2
    %s10150 = sshll.u32 %s10149, 4
    %10151 = dma.done %s136, %s10150
    %v10152 = vld [vmem:[#allocation4] sm:$0xf]
    %v10153 = vld [vmem:[#allocation4 + $0x8] sm:$0xf]
    %v10154 = vld [vmem:[#allocation4 + $0x10] sm:$0xf]
    %v10155 = vld [vmem:[#allocation4 + $0x18] sm:$0xf]
    %v10156 = vld [vmem:[#allocation4 + $0x20] sm:$0xf]
    %v10157 = vld [vmem:[#allocation4 + $0x28] sm:$0xf]
    %v10158 = vld [vmem:[#allocation4 + $0x30] sm:$0xf]
    %v10159 = vld [vmem:[#allocation4 + $0x38] sm:$0xf]
    %v10160 = vld [vmem:[#allocation4 + $0x40] sm:$0xf]
    %v10161 = vld [vmem:[#allocation4 + $0x48] sm:$0xf]
    %v10162 = vld [vmem:[#allocation4 + $0x50] sm:$0xf]
    %v10163 = vld [vmem:[#allocation4 + $0x58] sm:$0xf]
    %v10164 = vld [vmem:[#allocation4 + $0x60] sm:$0xf]
    %v10165 = vld [vmem:[#allocation4 + $0x68] sm:$0xf]
    %v10166 = vld [vmem:[#allocation4 + $0x70] sm:$0xf]
    %v10167 = vld [vmem:[#allocation4 + $0x78] sm:$0xf]
    %v10168 = vld [vmem:[#allocation4 + $0x80] sm:$0xf]
    %v10169 = vld [vmem:[#allocation4 + $0x88] sm:$0xf]
    %v10170 = vld [vmem:[#allocation4 + $0x90] sm:$0xf]
    %v10171 = vld [vmem:[#allocation4 + $0x98] sm:$0xf]
    %v10172 = vld [vmem:[#allocation4 + $0xa0] sm:$0xf]
    %v10173 = vld [vmem:[#allocation4 + $0xa8] sm:$0xf]
    %v10174 = vld [vmem:[#allocation4 + $0xb0] sm:$0xf]
    %v10175 = vld [vmem:[#allocation4 + $0xb8] sm:$0xf]
    %v10176 = vld [vmem:[#allocation4 + $0xc0] sm:$0xf]
    %v10177 = vld [vmem:[#allocation4 + $0xc8] sm:$0xf]
    %v10178 = vld [vmem:[#allocation4 + $0xd0] sm:$0xf]
    %v10179 = vld [vmem:[#allocation4 + $0xd8] sm:$0xf]
    %v10180 = vld [vmem:[#allocation4 + $0xe0] sm:$0xf]
    %v10181 = vld [vmem:[#allocation4 + $0xe8] sm:$0xf]
    %v10182 = vld [vmem:[#allocation4 + $0xf0] sm:$0xf]
    %v10183 = vld [vmem:[#allocation4 + $0xf8] sm:$0xf]
    %v10184 = vld [vmem:[#allocation4 + $0x100] sm:$0xf]
    %v10185 = vld [vmem:[#allocation4 + $0x108] sm:$0xf]
    %v10186 = vld [vmem:[#allocation4 + $0x110] sm:$0xf]
    %v10187 = vld [vmem:[#allocation4 + $0x118] sm:$0xf]
    %v10188 = vld [vmem:[#allocation4 + $0x120] sm:$0xf]
    %v10189 = vld [vmem:[#allocation4 + $0x128] sm:$0xf]
    %v10190 = vld [vmem:[#allocation4 + $0x130] sm:$0xf]
    %v10191 = vld [vmem:[#allocation4 + $0x138] sm:$0xf]
    %v10192 = vld [vmem:[#allocation4 + $0x140] sm:$0xf]
    %v10193 = vld [vmem:[#allocation4 + $0x148] sm:$0xf]
    %v10194 = vld [vmem:[#allocation4 + $0x150] sm:$0xf]
    %v10195 = vld [vmem:[#allocation4 + $0x158] sm:$0xf]
    %v10196 = vld [vmem:[#allocation4 + $0x160] sm:$0xf]
    %v10197 = vld [vmem:[#allocation4 + $0x168] sm:$0xf]
    %v10198 = vld [vmem:[#allocation4 + $0x170] sm:$0xf]
    %v10199 = vld [vmem:[#allocation4 + $0x178] sm:$0xf]
    %v10200 = vld [vmem:[#allocation4 + $0x180] sm:$0xf]
    %v10201 = vld [vmem:[#allocation4 + $0x188] sm:$0xf]
    %v10202 = vld [vmem:[#allocation4 + $0x190] sm:$0xf]
    %v10203 = vld [vmem:[#allocation4 + $0x198] sm:$0xf]
    %v10204 = vld [vmem:[#allocation4 + $0x1a0] sm:$0xf]
    %v10205 = vld [vmem:[#allocation4 + $0x1a8] sm:$0xf]
    %v10206 = vld [vmem:[#allocation4 + $0x1b0] sm:$0xf]
    %v10207 = vld [vmem:[#allocation4 + $0x1b8] sm:$0xf]
    %v10208 = vld [vmem:[#allocation4 + $0x1c0] sm:$0xf]
    %v10209 = vld [vmem:[#allocation4 + $0x1c8] sm:$0xf]
    %v10210 = vld [vmem:[#allocation4 + $0x1d0] sm:$0xf]
    %v10211 = vld [vmem:[#allocation4 + $0x1d8] sm:$0xf]
    %v10212 = vld [vmem:[#allocation4 + $0x1e0] sm:$0xf]
    %v10213 = vld [vmem:[#allocation4 + $0x1e8] sm:$0xf]
    %v10214 = vld [vmem:[#allocation4 + $0x1f0] sm:$0xf]
    %v10215 = vld [vmem:[#allocation4 + $0x1f8] sm:$0xf]
    %v10216 = vld [vmem:[#allocation14 + $0x4] ss:$0 sm:$0xff]
    %v10281 = vunpack.c.l.b16 %v10152
    %v10282 = vunpack.c.l.b16 %v10153
    %v10283 = vunpack.c.l.b16 %v10154
    %v10284 = vunpack.c.l.b16 %v10155
    %v10285 = vunpack.c.l.b16 %v10156
    %v10286 = vunpack.c.l.b16 %v10157
    %v10287 = vunpack.c.l.b16 %v10158
    %v10288 = vunpack.c.l.b16 %v10159
    %v10289 = vunpack.c.l.b16 %v10160
    %v10290 = vunpack.c.l.b16 %v10161
    %v10291 = vunpack.c.l.b16 %v10162
    %v10292 = vunpack.c.l.b16 %v10163
    %v10293 = vunpack.c.l.b16 %v10164
    %v10294 = vunpack.c.l.b16 %v10165
    %v10295 = vunpack.c.l.b16 %v10166
    %v10296 = vunpack.c.l.b16 %v10167
    %v10297 = vunpack.c.l.b16 %v10168
    %v10298 = vunpack.c.l.b16 %v10169
    %v10299 = vunpack.c.l.b16 %v10170
    %v10300 = vunpack.c.l.b16 %v10171
    %v10301 = vunpack.c.l.b16 %v10172
    %v10302 = vunpack.c.l.b16 %v10173
    %v10303 = vunpack.c.l.b16 %v10174
    %v10304 = vunpack.c.l.b16 %v10175
    %v10305 = vunpack.c.l.b16 %v10176
    %v10306 = vunpack.c.l.b16 %v10177
    %v10307 = vunpack.c.l.b16 %v10178
    %v10308 = vunpack.c.l.b16 %v10179
    %v10309 = vunpack.c.l.b16 %v10180
    %v10310 = vunpack.c.l.b16 %v10181
    %v10311 = vunpack.c.l.b16 %v10182
    %v10312 = vunpack.c.l.b16 %v10183
    %v10313 = vunpack.c.l.b16 %v10184
    %v10314 = vunpack.c.l.b16 %v10185
    %v10315 = vunpack.c.l.b16 %v10186
    %v10316 = vunpack.c.l.b16 %v10187
    %v10317 = vunpack.c.l.b16 %v10188
    %v10318 = vunpack.c.l.b16 %v10189
    %v10319 = vunpack.c.l.b16 %v10190
    %v10320 = vunpack.c.l.b16 %v10191
    %v10321 = vunpack.c.l.b16 %v10192
    %v10322 = vunpack.c.l.b16 %v10193
    %v10323 = vunpack.c.l.b16 %v10194
    %v10324 = vunpack.c.l.b16 %v10195
    %v10325 = vunpack.c.l.b16 %v10196
    %v10326 = vunpack.c.l.b16 %v10197
    %v10327 = vunpack.c.l.b16 %v10198
    %v10328 = vunpack.c.l.b16 %v10199
    %v10329 = vunpack.c.l.b16 %v10200
    %v10330 = vunpack.c.l.b16 %v10201
    %v10331 = vunpack.c.l.b16 %v10202
    %v10332 = vunpack.c.l.b16 %v10203
    %v10333 = vunpack.c.l.b16 %v10204
    %v10334 = vunpack.c.l.b16 %v10205
    %v10335 = vunpack.c.l.b16 %v10206
    %v10336 = vunpack.c.l.b16 %v10207
    %v10337 = vunpack.c.l.b16 %v10208
    %v10338 = vunpack.c.l.b16 %v10209
    %v10339 = vunpack.c.l.b16 %v10210
    %v10340 = vunpack.c.l.b16 %v10211
    %v10341 = vunpack.c.l.b16 %v10212
    %v10342 = vunpack.c.l.b16 %v10213
    %v10343 = vunpack.c.l.b16 %v10214
    %v10344 = vunpack.c.l.b16 %v10215
    %v10345 = vpack.c.b16 %v10282, %v10281
    %v10346 = vpack.c.b16 %v10284, %v10283
    %v10347 = vpack.c.b16 %v10286, %v10285
    %v10348 = vpack.c.b16 %v10288, %v10287
    %v10349 = vpack.c.b16 %v10290, %v10289
    %v10350 = vpack.c.b16 %v10292, %v10291
    %v10351 = vpack.c.b16 %v10294, %v10293
    %v10352 = vpack.c.b16 %v10296, %v10295
    %v10353 = vpack.c.b16 %v10298, %v10297
    %v10354 = vpack.c.b16 %v10300, %v10299
    %v10355 = vpack.c.b16 %v10302, %v10301
    %v10356 = vpack.c.b16 %v10304, %v10303
    %v10357 = vpack.c.b16 %v10306, %v10305
    %v10358 = vpack.c.b16 %v10308, %v10307
    %v10359 = vpack.c.b16 %v10310, %v10309
    %v10360 = vpack.c.b16 %v10312, %v10311
    %v10361 = vpack.c.b16 %v10314, %v10313
    %v10362 = vpack.c.b16 %v10316, %v10315
    %v10363 = vpack.c.b16 %v10318, %v10317
    %v10364 = vpack.c.b16 %v10320, %v10319
    %v10365 = vpack.c.b16 %v10322, %v10321
    %v10366 = vpack.c.b16 %v10324, %v10323
    %v10367 = vpack.c.b16 %v10326, %v10325
    %v10368 = vpack.c.b16 %v10328, %v10327
    %v10369 = vpack.c.b16 %v10330, %v10329
    %v10370 = vpack.c.b16 %v10332, %v10331
    %v10371 = vpack.c.b16 %v10334, %v10333
    %v10372 = vpack.c.b16 %v10336, %v10335
    %v10373 = vpack.c.b16 %v10338, %v10337
    %v10374 = vpack.c.b16 %v10340, %v10339
    %v10375 = vpack.c.b16 %v10342, %v10341
    %v10376 = vpack.c.b16 %v10344, %v10343
    %10409 = vmatprep.subr.bf16.mxu0 0
    %10410 = vmatpush1.bf16.msra.mxu0 %v10352
    %10411 = vmatprep.subr.bf16.mxu0 0
    %10412 = vmatpush1.bf16.msra.mxu0 %v10351
    %10413 = vmatprep.subr.bf16.mxu0 0
    %10414 = vmatpush1.bf16.msra.mxu0 %v10350
    %10415 = vmatprep.subr.bf16.mxu0 0
    %10416 = vmatpush1.bf16.msra.mxu0 %v10349
    %10417 = vmatprep.subr.bf16.mxu0 0
    %10418 = vmatpush1.bf16.msra.mxu0 %v10348
    %10419 = vmatprep.subr.bf16.mxu0 0
    %10420 = vmatpush1.bf16.msra.mxu0 %v10347
    %10421 = vmatprep.subr.bf16.mxu0 0
    %10422 = vmatpush1.bf16.msra.mxu0 %v10346
    %10423 = vmatprep.subr.bf16.mxu0 0
    %10424 = vmatpush1.bf16.msra.mxu0 %v10345
    %10425 = vmatprep.subr.bf16.mxu0 0
    %10426 = vmatpush2.bf16.msra.mxu0 %v10360
    %10427 = vmatprep.subr.bf16.mxu0 0
    %10428 = vmatpush2.bf16.msra.mxu0 %v10359
    %10429 = vmatprep.subr.bf16.mxu0 0
    %10430 = vmatpush2.bf16.msra.mxu0 %v10358
    %10431 = vmatprep.subr.bf16.mxu0 0
    %10432 = vmatpush2.bf16.msra.mxu0 %v10357
    %10433 = vmatprep.subr.bf16.mxu0 0
    %10434 = vmatpush2.bf16.msra.mxu0 %v10356
    %10435 = vmatprep.subr.bf16.mxu0 0
    %10436 = vmatpush2.bf16.msra.mxu0 %v10355
    %10437 = vmatprep.subr.bf16.mxu0 0
    %10438 = vmatpush2.bf16.msra.mxu0 %v10354
    %10439 = vmatprep.subr.bf16.mxu0 0
    %10440 = vmatpush2.bf16.msra.mxu0 %v10353
    %10441 = vmatprep.mubr.bf16.mxu0 %v10142
    %10442 = vmatmul.mubr.bf16.gmra.mxu0 %v10141
    %v10443 = vpop.f32.mrf.mxu0
    %v10444 = vadd.f32 %v10216, %v10443
    %v10445 = vpop.f32.mrf.mxu0
    %v10446 = vpop.f32.mrf.mxu0
    %v10447 = vpop.f32.mrf.mxu0
    %10448 = vdwg.mxu0
    %10449 = vmatprep.subr.bf16.mxu0 0
    %10450 = vmatpush1.bf16.msra.mxu0 %v10368
    %10451 = vmatprep.subr.bf16.mxu0 0
    %10452 = vmatpush1.bf16.msra.mxu0 %v10367
    %10453 = vmatprep.subr.bf16.mxu0 0
    %10454 = vmatpush1.bf16.msra.mxu0 %v10366
    %10455 = vmatprep.subr.bf16.mxu0 0
    %10456 = vmatpush1.bf16.msra.mxu0 %v10365
    %10457 = vmatprep.subr.bf16.mxu0 0
    %10458 = vmatpush1.bf16.msra.mxu0 %v10364
    %10459 = vmatprep.subr.bf16.mxu0 0
    %10460 = vmatpush1.bf16.msra.mxu0 %v10363
    %10461 = vmatprep.subr.bf16.mxu0 0
    %10462 = vmatpush1.bf16.msra.mxu0 %v10362
    %10463 = vmatprep.subr.bf16.mxu0 0
    %10464 = vmatpush1.bf16.msra.mxu0 %v10361
    %10465 = vmatprep.subr.bf16.mxu0 0
    %10466 = vmatpush2.bf16.msra.mxu0 %v10376
    %10467 = vmatprep.subr.bf16.mxu0 0
    %10468 = vmatpush2.bf16.msra.mxu0 %v10375
    %10469 = vmatprep.subr.bf16.mxu0 0
    %10470 = vmatpush2.bf16.msra.mxu0 %v10374
    %10471 = vmatprep.subr.bf16.mxu0 0
    %10472 = vmatpush2.bf16.msra.mxu0 %v10373
    %10473 = vmatprep.subr.bf16.mxu0 0
    %10474 = vmatpush2.bf16.msra.mxu0 %v10372
    %10475 = vmatprep.subr.bf16.mxu0 0
    %10476 = vmatpush2.bf16.msra.mxu0 %v10371
    %10477 = vmatprep.subr.bf16.mxu0 0
    %10478 = vmatpush2.bf16.msra.mxu0 %v10370
    %10479 = vmatprep.subr.bf16.mxu0 0
    %10480 = vmatpush2.bf16.msra.mxu0 %v10369
    %10481 = vmatprep.mubr.bf16.mxu0 %v10144
    %10482 = vmatmul.mubr.bf16.gmra.mxu0 %v10143
    %v10483 = vpop.f32.mrf.mxu0
    %v10484 = vadd.f32 %v10444, %v10483
    %v10485 = vpop.f32.mrf.mxu0
    %v10486 = vpop.f32.mrf.mxu0
    %v10487 = vpop.f32.mrf.mxu0
    %10488 = vdwg.mxu0
    %v10489 = vmax.f32 %v10484, 0.0
    %v10490 = vpack.c.bf16 %v10489, %v10489
    %v10491 = vld [vmem:[#allocation4 + $0x4] sm:$0xf]
    %v10492 = vld [vmem:[#allocation4 + $0xc] sm:$0xf]
    %v10493 = vld [vmem:[#allocation4 + $0x14] sm:$0xf]
    %v10494 = vld [vmem:[#allocation4 + $0x1c] sm:$0xf]
    %v10495 = vld [vmem:[#allocation4 + $0x24] sm:$0xf]
    %v10496 = vld [vmem:[#allocation4 + $0x2c] sm:$0xf]
    %v10497 = vld [vmem:[#allocation4 + $0x34] sm:$0xf]
    %v10498 = vld [vmem:[#allocation4 + $0x3c] sm:$0xf]
    %v10499 = vld [vmem:[#allocation4 + $0x44] sm:$0xf]
    %v10500 = vld [vmem:[#allocation4 + $0x4c] sm:$0xf]
    %v10501 = vld [vmem:[#allocation4 + $0x54] sm:$0xf]
    %v10502 = vld [vmem:[#allocation4 + $0x5c] sm:$0xf]
    %v10503 = vld [vmem:[#allocation4 + $0x64] sm:$0xf]
    %v10504 = vld [vmem:[#allocation4 + $0x6c] sm:$0xf]
    %v10505 = vld [vmem:[#allocation4 + $0x74] sm:$0xf]
    %v10506 = vld [vmem:[#allocation4 + $0x7c] sm:$0xf]
    %v10507 = vld [vmem:[#allocation4 + $0x84] sm:$0xf]
    %v10508 = vld [vmem:[#allocation4 + $0x8c] sm:$0xf]
    %v10509 = vld [vmem:[#allocation4 + $0x94] sm:$0xf]
    %v10510 = vld [vmem:[#allocation4 + $0x9c] sm:$0xf]
    %v10511 = vld [vmem:[#allocation4 + $0xa4] sm:$0xf]
    %v10512 = vld [vmem:[#allocation4 + $0xac] sm:$0xf]
    %v10513 = vld [vmem:[#allocation4 + $0xb4] sm:$0xf]
    %v10514 = vld [vmem:[#allocation4 + $0xbc] sm:$0xf]
    %v10515 = vld [vmem:[#allocation4 + $0xc4] sm:$0xf]
    %v10516 = vld [vmem:[#allocation4 + $0xcc] sm:$0xf]
    %v10517 = vld [vmem:[#allocation4 + $0xd4] sm:$0xf]
    %v10518 = vld [vmem:[#allocation4 + $0xdc] sm:$0xf]
    %v10519 = vld [vmem:[#allocation4 + $0xe4] sm:$0xf]
    %v10520 = vld [vmem:[#allocation4 + $0xec] sm:$0xf]
    %v10521 = vld [vmem:[#allocation4 + $0xf4] sm:$0xf]
    %v10522 = vld [vmem:[#allocation4 + $0xfc] sm:$0xf]
    %v10523 = vld [vmem:[#allocation4 + $0x104] sm:$0xf]
    %v10524 = vld [vmem:[#allocation4 + $0x10c] sm:$0xf]
    %v10525 = vld [vmem:[#allocation4 + $0x114] sm:$0xf]
    %v10526 = vld [vmem:[#allocation4 + $0x11c] sm:$0xf]
    %v10527 = vld [vmem:[#allocation4 + $0x124] sm:$0xf]
    %v10528 = vld [vmem:[#allocation4 + $0x12c] sm:$0xf]
    %v10529 = vld [vmem:[#allocation4 + $0x134] sm:$0xf]
    %v10530 = vld [vmem:[#allocation4 + $0x13c] sm:$0xf]
    %v10531 = vld [vmem:[#allocation4 + $0x144] sm:$0xf]
    %v10532 = vld [vmem:[#allocation4 + $0x14c] sm:$0xf]
    %v10533 = vld [vmem:[#allocation4 + $0x154] sm:$0xf]
    %v10534 = vld [vmem:[#allocation4 + $0x15c] sm:$0xf]
    %v10535 = vld [vmem:[#allocation4 + $0x164] sm:$0xf]
    %v10536 = vld [vmem:[#allocation4 + $0x16c] sm:$0xf]
    %v10537 = vld [vmem:[#allocation4 + $0x174] sm:$0xf]
    %v10538 = vld [vmem:[#allocation4 + $0x17c] sm:$0xf]
    %v10539 = vld [vmem:[#allocation4 + $0x184] sm:$0xf]
    %v10540 = vld [vmem:[#allocation4 + $0x18c] sm:$0xf]
    %v10541 = vld [vmem:[#allocation4 + $0x194] sm:$0xf]
    %v10542 = vld [vmem:[#allocation4 + $0x19c] sm:$0xf]
    %v10543 = vld [vmem:[#allocation4 + $0x1a4] sm:$0xf]
    %v10544 = vld [vmem:[#allocation4 + $0x1ac] sm:$0xf]
    %v10545 = vld [vmem:[#allocation4 + $0x1b4] sm:$0xf]
    %v10546 = vld [vmem:[#allocation4 + $0x1bc] sm:$0xf]
    %v10547 = vld [vmem:[#allocation4 + $0x1c4] sm:$0xf]
    %v10548 = vld [vmem:[#allocation4 + $0x1cc] sm:$0xf]
    %v10549 = vld [vmem:[#allocation4 + $0x1d4] sm:$0xf]
    %v10550 = vld [vmem:[#allocation4 + $0x1dc] sm:$0xf]
    %v10551 = vld [vmem:[#allocation4 + $0x1e4] sm:$0xf]
    %v10552 = vld [vmem:[#allocation4 + $0x1ec] sm:$0xf]
    %v10553 = vld [vmem:[#allocation4 + $0x1f4] sm:$0xf]
    %v10554 = vld [vmem:[#allocation4 + $0x1fc] sm:$0xf]
    %v10555 = vld [vmem:[#allocation14 + $0xc] ss:$0 sm:$0xff]
    %v10620 = vunpack.c.l.b16 %v10491
    %v10621 = vunpack.c.l.b16 %v10492
    %v10622 = vunpack.c.l.b16 %v10493
    %v10623 = vunpack.c.l.b16 %v10494
    %v10624 = vunpack.c.l.b16 %v10495
    %v10625 = vunpack.c.l.b16 %v10496
    %v10626 = vunpack.c.l.b16 %v10497
    %v10627 = vunpack.c.l.b16 %v10498
    %v10628 = vunpack.c.l.b16 %v10499
    %v10629 = vunpack.c.l.b16 %v10500
    %v10630 = vunpack.c.l.b16 %v10501
    %v10631 = vunpack.c.l.b16 %v10502
    %v10632 = vunpack.c.l.b16 %v10503
    %v10633 = vunpack.c.l.b16 %v10504
    %v10634 = vunpack.c.l.b16 %v10505
    %v10635 = vunpack.c.l.b16 %v10506
    %v10636 = vunpack.c.l.b16 %v10507
    %v10637 = vunpack.c.l.b16 %v10508
    %v10638 = vunpack.c.l.b16 %v10509
    %v10639 = vunpack.c.l.b16 %v10510
    %v10640 = vunpack.c.l.b16 %v10511
    %v10641 = vunpack.c.l.b16 %v10512
    %v10642 = vunpack.c.l.b16 %v10513
    %v10643 = vunpack.c.l.b16 %v10514
    %v10644 = vunpack.c.l.b16 %v10515
    %v10645 = vunpack.c.l.b16 %v10516
    %v10646 = vunpack.c.l.b16 %v10517
    %v10647 = vunpack.c.l.b16 %v10518
    %v10648 = vunpack.c.l.b16 %v10519
    %v10649 = vunpack.c.l.b16 %v10520
    %v10650 = vunpack.c.l.b16 %v10521
    %v10651 = vunpack.c.l.b16 %v10522
    %v10652 = vunpack.c.l.b16 %v10523
    %v10653 = vunpack.c.l.b16 %v10524
    %v10654 = vunpack.c.l.b16 %v10525
    %v10655 = vunpack.c.l.b16 %v10526
    %v10656 = vunpack.c.l.b16 %v10527
    %v10657 = vunpack.c.l.b16 %v10528
    %v10658 = vunpack.c.l.b16 %v10529
    %v10659 = vunpack.c.l.b16 %v10530
    %v10660 = vunpack.c.l.b16 %v10531
    %v10661 = vunpack.c.l.b16 %v10532
    %v10662 = vunpack.c.l.b16 %v10533
    %v10663 = vunpack.c.l.b16 %v10534
    %v10664 = vunpack.c.l.b16 %v10535
    %v10665 = vunpack.c.l.b16 %v10536
    %v10666 = vunpack.c.l.b16 %v10537
    %v10667 = vunpack.c.l.b16 %v10538
    %v10668 = vunpack.c.l.b16 %v10539
    %v10669 = vunpack.c.l.b16 %v10540
    %v10670 = vunpack.c.l.b16 %v10541
    %v10671 = vunpack.c.l.b16 %v10542
    %v10672 = vunpack.c.l.b16 %v10543
    %v10673 = vunpack.c.l.b16 %v10544
    %v10674 = vunpack.c.l.b16 %v10545
    %v10675 = vunpack.c.l.b16 %v10546
    %v10676 = vunpack.c.l.b16 %v10547
    %v10677 = vunpack.c.l.b16 %v10548
    %v10678 = vunpack.c.l.b16 %v10549
    %v10679 = vunpack.c.l.b16 %v10550
    %v10680 = vunpack.c.l.b16 %v10551
    %v10681 = vunpack.c.l.b16 %v10552
    %v10682 = vunpack.c.l.b16 %v10553
    %v10683 = vunpack.c.l.b16 %v10554
    %v10684 = vpack.c.b16 %v10621, %v10620
    %v10685 = vpack.c.b16 %v10623, %v10622
    %v10686 = vpack.c.b16 %v10625, %v10624
    %v10687 = vpack.c.b16 %v10627, %v10626
    %v10688 = vpack.c.b16 %v10629, %v10628
    %v10689 = vpack.c.b16 %v10631, %v10630
    %v10690 = vpack.c.b16 %v10633, %v10632
    %v10691 = vpack.c.b16 %v10635, %v10634
    %v10692 = vpack.c.b16 %v10637, %v10636
    %v10693 = vpack.c.b16 %v10639, %v10638
    %v10694 = vpack.c.b16 %v10641, %v10640
    %v10695 = vpack.c.b16 %v10643, %v10642
    %v10696 = vpack.c.b16 %v10645, %v10644
    %v10697 = vpack.c.b16 %v10647, %v10646
    %v10698 = vpack.c.b16 %v10649, %v10648
    %v10699 = vpack.c.b16 %v10651, %v10650
    %v10700 = vpack.c.b16 %v10653, %v10652
    %v10701 = vpack.c.b16 %v10655, %v10654
    %v10702 = vpack.c.b16 %v10657, %v10656
    %v10703 = vpack.c.b16 %v10659, %v10658
    %v10704 = vpack.c.b16 %v10661, %v10660
    %v10705 = vpack.c.b16 %v10663, %v10662
    %v10706 = vpack.c.b16 %v10665, %v10664
    %v10707 = vpack.c.b16 %v10667, %v10666
    %v10708 = vpack.c.b16 %v10669, %v10668
    %v10709 = vpack.c.b16 %v10671, %v10670
    %v10710 = vpack.c.b16 %v10673, %v10672
    %v10711 = vpack.c.b16 %v10675, %v10674
    %v10712 = vpack.c.b16 %v10677, %v10676
    %v10713 = vpack.c.b16 %v10679, %v10678
    %v10714 = vpack.c.b16 %v10681, %v10680
    %v10715 = vpack.c.b16 %v10683, %v10682
    %10748 = vmatprep.subr.bf16.mxu0 0
    %10749 = vmatpush1.bf16.msra.mxu0 %v10691
    %10750 = vmatprep.subr.bf16.mxu0 0
    %10751 = vmatpush1.bf16.msra.mxu0 %v10690
    %10752 = vmatprep.subr.bf16.mxu0 0
    %10753 = vmatpush1.bf16.msra.mxu0 %v10689
    %10754 = vmatprep.subr.bf16.mxu0 0
    %10755 = vmatpush1.bf16.msra.mxu0 %v10688
    %10756 = vmatprep.subr.bf16.mxu0 0
    %10757 = vmatpush1.bf16.msra.mxu0 %v10687
    %10758 = vmatprep.subr.bf16.mxu0 0
    %10759 = vmatpush1.bf16.msra.mxu0 %v10686
    %10760 = vmatprep.subr.bf16.mxu0 0
    %10761 = vmatpush1.bf16.msra.mxu0 %v10685
    %10762 = vmatprep.subr.bf16.mxu0 0
    %10763 = vmatpush1.bf16.msra.mxu0 %v10684
    %10764 = vmatprep.subr.bf16.mxu0 0
    %10765 = vmatpush2.bf16.msra.mxu0 %v10699
    %10766 = vmatprep.subr.bf16.mxu0 0
    %10767 = vmatpush2.bf16.msra.mxu0 %v10698
    %10768 = vmatprep.subr.bf16.mxu0 0
    %10769 = vmatpush2.bf16.msra.mxu0 %v10697
    %10770 = vmatprep.subr.bf16.mxu0 0
    %10771 = vmatpush2.bf16.msra.mxu0 %v10696
    %10772 = vmatprep.subr.bf16.mxu0 0
    %10773 = vmatpush2.bf16.msra.mxu0 %v10695
    %10774 = vmatprep.subr.bf16.mxu0 0
    %10775 = vmatpush2.bf16.msra.mxu0 %v10694
    %10776 = vmatprep.subr.bf16.mxu0 0
    %10777 = vmatpush2.bf16.msra.mxu0 %v10693
    %10778 = vmatprep.subr.bf16.mxu0 0
    %10779 = vmatpush2.bf16.msra.mxu0 %v10692
    %10780 = vmatprep.mubr.bf16.mxu0 %v10146
    %10781 = vmatmul.mubr.bf16.gmra.mxu0 %v10145
    %v10782 = vpop.f32.mrf.mxu0
    %v10783 = vadd.f32 %v10555, %v10782
    %v10784 = vpop.f32.mrf.mxu0
    %v10785 = vpop.f32.mrf.mxu0
    %v10786 = vpop.f32.mrf.mxu0
    %10787 = vdwg.mxu0
    %10788 = vmatprep.subr.bf16.mxu0 0
    %10789 = vmatpush1.bf16.msra.mxu0 %v10707
    %10790 = vmatprep.subr.bf16.mxu0 0
    %10791 = vmatpush1.bf16.msra.mxu0 %v10706
    %10792 = vmatprep.subr.bf16.mxu0 0
    %10793 = vmatpush1.bf16.msra.mxu0 %v10705
    %10794 = vmatprep.subr.bf16.mxu0 0
    %10795 = vmatpush1.bf16.msra.mxu0 %v10704
    %10796 = vmatprep.subr.bf16.mxu0 0
    %10797 = vmatpush1.bf16.msra.mxu0 %v10703
    %10798 = vmatprep.subr.bf16.mxu0 0
    %10799 = vmatpush1.bf16.msra.mxu0 %v10702
    %10800 = vmatprep.subr.bf16.mxu0 0
    %10801 = vmatpush1.bf16.msra.mxu0 %v10701
    %10802 = vmatprep.subr.bf16.mxu0 0
    %10803 = vmatpush1.bf16.msra.mxu0 %v10700
    %10804 = vmatprep.subr.bf16.mxu0 0
    %10805 = vmatpush2.bf16.msra.mxu0 %v10715
    %10806 = vmatprep.subr.bf16.mxu0 0
    %10807 = vmatpush2.bf16.msra.mxu0 %v10714
    %10808 = vmatprep.subr.bf16.mxu0 0
    %10809 = vmatpush2.bf16.msra.mxu0 %v10713
    %10810 = vmatprep.subr.bf16.mxu0 0
    %10811 = vmatpush2.bf16.msra.mxu0 %v10712
    %10812 = vmatprep.subr.bf16.mxu0 0
    %10813 = vmatpush2.bf16.msra.mxu0 %v10711
    %10814 = vmatprep.subr.bf16.mxu0 0
    %10815 = vmatpush2.bf16.msra.mxu0 %v10710
    %10816 = vmatprep.subr.bf16.mxu0 0
    %10817 = vmatpush2.bf16.msra.mxu0 %v10709
    %10818 = vmatprep.subr.bf16.mxu0 0
    %10819 = vmatpush2.bf16.msra.mxu0 %v10708
    %10820 = vmatprep.mubr.bf16.mxu0 %v10148
    %10821 = vmatmul.mubr.bf16.gmra.mxu0 %v10147
    %v10822 = vpop.f32.mrf.mxu0
    %v10823 = vadd.f32 %v10783, %v10822
    %v10824 = vpop.f32.mrf.mxu0
    %v10825 = vpop.f32.mrf.mxu0
    %v10826 = vpop.f32.mrf.mxu0
    %10827 = vdwg.mxu0
    %v10828 = vmax.f32 %v10823, 0.0
    %v10829 = vpack.c.bf16 %v10828, %v10828
    %v10830 = vld [vmem:[#allocation13] sm:$0xf]
    %v10831 = vld [vmem:[#allocation13 + $0x4] sm:$0xf]
    %v10832 = vld [vmem:[#allocation13 + $0x8] sm:$0xf]
    %v10833 = vld [vmem:[#allocation13 + $0xc] sm:$0xf]
    %v10834 = vld [vmem:[#allocation13 + $0x10] sm:$0xf]
    %v10835 = vld [vmem:[#allocation13 + $0x14] sm:$0xf]
    %v10836 = vld [vmem:[#allocation13 + $0x18] sm:$0xf]
    %v10837 = vld [vmem:[#allocation13 + $0x1c] sm:$0xf]
    %v10838 = vld [vmem:[#allocation13 + $0x20] sm:$0xf]
    %v10839 = vld [vmem:[#allocation13 + $0x24] sm:$0xf]
    %v10840 = vld [vmem:[#allocation13 + $0x28] sm:$0xf]
    %v10841 = vld [vmem:[#allocation13 + $0x2c] sm:$0xf]
    %v10842 = vld [vmem:[#allocation13 + $0x30] sm:$0xf]
    %v10843 = vld [vmem:[#allocation13 + $0x34] sm:$0xf]
    %v10844 = vld [vmem:[#allocation13 + $0x38] sm:$0xf]
    %v10845 = vld [vmem:[#allocation13 + $0x3c] sm:$0xf]
    %v10846 = vld [vmem:[#allocation13 + $0x40] sm:$0xf]
    %v10847 = vld [vmem:[#allocation13 + $0x44] sm:$0xf]
    %v10848 = vld [vmem:[#allocation13 + $0x48] sm:$0xf]
    %v10849 = vld [vmem:[#allocation13 + $0x4c] sm:$0xf]
    %v10850 = vld [vmem:[#allocation13 + $0x50] sm:$0xf]
    %v10851 = vld [vmem:[#allocation13 + $0x54] sm:$0xf]
    %v10852 = vld [vmem:[#allocation13 + $0x58] sm:$0xf]
    %v10853 = vld [vmem:[#allocation13 + $0x5c] sm:$0xf]
    %v10854 = vld [vmem:[#allocation13 + $0x60] sm:$0xf]
    %v10855 = vld [vmem:[#allocation13 + $0x64] sm:$0xf]
    %v10856 = vld [vmem:[#allocation13 + $0x68] sm:$0xf]
    %v10857 = vld [vmem:[#allocation13 + $0x6c] sm:$0xf]
    %v10858 = vld [vmem:[#allocation13 + $0x70] sm:$0xf]
    %v10859 = vld [vmem:[#allocation13 + $0x74] sm:$0xf]
    %v10860 = vld [vmem:[#allocation13 + $0x78] sm:$0xf]
    %v10861 = vld [vmem:[#allocation13 + $0x7c] sm:$0xf]
    %v10878 = vunpack.c.l.b16 %v10846
    %v10879 = vunpack.c.l.b16 %v10847
    %v10880 = vunpack.c.l.b16 %v10848
    %v10881 = vunpack.c.l.b16 %v10849
    %v10882 = vunpack.c.l.b16 %v10850
    %v10883 = vunpack.c.l.b16 %v10851
    %v10884 = vunpack.c.l.b16 %v10852
    %v10885 = vunpack.c.l.b16 %v10853
    %v10886 = vunpack.c.l.b16 %v10854
    %v10887 = vunpack.c.l.b16 %v10855
    %v10888 = vunpack.c.l.b16 %v10856
    %v10889 = vunpack.c.l.b16 %v10857
    %v10890 = vunpack.c.l.b16 %v10858
    %v10891 = vunpack.c.l.b16 %v10859
    %v10892 = vunpack.c.l.b16 %v10860
    %v10893 = vunpack.c.l.b16 %v10861
    %v10894 = vpack.c.b16 %v10879, %v10878
    %v10895 = vpack.c.b16 %v10881, %v10880
    %v10896 = vpack.c.b16 %v10883, %v10882
    %v10897 = vpack.c.b16 %v10885, %v10884
    %v10898 = vpack.c.b16 %v10887, %v10886
    %v10899 = vpack.c.b16 %v10889, %v10888
    %v10900 = vpack.c.b16 %v10891, %v10890
    %v10901 = vpack.c.b16 %v10893, %v10892
    %10910 = vmatprep.subr.bf16.mxu0 0
    %10911 = vmatpush1.bf16.msra.mxu0 %v10901
    %10912 = vmatprep.subr.bf16.mxu0 0
    %10913 = vmatpush1.bf16.msra.mxu0 %v10900
    %10914 = vmatprep.subr.bf16.mxu0 0
    %10915 = vmatpush1.bf16.msra.mxu0 %v10899
    %10916 = vmatprep.subr.bf16.mxu0 0
    %10917 = vmatpush1.bf16.msra.mxu0 %v10898
    %10918 = vmatprep.subr.bf16.mxu0 0
    %10919 = vmatpush1.bf16.msra.mxu0 %v10897
    %10920 = vmatprep.subr.bf16.mxu0 0
    %10921 = vmatpush1.bf16.msra.mxu0 %v10896
    %10922 = vmatprep.subr.bf16.mxu0 0
    %10923 = vmatpush1.bf16.msra.mxu0 %v10895
    %10924 = vmatprep.subr.bf16.mxu0 0
    %10925 = vmatpush1.bf16.msra.mxu0 %v10894
    %10926 = vmatprep.subr.bf16.mxu0 0
    %10927 = vmatpush2.bf16.msra.mxu0 0
    %10928 = vmatprep.subr.bf16.mxu0 0
    %10929 = vmatpush2.bf16.msra.mxu0 0
    %10930 = vmatprep.subr.bf16.mxu0 0
    %10931 = vmatpush2.bf16.msra.mxu0 0
    %10932 = vmatprep.subr.bf16.mxu0 0
    %10933 = vmatpush2.bf16.msra.mxu0 0
    %10934 = vmatprep.subr.bf16.mxu0 0
    %10935 = vmatpush2.bf16.msra.mxu0 0
    %10936 = vmatprep.subr.bf16.mxu0 0
    %10937 = vmatpush2.bf16.msra.mxu0 0
    %10938 = vmatprep.subr.bf16.mxu0 0
    %10939 = vmatpush2.bf16.msra.mxu0 0
    %10940 = vmatprep.subr.bf16.mxu0 0
    %10941 = vmatpush2.bf16.msra.mxu0 0
    %10942 = vmatprep.mubr.bf16.mxu0 0
    %10943 = vmatmul.mubr.bf16.gmra.mxu0 %v10829
    %v10944 = vpop.f32.mrf.mxu0
    %v10945 = vadd.f32 0.0, %v10944
    %v10946 = vpop.f32.mrf.mxu0
    %v10947 = vpop.f32.mrf.mxu0
    %v10948 = vpop.f32.mrf.mxu0
    %10949 = vdwg.mxu0
    %v10966 = vunpack.c.l.b16 %v10830
    %v10967 = vunpack.c.l.b16 %v10831
    %v10968 = vunpack.c.l.b16 %v10832
    %v10969 = vunpack.c.l.b16 %v10833
    %v10970 = vunpack.c.l.b16 %v10834
    %v10971 = vunpack.c.l.b16 %v10835
    %v10972 = vunpack.c.l.b16 %v10836
    %v10973 = vunpack.c.l.b16 %v10837
    %v10974 = vunpack.c.l.b16 %v10838
    %v10975 = vunpack.c.l.b16 %v10839
    %v10976 = vunpack.c.l.b16 %v10840
    %v10977 = vunpack.c.l.b16 %v10841
    %v10978 = vunpack.c.l.b16 %v10842
    %v10979 = vunpack.c.l.b16 %v10843
    %v10980 = vunpack.c.l.b16 %v10844
    %v10981 = vunpack.c.l.b16 %v10845
    %v10982 = vpack.c.b16 %v10967, %v10966
    %v10983 = vpack.c.b16 %v10969, %v10968
    %v10984 = vpack.c.b16 %v10971, %v10970
    %v10985 = vpack.c.b16 %v10973, %v10972
    %v10986 = vpack.c.b16 %v10975, %v10974
    %v10987 = vpack.c.b16 %v10977, %v10976
    %v10988 = vpack.c.b16 %v10979, %v10978
    %v10989 = vpack.c.b16 %v10981, %v10980
    %10998 = vmatprep.subr.bf16.mxu0 0
    %10999 = vmatpush1.bf16.msra.mxu0 %v10989
    %11000 = vmatprep.subr.bf16.mxu0 0
    %11001 = vmatpush1.bf16.msra.mxu0 %v10988
    %11002 = vmatprep.subr.bf16.mxu0 0
    %11003 = vmatpush1.bf16.msra.mxu0 %v10987
    %11004 = vmatprep.subr.bf16.mxu0 0
    %11005 = vmatpush1.bf16.msra.mxu0 %v10986
    %11006 = vmatprep.subr.bf16.mxu0 0
    %11007 = vmatpush1.bf16.msra.mxu0 %v10985
    %11008 = vmatprep.subr.bf16.mxu0 0
    %11009 = vmatpush1.bf16.msra.mxu0 %v10984
    %11010 = vmatprep.subr.bf16.mxu0 0
    %11011 = vmatpush1.bf16.msra.mxu0 %v10983
    %11012 = vmatprep.subr.bf16.mxu0 0
    %11013 = vmatpush1.bf16.msra.mxu0 %v10982
    %11014 = vmatprep.subr.bf16.mxu0 0
    %11015 = vmatpush2.bf16.msra.mxu0 0
    %11016 = vmatprep.subr.bf16.mxu0 0
    %11017 = vmatpush2.bf16.msra.mxu0 0
    %11018 = vmatprep.subr.bf16.mxu0 0
    %11019 = vmatpush2.bf16.msra.mxu0 0
    %11020 = vmatprep.subr.bf16.mxu0 0
    %11021 = vmatpush2.bf16.msra.mxu0 0
    %11022 = vmatprep.subr.bf16.mxu0 0
    %11023 = vmatpush2.bf16.msra.mxu0 0
    %11024 = vmatprep.subr.bf16.mxu0 0
    %11025 = vmatpush2.bf16.msra.mxu0 0
    %11026 = vmatprep.subr.bf16.mxu0 0
    %11027 = vmatpush2.bf16.msra.mxu0 0
    %11028 = vmatprep.subr.bf16.mxu0 0
    %11029 = vmatpush2.bf16.msra.mxu0 0
    %11030 = vmatprep.mubr.bf16.mxu0 0
    %11031 = vmatmul.mubr.bf16.gmra.mxu0 %v10490
    %v11032 = vpop.f32.mrf.mxu0
    %v11033 = vadd.f32 %v10945, %v11032
    %v11034 = vpop.f32.mrf.mxu0
    %v11035 = vpop.f32.mrf.mxu0
    %v11036 = vpop.f32.mrf.mxu0
    %11037 = vdwg.mxu0
    %v11038 = vld [vmem:[#allocation14 + $0x5] ss:$0 sm:$0xff]
    %v11039 = vadd.f32 %v11033, %v11038
    %11040 = vst [vmem:[%s11] sm:$0x3] %v11039
    // Predicated region
    $region70: #{pose_refine_net_v2.1} parent=1 // pred_check
      _
    $region71: #{pose_refine_net_v2.1} parent=1 // pred_check_branch
      %11042 = sbr.rel (0) target = $region73
    $region72: #{pose_refine_net_v2.1} parent=1 // pred_region
      _
    $region73: #{pose_refine_net_v2.1} parent=1 // pred_fallthru
      _
    // Predicated region
    $region74: #{pose_refine_net_v2.1} parent=1 // pred_check
      _
    $region75: #{pose_refine_net_v2.1} parent=1 // pred_check_branch
      %11044 = sbr.rel (0) target = $region77
    $region76: #{pose_refine_net_v2.1} parent=1 // pred_region
      _
    $region77: #{pose_refine_net_v2.1} parent=1 // pred_fallthru
      _
    %11045 = vsyncpa [#allocation7], 1
    %11046 = vsyncpa [#allocation9], 1
    %11047 = vsyncpa [#allocation12], 1
    %11048 = vsyncpa [#allocation15], 1
  %11049 = vsyncmov [#allocation5]
  %s11050 = vpop.sfrf %11049
  %p11051 = scmp.eq.s32.totalorder %s11050, 0
  %p11052 = pneg %p11051
  %11054 = shalt.err (%p11052)
  %s11055 = scalar_lea.sflag [#allocation5], 1
  %11056 = vsyncmov %s11055
  %s11057 = vpop.sfrf %11056
  %p11058 = scmp.eq.s32.totalorder %s11057, 0
  %p11059 = pneg %p11058
  %11061 = shalt.err (%p11059)
  %s11062 = scalar_lea.sflag [#allocation5], 2
  %11063 = vsyncmov %s11062
  %s11064 = vpop.sfrf %11063
  %p11065 = scmp.eq.s32.totalorder %s11064, 0
  %p11066 = pneg %p11065
  %11068 = shalt.err (%p11066)

</llo_original>
